<compile_context>
chip_gen: v5e
topology: v5e:2x2
jax: 0.10.0
libtpu: 0.0.40
codegen_flags: <defaults>
</compile_context>

<pallas_src>
import jax
import jax.numpy as jnp
from jax import lax
from jax.experimental import pallas as pl
from jax.experimental.pallas import tpu as pltpu

BN_EPS = 1e-5


def _make_kernel(n, h, w):
    """Fused forward kernel for batch n and (h, w) = (7, 7) spatial."""
    hp, wp = h + 2, w + 2
    L = hp * wp                        # padded frame size per sample (81)
    M = wp + 1                         # margin rows so every 3x3 tap slice stays in-bounds
    NL = n * L                         # rows of the working activation matrix
    inv_cnt = 1.0 / float(n * h * w)   # BN divisor (valid positions only)

    def kernel(x_ref, w1_ref, w2_ref, w3_ref, bn_ref, wf2_ref, wf1_hbm,
               o_ref, s1_ref, s2_ref, wf1_vmem, wf1_sem):
        # ---- overlap the big fc1 weight DMA with the conv stage -------------------------
        fc1_copy = pltpu.make_async_copy(wf1_hbm, wf1_vmem, wf1_sem)
        fc1_copy.start()

        xm = x_ref[...]                                   # (NL, 28) bf16: [0:27]=im2col, [27]=mask
        mask = xm[:, 27:28].astype(jnp.float32)           # 1.0 on the n*h*w valid positions

        def bn_relu_mask(acc, gamma, beta):
            # Training-mode BatchNorm2d over the valid (N,H,W) positions, biased variance.
            am = acc * mask                               # reused for both moments
            mean = jnp.sum(am, axis=0, keepdims=True) * inv_cnt
            ex2 = jnp.sum(am * acc, axis=0, keepdims=True) * inv_cnt
            var = jnp.maximum(ex2 - mean * mean, 0.0)     # clamp one-pass cancellation
            y = (acc - mean) * (lax.rsqrt(var + BN_EPS) * gamma) + beta
            return jnp.maximum(y, 0.0) * mask             # ReLU, then re-zero the padding ring

        # ---- conv1: im2col pre-built outside -> single K=27 GEMM ------------------------
        acc1 = jnp.dot(xm[:, 0:27], w1_ref[...], preferred_element_type=jnp.float32)
        y1 = bn_relu_mask(acc1, bn_ref[0:1, 0:64], bn_ref[1:2, 0:64])
        s1_ref[pl.ds(0, M), :] = jnp.zeros((M, 64), jnp.float32)        # zero only the margins
        s1_ref[pl.ds(M + NL, M), :] = jnp.zeros((M, 64), jnp.float32)
        s1_ref[pl.ds(M, NL), :] = y1

        def conv_im2col(a_ref, w_ref):
            # One GEMM per conv: lane-concat the 9 shifted tap slices -> (NL, 9*Cin) bf16.
            taps = [a_ref[pl.ds(M + (dy - 1) * wp + (dx - 1), NL), :]
                    for dy in range(3) for dx in range(3)]
            lhs = jnp.concatenate(taps, axis=1).astype(jnp.bfloat16)
            return jnp.dot(lhs, w_ref[...], preferred_element_type=jnp.float32)

        # ---- conv2 / conv3 ---------------------------------------------------------------
        y2 = bn_relu_mask(conv_im2col(s1_ref, w2_ref),
                          bn_ref[2:3, 0:128], bn_ref[3:4, 0:128])
        s2_ref[pl.ds(0, M), :] = jnp.zeros((M, 128), jnp.float32)
        s2_ref[pl.ds(M + NL, M), :] = jnp.zeros((M, 128), jnp.float32)
        s2_ref[pl.ds(M, NL), :] = y2

        y3 = bn_relu_mask(conv_im2col(s2_ref, w3_ref),
                          bn_ref[4:5, 0:256], bn_ref[5:6, 0:256]).astype(jnp.bfloat16)

        # ---- flatten + fc1: 7 grouped GEMMs (one per spatial row, K = 7*256 = 1792) ------
        # fc1 weight was pre-permuted at init to (7, 7*256, 128), so the PyTorch
        # view(-1, 256*7*7) flatten is pure slicing + lane-concatenation here.
        fc1_copy.wait()                                   # weight needed from here on
        acc = jnp.zeros((n, 128), jnp.float32)
        for y in range(h):
            rows = []
            for b in range(n):
                base = b * L + (y + 1) * wp + 1           # first valid column of spatial row y
                rows.append(jnp.concatenate(
                    [y3[base + x:base + x + 1, :] for x in range(w)], axis=1))   # (1, 1792)
            lhs = jnp.concatenate(rows, axis=0) if n > 1 else rows[0]            # (n, 1792)
            acc = acc + jnp.dot(lhs, wf1_vmem[y], preferred_element_type=jnp.float32)

        # ---- bn4 + relu4 -----------------------------------------------------------------
        # TODO(synk): the reference declares BatchNorm2d(128) but feeds it a 2-D tensor
        # (PyTorch would raise); implemented as BatchNorm1d-style batch statistics.
        # TODO(synk): training-mode batch statistics only; running stats are not tracked.
        mean = jnp.mean(acc, axis=0, keepdims=True)
        var = jnp.maximum(jnp.mean(acc * acc, axis=0, keepdims=True) - mean * mean, 0.0)
        hidden = (acc - mean) * (lax.rsqrt(var + BN_EPS) * bn_ref[6:7, 0:128]) + bn_ref[7:8, 0:128]
        hidden = jnp.maximum(hidden, 0.0)

        # ---- fc2 (bias kept); output padded to 128 lanes for a lane-dense store ----------
        o_ref[...] = jnp.dot(hidden.astype(jnp.bfloat16), wf2_ref[...],
                             preferred_element_type=jnp.float32) + bn_ref[8:9, 0:128]

    return kernel


# ---------------- parameters (stored directly in kernel-friendly layouts) ----------------

def init_params(key):
    ks = jax.random.split(key, 6)
    p = {}

    def conv_w(k, cin, cout):
        # torch Conv2d weight (Cout, Cin, 3, 3) -> (9*Cin, Cout); K index = (ky*3+kx)*Cin + cin,
        # matching the kernel's lane-concatenated im2col order.
        wt = jax.random.normal(k, (cout, cin, 3, 3), jnp.float32) / jnp.sqrt(9.0 * cin)
        return jnp.transpose(wt, (2, 3, 1, 0)).reshape(9 * cin, cout).astype(jnp.bfloat16)

    p["conv1_w"] = conv_w(ks[0], 3, 64)
    p["conv2_w"] = conv_w(ks[1], 64, 128)
    p["conv3_w"] = conv_w(ks[2], 128, 256)
    # NOTE: conv biases and the fc1 bias are omitted on purpose: training-mode BN subtracts the
    # batch mean immediately after each of them, so per-channel biases cancel exactly.

    # fc1: torch weight (128, 256*7*7) with feature index k = c*49 + y*7 + x.
    # Kernel layout: (7, 7*256, 128) indexed [y, x*256 + c, out].
    wt = jax.random.normal(ks[3], (128, 256 * 7 * 7), jnp.float32) / jnp.sqrt(256.0 * 49.0)
    p["fc1_w"] = (jnp.transpose(wt.reshape(128, 256, 7, 7), (2, 3, 1, 0))
                  .reshape(7, 7 * 256, 128).astype(jnp.bfloat16))

    # fc2: torch (10, 128) + bias(10); stored transposed, bf16, zero-padded to 128 out lanes.
    w2 = jax.random.normal(ks[4], (10, 128), jnp.float32) / jnp.sqrt(128.0)
    b2 = jax.random.normal(ks[5], (10,), jnp.float32) * 0.01
    p["fc2_w"] = jnp.pad(jnp.transpose(w2), ((0, 0), (0, 118))).astype(jnp.bfloat16)

    # All BN affine params (PyTorch defaults gamma=1, beta=0) and the fc2 bias packed into one
    # (9, 256) f32 array -> a single small DMA instead of nine.
    rows = []
    for cch in (64, 128, 256, 128):
        rows.append(jnp.pad(jnp.ones((cch,), jnp.float32), (0, 256 - cch)))   # gamma
        rows.append(jnp.zeros((256,), jnp.float32))                            # beta
    rows.append(jnp.pad(b2, (0, 246)))                                         # fc2 bias
    p["bn_pack"] = jnp.stack(rows, axis=0)
    return p


# ---------------- forward ----------------------------------------------------------------

def cap_recover_forward(x_nchw, params):
    n, c, h, w = x_nchw.shape
    assert c == 3 and (h, w) == (7, 7), "CapRecoverModel.fc1 implies 3x7x7 inputs"
    hp, wp = h + 2, w + 2
    L, M = hp * wp, wp + 1
    NL = n * L
    R = NL + 2 * M

    # conv1 im2col (27 taps) + validity-mask column, built with cheap XLA glue (a few KB).
    x = jnp.transpose(x_nchw, (0, 2, 3, 1)).astype(jnp.float32)        # NHWC
    xp = jnp.pad(x, ((0, 0), (2, 2), (2, 2), (0, 0)))                  # +1 frame ring, +1 taps
    taps = [xp[:, dy:dy + hp, dx:dx + wp, :] for dy in range(3) for dx in range(3)]
    im = jnp.concatenate(taps, axis=-1)                                 # (n, hp, wp, 27)
    valid = jnp.zeros((hp, wp), jnp.float32).at[1:1 + h, 1:1 + w].set(1.0)
    mask = jnp.broadcast_to(valid[None, :, :, None], (n, hp, wp, 1))
    x_in = jnp.concatenate([im, mask], axis=-1).reshape(NL, 28).astype(jnp.bfloat16)

    kernel = _make_kernel(n, h, w)
    vmem = lambda: pl.BlockSpec(memory_space=pltpu.MemorySpace.VMEM)

    out = pl.pallas_call(
        kernel,
        out_shape=jax.ShapeDtypeStruct((n, 128), jnp.float32),
        in_specs=[vmem(), vmem(), vmem(), vmem(), vmem(), vmem(),
                  pl.BlockSpec(memory_space=pl.ANY)],      # fc1_w stays in HBM; manual DMA
        out_specs=vmem(),
        scratch_shapes=[
            pltpu.VMEM((R, 64), jnp.float32),              # padded activation after conv1
            pltpu.VMEM((R, 128), jnp.float32),             # padded activation after conv2
            pltpu.VMEM((h, w * 256, 128), jnp.bfloat16),   # fc1 weight landing buffer
            pltpu.SemaphoreType.DMA,                       # fc1 weight DMA completion
        ],
        compiler_params=pltpu.CompilerParams(vmem_limit_bytes=32 * 1024 * 1024),
    )(x_in, params["conv1_w"], params["conv2_w"], params["conv3_w"],
      params["bn_pack"], params["fc2_w"], params["fc1_w"])

    return out[:, :10]                  # drop the lane padding of fc2


if __name__ == "__main__":
    key = jax.random.PRNGKey(0)
    k_x, k_p = jax.random.split(key)
    # Spatial must be 7x7 so that view(-1, 256*7*7) preserves the batch dimension.
    x = jax.random.normal(k_x, (2, 3, 7, 7), jnp.float32)
    params = init_params(k_p)

    out = jax.jit(cap_recover_forward)(x, params)
    out = jax.block_until_ready(out)
    assert out.shape == (2, 10) and out.dtype == jnp.float32
    print("KERNEL_OK")
</pallas_src>

<mosaic_0001>
module attributes {stable_mosaic.version = 11 : i64} {
  func.func @kernel(%arg0: memref<162x28xbf16, #tpu.memory_space<vmem>>, %arg1: memref<27x64xbf16, #tpu.memory_space<vmem>>, %arg2: memref<576x128xbf16, #tpu.memory_space<vmem>>, %arg3: memref<1152x256xbf16, #tpu.memory_space<vmem>>, %arg4: memref<9x256xf32, #tpu.memory_space<vmem>>, %arg5: memref<128x128xbf16, #tpu.memory_space<vmem>>, %arg6: memref<7x1792x128xbf16, #tpu.memory_space<any>>, %arg7: memref<2x128xf32, #tpu.memory_space<vmem>>, %arg8: memref<182x64xf32, #tpu.memory_space<vmem>>, %arg9: memref<182x128xf32, #tpu.memory_space<vmem>>, %arg10: memref<7x1792x128xbf16, #tpu.memory_space<vmem>>, %arg11: memref<!tpu.dma_semaphore, #tpu.memory_space<semaphore_mem>>) attributes {dimension_semantics = [], scalar_prefetch = 0 : i64, scratch_operands = 4 : i64, tpu.core_type = #tpu.core_type<tc>} {
    tpu.enqueue_dma source(%arg6 : memref<7x1792x128xbf16, #tpu.memory_space<any>>) target(%arg10 : memref<7x1792x128xbf16, #tpu.memory_space<vmem>>) target_semaphore(%arg11 : memref<!tpu.dma_semaphore, #tpu.memory_space<semaphore_mem>>)
    %c0 = arith.constant 0 : index
    %c0_0 = arith.constant 0 : index
    %0 = vector.load %arg0[%c0, %c0_0] : memref<162x28xbf16, #tpu.memory_space<vmem>>, vector<162x28xbf16>
    %1 = vector.extract_strided_slice %0 {offsets = [0, 27], sizes = [162, 1], strides = [1, 1]} : vector<162x28xbf16> to vector<162x1xbf16>
    %2 = arith.extf %1 : vector<162x1xbf16> to vector<162x1xf32>
    %3 = vector.extract_strided_slice %0 {offsets = [0, 0], sizes = [162, 27], strides = [1, 1]} : vector<162x28xbf16> to vector<162x27xbf16>
    %c0_1 = arith.constant 0 : index
    %c0_2 = arith.constant 0 : index
    %4 = vector.load %arg1[%c0_1, %c0_2] : memref<27x64xbf16, #tpu.memory_space<vmem>>, vector<27x64xbf16>
    %cst = arith.constant dense<0.000000e+00> : vector<162x64xf32>
    %5 = tpu.matmul %3, %4, %cst {dimension_numbers = #tpu.dot_dimension_numbers<[1], [0], [0], [1], [0, 0, 1, 1], [], []>} : vector<162x27xbf16>, vector<27x64xbf16>, vector<162x64xf32> -> vector<162x64xf32>
    %c0_3 = arith.constant 0 : index
    %c0_4 = arith.constant 0 : index
    %6 = vector.load %arg4[%c0_3, %c0_4] : memref<9x256xf32, #tpu.memory_space<vmem>>, vector<1x64xf32>
    %c1 = arith.constant 1 : index
    %c0_5 = arith.constant 0 : index
    %7 = vector.load %arg4[%c1, %c0_5] : memref<9x256xf32, #tpu.memory_space<vmem>>, vector<1x64xf32>
    %8 = vector.broadcast %2 : vector<162x1xf32> to vector<162x64xf32>
    %9 = arith.mulf %5, %8 : vector<162x64xf32>
    %cst_6 = arith.constant dense<0.000000e+00> : vector<64xf32>
    %10 = vector.multi_reduction <add>, %9, %cst_6 [0] : vector<162x64xf32> to vector<64xf32>
    %11 = vector.shape_cast %10 : vector<64xf32> to vector<1x64xf32>
    %cst_7 = arith.constant 0.0102040814 : f32
    %12 = vector.broadcast %cst_7 : f32 to vector<1x64xf32>
    %13 = arith.mulf %11, %12 : vector<1x64xf32>
    %14 = arith.mulf %9, %5 : vector<162x64xf32>
    %cst_8 = arith.constant dense<0.000000e+00> : vector<64xf32>
    %15 = vector.multi_reduction <add>, %14, %cst_8 [0] : vector<162x64xf32> to vector<64xf32>
    %16 = vector.shape_cast %15 : vector<64xf32> to vector<1x64xf32>
    %cst_9 = arith.constant 0.0102040814 : f32
    %17 = vector.broadcast %cst_9 : f32 to vector<1x64xf32>
    %18 = arith.mulf %16, %17 : vector<1x64xf32>
    %19 = arith.mulf %13, %13 : vector<1x64xf32>
    %20 = arith.subf %18, %19 : vector<1x64xf32>
    %cst_10 = arith.constant 0.000000e+00 : f32
    %21 = vector.broadcast %cst_10 : f32 to vector<1x64xf32>
    %22 = arith.maximumf %20, %21 : vector<1x64xf32>
    %23 = vector.broadcast %13 : vector<1x64xf32> to vector<162x64xf32>
    %24 = arith.subf %5, %23 : vector<162x64xf32>
    %cst_11 = arith.constant 9.99999974E-6 : f32
    %25 = vector.broadcast %cst_11 : f32 to vector<1x64xf32>
    %26 = arith.addf %22, %25 : vector<1x64xf32>
    %27 = math.rsqrt %26 : vector<1x64xf32>
    %28 = arith.mulf %27, %6 : vector<1x64xf32>
    %29 = vector.broadcast %28 : vector<1x64xf32> to vector<162x64xf32>
    %30 = arith.mulf %24, %29 : vector<162x64xf32>
    %31 = vector.broadcast %7 : vector<1x64xf32> to vector<162x64xf32>
    %32 = arith.addf %30, %31 : vector<162x64xf32>
    %cst_12 = arith.constant 0.000000e+00 : f32
    %33 = vector.broadcast %cst_12 : f32 to vector<162x64xf32>
    %34 = arith.maximumf %32, %33 : vector<162x64xf32>
    %35 = vector.broadcast %2 : vector<162x1xf32> to vector<162x64xf32>
    %36 = arith.mulf %34, %35 : vector<162x64xf32>
    %cst_13 = arith.constant 0.000000e+00 : f32
    %37 = vector.broadcast %cst_13 : f32 to vector<10x64xf32>
    %c0_14 = arith.constant 0 : index
    %c0_15 = arith.constant 0 : index
    %38 = vector.load %arg8[%c0_14, %c0_15] : memref<182x64xf32, #tpu.memory_space<vmem>>, vector<10x64xf32>
    tpu.vector_store %arg8[%c0_14, %c0_15], %37 {strides = array<i32>} : memref<182x64xf32, #tpu.memory_space<vmem>>, vector<10x64xf32>,
    %cst_16 = arith.constant 0.000000e+00 : f32
    %39 = vector.broadcast %cst_16 : f32 to vector<10x64xf32>
    %c172 = arith.constant 172 : index
    %c0_17 = arith.constant 0 : index
    %40 = vector.load %arg8[%c172, %c0_17] : memref<182x64xf32, #tpu.memory_space<vmem>>, vector<10x64xf32>
    tpu.vector_store %arg8[%c172, %c0_17], %39 {strides = array<i32>} : memref<182x64xf32, #tpu.memory_space<vmem>>, vector<10x64xf32>,
    %c10 = arith.constant 10 : index
    %c0_18 = arith.constant 0 : index
    %41 = vector.load %arg8[%c10, %c0_18] : memref<182x64xf32, #tpu.memory_space<vmem>>, vector<162x64xf32>
    tpu.vector_store %arg8[%c10, %c0_18], %36 {strides = array<i32>} : memref<182x64xf32, #tpu.memory_space<vmem>>, vector<162x64xf32>,
    %c0_19 = arith.constant 0 : index
    %c0_20 = arith.constant 0 : index
    %42 = vector.load %arg8[%c0_19, %c0_20] : memref<182x64xf32, #tpu.memory_space<vmem>>, vector<162x64xf32>
    %c1_21 = arith.constant 1 : index
    %c0_22 = arith.constant 0 : index
    %43 = vector.load %arg8[%c1_21, %c0_22] : memref<182x64xf32, #tpu.memory_space<vmem>>, vector<162x64xf32>
    %c2 = arith.constant 2 : index
    %c0_23 = arith.constant 0 : index
    %44 = vector.load %arg8[%c2, %c0_23] : memref<182x64xf32, #tpu.memory_space<vmem>>, vector<162x64xf32>
    %c9 = arith.constant 9 : index
    %c0_24 = arith.constant 0 : index
    %45 = vector.load %arg8[%c9, %c0_24] : memref<182x64xf32, #tpu.memory_space<vmem>>, vector<162x64xf32>
    %c10_25 = arith.constant 10 : index
    %c0_26 = arith.constant 0 : index
    %46 = vector.load %arg8[%c10_25, %c0_26] : memref<182x64xf32, #tpu.memory_space<vmem>>, vector<162x64xf32>
    %c11 = arith.constant 11 : index
    %c0_27 = arith.constant 0 : index
    %47 = vector.load %arg8[%c11, %c0_27] : memref<182x64xf32, #tpu.memory_space<vmem>>, vector<162x64xf32>
    %c18 = arith.constant 18 : index
    %c0_28 = arith.constant 0 : index
    %48 = vector.load %arg8[%c18, %c0_28] : memref<182x64xf32, #tpu.memory_space<vmem>>, vector<162x64xf32>
    %c19 = arith.constant 19 : index
    %c0_29 = arith.constant 0 : index
    %49 = vector.load %arg8[%c19, %c0_29] : memref<182x64xf32, #tpu.memory_space<vmem>>, vector<162x64xf32>
    %c20 = arith.constant 20 : index
    %c0_30 = arith.constant 0 : index
    %50 = vector.load %arg8[%c20, %c0_30] : memref<182x64xf32, #tpu.memory_space<vmem>>, vector<162x64xf32>
    %51 = tpu.concatenate %42, %43, %44, %45, %46, %47, %48, %49, %50 in 1 : vector<162x64xf32>, vector<162x64xf32>, vector<162x64xf32>, vector<162x64xf32>, vector<162x64xf32>, vector<162x64xf32>, vector<162x64xf32>, vector<162x64xf32>, vector<162x64xf32> -> vector<162x576xf32>
    %52 = arith.truncf %51 : vector<162x576xf32> to vector<162x576xbf16>
    %c0_31 = arith.constant 0 : index
    %c0_32 = arith.constant 0 : index
    %53 = vector.load %arg2[%c0_31, %c0_32] : memref<576x128xbf16, #tpu.memory_space<vmem>>, vector<576x128xbf16>
    %cst_33 = arith.constant dense<0.000000e+00> : vector<162x128xf32>
    %54 = tpu.matmul %52, %53, %cst_33 {dimension_numbers = #tpu.dot_dimension_numbers<[1], [0], [0], [1], [0, 0, 1, 1], [], []>} : vector<162x576xbf16>, vector<576x128xbf16>, vector<162x128xf32> -> vector<162x128xf32>
    %c2_34 = arith.constant 2 : index
    %c0_35 = arith.constant 0 : index
    %55 = vector.load %arg4[%c2_34, %c0_35] : memref<9x256xf32, #tpu.memory_space<vmem>>, vector<1x128xf32>
    %c3 = arith.constant 3 : index
    %c0_36 = arith.constant 0 : index
    %56 = vector.load %arg4[%c3, %c0_36] : memref<9x256xf32, #tpu.memory_space<vmem>>, vector<1x128xf32>
    %57 = vector.broadcast %2 : vector<162x1xf32> to vector<162x128xf32>
    %58 = arith.mulf %54, %57 : vector<162x128xf32>
    %cst_37 = arith.constant dense<0.000000e+00> : vector<128xf32>
    %59 = vector.multi_reduction <add>, %58, %cst_37 [0] : vector<162x128xf32> to vector<128xf32>
    %60 = vector.shape_cast %59 : vector<128xf32> to vector<1x128xf32>
    %cst_38 = arith.constant 0.0102040814 : f32
    %61 = vector.broadcast %cst_38 : f32 to vector<1x128xf32>
    %62 = arith.mulf %60, %61 : vector<1x128xf32>
    %63 = arith.mulf %58, %54 : vector<162x128xf32>
    %cst_39 = arith.constant dense<0.000000e+00> : vector<128xf32>
    %64 = vector.multi_reduction <add>, %63, %cst_39 [0] : vector<162x128xf32> to vector<128xf32>
    %65 = vector.shape_cast %64 : vector<128xf32> to vector<1x128xf32>
    %cst_40 = arith.constant 0.0102040814 : f32
    %66 = vector.broadcast %cst_40 : f32 to vector<1x128xf32>
    %67 = arith.mulf %65, %66 : vector<1x128xf32>
    %68 = arith.mulf %62, %62 : vector<1x128xf32>
    %69 = arith.subf %67, %68 : vector<1x128xf32>
    %cst_41 = arith.constant 0.000000e+00 : f32
    %70 = vector.broadcast %cst_41 : f32 to vector<1x128xf32>
    %71 = arith.maximumf %69, %70 : vector<1x128xf32>
    %72 = vector.broadcast %62 : vector<1x128xf32> to vector<162x128xf32>
    %73 = arith.subf %54, %72 : vector<162x128xf32>
    %cst_42 = arith.constant 9.99999974E-6 : f32
    %74 = vector.broadcast %cst_42 : f32 to vector<1x128xf32>
    %75 = arith.addf %71, %74 : vector<1x128xf32>
    %76 = math.rsqrt %75 : vector<1x128xf32>
    %77 = arith.mulf %76, %55 : vector<1x128xf32>
    %78 = vector.broadcast %77 : vector<1x128xf32> to vector<162x128xf32>
    %79 = arith.mulf %73, %78 : vector<162x128xf32>
    %80 = vector.broadcast %56 : vector<1x128xf32> to vector<162x128xf32>
    %81 = arith.addf %79, %80 : vector<162x128xf32>
    %cst_43 = arith.constant 0.000000e+00 : f32
    %82 = vector.broadcast %cst_43 : f32 to vector<162x128xf32>
    %83 = arith.maximumf %81, %82 : vector<162x128xf32>
    %84 = vector.broadcast %2 : vector<162x1xf32> to vector<162x128xf32>
    %85 = arith.mulf %83, %84 : vector<162x128xf32>
    %cst_44 = arith.constant 0.000000e+00 : f32
    %86 = vector.broadcast %cst_44 : f32 to vector<10x128xf32>
    %c0_45 = arith.constant 0 : index
    %c0_46 = arith.constant 0 : index
    %87 = vector.load %arg9[%c0_45, %c0_46] : memref<182x128xf32, #tpu.memory_space<vmem>>, vector<10x128xf32>
    tpu.vector_store %arg9[%c0_45, %c0_46], %86 {strides = array<i32>} : memref<182x128xf32, #tpu.memory_space<vmem>>, vector<10x128xf32>,
    %cst_47 = arith.constant 0.000000e+00 : f32
    %88 = vector.broadcast %cst_47 : f32 to vector<10x128xf32>
    %c172_48 = arith.constant 172 : index
    %c0_49 = arith.constant 0 : index
    %89 = vector.load %arg9[%c172_48, %c0_49] : memref<182x128xf32, #tpu.memory_space<vmem>>, vector<10x128xf32>
    tpu.vector_store %arg9[%c172_48, %c0_49], %88 {strides = array<i32>} : memref<182x128xf32, #tpu.memory_space<vmem>>, vector<10x128xf32>,
    %c10_50 = arith.constant 10 : index
    %c0_51 = arith.constant 0 : index
    %90 = vector.load %arg9[%c10_50, %c0_51] : memref<182x128xf32, #tpu.memory_space<vmem>>, vector<162x128xf32>
    tpu.vector_store %arg9[%c10_50, %c0_51], %85 {strides = array<i32>} : memref<182x128xf32, #tpu.memory_space<vmem>>, vector<162x128xf32>,
    %c0_52 = arith.constant 0 : index
    %c0_53 = arith.constant 0 : index
    %91 = vector.load %arg9[%c0_52, %c0_53] : memref<182x128xf32, #tpu.memory_space<vmem>>, vector<162x128xf32>
    %c1_54 = arith.constant 1 : index
    %c0_55 = arith.constant 0 : index
    %92 = vector.load %arg9[%c1_54, %c0_55] : memref<182x128xf32, #tpu.memory_space<vmem>>, vector<162x128xf32>
    %c2_56 = arith.constant 2 : index
    %c0_57 = arith.constant 0 : index
    %93 = vector.load %arg9[%c2_56, %c0_57] : memref<182x128xf32, #tpu.memory_space<vmem>>, vector<162x128xf32>
    %c9_58 = arith.constant 9 : index
    %c0_59 = arith.constant 0 : index
    %94 = vector.load %arg9[%c9_58, %c0_59] : memref<182x128xf32, #tpu.memory_space<vmem>>, vector<162x128xf32>
    %c10_60 = arith.constant 10 : index
    %c0_61 = arith.constant 0 : index
    %95 = vector.load %arg9[%c10_60, %c0_61] : memref<182x128xf32, #tpu.memory_space<vmem>>, vector<162x128xf32>
    %c11_62 = arith.constant 11 : index
    %c0_63 = arith.constant 0 : index
    %96 = vector.load %arg9[%c11_62, %c0_63] : memref<182x128xf32, #tpu.memory_space<vmem>>, vector<162x128xf32>
    %c18_64 = arith.constant 18 : index
    %c0_65 = arith.constant 0 : index
    %97 = vector.load %arg9[%c18_64, %c0_65] : memref<182x128xf32, #tpu.memory_space<vmem>>, vector<162x128xf32>
    %c19_66 = arith.constant 19 : index
    %c0_67 = arith.constant 0 : index
    %98 = vector.load %arg9[%c19_66, %c0_67] : memref<182x128xf32, #tpu.memory_space<vmem>>, vector<162x128xf32>
    %c20_68 = arith.constant 20 : index
    %c0_69 = arith.constant 0 : index
    %99 = vector.load %arg9[%c20_68, %c0_69] : memref<182x128xf32, #tpu.memory_space<vmem>>, vector<162x128xf32>
    %100 = tpu.concatenate %91, %92, %93, %94, %95, %96, %97, %98, %99 in 1 : vector<162x128xf32>, vector<162x128xf32>, vector<162x128xf32>, vector<162x128xf32>, vector<162x128xf32>, vector<162x128xf32>, vector<162x128xf32>, vector<162x128xf32>, vector<162x128xf32> -> vector<162x1152xf32>
    %101 = arith.truncf %100 : vector<162x1152xf32> to vector<162x1152xbf16>
    %c0_70 = arith.constant 0 : index
    %c0_71 = arith.constant 0 : index
    %102 = vector.load %arg3[%c0_70, %c0_71] : memref<1152x256xbf16, #tpu.memory_space<vmem>>, vector<1152x256xbf16>
    %cst_72 = arith.constant dense<0.000000e+00> : vector<162x256xf32>
    %103 = tpu.matmul %101, %102, %cst_72 {dimension_numbers = #tpu.dot_dimension_numbers<[1], [0], [0], [1], [0, 0, 1, 1], [], []>} : vector<162x1152xbf16>, vector<1152x256xbf16>, vector<162x256xf32> -> vector<162x256xf32>
    %c4 = arith.constant 4 : index
    %c0_73 = arith.constant 0 : index
    %104 = vector.load %arg4[%c4, %c0_73] : memref<9x256xf32, #tpu.memory_space<vmem>>, vector<1x256xf32>
    %c5 = arith.constant 5 : index
    %c0_74 = arith.constant 0 : index
    %105 = vector.load %arg4[%c5, %c0_74] : memref<9x256xf32, #tpu.memory_space<vmem>>, vector<1x256xf32>
    %106 = vector.broadcast %2 : vector<162x1xf32> to vector<162x256xf32>
    %107 = arith.mulf %103, %106 : vector<162x256xf32>
    %cst_75 = arith.constant dense<0.000000e+00> : vector<256xf32>
    %108 = vector.multi_reduction <add>, %107, %cst_75 [0] : vector<162x256xf32> to vector<256xf32>
    %109 = vector.shape_cast %108 : vector<256xf32> to vector<1x256xf32>
    %cst_76 = arith.constant 0.0102040814 : f32
    %110 = vector.broadcast %cst_76 : f32 to vector<1x256xf32>
    %111 = arith.mulf %109, %110 : vector<1x256xf32>
    %112 = arith.mulf %107, %103 : vector<162x256xf32>
    %cst_77 = arith.constant dense<0.000000e+00> : vector<256xf32>
    %113 = vector.multi_reduction <add>, %112, %cst_77 [0] : vector<162x256xf32> to vector<256xf32>
    %114 = vector.shape_cast %113 : vector<256xf32> to vector<1x256xf32>
    %cst_78 = arith.constant 0.0102040814 : f32
    %115 = vector.broadcast %cst_78 : f32 to vector<1x256xf32>
    %116 = arith.mulf %114, %115 : vector<1x256xf32>
    %117 = arith.mulf %111, %111 : vector<1x256xf32>
    %118 = arith.subf %116, %117 : vector<1x256xf32>
    %cst_79 = arith.constant 0.000000e+00 : f32
    %119 = vector.broadcast %cst_79 : f32 to vector<1x256xf32>
    %120 = arith.maximumf %118, %119 : vector<1x256xf32>
    %121 = vector.broadcast %111 : vector<1x256xf32> to vector<162x256xf32>
    %122 = arith.subf %103, %121 : vector<162x256xf32>
    %cst_80 = arith.constant 9.99999974E-6 : f32
    %123 = vector.broadcast %cst_80 : f32 to vector<1x256xf32>
    %124 = arith.addf %120, %123 : vector<1x256xf32>
    %125 = math.rsqrt %124 : vector<1x256xf32>
    %126 = arith.mulf %125, %104 : vector<1x256xf32>
    %127 = vector.broadcast %126 : vector<1x256xf32> to vector<162x256xf32>
    %128 = arith.mulf %122, %127 : vector<162x256xf32>
    %129 = vector.broadcast %105 : vector<1x256xf32> to vector<162x256xf32>
    %130 = arith.addf %128, %129 : vector<162x256xf32>
    %cst_81 = arith.constant 0.000000e+00 : f32
    %131 = vector.broadcast %cst_81 : f32 to vector<162x256xf32>
    %132 = arith.maximumf %130, %131 : vector<162x256xf32>
    %133 = vector.broadcast %2 : vector<162x1xf32> to vector<162x256xf32>
    %134 = arith.mulf %132, %133 : vector<162x256xf32>
    %135 = arith.truncf %134 : vector<162x256xf32> to vector<162x256xbf16>
    tpu.wait_dma2 semaphore(%arg11 : memref<!tpu.dma_semaphore, #tpu.memory_space<semaphore_mem>>) src(%arg6 : memref<7x1792x128xbf16, #tpu.memory_space<any>>) dst(%arg10 : memref<7x1792x128xbf16, #tpu.memory_space<vmem>>)
    %cst_82 = arith.constant 0.000000e+00 : f32
    %136 = vector.broadcast %cst_82 : f32 to vector<2x128xf32>
    %137 = vector.extract_strided_slice %135 {offsets = [10, 0], sizes = [1, 256], strides = [1, 1]} : vector<162x256xbf16> to vector<1x256xbf16>
    %138 = vector.extract_strided_slice %135 {offsets = [11, 0], sizes = [1, 256], strides = [1, 1]} : vector<162x256xbf16> to vector<1x256xbf16>
    %139 = vector.extract_strided_slice %135 {offsets = [12, 0], sizes = [1, 256], strides = [1, 1]} : vector<162x256xbf16> to vector<1x256xbf16>
    %140 = vector.extract_strided_slice %135 {offsets = [13, 0], sizes = [1, 256], strides = [1, 1]} : vector<162x256xbf16> to vector<1x256xbf16>
    %141 = vector.extract_strided_slice %135 {offsets = [14, 0], sizes = [1, 256], strides = [1, 1]} : vector<162x256xbf16> to vector<1x256xbf16>
    %142 = vector.extract_strided_slice %135 {offsets = [15, 0], sizes = [1, 256], strides = [1, 1]} : vector<162x256xbf16> to vector<1x256xbf16>
    %143 = vector.extract_strided_slice %135 {offsets = [16, 0], sizes = [1, 256], strides = [1, 1]} : vector<162x256xbf16> to vector<1x256xbf16>
    %144 = tpu.concatenate %137, %138, %139, %140, %141, %142, %143 in 1 : vector<1x256xbf16>, vector<1x256xbf16>, vector<1x256xbf16>, vector<1x256xbf16>, vector<1x256xbf16>, vector<1x256xbf16>, vector<1x256xbf16> -> vector<1x1792xbf16>
    %145 = vector.extract_strided_slice %135 {offsets = [91, 0], sizes = [1, 256], strides = [1, 1]} : vector<162x256xbf16> to vector<1x256xbf16>
    %146 = vector.extract_strided_slice %135 {offsets = [92, 0], sizes = [1, 256], strides = [1, 1]} : vector<162x256xbf16> to vector<1x256xbf16>
    %147 = vector.extract_strided_slice %135 {offsets = [93, 0], sizes = [1, 256], strides = [1, 1]} : vector<162x256xbf16> to vector<1x256xbf16>
    %148 = vector.extract_strided_slice %135 {offsets = [94, 0], sizes = [1, 256], strides = [1, 1]} : vector<162x256xbf16> to vector<1x256xbf16>
    %149 = vector.extract_strided_slice %135 {offsets = [95, 0], sizes = [1, 256], strides = [1, 1]} : vector<162x256xbf16> to vector<1x256xbf16>
    %150 = vector.extract_strided_slice %135 {offsets = [96, 0], sizes = [1, 256], strides = [1, 1]} : vector<162x256xbf16> to vector<1x256xbf16>
    %151 = vector.extract_strided_slice %135 {offsets = [97, 0], sizes = [1, 256], strides = [1, 1]} : vector<162x256xbf16> to vector<1x256xbf16>
    %152 = tpu.concatenate %145, %146, %147, %148, %149, %150, %151 in 1 : vector<1x256xbf16>, vector<1x256xbf16>, vector<1x256xbf16>, vector<1x256xbf16>, vector<1x256xbf16>, vector<1x256xbf16>, vector<1x256xbf16> -> vector<1x1792xbf16>
    %153 = tpu.concatenate %144, %152 in 0 : vector<1x1792xbf16>, vector<1x1792xbf16> -> vector<2x1792xbf16>
    %c0_83 = arith.constant 0 : index
    %c0_84 = arith.constant 0 : index
    %c0_85 = arith.constant 0 : index
    %154 = vector.load %arg10[%c0_83, %c0_84, %c0_85] : memref<7x1792x128xbf16, #tpu.memory_space<vmem>>, vector<1x1792x128xbf16>
    %155 = vector.shape_cast %154 : vector<1x1792x128xbf16> to vector<1792x128xbf16>
    %cst_86 = arith.constant dense<0.000000e+00> : vector<2x128xf32>
    %156 = tpu.matmul %153, %155, %cst_86 {dimension_numbers = #tpu.dot_dimension_numbers<[1], [0], [0], [1], [0, 0, 1, 1], [], []>} : vector<2x1792xbf16>, vector<1792x128xbf16>, vector<2x128xf32> -> vector<2x128xf32>
    %157 = arith.addf %136, %156 : vector<2x128xf32>
    %158 = vector.extract_strided_slice %135 {offsets = [19, 0], sizes = [1, 256], strides = [1, 1]} : vector<162x256xbf16> to vector<1x256xbf16>
    %159 = vector.extract_strided_slice %135 {offsets = [20, 0], sizes = [1, 256], strides = [1, 1]} : vector<162x256xbf16> to vector<1x256xbf16>
    %160 = vector.extract_strided_slice %135 {offsets = [21, 0], sizes = [1, 256], strides = [1, 1]} : vector<162x256xbf16> to vector<1x256xbf16>
    %161 = vector.extract_strided_slice %135 {offsets = [22, 0], sizes = [1, 256], strides = [1, 1]} : vector<162x256xbf16> to vector<1x256xbf16>
    %162 = vector.extract_strided_slice %135 {offsets = [23, 0], sizes = [1, 256], strides = [1, 1]} : vector<162x256xbf16> to vector<1x256xbf16>
    %163 = vector.extract_strided_slice %135 {offsets = [24, 0], sizes = [1, 256], strides = [1, 1]} : vector<162x256xbf16> to vector<1x256xbf16>
    %164 = vector.extract_strided_slice %135 {offsets = [25, 0], sizes = [1, 256], strides = [1, 1]} : vector<162x256xbf16> to vector<1x256xbf16>
    %165 = tpu.concatenate %158, %159, %160, %161, %162, %163, %164 in 1 : vector<1x256xbf16>, vector<1x256xbf16>, vector<1x256xbf16>, vector<1x256xbf16>, vector<1x256xbf16>, vector<1x256xbf16>, vector<1x256xbf16> -> vector<1x1792xbf16>
    %166 = vector.extract_strided_slice %135 {offsets = [100, 0], sizes = [1, 256], strides = [1, 1]} : vector<162x256xbf16> to vector<1x256xbf16>
    %167 = vector.extract_strided_slice %135 {offsets = [101, 0], sizes = [1, 256], strides = [1, 1]} : vector<162x256xbf16> to vector<1x256xbf16>
    %168 = vector.extract_strided_slice %135 {offsets = [102, 0], sizes = [1, 256], strides = [1, 1]} : vector<162x256xbf16> to vector<1x256xbf16>
    %169 = vector.extract_strided_slice %135 {offsets = [103, 0], sizes = [1, 256], strides = [1, 1]} : vector<162x256xbf16> to vector<1x256xbf16>
    %170 = vector.extract_strided_slice %135 {offsets = [104, 0], sizes = [1, 256], strides = [1, 1]} : vector<162x256xbf16> to vector<1x256xbf16>
    %171 = vector.extract_strided_slice %135 {offsets = [105, 0], sizes = [1, 256], strides = [1, 1]} : vector<162x256xbf16> to vector<1x256xbf16>
    %172 = vector.extract_strided_slice %135 {offsets = [106, 0], sizes = [1, 256], strides = [1, 1]} : vector<162x256xbf16> to vector<1x256xbf16>
    %173 = tpu.concatenate %166, %167, %168, %169, %170, %171, %172 in 1 : vector<1x256xbf16>, vector<1x256xbf16>, vector<1x256xbf16>, vector<1x256xbf16>, vector<1x256xbf16>, vector<1x256xbf16>, vector<1x256xbf16> -> vector<1x1792xbf16>
    %174 = tpu.concatenate %165, %173 in 0 : vector<1x1792xbf16>, vector<1x1792xbf16> -> vector<2x1792xbf16>
    %c1_87 = arith.constant 1 : index
    %c0_88 = arith.constant 0 : index
    %c0_89 = arith.constant 0 : index
    %175 = vector.load %arg10[%c1_87, %c0_88, %c0_89] : memref<7x1792x128xbf16, #tpu.memory_space<vmem>>, vector<1x1792x128xbf16>
    %176 = vector.shape_cast %175 : vector<1x1792x128xbf16> to vector<1792x128xbf16>
    %cst_90 = arith.constant dense<0.000000e+00> : vector<2x128xf32>
    %177 = tpu.matmul %174, %176, %cst_90 {dimension_numbers = #tpu.dot_dimension_numbers<[1], [0], [0], [1], [0, 0, 1, 1], [], []>} : vector<2x1792xbf16>, vector<1792x128xbf16>, vector<2x128xf32> -> vector<2x128xf32>
    %178 = arith.addf %157, %177 : vector<2x128xf32>
    %179 = vector.extract_strided_slice %135 {offsets = [28, 0], sizes = [1, 256], strides = [1, 1]} : vector<162x256xbf16> to vector<1x256xbf16>
    %180 = vector.extract_strided_slice %135 {offsets = [29, 0], sizes = [1, 256], strides = [1, 1]} : vector<162x256xbf16> to vector<1x256xbf16>
    %181 = vector.extract_strided_slice %135 {offsets = [30, 0], sizes = [1, 256], strides = [1, 1]} : vector<162x256xbf16> to vector<1x256xbf16>
    %182 = vector.extract_strided_slice %135 {offsets = [31, 0], sizes = [1, 256], strides = [1, 1]} : vector<162x256xbf16> to vector<1x256xbf16>
    %183 = vector.extract_strided_slice %135 {offsets = [32, 0], sizes = [1, 256], strides = [1, 1]} : vector<162x256xbf16> to vector<1x256xbf16>
    %184 = vector.extract_strided_slice %135 {offsets = [33, 0], sizes = [1, 256], strides = [1, 1]} : vector<162x256xbf16> to vector<1x256xbf16>
    %185 = vector.extract_strided_slice %135 {offsets = [34, 0], sizes = [1, 256], strides = [1, 1]} : vector<162x256xbf16> to vector<1x256xbf16>
    %186 = tpu.concatenate %179, %180, %181, %182, %183, %184, %185 in 1 : vector<1x256xbf16>, vector<1x256xbf16>, vector<1x256xbf16>, vector<1x256xbf16>, vector<1x256xbf16>, vector<1x256xbf16>, vector<1x256xbf16> -> vector<1x1792xbf16>
    %187 = vector.extract_strided_slice %135 {offsets = [109, 0], sizes = [1, 256], strides = [1, 1]} : vector<162x256xbf16> to vector<1x256xbf16>
    %188 = vector.extract_strided_slice %135 {offsets = [110, 0], sizes = [1, 256], strides = [1, 1]} : vector<162x256xbf16> to vector<1x256xbf16>
    %189 = vector.extract_strided_slice %135 {offsets = [111, 0], sizes = [1, 256], strides = [1, 1]} : vector<162x256xbf16> to vector<1x256xbf16>
    %190 = vector.extract_strided_slice %135 {offsets = [112, 0], sizes = [1, 256], strides = [1, 1]} : vector<162x256xbf16> to vector<1x256xbf16>
    %191 = vector.extract_strided_slice %135 {offsets = [113, 0], sizes = [1, 256], strides = [1, 1]} : vector<162x256xbf16> to vector<1x256xbf16>
    %192 = vector.extract_strided_slice %135 {offsets = [114, 0], sizes = [1, 256], strides = [1, 1]} : vector<162x256xbf16> to vector<1x256xbf16>
    %193 = vector.extract_strided_slice %135 {offsets = [115, 0], sizes = [1, 256], strides = [1, 1]} : vector<162x256xbf16> to vector<1x256xbf16>
    %194 = tpu.concatenate %187, %188, %189, %190, %191, %192, %193 in 1 : vector<1x256xbf16>, vector<1x256xbf16>, vector<1x256xbf16>, vector<1x256xbf16>, vector<1x256xbf16>, vector<1x256xbf16>, vector<1x256xbf16> -> vector<1x1792xbf16>
    %195 = tpu.concatenate %186, %194 in 0 : vector<1x1792xbf16>, vector<1x1792xbf16> -> vector<2x1792xbf16>
    %c2_91 = arith.constant 2 : index
    %c0_92 = arith.constant 0 : index
    %c0_93 = arith.constant 0 : index
    %196 = vector.load %arg10[%c2_91, %c0_92, %c0_93] : memref<7x1792x128xbf16, #tpu.memory_space<vmem>>, vector<1x1792x128xbf16>
    %197 = vector.shape_cast %196 : vector<1x1792x128xbf16> to vector<1792x128xbf16>
    %cst_94 = arith.constant dense<0.000000e+00> : vector<2x128xf32>
    %198 = tpu.matmul %195, %197, %cst_94 {dimension_numbers = #tpu.dot_dimension_numbers<[1], [0], [0], [1], [0, 0, 1, 1], [], []>} : vector<2x1792xbf16>, vector<1792x128xbf16>, vector<2x128xf32> -> vector<2x128xf32>
    %199 = arith.addf %178, %198 : vector<2x128xf32>
    %200 = vector.extract_strided_slice %135 {offsets = [37, 0], sizes = [1, 256], strides = [1, 1]} : vector<162x256xbf16> to vector<1x256xbf16>
    %201 = vector.extract_strided_slice %135 {offsets = [38, 0], sizes = [1, 256], strides = [1, 1]} : vector<162x256xbf16> to vector<1x256xbf16>
    %202 = vector.extract_strided_slice %135 {offsets = [39, 0], sizes = [1, 256], strides = [1, 1]} : vector<162x256xbf16> to vector<1x256xbf16>
    %203 = vector.extract_strided_slice %135 {offsets = [40, 0], sizes = [1, 256], strides = [1, 1]} : vector<162x256xbf16> to vector<1x256xbf16>
    %204 = vector.extract_strided_slice %135 {offsets = [41, 0], sizes = [1, 256], strides = [1, 1]} : vector<162x256xbf16> to vector<1x256xbf16>
    %205 = vector.extract_strided_slice %135 {offsets = [42, 0], sizes = [1, 256], strides = [1, 1]} : vector<162x256xbf16> to vector<1x256xbf16>
    %206 = vector.extract_strided_slice %135 {offsets = [43, 0], sizes = [1, 256], strides = [1, 1]} : vector<162x256xbf16> to vector<1x256xbf16>
    %207 = tpu.concatenate %200, %201, %202, %203, %204, %205, %206 in 1 : vector<1x256xbf16>, vector<1x256xbf16>, vector<1x256xbf16>, vector<1x256xbf16>, vector<1x256xbf16>, vector<1x256xbf16>, vector<1x256xbf16> -> vector<1x1792xbf16>
    %208 = vector.extract_strided_slice %135 {offsets = [118, 0], sizes = [1, 256], strides = [1, 1]} : vector<162x256xbf16> to vector<1x256xbf16>
    %209 = vector.extract_strided_slice %135 {offsets = [119, 0], sizes = [1, 256], strides = [1, 1]} : vector<162x256xbf16> to vector<1x256xbf16>
    %210 = vector.extract_strided_slice %135 {offsets = [120, 0], sizes = [1, 256], strides = [1, 1]} : vector<162x256xbf16> to vector<1x256xbf16>
    %211 = vector.extract_strided_slice %135 {offsets = [121, 0], sizes = [1, 256], strides = [1, 1]} : vector<162x256xbf16> to vector<1x256xbf16>
    %212 = vector.extract_strided_slice %135 {offsets = [122, 0], sizes = [1, 256], strides = [1, 1]} : vector<162x256xbf16> to vector<1x256xbf16>
    %213 = vector.extract_strided_slice %135 {offsets = [123, 0], sizes = [1, 256], strides = [1, 1]} : vector<162x256xbf16> to vector<1x256xbf16>
    %214 = vector.extract_strided_slice %135 {offsets = [124, 0], sizes = [1, 256], strides = [1, 1]} : vector<162x256xbf16> to vector<1x256xbf16>
    %215 = tpu.concatenate %208, %209, %210, %211, %212, %213, %214 in 1 : vector<1x256xbf16>, vector<1x256xbf16>, vector<1x256xbf16>, vector<1x256xbf16>, vector<1x256xbf16>, vector<1x256xbf16>, vector<1x256xbf16> -> vector<1x1792xbf16>
    %216 = tpu.concatenate %207, %215 in 0 : vector<1x1792xbf16>, vector<1x1792xbf16> -> vector<2x1792xbf16>
    %c3_95 = arith.constant 3 : index
    %c0_96 = arith.constant 0 : index
    %c0_97 = arith.constant 0 : index
    %217 = vector.load %arg10[%c3_95, %c0_96, %c0_97] : memref<7x1792x128xbf16, #tpu.memory_space<vmem>>, vector<1x1792x128xbf16>
    %218 = vector.shape_cast %217 : vector<1x1792x128xbf16> to vector<1792x128xbf16>
    %cst_98 = arith.constant dense<0.000000e+00> : vector<2x128xf32>
    %219 = tpu.matmul %216, %218, %cst_98 {dimension_numbers = #tpu.dot_dimension_numbers<[1], [0], [0], [1], [0, 0, 1, 1], [], []>} : vector<2x1792xbf16>, vector<1792x128xbf16>, vector<2x128xf32> -> vector<2x128xf32>
    %220 = arith.addf %199, %219 : vector<2x128xf32>
    %221 = vector.extract_strided_slice %135 {offsets = [46, 0], sizes = [1, 256], strides = [1, 1]} : vector<162x256xbf16> to vector<1x256xbf16>
    %222 = vector.extract_strided_slice %135 {offsets = [47, 0], sizes = [1, 256], strides = [1, 1]} : vector<162x256xbf16> to vector<1x256xbf16>
    %223 = vector.extract_strided_slice %135 {offsets = [48, 0], sizes = [1, 256], strides = [1, 1]} : vector<162x256xbf16> to vector<1x256xbf16>
    %224 = vector.extract_strided_slice %135 {offsets = [49, 0], sizes = [1, 256], strides = [1, 1]} : vector<162x256xbf16> to vector<1x256xbf16>
    %225 = vector.extract_strided_slice %135 {offsets = [50, 0], sizes = [1, 256], strides = [1, 1]} : vector<162x256xbf16> to vector<1x256xbf16>
    %226 = vector.extract_strided_slice %135 {offsets = [51, 0], sizes = [1, 256], strides = [1, 1]} : vector<162x256xbf16> to vector<1x256xbf16>
    %227 = vector.extract_strided_slice %135 {offsets = [52, 0], sizes = [1, 256], strides = [1, 1]} : vector<162x256xbf16> to vector<1x256xbf16>
    %228 = tpu.concatenate %221, %222, %223, %224, %225, %226, %227 in 1 : vector<1x256xbf16>, vector<1x256xbf16>, vector<1x256xbf16>, vector<1x256xbf16>, vector<1x256xbf16>, vector<1x256xbf16>, vector<1x256xbf16> -> vector<1x1792xbf16>
    %229 = vector.extract_strided_slice %135 {offsets = [127, 0], sizes = [1, 256], strides = [1, 1]} : vector<162x256xbf16> to vector<1x256xbf16>
    %230 = vector.extract_strided_slice %135 {offsets = [128, 0], sizes = [1, 256], strides = [1, 1]} : vector<162x256xbf16> to vector<1x256xbf16>
    %231 = vector.extract_strided_slice %135 {offsets = [129, 0], sizes = [1, 256], strides = [1, 1]} : vector<162x256xbf16> to vector<1x256xbf16>
    %232 = vector.extract_strided_slice %135 {offsets = [130, 0], sizes = [1, 256], strides = [1, 1]} : vector<162x256xbf16> to vector<1x256xbf16>
    %233 = vector.extract_strided_slice %135 {offsets = [131, 0], sizes = [1, 256], strides = [1, 1]} : vector<162x256xbf16> to vector<1x256xbf16>
    %234 = vector.extract_strided_slice %135 {offsets = [132, 0], sizes = [1, 256], strides = [1, 1]} : vector<162x256xbf16> to vector<1x256xbf16>
    %235 = vector.extract_strided_slice %135 {offsets = [133, 0], sizes = [1, 256], strides = [1, 1]} : vector<162x256xbf16> to vector<1x256xbf16>
    %236 = tpu.concatenate %229, %230, %231, %232, %233, %234, %235 in 1 : vector<1x256xbf16>, vector<1x256xbf16>, vector<1x256xbf16>, vector<1x256xbf16>, vector<1x256xbf16>, vector<1x256xbf16>, vector<1x256xbf16> -> vector<1x1792xbf16>
    %237 = tpu.concatenate %228, %236 in 0 : vector<1x1792xbf16>, vector<1x1792xbf16> -> vector<2x1792xbf16>
    %c4_99 = arith.constant 4 : index
    %c0_100 = arith.constant 0 : index
    %c0_101 = arith.constant 0 : index
    %238 = vector.load %arg10[%c4_99, %c0_100, %c0_101] : memref<7x1792x128xbf16, #tpu.memory_space<vmem>>, vector<1x1792x128xbf16>
    %239 = vector.shape_cast %238 : vector<1x1792x128xbf16> to vector<1792x128xbf16>
    %cst_102 = arith.constant dense<0.000000e+00> : vector<2x128xf32>
    %240 = tpu.matmul %237, %239, %cst_102 {dimension_numbers = #tpu.dot_dimension_numbers<[1], [0], [0], [1], [0, 0, 1, 1], [], []>} : vector<2x1792xbf16>, vector<1792x128xbf16>, vector<2x128xf32> -> vector<2x128xf32>
    %241 = arith.addf %220, %240 : vector<2x128xf32>
    %242 = vector.extract_strided_slice %135 {offsets = [55, 0], sizes = [1, 256], strides = [1, 1]} : vector<162x256xbf16> to vector<1x256xbf16>
    %243 = vector.extract_strided_slice %135 {offsets = [56, 0], sizes = [1, 256], strides = [1, 1]} : vector<162x256xbf16> to vector<1x256xbf16>
    %244 = vector.extract_strided_slice %135 {offsets = [57, 0], sizes = [1, 256], strides = [1, 1]} : vector<162x256xbf16> to vector<1x256xbf16>
    %245 = vector.extract_strided_slice %135 {offsets = [58, 0], sizes = [1, 256], strides = [1, 1]} : vector<162x256xbf16> to vector<1x256xbf16>
    %246 = vector.extract_strided_slice %135 {offsets = [59, 0], sizes = [1, 256], strides = [1, 1]} : vector<162x256xbf16> to vector<1x256xbf16>
    %247 = vector.extract_strided_slice %135 {offsets = [60, 0], sizes = [1, 256], strides = [1, 1]} : vector<162x256xbf16> to vector<1x256xbf16>
    %248 = vector.extract_strided_slice %135 {offsets = [61, 0], sizes = [1, 256], strides = [1, 1]} : vector<162x256xbf16> to vector<1x256xbf16>
    %249 = tpu.concatenate %242, %243, %244, %245, %246, %247, %248 in 1 : vector<1x256xbf16>, vector<1x256xbf16>, vector<1x256xbf16>, vector<1x256xbf16>, vector<1x256xbf16>, vector<1x256xbf16>, vector<1x256xbf16> -> vector<1x1792xbf16>
    %250 = vector.extract_strided_slice %135 {offsets = [136, 0], sizes = [1, 256], strides = [1, 1]} : vector<162x256xbf16> to vector<1x256xbf16>
    %251 = vector.extract_strided_slice %135 {offsets = [137, 0], sizes = [1, 256], strides = [1, 1]} : vector<162x256xbf16> to vector<1x256xbf16>
    %252 = vector.extract_strided_slice %135 {offsets = [138, 0], sizes = [1, 256], strides = [1, 1]} : vector<162x256xbf16> to vector<1x256xbf16>
    %253 = vector.extract_strided_slice %135 {offsets = [139, 0], sizes = [1, 256], strides = [1, 1]} : vector<162x256xbf16> to vector<1x256xbf16>
    %254 = vector.extract_strided_slice %135 {offsets = [140, 0], sizes = [1, 256], strides = [1, 1]} : vector<162x256xbf16> to vector<1x256xbf16>
    %255 = vector.extract_strided_slice %135 {offsets = [141, 0], sizes = [1, 256], strides = [1, 1]} : vector<162x256xbf16> to vector<1x256xbf16>
    %256 = vector.extract_strided_slice %135 {offsets = [142, 0], sizes = [1, 256], strides = [1, 1]} : vector<162x256xbf16> to vector<1x256xbf16>
    %257 = tpu.concatenate %250, %251, %252, %253, %254, %255, %256 in 1 : vector<1x256xbf16>, vector<1x256xbf16>, vector<1x256xbf16>, vector<1x256xbf16>, vector<1x256xbf16>, vector<1x256xbf16>, vector<1x256xbf16> -> vector<1x1792xbf16>
    %258 = tpu.concatenate %249, %257 in 0 : vector<1x1792xbf16>, vector<1x1792xbf16> -> vector<2x1792xbf16>
    %c5_103 = arith.constant 5 : index
    %c0_104 = arith.constant 0 : index
    %c0_105 = arith.constant 0 : index
    %259 = vector.load %arg10[%c5_103, %c0_104, %c0_105] : memref<7x1792x128xbf16, #tpu.memory_space<vmem>>, vector<1x1792x128xbf16>
    %260 = vector.shape_cast %259 : vector<1x1792x128xbf16> to vector<1792x128xbf16>
    %cst_106 = arith.constant dense<0.000000e+00> : vector<2x128xf32>
    %261 = tpu.matmul %258, %260, %cst_106 {dimension_numbers = #tpu.dot_dimension_numbers<[1], [0], [0], [1], [0, 0, 1, 1], [], []>} : vector<2x1792xbf16>, vector<1792x128xbf16>, vector<2x128xf32> -> vector<2x128xf32>
    %262 = arith.addf %241, %261 : vector<2x128xf32>
    %263 = vector.extract_strided_slice %135 {offsets = [64, 0], sizes = [1, 256], strides = [1, 1]} : vector<162x256xbf16> to vector<1x256xbf16>
    %264 = vector.extract_strided_slice %135 {offsets = [65, 0], sizes = [1, 256], strides = [1, 1]} : vector<162x256xbf16> to vector<1x256xbf16>
    %265 = vector.extract_strided_slice %135 {offsets = [66, 0], sizes = [1, 256], strides = [1, 1]} : vector<162x256xbf16> to vector<1x256xbf16>
    %266 = vector.extract_strided_slice %135 {offsets = [67, 0], sizes = [1, 256], strides = [1, 1]} : vector<162x256xbf16> to vector<1x256xbf16>
    %267 = vector.extract_strided_slice %135 {offsets = [68, 0], sizes = [1, 256], strides = [1, 1]} : vector<162x256xbf16> to vector<1x256xbf16>
    %268 = vector.extract_strided_slice %135 {offsets = [69, 0], sizes = [1, 256], strides = [1, 1]} : vector<162x256xbf16> to vector<1x256xbf16>
    %269 = vector.extract_strided_slice %135 {offsets = [70, 0], sizes = [1, 256], strides = [1, 1]} : vector<162x256xbf16> to vector<1x256xbf16>
    %270 = tpu.concatenate %263, %264, %265, %266, %267, %268, %269 in 1 : vector<1x256xbf16>, vector<1x256xbf16>, vector<1x256xbf16>, vector<1x256xbf16>, vector<1x256xbf16>, vector<1x256xbf16>, vector<1x256xbf16> -> vector<1x1792xbf16>
    %271 = vector.extract_strided_slice %135 {offsets = [145, 0], sizes = [1, 256], strides = [1, 1]} : vector<162x256xbf16> to vector<1x256xbf16>
    %272 = vector.extract_strided_slice %135 {offsets = [146, 0], sizes = [1, 256], strides = [1, 1]} : vector<162x256xbf16> to vector<1x256xbf16>
    %273 = vector.extract_strided_slice %135 {offsets = [147, 0], sizes = [1, 256], strides = [1, 1]} : vector<162x256xbf16> to vector<1x256xbf16>
    %274 = vector.extract_strided_slice %135 {offsets = [148, 0], sizes = [1, 256], strides = [1, 1]} : vector<162x256xbf16> to vector<1x256xbf16>
    %275 = vector.extract_strided_slice %135 {offsets = [149, 0], sizes = [1, 256], strides = [1, 1]} : vector<162x256xbf16> to vector<1x256xbf16>
    %276 = vector.extract_strided_slice %135 {offsets = [150, 0], sizes = [1, 256], strides = [1, 1]} : vector<162x256xbf16> to vector<1x256xbf16>
    %277 = vector.extract_strided_slice %135 {offsets = [151, 0], sizes = [1, 256], strides = [1, 1]} : vector<162x256xbf16> to vector<1x256xbf16>
    %278 = tpu.concatenate %271, %272, %273, %274, %275, %276, %277 in 1 : vector<1x256xbf16>, vector<1x256xbf16>, vector<1x256xbf16>, vector<1x256xbf16>, vector<1x256xbf16>, vector<1x256xbf16>, vector<1x256xbf16> -> vector<1x1792xbf16>
    %279 = tpu.concatenate %270, %278 in 0 : vector<1x1792xbf16>, vector<1x1792xbf16> -> vector<2x1792xbf16>
    %c6 = arith.constant 6 : index
    %c0_107 = arith.constant 0 : index
    %c0_108 = arith.constant 0 : index
    %280 = vector.load %arg10[%c6, %c0_107, %c0_108] : memref<7x1792x128xbf16, #tpu.memory_space<vmem>>, vector<1x1792x128xbf16>
    %281 = vector.shape_cast %280 : vector<1x1792x128xbf16> to vector<1792x128xbf16>
    %cst_109 = arith.constant dense<0.000000e+00> : vector<2x128xf32>
    %282 = tpu.matmul %279, %281, %cst_109 {dimension_numbers = #tpu.dot_dimension_numbers<[1], [0], [0], [1], [0, 0, 1, 1], [], []>} : vector<2x1792xbf16>, vector<1792x128xbf16>, vector<2x128xf32> -> vector<2x128xf32>
    %283 = arith.addf %262, %282 : vector<2x128xf32>
    %cst_110 = arith.constant dense<0.000000e+00> : vector<128xf32>
    %284 = vector.multi_reduction <add>, %283, %cst_110 [0] : vector<2x128xf32> to vector<128xf32>
    %285 = vector.shape_cast %284 : vector<128xf32> to vector<1x128xf32>
    %cst_111 = arith.constant 2.000000e+00 : f32
    %286 = vector.broadcast %cst_111 : f32 to vector<1x128xf32>
    %287 = arith.divf %285, %286 : vector<1x128xf32>
    %288 = arith.mulf %283, %283 : vector<2x128xf32>
    %cst_112 = arith.constant dense<0.000000e+00> : vector<128xf32>
    %289 = vector.multi_reduction <add>, %288, %cst_112 [0] : vector<2x128xf32> to vector<128xf32>
    %290 = vector.shape_cast %289 : vector<128xf32> to vector<1x128xf32>
    %cst_113 = arith.constant 2.000000e+00 : f32
    %291 = vector.broadcast %cst_113 : f32 to vector<1x128xf32>
    %292 = arith.divf %290, %291 : vector<1x128xf32>
    %293 = arith.mulf %287, %287 : vector<1x128xf32>
    %294 = arith.subf %292, %293 : vector<1x128xf32>
    %cst_114 = arith.constant 0.000000e+00 : f32
    %295 = vector.broadcast %cst_114 : f32 to vector<1x128xf32>
    %296 = arith.maximumf %294, %295 : vector<1x128xf32>
    %297 = vector.broadcast %287 : vector<1x128xf32> to vector<2x128xf32>
    %298 = arith.subf %283, %297 : vector<2x128xf32>
    %cst_115 = arith.constant 9.99999974E-6 : f32
    %299 = vector.broadcast %cst_115 : f32 to vector<1x128xf32>
    %300 = arith.addf %296, %299 : vector<1x128xf32>
    %301 = math.rsqrt %300 : vector<1x128xf32>
    %c6_116 = arith.constant 6 : index
    %c0_117 = arith.constant 0 : index
    %302 = vector.load %arg4[%c6_116, %c0_117] : memref<9x256xf32, #tpu.memory_space<vmem>>, vector<1x128xf32>
    %303 = arith.mulf %301, %302 : vector<1x128xf32>
    %304 = vector.broadcast %303 : vector<1x128xf32> to vector<2x128xf32>
    %305 = arith.mulf %298, %304 : vector<2x128xf32>
    %c7 = arith.constant 7 : index
    %c0_118 = arith.constant 0 : index
    %306 = vector.load %arg4[%c7, %c0_118] : memref<9x256xf32, #tpu.memory_space<vmem>>, vector<1x128xf32>
    %307 = vector.broadcast %306 : vector<1x128xf32> to vector<2x128xf32>
    %308 = arith.addf %305, %307 : vector<2x128xf32>
    %cst_119 = arith.constant 0.000000e+00 : f32
    %309 = vector.broadcast %cst_119 : f32 to vector<2x128xf32>
    %310 = arith.maximumf %308, %309 : vector<2x128xf32>
    %311 = arith.truncf %310 : vector<2x128xf32> to vector<2x128xbf16>
    %c0_120 = arith.constant 0 : index
    %c0_121 = arith.constant 0 : index
    %312 = vector.load %arg5[%c0_120, %c0_121] : memref<128x128xbf16, #tpu.memory_space<vmem>>, vector<128x128xbf16>
    %cst_122 = arith.constant dense<0.000000e+00> : vector<2x128xf32>
    %313 = tpu.matmul %311, %312, %cst_122 {dimension_numbers = #tpu.dot_dimension_numbers<[1], [0], [0], [1], [0, 0, 1, 1], [], []>} : vector<2x128xbf16>, vector<128x128xbf16>, vector<2x128xf32> -> vector<2x128xf32>
    %c8 = arith.constant 8 : index
    %c0_123 = arith.constant 0 : index
    %314 = vector.load %arg4[%c8, %c0_123] : memref<9x256xf32, #tpu.memory_space<vmem>>, vector<1x128xf32>
    %315 = vector.broadcast %314 : vector<1x128xf32> to vector<2x128xf32>
    %316 = arith.addf %313, %315 : vector<2x128xf32>
    %c0_124 = arith.constant 0 : index
    %c0_125 = arith.constant 0 : index
    %317 = vector.load %arg7[%c0_124, %c0_125] : memref<2x128xf32, #tpu.memory_space<vmem>>, vector<2x128xf32>
    tpu.vector_store %arg7[%c0_124, %c0_125], %316 {strides = array<i32>} : memref<2x128xf32, #tpu.memory_space<vmem>>, vector<2x128xf32>,
    return
  }
}

</mosaic_0001>

<llo_original>
// kernel: cap_recover_forward.1
$region0: #{cap_recover_forward.1}
  #allocation0 [shape = 'u32[]', space=smem, size = 0x4, offset = 0x4, fixed_abs, tag = 'smem constant byte address 0x4 - core index']
  #allocation1 [shape = 'u32[72,128]{1,0:T(1,128)}', space=vmem, size = 0x9000, scoped, tag = 'internal scratch']
  #allocation2 [shape = 'f32[182,64]{1,0:T(8,128)}', space=vmem, size = 0x17000, scoped, tag = 'scratch operand']
  #allocation3 [shape = 'f32[182,128]{1,0:T(8,128)}', space=vmem, size = 0x17000, scoped, tag = 'scratch operand']
  #allocation4 [shape = 'bf16[7,1792,128]{2,1,0:T(8,128)(2,1)}', space=vmem, size = 0x310000, scoped, tag = 'scratch operand']
  #allocation5 [shape = 's32[1]{0}', space=sflag, size = 0x4, scoped, tag = 'scratch operand']
  #allocation16 [shape = 's32[]', space=sflag, size = 0x4, offset = 0, fixed_abs, tag = 'sflag constant byte address 0x0 - dummy sync flag']
  #allocation17 [shape = 's32[]', space=sflag, size = 0x4, offset = 0, fixed_abs, tag = 'sflag constant byte address 0x0 - dummy sync flag']
  #allocation18 [shape = 'u32[]', space=smem, size = 0x4, offset = 0x44, fixed_abs, tag = 'smem constant byte address 0x44 - assertion arg 0']
  #allocation19 [shape = 'u32[]', space=smem, size = 0x4, offset = 0x48, fixed_abs, tag = 'smem constant byte address 0x48 - assertion arg 1']
  %s0 = inlined_call_operand.vmem [shape: bf16[162,28], index: 0, kind: input, shape index: {}]
  %s1 = inlined_call_operand.hbm [shape: bf16[27,64], index: 1, kind: input, shape index: {}]
  %s2 = inlined_call_operand.hbm [shape: bf16[576,128], index: 2, kind: input, shape index: {}]
  %s3 = inlined_call_operand.hbm [shape: bf16[1152,256], index: 3, kind: input, shape index: {}]
  %s4 = inlined_call_operand.hbm [shape: f32[9,256], index: 4, kind: input, shape index: {}]
  %s5 = inlined_call_operand.hbm [shape: bf16[128,128], index: 5, kind: input, shape index: {}]
  %s6 = inlined_call_operand.hbm [shape: bf16[7,1792,128], index: 6, kind: input, shape index: {}]
  %s7 = inlined_call_operand.hbm [shape: f32[2,128], index: 7, kind: output, shape index: {}]
  %s8 = sld [smem:[#allocation0]]
  $region58: #{cap_recover_forward.1} parent=0
    _
  %s10 = ssub.s32 1, %s8
  %s11 = scalar_select 0, %s10, %s8
  $region1: #{cap_recover_forward.1} parent=0
    #allocation6 [shape = 'u8[8192]{0}', space=vmem, size = 0x2000, scoped, tag = 'input window, operand 1, single buffered']
    #allocation7 [shape = 's32[1]{0}', space=sflag, size = 0x4, scoped, tag = 'scoped memory for cap_recover_forward.1']
    #allocation8 [shape = 's32[1]{0}', space=sflag, size = 0x4, scoped, tag = 'scoped memory for cap_recover_forward.1']
    #allocation9 [shape = 'u8[147456]{0}', space=vmem, size = 0x24000, scoped, tag = 'input window, operand 2, single buffered']
    #allocation10 [shape = 's32[1]{0}', space=sflag, size = 0x4, scoped, tag = 'scoped memory for cap_recover_forward.1']
    #allocation11 [shape = 'u8[589824]{0}', space=vmem, size = 0x90000, scoped, tag = 'input window, operand 3, single buffered']
    #allocation12 [shape = 'u8[16384]{0}', space=vmem, size = 0x4000, scoped, tag = 'input window, operand 4, single buffered']
    #allocation13 [shape = 's32[1]{0}', space=sflag, size = 0x4, scoped, tag = 'scoped memory for cap_recover_forward.1']
    #allocation14 [shape = 'u8[32768]{0}', space=vmem, size = 0x8000, scoped, tag = 'input window, operand 5, single buffered']
    #allocation15 [shape = 'u8[1024]{0}', space=vmem, size = 0x400, scoped, tag = 'output window, operand 0, single buffered']
    %12 = vsyncpa [#allocation7], 0
    %13 = vsyncpa [#allocation10], 0
    %14 = vsyncpa [#allocation13], 0
    %15 = vsyncpa [#allocation8], 0
    // Predicated region
    $region2: #{cap_recover_forward.1} parent=1 // pred_check
      _
    $region3: #{cap_recover_forward.1} parent=1 // pred_check_branch
      %17 = sbr.rel (0) target = $region5
    $region4: #{cap_recover_forward.1} parent=1 // pred_region
      _
    $region5: #{cap_recover_forward.1} parent=1 // pred_fallthru
      _
    // Predicated region
    $region6: #{cap_recover_forward.1} parent=1 // pred_check
      _
    $region7: #{cap_recover_forward.1} parent=1 // pred_check_branch
      %19 = sbr.rel (0) target = $region9
    $region8: #{cap_recover_forward.1} parent=1 // pred_region
      %21 = vsyncadd [#allocation7], 0
      %s22 = sshll.u32 %s1, 4
      %s23 = int_to_ptr.hbm [resolvable:$true] %s22
      %s24 = sshll.u32 [#allocation6], 4
      %s25 = int_to_ptr.vmem [resolvable:$true] %s24
      %30 = dma.hbm_to_vmem [thread:$0]  %s23, 256, %s25, [#allocation7], 64, 64, 4
    $region9: #{cap_recover_forward.1} parent=1 // pred_fallthru
      _
    // Predicated region
    $region10: #{cap_recover_forward.1} parent=1 // pred_check
      _
    $region11: #{cap_recover_forward.1} parent=1 // pred_check_branch
      %32 = sbr.rel (0) target = $region13
    $region12: #{cap_recover_forward.1} parent=1 // pred_region
      %34 = vsyncadd [#allocation10], 0
      %s35 = sshll.u32 %s2, 4
      %s36 = int_to_ptr.hbm [resolvable:$true] %s35
      %s37 = sshll.u32 [#allocation9], 4
      %s38 = int_to_ptr.vmem [resolvable:$true] %s37
      %43 = dma.hbm_to_vmem [thread:$0]  %s36, 4608, %s38, [#allocation10], 64, 64, 4
    $region13: #{cap_recover_forward.1} parent=1 // pred_fallthru
      _
    // Predicated region
    $region14: #{cap_recover_forward.1} parent=1 // pred_check
      _
    $region15: #{cap_recover_forward.1} parent=1 // pred_check_branch
      %45 = sbr.rel (0) target = $region17
    $region16: #{cap_recover_forward.1} parent=1 // pred_region
      %47 = vsyncadd [#allocation10], 0
      %s48 = sshll.u32 %s3, 4
      %s49 = int_to_ptr.hbm [resolvable:$true] %s48
      %s50 = sshll.u32 [#allocation11], 4
      %s51 = int_to_ptr.vmem [resolvable:$true] %s50
      %56 = dma.hbm_to_vmem [thread:$0]  %s49, 18432, %s51, [#allocation10], 128, 128, 8
    $region17: #{cap_recover_forward.1} parent=1 // pred_fallthru
      _
    // Predicated region
    $region18: #{cap_recover_forward.1} parent=1 // pred_check
      _
    $region19: #{cap_recover_forward.1} parent=1 // pred_check_branch
      %58 = sbr.rel (0) target = $region21
    $region20: #{cap_recover_forward.1} parent=1 // pred_region
      %60 = vsyncadd [#allocation13], 0
      %s61 = sshll.u32 %s4, 4
      %s62 = int_to_ptr.hbm [resolvable:$true] %s61
      %s63 = sshll.u32 [#allocation12], 4
      %s64 = int_to_ptr.vmem [resolvable:$true] %s63
      %69 = dma.hbm_to_vmem [thread:$0]  %s62, 512, %s64, [#allocation13], 256, 256, 16
    $region21: #{cap_recover_forward.1} parent=1 // pred_fallthru
      _
    // Predicated region
    $region22: #{cap_recover_forward.1} parent=1 // pred_check
      _
    $region23: #{cap_recover_forward.1} parent=1 // pred_check_branch
      %71 = sbr.rel (0) target = $region25
    $region24: #{cap_recover_forward.1} parent=1 // pred_region
      %73 = vsyncadd [#allocation13], 0
      %s74 = sshll.u32 %s5, 4
      %s75 = int_to_ptr.hbm [resolvable:$true] %s74
      %s76 = sshll.u32 [#allocation14], 4
      %s77 = int_to_ptr.vmem [resolvable:$true] %s76
      %82 = dma.hbm_to_vmem [thread:$0]  %s75, 1024, %s77, [#allocation13], 64, 64, 4
    $region25: #{cap_recover_forward.1} parent=1 // pred_fallthru
      _
    // Predicated region
    $region26: #{cap_recover_forward.1} parent=1 // pred_check
      _
    $region27: #{cap_recover_forward.1} parent=1 // pred_check_branch
      %84 = sbr.rel (0) target = $region29
    $region28: #{cap_recover_forward.1} parent=1 // pred_region
      %86 = dma.done [#allocation7], 256
    $region29: #{cap_recover_forward.1} parent=1 // pred_fallthru
      _
    // Predicated region
    $region30: #{cap_recover_forward.1} parent=1 // pred_check
      _
    $region31: #{cap_recover_forward.1} parent=1 // pred_check_branch
      %88 = sbr.rel (0) target = $region33
    $region32: #{cap_recover_forward.1} parent=1 // pred_region
      %90 = dma.done [#allocation10], 4608
    $region33: #{cap_recover_forward.1} parent=1 // pred_fallthru
      _
    // Predicated region
    $region34: #{cap_recover_forward.1} parent=1 // pred_check
      _
    $region35: #{cap_recover_forward.1} parent=1 // pred_check_branch
      %92 = sbr.rel (0) target = $region37
    $region36: #{cap_recover_forward.1} parent=1 // pred_region
      %94 = dma.done [#allocation10], 18432
    $region37: #{cap_recover_forward.1} parent=1 // pred_fallthru
      _
    // Predicated region
    $region38: #{cap_recover_forward.1} parent=1 // pred_check
      _
    $region39: #{cap_recover_forward.1} parent=1 // pred_check_branch
      %96 = sbr.rel (0) target = $region41
    $region40: #{cap_recover_forward.1} parent=1 // pred_region
      %98 = dma.done [#allocation13], 512
    $region41: #{cap_recover_forward.1} parent=1 // pred_fallthru
      _
    // Predicated region
    $region42: #{cap_recover_forward.1} parent=1 // pred_check
      _
    $region43: #{cap_recover_forward.1} parent=1 // pred_check_branch
      %100 = sbr.rel (0) target = $region45
    $region44: #{cap_recover_forward.1} parent=1 // pred_region
      %102 = dma.done [#allocation13], 1024
    $region45: #{cap_recover_forward.1} parent=1 // pred_fallthru
      _
    // Predicated region
    $region46: #{cap_recover_forward.1} parent=1 // pred_check
      _
    $region47: #{cap_recover_forward.1} parent=1 // pred_check_branch
      %105 = sbr.rel target = $region49
    $region48: #{cap_recover_forward.1} parent=1 // pred_region
      %106 = sst [smem:[#allocation18]] [#allocation17]
      %107 = sst [smem:[#allocation19]] [#allocation16]
    $region49: #{cap_recover_forward.1} parent=1 // pred_fallthru
      _
    %109 = shalt.err (0)
    %s111 = sshll.u32 %s6, 4
    %s112 = int_to_ptr.hbm [resolvable:$true] %s111
    %s113 = sshll.u32 [#allocation4], 4
    %s114 = int_to_ptr.vmem [resolvable:$true] %s113
    %116 = dma.hbm_to_vmem [thread:$0]  %s112, 100352, %s114, [#allocation5]
    %v117 = vld [vmem:[%s0] sm:$0xf]
    %v118 = vld [vmem:[%s0 + $0x4] sm:$0xf]
    %v119 = vld [vmem:[%s0 + $0x8] sm:$0xf]
    %v120 = vld [vmem:[%s0 + $0xc] sm:$0xf]
    %v121 = vld [vmem:[%s0 + $0x10] sm:$0xf]
    %v122 = vld [vmem:[%s0 + $0x14] sm:$0xf]
    %v123 = vld [vmem:[%s0 + $0x18] sm:$0xf]
    %v124 = vld [vmem:[%s0 + $0x1c] sm:$0xf]
    %v125 = vld [vmem:[%s0 + $0x20] sm:$0xf]
    %v126 = vld [vmem:[%s0 + $0x24] sm:$0xf]
    %v127 = vld [vmem:[%s0 + $0x28] sm:$0xf]
    %v128 = vld [vmem:[%s0 + $0x2c] sm:$0xf]
    %v129 = vld [vmem:[%s0 + $0x30] sm:$0xf]
    %v130 = vld [vmem:[%s0 + $0x34] sm:$0xf]
    %v131 = vld [vmem:[%s0 + $0x38] sm:$0xf]
    %v132 = vld [vmem:[%s0 + $0x3c] sm:$0xf]
    %v133 = vld [vmem:[%s0 + $0x40] sm:$0xf]
    %v134 = vld [vmem:[%s0 + $0x44] sm:$0xf]
    %v135 = vld [vmem:[%s0 + $0x48] sm:$0xf]
    %v136 = vld [vmem:[%s0 + $0x4c] sm:$0xf]
    %v137 = vld [vmem:[%s0 + $0x50] sm:$0x1]
    %v138 = vunpack.c.l.bf16 %v117
    %v139 = vunpack.c.l.bf16 %v118
    %v140 = vunpack.c.l.bf16 %v119
    %v141 = vunpack.c.l.bf16 %v120
    %v142 = vunpack.c.l.bf16 %v121
    %v143 = vunpack.c.l.bf16 %v122
    %v144 = vunpack.c.l.bf16 %v123
    %v145 = vunpack.c.l.bf16 %v124
    %v146 = vunpack.c.l.bf16 %v125
    %v147 = vunpack.c.l.bf16 %v126
    %v148 = vunpack.c.l.bf16 %v127
    %v149 = vunpack.c.l.bf16 %v128
    %v150 = vunpack.c.l.bf16 %v129
    %v151 = vunpack.c.l.bf16 %v130
    %v152 = vunpack.c.l.bf16 %v131
    %v153 = vunpack.c.l.bf16 %v132
    %v154 = vunpack.c.l.bf16 %v133
    %v155 = vunpack.c.l.bf16 %v134
    %v156 = vunpack.c.l.bf16 %v135
    %v157 = vunpack.c.l.bf16 %v136
    %v158 = vunpack.c.l.bf16 %v137
    %v159 = vld [vmem:[#allocation6] sm:$0xf]
    %v160 = vld [vmem:[#allocation6 + $0x4] sm:$0xf]
    %v161 = vld [vmem:[#allocation6 + $0x8] sm:$0xf]
    %v162 = vld [vmem:[#allocation6 + $0xc] sm:$0x3]
    %v184 = vunpack.c.l.b16 %v117
    %v185 = vunpack.c.l.b16 %v118
    %v186 = vunpack.c.l.b16 %v119
    %v187 = vunpack.c.l.b16 %v120
    %v188 = vunpack.c.l.b16 %v121
    %v189 = vunpack.c.l.b16 %v122
    %v190 = vunpack.c.l.b16 %v123
    %v191 = vunpack.c.l.b16 %v124
    %v192 = vunpack.c.l.b16 %v125
    %v193 = vunpack.c.l.b16 %v126
    %v194 = vunpack.c.l.b16 %v127
    %v195 = vunpack.c.l.b16 %v128
    %v196 = vunpack.c.l.b16 %v129
    %v197 = vunpack.c.l.b16 %v130
    %v198 = vunpack.c.l.b16 %v131
    %v199 = vunpack.c.l.b16 %v132
    %v200 = vunpack.c.l.b16 %v133
    %v201 = vunpack.c.l.b16 %v134
    %v202 = vunpack.c.l.b16 %v135
    %v203 = vunpack.c.l.b16 %v136
    %v204 = vunpack.c.l.b16 %v137
    %v205 = vpack.c.b16 %v185, %v184
    %v206 = vpack.c.b16 %v187, %v186
    %v207 = vpack.c.b16 %v189, %v188
    %v208 = vpack.c.b16 %v191, %v190
    %v209 = vpack.c.b16 %v193, %v192
    %v210 = vpack.c.b16 %v195, %v194
    %v211 = vpack.c.b16 %v197, %v196
    %v212 = vpack.c.b16 %v199, %v198
    %v213 = vpack.c.b16 %v201, %v200
    %v214 = vpack.c.b16 %v203, %v202
    %v215 = vpack.c.b16 %v204, %v204
    %v220 = vunpack.c.l.b16 %v159
    %v221 = vunpack.c.l.b16 %v160
    %v222 = vunpack.c.l.b16 %v161
    %v223 = vunpack.c.l.b16 %v162
    %v224 = vpack.c.b16 %v221, %v220
    %v225 = vpack.c.b16 %v223, %v222
    %vm227 = vcmask 220160
    %v229 = vsel %vm227, %v205, 0
    %v232 = vsel %vm227, %v206, 0
    %v235 = vsel %vm227, %v207, 0
    %v238 = vsel %vm227, %v208, 0
    %v241 = vsel %vm227, %v209, 0
    %v244 = vsel %vm227, %v210, 0
    %v247 = vsel %vm227, %v211, 0
    %v250 = vsel %vm227, %v212, 0
    %v253 = vsel %vm227, %v213, 0
    %v256 = vsel %vm227, %v214, 0
    %v259 = vsel %vm227, %v215, 0
    %vm261 = vcmask 1044480
    %vm262 = vcmask 1045504
    %v263 = vsel %vm261, 4294967295, 65535
    %v264 = vsel %vm262, %v263, 0
    %v266 = vand.u32 %v225, %v264
    %268 = vmatpush.bf16.msra.mxu0 0
    %269 = vmatpush.bf16.msra.mxu0 0
    %270 = vmatpush.bf16.msra.mxu0 0
    %271 = vmatpush.bf16.msra.mxu0 0
    %272 = vmatpush.bf16.msra.mxu0 0
    %273 = vmatpush.bf16.msra.mxu0 0
    %274 = vmatpush.bf16.msra.mxu0 %v266
    %275 = vmatpush.bf16.msra.mxu0 %v224
    %276 = vmatmul.bf16.gmra.mxu0 %v229
    %v277 = vpop.f32.mrf.mxu0
    %v278 = vadd.f32 0.0, %v277
    %v279 = vpop.f32.mrf.mxu0
    %v280 = vadd.f32 0.0, %v279
    %281 = vmatmul.bf16.gmra.mxu0 %v232
    %v282 = vpop.f32.mrf.mxu0
    %v283 = vadd.f32 0.0, %v282
    %v284 = vpop.f32.mrf.mxu0
    %v285 = vadd.f32 0.0, %v284
    %286 = vmatmul.bf16.gmra.mxu0 %v235
    %v287 = vpop.f32.mrf.mxu0
    %v288 = vadd.f32 0.0, %v287
    %v289 = vpop.f32.mrf.mxu0
    %v290 = vadd.f32 0.0, %v289
    %291 = vmatmul.bf16.gmra.mxu0 %v238
    %v292 = vpop.f32.mrf.mxu0
    %v293 = vadd.f32 0.0, %v292
    %v294 = vpop.f32.mrf.mxu0
    %v295 = vadd.f32 0.0, %v294
    %296 = vmatmul.bf16.gmra.mxu0 %v241
    %v297 = vpop.f32.mrf.mxu0
    %v298 = vadd.f32 0.0, %v297
    %v299 = vpop.f32.mrf.mxu0
    %v300 = vadd.f32 0.0, %v299
    %301 = vmatmul.bf16.gmra.mxu0 %v244
    %v302 = vpop.f32.mrf.mxu0
    %v303 = vadd.f32 0.0, %v302
    %v304 = vpop.f32.mrf.mxu0
    %v305 = vadd.f32 0.0, %v304
    %306 = vmatmul.bf16.gmra.mxu0 %v247
    %v307 = vpop.f32.mrf.mxu0
    %v308 = vadd.f32 0.0, %v307
    %v309 = vpop.f32.mrf.mxu0
    %v310 = vadd.f32 0.0, %v309
    %311 = vmatmul.bf16.gmra.mxu0 %v250
    %v312 = vpop.f32.mrf.mxu0
    %v313 = vadd.f32 0.0, %v312
    %v314 = vpop.f32.mrf.mxu0
    %v315 = vadd.f32 0.0, %v314
    %316 = vmatmul.bf16.gmra.mxu0 %v253
    %v317 = vpop.f32.mrf.mxu0
    %v318 = vadd.f32 0.0, %v317
    %v319 = vpop.f32.mrf.mxu0
    %v320 = vadd.f32 0.0, %v319
    %321 = vmatmul.bf16.gmra.mxu0 %v256
    %v322 = vpop.f32.mrf.mxu0
    %v323 = vadd.f32 0.0, %v322
    %v324 = vpop.f32.mrf.mxu0
    %v325 = vadd.f32 0.0, %v324
    %326 = vmatmul.bf16.gmra.mxu0 %v259
    %v327 = vpop.f32.mrf.mxu0
    %v328 = vadd.f32 0.0, %v327
    %v329 = vpop.f32.mrf.mxu0
    %330 = vdwg.mxu0
    %v331 = vld [vmem:[#allocation12] ss:$0 sm:$0xff]
    %v332 = vld [vmem:[#allocation12 + $0x1] ss:$0 sm:$0xff]
    %334 = vset.pattern.permute.xlu0 27
    %335 = vperm.xlu0 %334, %v138
    %v336 = vpop.permute.xlu0 %335
    %339 = vset.pattern.permute.xlu0 27
    %340 = vperm.xlu0 %339, %v139
    %v341 = vpop.permute.xlu0 %340
    %344 = vset.pattern.permute.xlu0 27
    %345 = vperm.xlu0 %344, %v140
    %v346 = vpop.permute.xlu0 %345
    %349 = vset.pattern.permute.xlu0 27
    %350 = vperm.xlu0 %349, %v141
    %v351 = vpop.permute.xlu0 %350
    %354 = vset.pattern.permute.xlu0 27
    %355 = vperm.xlu0 %354, %v142
    %v356 = vpop.permute.xlu0 %355
    %359 = vset.pattern.permute.xlu0 27
    %360 = vperm.xlu0 %359, %v143
    %v361 = vpop.permute.xlu0 %360
    %364 = vset.pattern.permute.xlu0 27
    %365 = vperm.xlu0 %364, %v144
    %v366 = vpop.permute.xlu0 %365
    %369 = vset.pattern.permute.xlu0 27
    %370 = vperm.xlu0 %369, %v145
    %v371 = vpop.permute.xlu0 %370
    %374 = vset.pattern.permute.xlu0 27
    %375 = vperm.xlu0 %374, %v146
    %v376 = vpop.permute.xlu0 %375
    %379 = vset.pattern.permute.xlu0 27
    %380 = vperm.xlu0 %379, %v147
    %v381 = vpop.permute.xlu0 %380
    %384 = vset.pattern.permute.xlu0 27
    %385 = vperm.xlu0 %384, %v148
    %v386 = vpop.permute.xlu0 %385
    %389 = vset.pattern.permute.xlu0 27
    %390 = vperm.xlu0 %389, %v149
    %v391 = vpop.permute.xlu0 %390
    %394 = vset.pattern.permute.xlu0 27
    %395 = vperm.xlu0 %394, %v150
    %v396 = vpop.permute.xlu0 %395
    %399 = vset.pattern.permute.xlu0 27
    %400 = vperm.xlu0 %399, %v151
    %v401 = vpop.permute.xlu0 %400
    %404 = vset.pattern.permute.xlu0 27
    %405 = vperm.xlu0 %404, %v152
    %v406 = vpop.permute.xlu0 %405
    %409 = vset.pattern.permute.xlu0 27
    %410 = vperm.xlu0 %409, %v153
    %v411 = vpop.permute.xlu0 %410
    %414 = vset.pattern.permute.xlu0 27
    %415 = vperm.xlu0 %414, %v154
    %v416 = vpop.permute.xlu0 %415
    %419 = vset.pattern.permute.xlu0 27
    %420 = vperm.xlu0 %419, %v155
    %v421 = vpop.permute.xlu0 %420
    %424 = vset.pattern.permute.xlu0 27
    %425 = vperm.xlu0 %424, %v156
    %v426 = vpop.permute.xlu0 %425
    %429 = vset.pattern.permute.xlu0 27
    %430 = vperm.xlu0 %429, %v157
    %v431 = vpop.permute.xlu0 %430
    %434 = vset.pattern.permute.xlu0 27
    %435 = vperm.xlu0 %434, %v158
    %v436 = vpop.permute.xlu0 %435
    %v438 = vmul.f32 %v278, %v336
    %v439 = vmul.f32 %v280, %v341
    %v440 = vmul.f32 %v283, %v346
    %v441 = vmul.f32 %v285, %v351
    %v442 = vmul.f32 %v288, %v356
    %v443 = vmul.f32 %v290, %v361
    %v444 = vmul.f32 %v293, %v366
    %v445 = vmul.f32 %v295, %v371
    %v446 = vmul.f32 %v298, %v376
    %v447 = vmul.f32 %v300, %v381
    %v448 = vmul.f32 %v303, %v386
    %v449 = vmul.f32 %v305, %v391
    %v450 = vmul.f32 %v308, %v396
    %v451 = vmul.f32 %v310, %v401
    %v452 = vmul.f32 %v313, %v406
    %v453 = vmul.f32 %v315, %v411
    %v454 = vmul.f32 %v318, %v416
    %v455 = vmul.f32 %v320, %v421
    %v456 = vmul.f32 %v323, %v426
    %v457 = vmul.f32 %v325, %v431
    %v458 = vmul.f32 %v328, %v436
    %vm459 = vcmask 523264
    %v460 = vsel %vm459, %v438, 0.0
    %v461 = vsel %vm459, %v439, 0.0
    %v462 = vadd.f32 %v460, %v461
    %v463 = vsel %vm459, %v440, 0.0
    %v464 = vadd.f32 %v462, %v463
    %v465 = vsel %vm459, %v441, 0.0
    %v466 = vadd.f32 %v464, %v465
    %v467 = vsel %vm459, %v442, 0.0
    %v468 = vadd.f32 %v466, %v467
    %v469 = vsel %vm459, %v443, 0.0
    %v470 = vadd.f32 %v468, %v469
    %v471 = vsel %vm459, %v444, 0.0
    %v472 = vadd.f32 %v470, %v471
    %v473 = vsel %vm459, %v445, 0.0
    %v474 = vadd.f32 %v472, %v473
    %v475 = vsel %vm459, %v446, 0.0
    %v476 = vadd.f32 %v474, %v475
    %v477 = vsel %vm459, %v447, 0.0
    %v478 = vadd.f32 %v476, %v477
    %v479 = vsel %vm459, %v448, 0.0
    %v480 = vadd.f32 %v478, %v479
    %v481 = vsel %vm459, %v449, 0.0
    %v482 = vadd.f32 %v480, %v481
    %v483 = vsel %vm459, %v450, 0.0
    %v484 = vadd.f32 %v482, %v483
    %v485 = vsel %vm459, %v451, 0.0
    %v486 = vadd.f32 %v484, %v485
    %v487 = vsel %vm459, %v452, 0.0
    %v488 = vadd.f32 %v486, %v487
    %v489 = vsel %vm459, %v453, 0.0
    %v490 = vadd.f32 %v488, %v489
    %v491 = vsel %vm459, %v454, 0.0
    %v492 = vadd.f32 %v490, %v491
    %v493 = vsel %vm459, %v455, 0.0
    %v494 = vadd.f32 %v492, %v493
    %v495 = vsel %vm459, %v456, 0.0
    %v496 = vadd.f32 %v494, %v495
    %v497 = vsel %vm459, %v457, 0.0
    %v498 = vadd.f32 %v496, %v497
    %vm499 = vcmask 517120
    %v500 = vsel %vm499, %v458, 0.0
    %v501 = vadd.f32 %v498, %v500
    %v502 = vrot.slane %v501, 4
    %v503 = vadd.f32 %v501, %v502
    %v504 = vrot.slane %v503, 2
    %v505 = vadd.f32 %v503, %v504
    %v506 = vrot.slane %v505, 1
    %v507 = vadd.f32 %v505, %v506
    %v508 = vmul.f32 %v507, 0.010204081
    %v509 = vmul.f32 %v438, %v278
    %v510 = vmul.f32 %v439, %v280
    %v511 = vmul.f32 %v440, %v283
    %v512 = vmul.f32 %v441, %v285
    %v513 = vmul.f32 %v442, %v288
    %v514 = vmul.f32 %v443, %v290
    %v515 = vmul.f32 %v444, %v293
    %v516 = vmul.f32 %v445, %v295
    %v517 = vmul.f32 %v446, %v298
    %v518 = vmul.f32 %v447, %v300
    %v519 = vmul.f32 %v448, %v303
    %v520 = vmul.f32 %v449, %v305
    %v521 = vmul.f32 %v450, %v308
    %v522 = vmul.f32 %v451, %v310
    %v523 = vmul.f32 %v452, %v313
    %v524 = vmul.f32 %v453, %v315
    %v525 = vmul.f32 %v454, %v318
    %v526 = vmul.f32 %v455, %v320
    %v527 = vmul.f32 %v456, %v323
    %v528 = vmul.f32 %v457, %v325
    %v529 = vmul.f32 %v458, %v328
    %v530 = vsel %vm459, %v509, 0.0
    %v531 = vsel %vm459, %v510, 0.0
    %v532 = vadd.f32 %v530, %v531
    %v533 = vsel %vm459, %v511, 0.0
    %v534 = vadd.f32 %v532, %v533
    %v535 = vsel %vm459, %v512, 0.0
    %v536 = vadd.f32 %v534, %v535
    %v537 = vsel %vm459, %v513, 0.0
    %v538 = vadd.f32 %v536, %v537
    %v539 = vsel %vm459, %v514, 0.0
    %v540 = vadd.f32 %v538, %v539
    %v541 = vsel %vm459, %v515, 0.0
    %v542 = vadd.f32 %v540, %v541
    %v543 = vsel %vm459, %v516, 0.0
    %v544 = vadd.f32 %v542, %v543
    %v545 = vsel %vm459, %v517, 0.0
    %v546 = vadd.f32 %v544, %v545
    %v547 = vsel %vm459, %v518, 0.0
    %v548 = vadd.f32 %v546, %v547
    %v549 = vsel %vm459, %v519, 0.0
    %v550 = vadd.f32 %v548, %v549
    %v551 = vsel %vm459, %v520, 0.0
    %v552 = vadd.f32 %v550, %v551
    %v553 = vsel %vm459, %v521, 0.0
    %v554 = vadd.f32 %v552, %v553
    %v555 = vsel %vm459, %v522, 0.0
    %v556 = vadd.f32 %v554, %v555
    %v557 = vsel %vm459, %v523, 0.0
    %v558 = vadd.f32 %v556, %v557
    %v559 = vsel %vm459, %v524, 0.0
    %v560 = vadd.f32 %v558, %v559
    %v561 = vsel %vm459, %v525, 0.0
    %v562 = vadd.f32 %v560, %v561
    %v563 = vsel %vm459, %v526, 0.0
    %v564 = vadd.f32 %v562, %v563
    %v565 = vsel %vm459, %v527, 0.0
    %v566 = vadd.f32 %v564, %v565
    %v567 = vsel %vm459, %v528, 0.0
    %v568 = vadd.f32 %v566, %v567
    %v569 = vsel %vm499, %v529, 0.0
    %v570 = vadd.f32 %v568, %v569
    %v571 = vrot.slane %v570, 4
    %v572 = vadd.f32 %v570, %v571
    %v573 = vrot.slane %v572, 2
    %v574 = vadd.f32 %v572, %v573
    %v575 = vrot.slane %v574, 1
    %v576 = vadd.f32 %v574, %v575
    %v577 = vmul.f32 %v576, 0.010204081
    %v578 = vmul.f32 %v508, %v508
    %v579 = vsub.f32 %v577, %v578
    %v580 = vmax.f32 %v579, 0.0
    %v581 = vsub.f32 %v278, %v508
    %v582 = vsub.f32 %v280, %v508
    %v583 = vsub.f32 %v283, %v508
    %v584 = vsub.f32 %v285, %v508
    %v585 = vsub.f32 %v288, %v508
    %v586 = vsub.f32 %v290, %v508
    %v587 = vsub.f32 %v293, %v508
    %v588 = vsub.f32 %v295, %v508
    %v589 = vsub.f32 %v298, %v508
    %v590 = vsub.f32 %v300, %v508
    %v591 = vsub.f32 %v303, %v508
    %v592 = vsub.f32 %v305, %v508
    %v593 = vsub.f32 %v308, %v508
    %v594 = vsub.f32 %v310, %v508
    %v595 = vsub.f32 %v313, %v508
    %v596 = vsub.f32 %v315, %v508
    %v597 = vsub.f32 %v318, %v508
    %v598 = vsub.f32 %v320, %v508
    %v599 = vsub.f32 %v323, %v508
    %v600 = vsub.f32 %v325, %v508
    %v601 = vsub.f32 %v328, %v508
    %v602 = vadd.f32 %v580, 1e-05
    %v603 = vrsqrt.pop %v602
    %v604 = vmul.f32 %v603, %v602
    %v605 = vmul.f32 %v604, %v603
    %v606 = vmul.f32 0.5, %v605
    %v607 = vsub.f32 1.5, %v606
    %v608 = vmul.f32 %v603, %v607
    %vm609 = vweird.f32 %v602
    %vm610 = vweird.f32 %v603
    %vm611 = vmor %vm609, %vm610
    %v612 = vsel %vm611, %v603, %v608
    %v613 = vmul.f32 %v612, %v331
    %v614 = vmul.f32 %v581, %v613
    %v615 = vmul.f32 %v582, %v613
    %v616 = vmul.f32 %v583, %v613
    %v617 = vmul.f32 %v584, %v613
    %v618 = vmul.f32 %v585, %v613
    %v619 = vmul.f32 %v586, %v613
    %v620 = vmul.f32 %v587, %v613
    %v621 = vmul.f32 %v588, %v613
    %v622 = vmul.f32 %v589, %v613
    %v623 = vmul.f32 %v590, %v613
    %v624 = vmul.f32 %v591, %v613
    %v625 = vmul.f32 %v592, %v613
    %v626 = vmul.f32 %v593, %v613
    %v627 = vmul.f32 %v594, %v613
    %v628 = vmul.f32 %v595, %v613
    %v629 = vmul.f32 %v596, %v613
    %v630 = vmul.f32 %v597, %v613
    %v631 = vmul.f32 %v598, %v613
    %v632 = vmul.f32 %v599, %v613
    %v633 = vmul.f32 %v600, %v613
    %v634 = vmul.f32 %v601, %v613
    %v635 = vadd.f32 %v614, %v332
    %v636 = vadd.f32 %v615, %v332
    %v637 = vadd.f32 %v616, %v332
    %v638 = vadd.f32 %v617, %v332
    %v639 = vadd.f32 %v618, %v332
    %v640 = vadd.f32 %v619, %v332
    %v641 = vadd.f32 %v620, %v332
    %v642 = vadd.f32 %v621, %v332
    %v643 = vadd.f32 %v622, %v332
    %v644 = vadd.f32 %v623, %v332
    %v645 = vadd.f32 %v624, %v332
    %v646 = vadd.f32 %v625, %v332
    %v647 = vadd.f32 %v626, %v332
    %v648 = vadd.f32 %v627, %v332
    %v649 = vadd.f32 %v628, %v332
    %v650 = vadd.f32 %v629, %v332
    %v651 = vadd.f32 %v630, %v332
    %v652 = vadd.f32 %v631, %v332
    %v653 = vadd.f32 %v632, %v332
    %v654 = vadd.f32 %v633, %v332
    %v655 = vadd.f32 %v634, %v332
    %v656 = vmax.f32 %v635, 0.0
    %v657 = vmax.f32 %v636, 0.0
    %v658 = vmax.f32 %v637, 0.0
    %v659 = vmax.f32 %v638, 0.0
    %v660 = vmax.f32 %v639, 0.0
    %v661 = vmax.f32 %v640, 0.0
    %v662 = vmax.f32 %v641, 0.0
    %v663 = vmax.f32 %v642, 0.0
    %v664 = vmax.f32 %v643, 0.0
    %v665 = vmax.f32 %v644, 0.0
    %v666 = vmax.f32 %v645, 0.0
    %v667 = vmax.f32 %v646, 0.0
    %v668 = vmax.f32 %v647, 0.0
    %v669 = vmax.f32 %v648, 0.0
    %v670 = vmax.f32 %v649, 0.0
    %v671 = vmax.f32 %v650, 0.0
    %v672 = vmax.f32 %v651, 0.0
    %v673 = vmax.f32 %v652, 0.0
    %v674 = vmax.f32 %v653, 0.0
    %v675 = vmax.f32 %v654, 0.0
    %v676 = vmax.f32 %v655, 0.0
    %v677 = vmul.f32 %v656, %v336
    %v678 = vmul.f32 %v657, %v341
    %v679 = vmul.f32 %v658, %v346
    %v680 = vmul.f32 %v659, %v351
    %v681 = vmul.f32 %v660, %v356
    %v682 = vmul.f32 %v661, %v361
    %v683 = vmul.f32 %v662, %v366
    %v684 = vmul.f32 %v663, %v371
    %v685 = vmul.f32 %v664, %v376
    %v686 = vmul.f32 %v665, %v381
    %v687 = vmul.f32 %v666, %v386
    %v688 = vmul.f32 %v667, %v391
    %v689 = vmul.f32 %v668, %v396
    %v690 = vmul.f32 %v669, %v401
    %v691 = vmul.f32 %v670, %v406
    %v692 = vmul.f32 %v671, %v411
    %v693 = vmul.f32 %v672, %v416
    %v694 = vmul.f32 %v673, %v421
    %v695 = vmul.f32 %v674, %v426
    %v696 = vmul.f32 %v675, %v431
    %v697 = vmul.f32 %v676, %v436
    %698 = vst.msk [vmem:[#allocation2] sm:$0xff] %vm459, 0.0
    %699 = vst.msk [vmem:[#allocation2 + $0x8] sm:$0x3] %vm499, 0.0
    %700 = vst.msk [vmem:[#allocation2 + $0xac] sm:$0xff] %vm459, 0.0
    %701 = vst.msk [vmem:[#allocation2 + $0xb4] sm:$0x3] %vm499, 0.0
    %702 = vst.msk [vmem:[#allocation2 + $0xa] sm:$0xff] %vm459, %v677
    %703 = vst.msk [vmem:[#allocation2 + $0x12] sm:$0xff] %vm459, %v678
    %704 = vst.msk [vmem:[#allocation2 + $0x1a] sm:$0xff] %vm459, %v679
    %705 = vst.msk [vmem:[#allocation2 + $0x22] sm:$0xff] %vm459, %v680
    %706 = vst.msk [vmem:[#allocation2 + $0x2a] sm:$0xff] %vm459, %v681
    %707 = vst.msk [vmem:[#allocation2 + $0x32] sm:$0xff] %vm459, %v682
    %708 = vst.msk [vmem:[#allocation2 + $0x3a] sm:$0xff] %vm459, %v683
    %709 = vst.msk [vmem:[#allocation2 + $0x42] sm:$0xff] %vm459, %v684
    %710 = vst.msk [vmem:[#allocation2 + $0x4a] sm:$0xff] %vm459, %v685
    %711 = vst.msk [vmem:[#allocation2 + $0x52] sm:$0xff] %vm459, %v686
    %712 = vst.msk [vmem:[#allocation2 + $0x5a] sm:$0xff] %vm459, %v687
    %713 = vst.msk [vmem:[#allocation2 + $0x62] sm:$0xff] %vm459, %v688
    %714 = vst.msk [vmem:[#allocation2 + $0x6a] sm:$0xff] %vm459, %v689
    %715 = vst.msk [vmem:[#allocation2 + $0x72] sm:$0xff] %vm459, %v690
    %716 = vst.msk [vmem:[#allocation2 + $0x7a] sm:$0xff] %vm459, %v691
    %717 = vst.msk [vmem:[#allocation2 + $0x82] sm:$0xff] %vm459, %v692
    %718 = vst.msk [vmem:[#allocation2 + $0x8a] sm:$0xff] %vm459, %v693
    %719 = vst.msk [vmem:[#allocation2 + $0x92] sm:$0xff] %vm459, %v694
    %720 = vst.msk [vmem:[#allocation2 + $0x9a] sm:$0xff] %vm459, %v695
    %721 = vst.msk [vmem:[#allocation2 + $0xa2] sm:$0xff] %vm459, %v696
    %722 = vst.msk [vmem:[#allocation2 + $0xaa] sm:$0x3] %vm499, %v697
    %v723 = vld [vmem:[#allocation2] sm:$0xff]
    %v724 = vld [vmem:[#allocation2 + $0x8] sm:$0xff]
    %v725 = vld [vmem:[#allocation2 + $0x10] sm:$0xff]
    %v726 = vld [vmem:[#allocation2 + $0x18] sm:$0xff]
    %v727 = vld [vmem:[#allocation2 + $0x20] sm:$0xff]
    %v728 = vld [vmem:[#allocation2 + $0x28] sm:$0xff]
    %v729 = vld [vmem:[#allocation2 + $0x30] sm:$0xff]
    %v730 = vld [vmem:[#allocation2 + $0x38] sm:$0xff]
    %v731 = vld [vmem:[#allocation2 + $0x40] sm:$0xff]
    %v732 = vld [vmem:[#allocation2 + $0x48] sm:$0xff]
    %v733 = vld [vmem:[#allocation2 + $0x50] sm:$0xff]
    %v734 = vld [vmem:[#allocation2 + $0x58] sm:$0xff]
    %v735 = vld [vmem:[#allocation2 + $0x60] sm:$0xff]
    %v736 = vld [vmem:[#allocation2 + $0x68] sm:$0xff]
    %v737 = vld [vmem:[#allocation2 + $0x70] sm:$0xff]
    %v738 = vld [vmem:[#allocation2 + $0x78] sm:$0xff]
    %v739 = vld [vmem:[#allocation2 + $0x80] sm:$0xff]
    %v740 = vld [vmem:[#allocation2 + $0x88] sm:$0xff]
    %v741 = vld [vmem:[#allocation2 + $0x90] sm:$0xff]
    %v742 = vld [vmem:[#allocation2 + $0x98] sm:$0xff]
    %v743 = vld [vmem:[#allocation2 + $0xa0] sm:$0x3]
    %v744 = vld [vmem:[#allocation2 + $0x1] sm:$0xff]
    %v745 = vld [vmem:[#allocation2 + $0x9] sm:$0xff]
    %v746 = vld [vmem:[#allocation2 + $0x11] sm:$0xff]
    %v747 = vld [vmem:[#allocation2 + $0x19] sm:$0xff]
    %v748 = vld [vmem:[#allocation2 + $0x21] sm:$0xff]
    %v749 = vld [vmem:[#allocation2 + $0x29] sm:$0xff]
    %v750 = vld [vmem:[#allocation2 + $0x31] sm:$0xff]
    %v751 = vld [vmem:[#allocation2 + $0x39] sm:$0xff]
    %v752 = vld [vmem:[#allocation2 + $0x41] sm:$0xff]
    %v753 = vld [vmem:[#allocation2 + $0x49] sm:$0xff]
    %v754 = vld [vmem:[#allocation2 + $0x51] sm:$0xff]
    %v755 = vld [vmem:[#allocation2 + $0x59] sm:$0xff]
    %v756 = vld [vmem:[#allocation2 + $0x61] sm:$0xff]
    %v757 = vld [vmem:[#allocation2 + $0x69] sm:$0xff]
    %v758 = vld [vmem:[#allocation2 + $0x71] sm:$0xff]
    %v759 = vld [vmem:[#allocation2 + $0x79] sm:$0xff]
    %v760 = vld [vmem:[#allocation2 + $0x81] sm:$0xff]
    %v761 = vld [vmem:[#allocation2 + $0x89] sm:$0xff]
    %v762 = vld [vmem:[#allocation2 + $0x91] sm:$0xff]
    %v763 = vld [vmem:[#allocation2 + $0x99] sm:$0xff]
    %v764 = vld [vmem:[#allocation2 + $0xa1] sm:$0x3]
    %v765 = vld [vmem:[#allocation2 + $0x2] sm:$0xff]
    %v766 = vld [vmem:[#allocation2 + $0xa] sm:$0xff]
    %v767 = vld [vmem:[#allocation2 + $0x12] sm:$0xff]
    %v768 = vld [vmem:[#allocation2 + $0x1a] sm:$0xff]
    %v769 = vld [vmem:[#allocation2 + $0x22] sm:$0xff]
    %v770 = vld [vmem:[#allocation2 + $0x2a] sm:$0xff]
    %v771 = vld [vmem:[#allocation2 + $0x32] sm:$0xff]
    %v772 = vld [vmem:[#allocation2 + $0x3a] sm:$0xff]
    %v773 = vld [vmem:[#allocation2 + $0x42] sm:$0xff]
    %v774 = vld [vmem:[#allocation2 + $0x4a] sm:$0xff]
    %v775 = vld [vmem:[#allocation2 + $0x52] sm:$0xff]
    %v776 = vld [vmem:[#allocation2 + $0x5a] sm:$0xff]
    %v777 = vld [vmem:[#allocation2 + $0x62] sm:$0xff]
    %v778 = vld [vmem:[#allocation2 + $0x6a] sm:$0xff]
    %v779 = vld [vmem:[#allocation2 + $0x72] sm:$0xff]
    %v780 = vld [vmem:[#allocation2 + $0x7a] sm:$0xff]
    %v781 = vld [vmem:[#allocation2 + $0x82] sm:$0xff]
    %v782 = vld [vmem:[#allocation2 + $0x8a] sm:$0xff]
    %v783 = vld [vmem:[#allocation2 + $0x92] sm:$0xff]
    %v784 = vld [vmem:[#allocation2 + $0x9a] sm:$0xff]
    %v785 = vld [vmem:[#allocation2 + $0xa2] sm:$0x3]
    %v786 = vld [vmem:[#allocation2 + $0xa1] sm:$0xff]
    %v787 = vld [vmem:[#allocation2 + $0xa9] sm:$0x3]
    %v788 = vld [vmem:[#allocation2 + $0xa2] sm:$0xff]
    %v789 = vld [vmem:[#allocation2 + $0xaa] sm:$0x3]
    %v790 = vld [vmem:[#allocation2 + $0xb] sm:$0xff]
    %v791 = vld [vmem:[#allocation2 + $0x13] sm:$0xff]
    %v792 = vld [vmem:[#allocation2 + $0x1b] sm:$0xff]
    %v793 = vld [vmem:[#allocation2 + $0x23] sm:$0xff]
    %v794 = vld [vmem:[#allocation2 + $0x2b] sm:$0xff]
    %v795 = vld [vmem:[#allocation2 + $0x33] sm:$0xff]
    %v796 = vld [vmem:[#allocation2 + $0x3b] sm:$0xff]
    %v797 = vld [vmem:[#allocation2 + $0x43] sm:$0xff]
    %v798 = vld [vmem:[#allocation2 + $0x4b] sm:$0xff]
    %v799 = vld [vmem:[#allocation2 + $0x53] sm:$0xff]
    %v800 = vld [vmem:[#allocation2 + $0x5b] sm:$0xff]
    %v801 = vld [vmem:[#allocation2 + $0x63] sm:$0xff]
    %v802 = vld [vmem:[#allocation2 + $0x6b] sm:$0xff]
    %v803 = vld [vmem:[#allocation2 + $0x73] sm:$0xff]
    %v804 = vld [vmem:[#allocation2 + $0x7b] sm:$0xff]
    %v805 = vld [vmem:[#allocation2 + $0x83] sm:$0xff]
    %v806 = vld [vmem:[#allocation2 + $0x8b] sm:$0xff]
    %v807 = vld [vmem:[#allocation2 + $0x93] sm:$0xff]
    %v808 = vld [vmem:[#allocation2 + $0x9b] sm:$0xff]
    %v809 = vld [vmem:[#allocation2 + $0xa3] sm:$0xff]
    %v810 = vld [vmem:[#allocation2 + $0xab] sm:$0x3]
    %v811 = vld [vmem:[#allocation2 + $0xaa] sm:$0xff]
    %v812 = vld [vmem:[#allocation2 + $0xb2] sm:$0x3]
    %v813 = vld [vmem:[#allocation2 + $0xab] sm:$0xff]
    %v814 = vld [vmem:[#allocation2 + $0xb3] sm:$0x3]
    %v815 = vld [vmem:[#allocation2 + $0x14] sm:$0xff]
    %v816 = vld [vmem:[#allocation2 + $0x1c] sm:$0xff]
    %v817 = vld [vmem:[#allocation2 + $0x24] sm:$0xff]
    %v818 = vld [vmem:[#allocation2 + $0x2c] sm:$0xff]
    %v819 = vld [vmem:[#allocation2 + $0x34] sm:$0xff]
    %v820 = vld [vmem:[#allocation2 + $0x3c] sm:$0xff]
    %v821 = vld [vmem:[#allocation2 + $0x44] sm:$0xff]
    %v822 = vld [vmem:[#allocation2 + $0x4c] sm:$0xff]
    %v823 = vld [vmem:[#allocation2 + $0x54] sm:$0xff]
    %v824 = vld [vmem:[#allocation2 + $0x5c] sm:$0xff]
    %v825 = vld [vmem:[#allocation2 + $0x64] sm:$0xff]
    %v826 = vld [vmem:[#allocation2 + $0x6c] sm:$0xff]
    %v827 = vld [vmem:[#allocation2 + $0x74] sm:$0xff]
    %v828 = vld [vmem:[#allocation2 + $0x7c] sm:$0xff]
    %v829 = vld [vmem:[#allocation2 + $0x84] sm:$0xff]
    %v830 = vld [vmem:[#allocation2 + $0x8c] sm:$0xff]
    %v831 = vld [vmem:[#allocation2 + $0x94] sm:$0xff]
    %v832 = vld [vmem:[#allocation2 + $0x9c] sm:$0xff]
    %v833 = vld [vmem:[#allocation2 + $0xa4] sm:$0xff]
    %v834 = vld [vmem:[#allocation2 + $0xac] sm:$0xff]
    %v835 = vld [vmem:[#allocation2 + $0xb4] sm:$0x3]
    %857 = vrot.lane.b32.xlu0 %v744, 64
    %v858 = vpop.permute.xlu0 %857
    %859 = vrot.lane.b32.xlu0 %v745, 64
    %v860 = vpop.permute.xlu0 %859
    %861 = vrot.lane.b32.xlu0 %v746, 64
    %v862 = vpop.permute.xlu0 %861
    %863 = vrot.lane.b32.xlu0 %v747, 64
    %v864 = vpop.permute.xlu0 %863
    %865 = vrot.lane.b32.xlu0 %v748, 64
    %v866 = vpop.permute.xlu0 %865
    %867 = vrot.lane.b32.xlu0 %v749, 64
    %v868 = vpop.permute.xlu0 %867
    %869 = vrot.lane.b32.xlu0 %v750, 64
    %v870 = vpop.permute.xlu0 %869
    %871 = vrot.lane.b32.xlu0 %v751, 64
    %v872 = vpop.permute.xlu0 %871
    %873 = vrot.lane.b32.xlu0 %v752, 64
    %v874 = vpop.permute.xlu0 %873
    %875 = vrot.lane.b32.xlu0 %v753, 64
    %v876 = vpop.permute.xlu0 %875
    %877 = vrot.lane.b32.xlu0 %v754, 64
    %v878 = vpop.permute.xlu0 %877
    %879 = vrot.lane.b32.xlu0 %v755, 64
    %v880 = vpop.permute.xlu0 %879
    %881 = vrot.lane.b32.xlu0 %v756, 64
    %v882 = vpop.permute.xlu0 %881
    %883 = vrot.lane.b32.xlu0 %v757, 64
    %v884 = vpop.permute.xlu0 %883
    %885 = vrot.lane.b32.xlu0 %v758, 64
    %v886 = vpop.permute.xlu0 %885
    %887 = vrot.lane.b32.xlu0 %v759, 64
    %v888 = vpop.permute.xlu0 %887
    %889 = vrot.lane.b32.xlu0 %v760, 64
    %v890 = vpop.permute.xlu0 %889
    %891 = vrot.lane.b32.xlu0 %v761, 64
    %v892 = vpop.permute.xlu0 %891
    %893 = vrot.lane.b32.xlu0 %v762, 64
    %v894 = vpop.permute.xlu0 %893
    %895 = vrot.lane.b32.xlu0 %v763, 64
    %v896 = vpop.permute.xlu0 %895
    %897 = vrot.lane.b32.xlu0 %v764, 64
    %v898 = vpop.permute.xlu0 %897
    %922 = vrot.lane.b32.xlu0 %v786, 64
    %v923 = vpop.permute.xlu0 %922
    %924 = vrot.lane.b32.xlu0 %v787, 64
    %v925 = vpop.permute.xlu0 %924
    %949 = vrot.lane.b32.xlu0 %v790, 64
    %v950 = vpop.permute.xlu0 %949
    %951 = vrot.lane.b32.xlu0 %v791, 64
    %v952 = vpop.permute.xlu0 %951
    %953 = vrot.lane.b32.xlu0 %v792, 64
    %v954 = vpop.permute.xlu0 %953
    %955 = vrot.lane.b32.xlu0 %v793, 64
    %v956 = vpop.permute.xlu0 %955
    %957 = vrot.lane.b32.xlu0 %v794, 64
    %v958 = vpop.permute.xlu0 %957
    %959 = vrot.lane.b32.xlu0 %v795, 64
    %v960 = vpop.permute.xlu0 %959
    %961 = vrot.lane.b32.xlu0 %v796, 64
    %v962 = vpop.permute.xlu0 %961
    %963 = vrot.lane.b32.xlu0 %v797, 64
    %v964 = vpop.permute.xlu0 %963
    %965 = vrot.lane.b32.xlu0 %v798, 64
    %v966 = vpop.permute.xlu0 %965
    %967 = vrot.lane.b32.xlu0 %v799, 64
    %v968 = vpop.permute.xlu0 %967
    %969 = vrot.lane.b32.xlu0 %v800, 64
    %v970 = vpop.permute.xlu0 %969
    %971 = vrot.lane.b32.xlu0 %v801, 64
    %v972 = vpop.permute.xlu0 %971
    %973 = vrot.lane.b32.xlu0 %v802, 64
    %v974 = vpop.permute.xlu0 %973
    %975 = vrot.lane.b32.xlu0 %v803, 64
    %v976 = vpop.permute.xlu0 %975
    %977 = vrot.lane.b32.xlu0 %v804, 64
    %v978 = vpop.permute.xlu0 %977
    %979 = vrot.lane.b32.xlu0 %v805, 64
    %v980 = vpop.permute.xlu0 %979
    %981 = vrot.lane.b32.xlu0 %v806, 64
    %v982 = vpop.permute.xlu0 %981
    %983 = vrot.lane.b32.xlu0 %v807, 64
    %v984 = vpop.permute.xlu0 %983
    %985 = vrot.lane.b32.xlu0 %v808, 64
    %v986 = vpop.permute.xlu0 %985
    %987 = vrot.lane.b32.xlu0 %v809, 64
    %v988 = vpop.permute.xlu0 %987
    %989 = vrot.lane.b32.xlu0 %v810, 64
    %v990 = vpop.permute.xlu0 %989
    %1014 = vrot.lane.b32.xlu0 %v813, 64
    %v1015 = vpop.permute.xlu0 %1014
    %1016 = vrot.lane.b32.xlu0 %v814, 64
    %v1017 = vpop.permute.xlu0 %1016
    %v1020 = vsel %vm459, %v723, %v858
    %v1021 = vsel %vm459, %v724, %v860
    %v1022 = vsel %vm459, %v725, %v862
    %v1023 = vsel %vm459, %v726, %v864
    %v1024 = vsel %vm459, %v727, %v866
    %v1025 = vsel %vm459, %v728, %v868
    %v1026 = vsel %vm459, %v729, %v870
    %v1027 = vsel %vm459, %v730, %v872
    %v1028 = vsel %vm459, %v731, %v874
    %v1029 = vsel %vm459, %v732, %v876
    %v1030 = vsel %vm459, %v733, %v878
    %v1031 = vsel %vm459, %v734, %v880
    %v1032 = vsel %vm459, %v735, %v882
    %v1033 = vsel %vm459, %v736, %v884
    %v1034 = vsel %vm459, %v737, %v886
    %v1035 = vsel %vm459, %v738, %v888
    %v1036 = vsel %vm459, %v739, %v890
    %v1037 = vsel %vm459, %v740, %v892
    %v1038 = vsel %vm459, %v741, %v894
    %v1039 = vsel %vm459, %v742, %v896
    %v1040 = vsel %vm459, %v743, %v898
    %v1041 = vsel %vm459, %v765, %v860
    %v1042 = vsel %vm459, %v766, %v862
    %v1043 = vsel %vm459, %v767, %v864
    %v1044 = vsel %vm459, %v768, %v866
    %v1045 = vsel %vm459, %v769, %v868
    %v1046 = vsel %vm459, %v770, %v870
    %v1047 = vsel %vm459, %v771, %v872
    %v1048 = vsel %vm459, %v772, %v874
    %v1049 = vsel %vm459, %v773, %v876
    %v1050 = vsel %vm459, %v774, %v878
    %v1051 = vsel %vm459, %v775, %v880
    %v1052 = vsel %vm459, %v776, %v882
    %v1053 = vsel %vm459, %v777, %v884
    %v1054 = vsel %vm459, %v778, %v886
    %v1055 = vsel %vm459, %v779, %v888
    %v1056 = vsel %vm459, %v780, %v890
    %v1057 = vsel %vm459, %v781, %v892
    %v1058 = vsel %vm459, %v782, %v894
    %v1059 = vsel %vm459, %v783, %v896
    %v1060 = vsel %vm459, %v784, %v923
    %v1061 = vsel %vm459, %v785, %v925
    %v1062 = vsel %vm459, %v766, %v950
    %v1063 = vsel %vm459, %v767, %v952
    %v1064 = vsel %vm459, %v768, %v954
    %v1065 = vsel %vm459, %v769, %v956
    %v1066 = vsel %vm459, %v770, %v958
    %v1067 = vsel %vm459, %v771, %v960
    %v1068 = vsel %vm459, %v772, %v962
    %v1069 = vsel %vm459, %v773, %v964
    %v1070 = vsel %vm459, %v774, %v966
    %v1071 = vsel %vm459, %v775, %v968
    %v1072 = vsel %vm459, %v776, %v970
    %v1073 = vsel %vm459, %v777, %v972
    %v1074 = vsel %vm459, %v778, %v974
    %v1075 = vsel %vm459, %v779, %v976
    %v1076 = vsel %vm459, %v780, %v978
    %v1077 = vsel %vm459, %v781, %v980
    %v1078 = vsel %vm459, %v782, %v982
    %v1079 = vsel %vm459, %v783, %v984
    %v1080 = vsel %vm459, %v784, %v986
    %v1081 = vsel %vm459, %v788, %v988
    %v1082 = vsel %vm459, %v789, %v990
    %v1083 = vsel %vm459, %v811, %v1015
    %v1084 = vsel %vm459, %v812, %v1017
    %v1085 = vpack.c.bf16 %v1021, %v1020
    %v1086 = vpack.c.bf16 %v1042, %v1041
    %v1087 = vpack.c.bf16 %v1063, %v1062
    %v1088 = vpack.c.bf16 %v1064, %v1063
    %v1089 = vpack.c.bf16 %v816, %v815
    %v1090 = vpack.c.bf16 %v1023, %v1022
    %v1091 = vpack.c.bf16 %v1044, %v1043
    %v1092 = vpack.c.bf16 %v1065, %v1064
    %v1093 = vpack.c.bf16 %v1066, %v1065
    %v1094 = vpack.c.bf16 %v818, %v817
    %v1095 = vpack.c.bf16 %v1025, %v1024
    %v1096 = vpack.c.bf16 %v1046, %v1045
    %v1097 = vpack.c.bf16 %v1067, %v1066
    %v1098 = vpack.c.bf16 %v1068, %v1067
    %v1099 = vpack.c.bf16 %v820, %v819
    %v1100 = vpack.c.bf16 %v1027, %v1026
    %v1101 = vpack.c.bf16 %v1048, %v1047
    %v1102 = vpack.c.bf16 %v1069, %v1068
    %v1103 = vpack.c.bf16 %v1070, %v1069
    %v1104 = vpack.c.bf16 %v822, %v821
    %v1105 = vpack.c.bf16 %v1029, %v1028
    %v1106 = vpack.c.bf16 %v1050, %v1049
    %v1107 = vpack.c.bf16 %v1071, %v1070
    %v1108 = vpack.c.bf16 %v1072, %v1071
    %v1109 = vpack.c.bf16 %v824, %v823
    %v1110 = vpack.c.bf16 %v1031, %v1030
    %v1111 = vpack.c.bf16 %v1052, %v1051
    %v1112 = vpack.c.bf16 %v1073, %v1072
    %v1113 = vpack.c.bf16 %v1074, %v1073
    %v1114 = vpack.c.bf16 %v826, %v825
    %v1115 = vpack.c.bf16 %v1033, %v1032
    %v1116 = vpack.c.bf16 %v1054, %v1053
    %v1117 = vpack.c.bf16 %v1075, %v1074
    %v1118 = vpack.c.bf16 %v1076, %v1075
    %v1119 = vpack.c.bf16 %v828, %v827
    %v1120 = vpack.c.bf16 %v1035, %v1034
    %v1121 = vpack.c.bf16 %v1056, %v1055
    %v1122 = vpack.c.bf16 %v1077, %v1076
    %v1123 = vpack.c.bf16 %v1078, %v1077
    %v1124 = vpack.c.bf16 %v830, %v829
    %v1125 = vpack.c.bf16 %v1037, %v1036
    %v1126 = vpack.c.bf16 %v1058, %v1057
    %v1127 = vpack.c.bf16 %v1079, %v1078
    %v1128 = vpack.c.bf16 %v1080, %v1079
    %v1129 = vpack.c.bf16 %v832, %v831
    %v1130 = vpack.c.bf16 %v1039, %v1038
    %v1131 = vpack.c.bf16 %v1060, %v1059
    %v1132 = vpack.c.bf16 %v1081, %v1080
    %v1133 = vpack.c.bf16 %v1083, %v1081
    %v1134 = vpack.c.bf16 %v834, %v833
    %v1135 = vpack.c.bf16 %v1040, %v1040
    %v1136 = vpack.c.bf16 %v1061, %v1061
    %v1137 = vpack.c.bf16 %v1082, %v1082
    %v1138 = vpack.c.bf16 %v1084, %v1084
    %v1139 = vpack.c.bf16 %v835, %v835
    %v1140 = vld [vmem:[#allocation9] sm:$0xf]
    %v1141 = vld [vmem:[#allocation9 + $0x4] sm:$0xf]
    %v1142 = vld [vmem:[#allocation9 + $0x8] sm:$0xf]
    %v1143 = vld [vmem:[#allocation9 + $0xc] sm:$0xf]
    %v1144 = vld [vmem:[#allocation9 + $0x10] sm:$0xf]
    %v1145 = vld [vmem:[#allocation9 + $0x14] sm:$0xf]
    %v1146 = vld [vmem:[#allocation9 + $0x18] sm:$0xf]
    %v1147 = vld [vmem:[#allocation9 + $0x1c] sm:$0xf]
    %v1148 = vld [vmem:[#allocation9 + $0x20] sm:$0xf]
    %v1149 = vld [vmem:[#allocation9 + $0x24] sm:$0xf]
    %v1150 = vld [vmem:[#allocation9 + $0x28] sm:$0xf]
    %v1151 = vld [vmem:[#allocation9 + $0x2c] sm:$0xf]
    %v1152 = vld [vmem:[#allocation9 + $0x30] sm:$0xf]
    %v1153 = vld [vmem:[#allocation9 + $0x34] sm:$0xf]
    %v1154 = vld [vmem:[#allocation9 + $0x38] sm:$0xf]
    %v1155 = vld [vmem:[#allocation9 + $0x3c] sm:$0xf]
    %v1156 = vld [vmem:[#allocation9 + $0x40] sm:$0xf]
    %v1157 = vld [vmem:[#allocation9 + $0x44] sm:$0xf]
    %v1158 = vld [vmem:[#allocation9 + $0x48] sm:$0xf]
    %v1159 = vld [vmem:[#allocation9 + $0x4c] sm:$0xf]
    %v1160 = vld [vmem:[#allocation9 + $0x50] sm:$0xf]
    %v1161 = vld [vmem:[#allocation9 + $0x54] sm:$0xf]
    %v1162 = vld [vmem:[#allocation9 + $0x58] sm:$0xf]
    %v1163 = vld [vmem:[#allocation9 + $0x5c] sm:$0xf]
    %v1164 = vld [vmem:[#allocation9 + $0x60] sm:$0xf]
    %v1165 = vld [vmem:[#allocation9 + $0x64] sm:$0xf]
    %v1166 = vld [vmem:[#allocation9 + $0x68] sm:$0xf]
    %v1167 = vld [vmem:[#allocation9 + $0x6c] sm:$0xf]
    %v1168 = vld [vmem:[#allocation9 + $0x70] sm:$0xf]
    %v1169 = vld [vmem:[#allocation9 + $0x74] sm:$0xf]
    %v1170 = vld [vmem:[#allocation9 + $0x78] sm:$0xf]
    %v1171 = vld [vmem:[#allocation9 + $0x7c] sm:$0xf]
    %v1172 = vld [vmem:[#allocation9 + $0x80] sm:$0xf]
    %v1173 = vld [vmem:[#allocation9 + $0x84] sm:$0xf]
    %v1174 = vld [vmem:[#allocation9 + $0x88] sm:$0xf]
    %v1175 = vld [vmem:[#allocation9 + $0x8c] sm:$0xf]
    %v1176 = vld [vmem:[#allocation9 + $0x90] sm:$0xf]
    %v1177 = vld [vmem:[#allocation9 + $0x94] sm:$0xf]
    %v1178 = vld [vmem:[#allocation9 + $0x98] sm:$0xf]
    %v1179 = vld [vmem:[#allocation9 + $0x9c] sm:$0xf]
    %v1180 = vld [vmem:[#allocation9 + $0xa0] sm:$0xf]
    %v1181 = vld [vmem:[#allocation9 + $0xa4] sm:$0xf]
    %v1182 = vld [vmem:[#allocation9 + $0xa8] sm:$0xf]
    %v1183 = vld [vmem:[#allocation9 + $0xac] sm:$0xf]
    %v1184 = vld [vmem:[#allocation9 + $0xb0] sm:$0xf]
    %v1185 = vld [vmem:[#allocation9 + $0xb4] sm:$0xf]
    %v1186 = vld [vmem:[#allocation9 + $0xb8] sm:$0xf]
    %v1187 = vld [vmem:[#allocation9 + $0xbc] sm:$0xf]
    %v1188 = vld [vmem:[#allocation9 + $0xc0] sm:$0xf]
    %v1189 = vld [vmem:[#allocation9 + $0xc4] sm:$0xf]
    %v1190 = vld [vmem:[#allocation9 + $0xc8] sm:$0xf]
    %v1191 = vld [vmem:[#allocation9 + $0xcc] sm:$0xf]
    %v1192 = vld [vmem:[#allocation9 + $0xd0] sm:$0xf]
    %v1193 = vld [vmem:[#allocation9 + $0xd4] sm:$0xf]
    %v1194 = vld [vmem:[#allocation9 + $0xd8] sm:$0xf]
    %v1195 = vld [vmem:[#allocation9 + $0xdc] sm:$0xf]
    %v1196 = vld [vmem:[#allocation9 + $0xe0] sm:$0xf]
    %v1197 = vld [vmem:[#allocation9 + $0xe4] sm:$0xf]
    %v1198 = vld [vmem:[#allocation9 + $0xe8] sm:$0xf]
    %v1199 = vld [vmem:[#allocation9 + $0xec] sm:$0xf]
    %v1200 = vld [vmem:[#allocation9 + $0xf0] sm:$0xf]
    %v1201 = vld [vmem:[#allocation9 + $0xf4] sm:$0xf]
    %v1202 = vld [vmem:[#allocation9 + $0xf8] sm:$0xf]
    %v1203 = vld [vmem:[#allocation9 + $0xfc] sm:$0xf]
    %v1204 = vld [vmem:[#allocation9 + $0x100] sm:$0xf]
    %v1205 = vld [vmem:[#allocation9 + $0x104] sm:$0xf]
    %v1206 = vld [vmem:[#allocation9 + $0x108] sm:$0xf]
    %v1207 = vld [vmem:[#allocation9 + $0x10c] sm:$0xf]
    %v1208 = vld [vmem:[#allocation9 + $0x110] sm:$0xf]
    %v1209 = vld [vmem:[#allocation9 + $0x114] sm:$0xf]
    %v1210 = vld [vmem:[#allocation9 + $0x118] sm:$0xf]
    %v1211 = vld [vmem:[#allocation9 + $0x11c] sm:$0xf]
    %v1284 = vunpack.c.l.b16 %v1140
    %v1285 = vunpack.c.l.b16 %v1141
    %v1286 = vunpack.c.l.b16 %v1142
    %v1287 = vunpack.c.l.b16 %v1143
    %v1288 = vunpack.c.l.b16 %v1144
    %v1289 = vunpack.c.l.b16 %v1145
    %v1290 = vunpack.c.l.b16 %v1146
    %v1291 = vunpack.c.l.b16 %v1147
    %v1292 = vunpack.c.l.b16 %v1148
    %v1293 = vunpack.c.l.b16 %v1149
    %v1294 = vunpack.c.l.b16 %v1150
    %v1295 = vunpack.c.l.b16 %v1151
    %v1296 = vunpack.c.l.b16 %v1152
    %v1297 = vunpack.c.l.b16 %v1153
    %v1298 = vunpack.c.l.b16 %v1154
    %v1299 = vunpack.c.l.b16 %v1155
    %v1300 = vunpack.c.l.b16 %v1156
    %v1301 = vunpack.c.l.b16 %v1157
    %v1302 = vunpack.c.l.b16 %v1158
    %v1303 = vunpack.c.l.b16 %v1159
    %v1304 = vunpack.c.l.b16 %v1160
    %v1305 = vunpack.c.l.b16 %v1161
    %v1306 = vunpack.c.l.b16 %v1162
    %v1307 = vunpack.c.l.b16 %v1163
    %v1308 = vunpack.c.l.b16 %v1164
    %v1309 = vunpack.c.l.b16 %v1165
    %v1310 = vunpack.c.l.b16 %v1166
    %v1311 = vunpack.c.l.b16 %v1167
    %v1312 = vunpack.c.l.b16 %v1168
    %v1313 = vunpack.c.l.b16 %v1169
    %v1314 = vunpack.c.l.b16 %v1170
    %v1315 = vunpack.c.l.b16 %v1171
    %v1316 = vunpack.c.l.b16 %v1172
    %v1317 = vunpack.c.l.b16 %v1173
    %v1318 = vunpack.c.l.b16 %v1174
    %v1319 = vunpack.c.l.b16 %v1175
    %v1320 = vunpack.c.l.b16 %v1176
    %v1321 = vunpack.c.l.b16 %v1177
    %v1322 = vunpack.c.l.b16 %v1178
    %v1323 = vunpack.c.l.b16 %v1179
    %v1324 = vunpack.c.l.b16 %v1180
    %v1325 = vunpack.c.l.b16 %v1181
    %v1326 = vunpack.c.l.b16 %v1182
    %v1327 = vunpack.c.l.b16 %v1183
    %v1328 = vunpack.c.l.b16 %v1184
    %v1329 = vunpack.c.l.b16 %v1185
    %v1330 = vunpack.c.l.b16 %v1186
    %v1331 = vunpack.c.l.b16 %v1187
    %v1332 = vunpack.c.l.b16 %v1188
    %v1333 = vunpack.c.l.b16 %v1189
    %v1334 = vunpack.c.l.b16 %v1190
    %v1335 = vunpack.c.l.b16 %v1191
    %v1336 = vunpack.c.l.b16 %v1192
    %v1337 = vunpack.c.l.b16 %v1193
    %v1338 = vunpack.c.l.b16 %v1194
    %v1339 = vunpack.c.l.b16 %v1195
    %v1340 = vunpack.c.l.b16 %v1196
    %v1341 = vunpack.c.l.b16 %v1197
    %v1342 = vunpack.c.l.b16 %v1198
    %v1343 = vunpack.c.l.b16 %v1199
    %v1344 = vunpack.c.l.b16 %v1200
    %v1345 = vunpack.c.l.b16 %v1201
    %v1346 = vunpack.c.l.b16 %v1202
    %v1347 = vunpack.c.l.b16 %v1203
    %v1348 = vunpack.c.l.b16 %v1204
    %v1349 = vunpack.c.l.b16 %v1205
    %v1350 = vunpack.c.l.b16 %v1206
    %v1351 = vunpack.c.l.b16 %v1207
    %v1352 = vunpack.c.l.b16 %v1208
    %v1353 = vunpack.c.l.b16 %v1209
    %v1354 = vunpack.c.l.b16 %v1210
    %v1355 = vunpack.c.l.b16 %v1211
    %v1356 = vpack.c.b16 %v1285, %v1284
    %v1357 = vpack.c.b16 %v1287, %v1286
    %v1358 = vpack.c.b16 %v1289, %v1288
    %v1359 = vpack.c.b16 %v1291, %v1290
    %v1360 = vpack.c.b16 %v1293, %v1292
    %v1361 = vpack.c.b16 %v1295, %v1294
    %v1362 = vpack.c.b16 %v1297, %v1296
    %v1363 = vpack.c.b16 %v1299, %v1298
    %v1364 = vpack.c.b16 %v1301, %v1300
    %v1365 = vpack.c.b16 %v1303, %v1302
    %v1366 = vpack.c.b16 %v1305, %v1304
    %v1367 = vpack.c.b16 %v1307, %v1306
    %v1368 = vpack.c.b16 %v1309, %v1308
    %v1369 = vpack.c.b16 %v1311, %v1310
    %v1370 = vpack.c.b16 %v1313, %v1312
    %v1371 = vpack.c.b16 %v1315, %v1314
    %v1372 = vpack.c.b16 %v1317, %v1316
    %v1373 = vpack.c.b16 %v1319, %v1318
    %v1374 = vpack.c.b16 %v1321, %v1320
    %v1375 = vpack.c.b16 %v1323, %v1322
    %v1376 = vpack.c.b16 %v1325, %v1324
    %v1377 = vpack.c.b16 %v1327, %v1326
    %v1378 = vpack.c.b16 %v1329, %v1328
    %v1379 = vpack.c.b16 %v1331, %v1330
    %v1380 = vpack.c.b16 %v1333, %v1332
    %v1381 = vpack.c.b16 %v1335, %v1334
    %v1382 = vpack.c.b16 %v1337, %v1336
    %v1383 = vpack.c.b16 %v1339, %v1338
    %v1384 = vpack.c.b16 %v1341, %v1340
    %v1385 = vpack.c.b16 %v1343, %v1342
    %v1386 = vpack.c.b16 %v1345, %v1344
    %v1387 = vpack.c.b16 %v1347, %v1346
    %v1388 = vpack.c.b16 %v1349, %v1348
    %v1389 = vpack.c.b16 %v1351, %v1350
    %v1390 = vpack.c.b16 %v1353, %v1352
    %v1391 = vpack.c.b16 %v1355, %v1354
    %v1429 = vsel %vm459, %v1089, 0
    %v1432 = vsel %vm459, %v1094, 0
    %v1435 = vsel %vm459, %v1099, 0
    %v1438 = vsel %vm459, %v1104, 0
    %v1441 = vsel %vm459, %v1109, 0
    %v1444 = vsel %vm459, %v1114, 0
    %v1447 = vsel %vm459, %v1119, 0
    %v1450 = vsel %vm459, %v1124, 0
    %v1453 = vsel %vm459, %v1129, 0
    %v1456 = vsel %vm459, %v1134, 0
    %v1459 = vsel %vm459, %v1139, 0
    %1461 = vmatpush.bf16.msra.mxu0 %v1363
    %1462 = vmatpush.bf16.msra.mxu0 %v1362
    %1463 = vmatpush.bf16.msra.mxu0 %v1361
    %1464 = vmatpush.bf16.msra.mxu0 %v1360
    %1465 = vmatpush.bf16.msra.mxu0 %v1359
    %1466 = vmatpush.bf16.msra.mxu0 %v1358
    %1467 = vmatpush.bf16.msra.mxu0 %v1357
    %1468 = vmatpush.bf16.msra.mxu0 %v1356
    %1469 = vmatmul.bf16.gmra.mxu0 %v1085
    %v1470 = vpop.f32.mrf.mxu0
    %v1471 = vadd.f32 0.0, %v1470
    %v1472 = vpop.f32.mrf.mxu0
    %v1473 = vadd.f32 0.0, %v1472
    %1474 = vmatmul.bf16.gmra.mxu0 %v1090
    %v1475 = vpop.f32.mrf.mxu0
    %v1476 = vadd.f32 0.0, %v1475
    %v1477 = vpop.f32.mrf.mxu0
    %v1478 = vadd.f32 0.0, %v1477
    %1479 = vmatmul.bf16.gmra.mxu0 %v1095
    %v1480 = vpop.f32.mrf.mxu0
    %v1481 = vadd.f32 0.0, %v1480
    %v1482 = vpop.f32.mrf.mxu0
    %v1483 = vadd.f32 0.0, %v1482
    %1484 = vmatmul.bf16.gmra.mxu0 %v1100
    %v1485 = vpop.f32.mrf.mxu0
    %v1486 = vadd.f32 0.0, %v1485
    %v1487 = vpop.f32.mrf.mxu0
    %v1488 = vadd.f32 0.0, %v1487
    %1489 = vmatmul.bf16.gmra.mxu0 %v1105
    %v1490 = vpop.f32.mrf.mxu0
    %v1491 = vadd.f32 0.0, %v1490
    %v1492 = vpop.f32.mrf.mxu0
    %v1493 = vadd.f32 0.0, %v1492
    %1494 = vmatmul.bf16.gmra.mxu0 %v1110
    %v1495 = vpop.f32.mrf.mxu0
    %v1496 = vadd.f32 0.0, %v1495
    %v1497 = vpop.f32.mrf.mxu0
    %v1498 = vadd.f32 0.0, %v1497
    %1499 = vmatmul.bf16.gmra.mxu0 %v1115
    %v1500 = vpop.f32.mrf.mxu0
    %v1501 = vadd.f32 0.0, %v1500
    %v1502 = vpop.f32.mrf.mxu0
    %v1503 = vadd.f32 0.0, %v1502
    %1504 = vmatmul.bf16.gmra.mxu0 %v1120
    %v1505 = vpop.f32.mrf.mxu0
    %v1506 = vadd.f32 0.0, %v1505
    %v1507 = vpop.f32.mrf.mxu0
    %v1508 = vadd.f32 0.0, %v1507
    %1509 = vmatmul.bf16.gmra.mxu0 %v1125
    %v1510 = vpop.f32.mrf.mxu0
    %v1511 = vadd.f32 0.0, %v1510
    %v1512 = vpop.f32.mrf.mxu0
    %v1513 = vadd.f32 0.0, %v1512
    %1514 = vmatmul.bf16.gmra.mxu0 %v1130
    %v1515 = vpop.f32.mrf.mxu0
    %v1516 = vadd.f32 0.0, %v1515
    %v1517 = vpop.f32.mrf.mxu0
    %v1518 = vadd.f32 0.0, %v1517
    %1519 = vmatmul.bf16.gmra.mxu0 %v1135
    %v1520 = vpop.f32.mrf.mxu0
    %v1521 = vadd.f32 0.0, %v1520
    %v1522 = vpop.f32.mrf.mxu0
    %1523 = vdwg.mxu0
    %1524 = vmatpush.bf16.msra.mxu0 %v1371
    %1525 = vmatpush.bf16.msra.mxu0 %v1370
    %1526 = vmatpush.bf16.msra.mxu0 %v1369
    %1527 = vmatpush.bf16.msra.mxu0 %v1368
    %1528 = vmatpush.bf16.msra.mxu0 %v1367
    %1529 = vmatpush.bf16.msra.mxu0 %v1366
    %1530 = vmatpush.bf16.msra.mxu0 %v1365
    %1531 = vmatpush.bf16.msra.mxu0 %v1364
    %1532 = vmatmul.bf16.gmra.mxu0 %v1086
    %v1533 = vpop.f32.mrf.mxu0
    %v1534 = vadd.f32 %v1471, %v1533
    %v1535 = vpop.f32.mrf.mxu0
    %v1536 = vadd.f32 %v1473, %v1535
    %1537 = vmatmul.bf16.gmra.mxu0 %v1091
    %v1538 = vpop.f32.mrf.mxu0
    %v1539 = vadd.f32 %v1476, %v1538
    %v1540 = vpop.f32.mrf.mxu0
    %v1541 = vadd.f32 %v1478, %v1540
    %1542 = vmatmul.bf16.gmra.mxu0 %v1096
    %v1543 = vpop.f32.mrf.mxu0
    %v1544 = vadd.f32 %v1481, %v1543
    %v1545 = vpop.f32.mrf.mxu0
    %v1546 = vadd.f32 %v1483, %v1545
    %1547 = vmatmul.bf16.gmra.mxu0 %v1101
    %v1548 = vpop.f32.mrf.mxu0
    %v1549 = vadd.f32 %v1486, %v1548
    %v1550 = vpop.f32.mrf.mxu0
    %v1551 = vadd.f32 %v1488, %v1550
    %1552 = vmatmul.bf16.gmra.mxu0 %v1106
    %v1553 = vpop.f32.mrf.mxu0
    %v1554 = vadd.f32 %v1491, %v1553
    %v1555 = vpop.f32.mrf.mxu0
    %v1556 = vadd.f32 %v1493, %v1555
    %1557 = vmatmul.bf16.gmra.mxu0 %v1111
    %v1558 = vpop.f32.mrf.mxu0
    %v1559 = vadd.f32 %v1496, %v1558
    %v1560 = vpop.f32.mrf.mxu0
    %v1561 = vadd.f32 %v1498, %v1560
    %1562 = vmatmul.bf16.gmra.mxu0 %v1116
    %v1563 = vpop.f32.mrf.mxu0
    %v1564 = vadd.f32 %v1501, %v1563
    %v1565 = vpop.f32.mrf.mxu0
    %v1566 = vadd.f32 %v1503, %v1565
    %1567 = vmatmul.bf16.gmra.mxu0 %v1121
    %v1568 = vpop.f32.mrf.mxu0
    %v1569 = vadd.f32 %v1506, %v1568
    %v1570 = vpop.f32.mrf.mxu0
    %v1571 = vadd.f32 %v1508, %v1570
    %1572 = vmatmul.bf16.gmra.mxu0 %v1126
    %v1573 = vpop.f32.mrf.mxu0
    %v1574 = vadd.f32 %v1511, %v1573
    %v1575 = vpop.f32.mrf.mxu0
    %v1576 = vadd.f32 %v1513, %v1575
    %1577 = vmatmul.bf16.gmra.mxu0 %v1131
    %v1578 = vpop.f32.mrf.mxu0
    %v1579 = vadd.f32 %v1516, %v1578
    %v1580 = vpop.f32.mrf.mxu0
    %v1581 = vadd.f32 %v1518, %v1580
    %1582 = vmatmul.bf16.gmra.mxu0 %v1136
    %v1583 = vpop.f32.mrf.mxu0
    %v1584 = vadd.f32 %v1521, %v1583
    %v1585 = vpop.f32.mrf.mxu0
    %1586 = vdwg.mxu0
    %1587 = vmatpush.bf16.msra.mxu0 %v1379
    %1588 = vmatpush.bf16.msra.mxu0 %v1378
    %1589 = vmatpush.bf16.msra.mxu0 %v1377
    %1590 = vmatpush.bf16.msra.mxu0 %v1376
    %1591 = vmatpush.bf16.msra.mxu0 %v1375
    %1592 = vmatpush.bf16.msra.mxu0 %v1374
    %1593 = vmatpush.bf16.msra.mxu0 %v1373
    %1594 = vmatpush.bf16.msra.mxu0 %v1372
    %1595 = vmatmul.bf16.gmra.mxu0 %v1087
    %v1596 = vpop.f32.mrf.mxu0
    %v1597 = vadd.f32 %v1534, %v1596
    %v1598 = vpop.f32.mrf.mxu0
    %v1599 = vadd.f32 %v1536, %v1598
    %1600 = vmatmul.bf16.gmra.mxu0 %v1092
    %v1601 = vpop.f32.mrf.mxu0
    %v1602 = vadd.f32 %v1539, %v1601
    %v1603 = vpop.f32.mrf.mxu0
    %v1604 = vadd.f32 %v1541, %v1603
    %1605 = vmatmul.bf16.gmra.mxu0 %v1097
    %v1606 = vpop.f32.mrf.mxu0
    %v1607 = vadd.f32 %v1544, %v1606
    %v1608 = vpop.f32.mrf.mxu0
    %v1609 = vadd.f32 %v1546, %v1608
    %1610 = vmatmul.bf16.gmra.mxu0 %v1102
    %v1611 = vpop.f32.mrf.mxu0
    %v1612 = vadd.f32 %v1549, %v1611
    %v1613 = vpop.f32.mrf.mxu0
    %v1614 = vadd.f32 %v1551, %v1613
    %1615 = vmatmul.bf16.gmra.mxu0 %v1107
    %v1616 = vpop.f32.mrf.mxu0
    %v1617 = vadd.f32 %v1554, %v1616
    %v1618 = vpop.f32.mrf.mxu0
    %v1619 = vadd.f32 %v1556, %v1618
    %1620 = vmatmul.bf16.gmra.mxu0 %v1112
    %v1621 = vpop.f32.mrf.mxu0
    %v1622 = vadd.f32 %v1559, %v1621
    %v1623 = vpop.f32.mrf.mxu0
    %v1624 = vadd.f32 %v1561, %v1623
    %1625 = vmatmul.bf16.gmra.mxu0 %v1117
    %v1626 = vpop.f32.mrf.mxu0
    %v1627 = vadd.f32 %v1564, %v1626
    %v1628 = vpop.f32.mrf.mxu0
    %v1629 = vadd.f32 %v1566, %v1628
    %1630 = vmatmul.bf16.gmra.mxu0 %v1122
    %v1631 = vpop.f32.mrf.mxu0
    %v1632 = vadd.f32 %v1569, %v1631
    %v1633 = vpop.f32.mrf.mxu0
    %v1634 = vadd.f32 %v1571, %v1633
    %1635 = vmatmul.bf16.gmra.mxu0 %v1127
    %v1636 = vpop.f32.mrf.mxu0
    %v1637 = vadd.f32 %v1574, %v1636
    %v1638 = vpop.f32.mrf.mxu0
    %v1639 = vadd.f32 %v1576, %v1638
    %1640 = vmatmul.bf16.gmra.mxu0 %v1132
    %v1641 = vpop.f32.mrf.mxu0
    %v1642 = vadd.f32 %v1579, %v1641
    %v1643 = vpop.f32.mrf.mxu0
    %v1644 = vadd.f32 %v1581, %v1643
    %1645 = vmatmul.bf16.gmra.mxu0 %v1137
    %v1646 = vpop.f32.mrf.mxu0
    %v1647 = vadd.f32 %v1584, %v1646
    %v1648 = vpop.f32.mrf.mxu0
    %1649 = vdwg.mxu0
    %1650 = vmatpush.bf16.msra.mxu0 %v1387
    %1651 = vmatpush.bf16.msra.mxu0 %v1386
    %1652 = vmatpush.bf16.msra.mxu0 %v1385
    %1653 = vmatpush.bf16.msra.mxu0 %v1384
    %1654 = vmatpush.bf16.msra.mxu0 %v1383
    %1655 = vmatpush.bf16.msra.mxu0 %v1382
    %1656 = vmatpush.bf16.msra.mxu0 %v1381
    %1657 = vmatpush.bf16.msra.mxu0 %v1380
    %1658 = vmatmul.bf16.gmra.mxu0 %v1088
    %v1659 = vpop.f32.mrf.mxu0
    %v1660 = vadd.f32 %v1597, %v1659
    %v1661 = vpop.f32.mrf.mxu0
    %v1662 = vadd.f32 %v1599, %v1661
    %1663 = vmatmul.bf16.gmra.mxu0 %v1093
    %v1664 = vpop.f32.mrf.mxu0
    %v1665 = vadd.f32 %v1602, %v1664
    %v1666 = vpop.f32.mrf.mxu0
    %v1667 = vadd.f32 %v1604, %v1666
    %1668 = vmatmul.bf16.gmra.mxu0 %v1098
    %v1669 = vpop.f32.mrf.mxu0
    %v1670 = vadd.f32 %v1607, %v1669
    %v1671 = vpop.f32.mrf.mxu0
    %v1672 = vadd.f32 %v1609, %v1671
    %1673 = vmatmul.bf16.gmra.mxu0 %v1103
    %v1674 = vpop.f32.mrf.mxu0
    %v1675 = vadd.f32 %v1612, %v1674
    %v1676 = vpop.f32.mrf.mxu0
    %v1677 = vadd.f32 %v1614, %v1676
    %1678 = vmatmul.bf16.gmra.mxu0 %v1108
    %v1679 = vpop.f32.mrf.mxu0
    %v1680 = vadd.f32 %v1617, %v1679
    %v1681 = vpop.f32.mrf.mxu0
    %v1682 = vadd.f32 %v1619, %v1681
    %1683 = vmatmul.bf16.gmra.mxu0 %v1113
    %v1684 = vpop.f32.mrf.mxu0
    %v1685 = vadd.f32 %v1622, %v1684
    %v1686 = vpop.f32.mrf.mxu0
    %v1687 = vadd.f32 %v1624, %v1686
    %1688 = vmatmul.bf16.gmra.mxu0 %v1118
    %v1689 = vpop.f32.mrf.mxu0
    %v1690 = vadd.f32 %v1627, %v1689
    %v1691 = vpop.f32.mrf.mxu0
    %v1692 = vadd.f32 %v1629, %v1691
    %1693 = vmatmul.bf16.gmra.mxu0 %v1123
    %v1694 = vpop.f32.mrf.mxu0
    %v1695 = vadd.f32 %v1632, %v1694
    %v1696 = vpop.f32.mrf.mxu0
    %v1697 = vadd.f32 %v1634, %v1696
    %1698 = vmatmul.bf16.gmra.mxu0 %v1128
    %v1699 = vpop.f32.mrf.mxu0
    %v1700 = vadd.f32 %v1637, %v1699
    %v1701 = vpop.f32.mrf.mxu0
    %v1702 = vadd.f32 %v1639, %v1701
    %1703 = vmatmul.bf16.gmra.mxu0 %v1133
    %v1704 = vpop.f32.mrf.mxu0
    %v1705 = vadd.f32 %v1642, %v1704
    %v1706 = vpop.f32.mrf.mxu0
    %v1707 = vadd.f32 %v1644, %v1706
    %1708 = vmatmul.bf16.gmra.mxu0 %v1138
    %v1709 = vpop.f32.mrf.mxu0
    %v1710 = vadd.f32 %v1647, %v1709
    %v1711 = vpop.f32.mrf.mxu0
    %1712 = vdwg.mxu0
    %1713 = vmatpush.bf16.msra.mxu0 0
    %1714 = vmatpush.bf16.msra.mxu0 0
    %1715 = vmatpush.bf16.msra.mxu0 0
    %1716 = vmatpush.bf16.msra.mxu0 0
    %1717 = vmatpush.bf16.msra.mxu0 %v1391
    %1718 = vmatpush.bf16.msra.mxu0 %v1390
    %1719 = vmatpush.bf16.msra.mxu0 %v1389
    %1720 = vmatpush.bf16.msra.mxu0 %v1388
    %1721 = vmatmul.bf16.gmra.mxu0 %v1429
    %v1722 = vpop.f32.mrf.mxu0
    %v1723 = vadd.f32 %v1660, %v1722
    %v1724 = vpop.f32.mrf.mxu0
    %v1725 = vadd.f32 %v1662, %v1724
    %1726 = vmatmul.bf16.gmra.mxu0 %v1432
    %v1727 = vpop.f32.mrf.mxu0
    %v1728 = vadd.f32 %v1665, %v1727
    %v1729 = vpop.f32.mrf.mxu0
    %v1730 = vadd.f32 %v1667, %v1729
    %1731 = vmatmul.bf16.gmra.mxu0 %v1435
    %v1732 = vpop.f32.mrf.mxu0
    %v1733 = vadd.f32 %v1670, %v1732
    %v1734 = vpop.f32.mrf.mxu0
    %v1735 = vadd.f32 %v1672, %v1734
    %1736 = vmatmul.bf16.gmra.mxu0 %v1438
    %v1737 = vpop.f32.mrf.mxu0
    %v1738 = vadd.f32 %v1675, %v1737
    %v1739 = vpop.f32.mrf.mxu0
    %v1740 = vadd.f32 %v1677, %v1739
    %1741 = vmatmul.bf16.gmra.mxu0 %v1441
    %v1742 = vpop.f32.mrf.mxu0
    %v1743 = vadd.f32 %v1680, %v1742
    %v1744 = vpop.f32.mrf.mxu0
    %v1745 = vadd.f32 %v1682, %v1744
    %1746 = vmatmul.bf16.gmra.mxu0 %v1444
    %v1747 = vpop.f32.mrf.mxu0
    %v1748 = vadd.f32 %v1685, %v1747
    %v1749 = vpop.f32.mrf.mxu0
    %v1750 = vadd.f32 %v1687, %v1749
    %1751 = vmatmul.bf16.gmra.mxu0 %v1447
    %v1752 = vpop.f32.mrf.mxu0
    %v1753 = vadd.f32 %v1690, %v1752
    %v1754 = vpop.f32.mrf.mxu0
    %v1755 = vadd.f32 %v1692, %v1754
    %1756 = vmatmul.bf16.gmra.mxu0 %v1450
    %v1757 = vpop.f32.mrf.mxu0
    %v1758 = vadd.f32 %v1695, %v1757
    %v1759 = vpop.f32.mrf.mxu0
    %v1760 = vadd.f32 %v1697, %v1759
    %1761 = vmatmul.bf16.gmra.mxu0 %v1453
    %v1762 = vpop.f32.mrf.mxu0
    %v1763 = vadd.f32 %v1700, %v1762
    %v1764 = vpop.f32.mrf.mxu0
    %v1765 = vadd.f32 %v1702, %v1764
    %1766 = vmatmul.bf16.gmra.mxu0 %v1456
    %v1767 = vpop.f32.mrf.mxu0
    %v1768 = vadd.f32 %v1705, %v1767
    %v1769 = vpop.f32.mrf.mxu0
    %v1770 = vadd.f32 %v1707, %v1769
    %1771 = vmatmul.bf16.gmra.mxu0 %v1459
    %v1772 = vpop.f32.mrf.mxu0
    %v1773 = vadd.f32 %v1710, %v1772
    %v1774 = vpop.f32.mrf.mxu0
    %1775 = vdwg.mxu0
    %v1776 = vld [vmem:[#allocation12 + $0x2] ss:$0 sm:$0xff]
    %v1777 = vld [vmem:[#allocation12 + $0x3] ss:$0 sm:$0xff]
    %v1778 = vmul.f32 %v1723, %v336
    %v1779 = vmul.f32 %v1725, %v341
    %v1780 = vmul.f32 %v1728, %v346
    %v1781 = vmul.f32 %v1730, %v351
    %v1782 = vmul.f32 %v1733, %v356
    %v1783 = vmul.f32 %v1735, %v361
    %v1784 = vmul.f32 %v1738, %v366
    %v1785 = vmul.f32 %v1740, %v371
    %v1786 = vmul.f32 %v1743, %v376
    %v1787 = vmul.f32 %v1745, %v381
    %v1788 = vmul.f32 %v1748, %v386
    %v1789 = vmul.f32 %v1750, %v391
    %v1790 = vmul.f32 %v1753, %v396
    %v1791 = vmul.f32 %v1755, %v401
    %v1792 = vmul.f32 %v1758, %v406
    %v1793 = vmul.f32 %v1760, %v411
    %v1794 = vmul.f32 %v1763, %v416
    %v1795 = vmul.f32 %v1765, %v421
    %v1796 = vmul.f32 %v1768, %v426
    %v1797 = vmul.f32 %v1770, %v431
    %v1798 = vmul.f32 %v1773, %v436
    %v1799 = vadd.f32 %v1778, %v1779
    %v1800 = vadd.f32 %v1799, %v1780
    %v1801 = vadd.f32 %v1800, %v1781
    %v1802 = vadd.f32 %v1801, %v1782
    %v1803 = vadd.f32 %v1802, %v1783
    %v1804 = vadd.f32 %v1803, %v1784
    %v1805 = vadd.f32 %v1804, %v1785
    %v1806 = vadd.f32 %v1805, %v1786
    %v1807 = vadd.f32 %v1806, %v1787
    %v1808 = vadd.f32 %v1807, %v1788
    %v1809 = vadd.f32 %v1808, %v1789
    %v1810 = vadd.f32 %v1809, %v1790
    %v1811 = vadd.f32 %v1810, %v1791
    %v1812 = vadd.f32 %v1811, %v1792
    %v1813 = vadd.f32 %v1812, %v1793
    %v1814 = vadd.f32 %v1813, %v1794
    %v1815 = vadd.f32 %v1814, %v1795
    %v1816 = vadd.f32 %v1815, %v1796
    %v1817 = vadd.f32 %v1816, %v1797
    %vm1818 = vcmask 1041408
    %v1819 = vsel %vm1818, %v1798, 0.0
    %v1820 = vadd.f32 %v1817, %v1819
    %v1821 = vrot.slane %v1820, 4
    %v1822 = vadd.f32 %v1820, %v1821
    %v1823 = vrot.slane %v1822, 2
    %v1824 = vadd.f32 %v1822, %v1823
    %v1825 = vrot.slane %v1824, 1
    %v1826 = vadd.f32 %v1824, %v1825
    %v1827 = vmul.f32 %v1826, 0.010204081
    %v1828 = vmul.f32 %v1778, %v1723
    %v1829 = vmul.f32 %v1779, %v1725
    %v1830 = vmul.f32 %v1780, %v1728
    %v1831 = vmul.f32 %v1781, %v1730
    %v1832 = vmul.f32 %v1782, %v1733
    %v1833 = vmul.f32 %v1783, %v1735
    %v1834 = vmul.f32 %v1784, %v1738
    %v1835 = vmul.f32 %v1785, %v1740
    %v1836 = vmul.f32 %v1786, %v1743
    %v1837 = vmul.f32 %v1787, %v1745
    %v1838 = vmul.f32 %v1788, %v1748
    %v1839 = vmul.f32 %v1789, %v1750
    %v1840 = vmul.f32 %v1790, %v1753
    %v1841 = vmul.f32 %v1791, %v1755
    %v1842 = vmul.f32 %v1792, %v1758
    %v1843 = vmul.f32 %v1793, %v1760
    %v1844 = vmul.f32 %v1794, %v1763
    %v1845 = vmul.f32 %v1795, %v1765
    %v1846 = vmul.f32 %v1796, %v1768
    %v1847 = vmul.f32 %v1797, %v1770
    %v1848 = vmul.f32 %v1798, %v1773
    %v1849 = vadd.f32 %v1828, %v1829
    %v1850 = vadd.f32 %v1849, %v1830
    %v1851 = vadd.f32 %v1850, %v1831
    %v1852 = vadd.f32 %v1851, %v1832
    %v1853 = vadd.f32 %v1852, %v1833
    %v1854 = vadd.f32 %v1853, %v1834
    %v1855 = vadd.f32 %v1854, %v1835
    %v1856 = vadd.f32 %v1855, %v1836
    %v1857 = vadd.f32 %v1856, %v1837
    %v1858 = vadd.f32 %v1857, %v1838
    %v1859 = vadd.f32 %v1858, %v1839
    %v1860 = vadd.f32 %v1859, %v1840
    %v1861 = vadd.f32 %v1860, %v1841
    %v1862 = vadd.f32 %v1861, %v1842
    %v1863 = vadd.f32 %v1862, %v1843
    %v1864 = vadd.f32 %v1863, %v1844
    %v1865 = vadd.f32 %v1864, %v1845
    %v1866 = vadd.f32 %v1865, %v1846
    %v1867 = vadd.f32 %v1866, %v1847
    %v1868 = vsel %vm1818, %v1848, 0.0
    %v1869 = vadd.f32 %v1867, %v1868
    %v1870 = vrot.slane %v1869, 4
    %v1871 = vadd.f32 %v1869, %v1870
    %v1872 = vrot.slane %v1871, 2
    %v1873 = vadd.f32 %v1871, %v1872
    %v1874 = vrot.slane %v1873, 1
    %v1875 = vadd.f32 %v1873, %v1874
    %v1876 = vmul.f32 %v1875, 0.010204081
    %v1877 = vmul.f32 %v1827, %v1827
    %v1878 = vsub.f32 %v1876, %v1877
    %v1879 = vmax.f32 %v1878, 0.0
    %v1880 = vsub.f32 %v1723, %v1827
    %v1881 = vsub.f32 %v1725, %v1827
    %v1882 = vsub.f32 %v1728, %v1827
    %v1883 = vsub.f32 %v1730, %v1827
    %v1884 = vsub.f32 %v1733, %v1827
    %v1885 = vsub.f32 %v1735, %v1827
    %v1886 = vsub.f32 %v1738, %v1827
    %v1887 = vsub.f32 %v1740, %v1827
    %v1888 = vsub.f32 %v1743, %v1827
    %v1889 = vsub.f32 %v1745, %v1827
    %v1890 = vsub.f32 %v1748, %v1827
    %v1891 = vsub.f32 %v1750, %v1827
    %v1892 = vsub.f32 %v1753, %v1827
    %v1893 = vsub.f32 %v1755, %v1827
    %v1894 = vsub.f32 %v1758, %v1827
    %v1895 = vsub.f32 %v1760, %v1827
    %v1896 = vsub.f32 %v1763, %v1827
    %v1897 = vsub.f32 %v1765, %v1827
    %v1898 = vsub.f32 %v1768, %v1827
    %v1899 = vsub.f32 %v1770, %v1827
    %v1900 = vsub.f32 %v1773, %v1827
    %v1901 = vadd.f32 %v1879, 1e-05
    %v1902 = vrsqrt.pop %v1901
    %v1903 = vmul.f32 %v1902, %v1901
    %v1904 = vmul.f32 %v1903, %v1902
    %v1905 = vmul.f32 0.5, %v1904
    %v1906 = vsub.f32 1.5, %v1905
    %v1907 = vmul.f32 %v1902, %v1906
    %vm1908 = vweird.f32 %v1901
    %vm1909 = vweird.f32 %v1902
    %vm1910 = vmor %vm1908, %vm1909
    %v1911 = vsel %vm1910, %v1902, %v1907
    %v1912 = vmul.f32 %v1911, %v1776
    %v1913 = vmul.f32 %v1880, %v1912
    %v1914 = vmul.f32 %v1881, %v1912
    %v1915 = vmul.f32 %v1882, %v1912
    %v1916 = vmul.f32 %v1883, %v1912
    %v1917 = vmul.f32 %v1884, %v1912
    %v1918 = vmul.f32 %v1885, %v1912
    %v1919 = vmul.f32 %v1886, %v1912
    %v1920 = vmul.f32 %v1887, %v1912
    %v1921 = vmul.f32 %v1888, %v1912
    %v1922 = vmul.f32 %v1889, %v1912
    %v1923 = vmul.f32 %v1890, %v1912
    %v1924 = vmul.f32 %v1891, %v1912
    %v1925 = vmul.f32 %v1892, %v1912
    %v1926 = vmul.f32 %v1893, %v1912
    %v1927 = vmul.f32 %v1894, %v1912
    %v1928 = vmul.f32 %v1895, %v1912
    %v1929 = vmul.f32 %v1896, %v1912
    %v1930 = vmul.f32 %v1897, %v1912
    %v1931 = vmul.f32 %v1898, %v1912
    %v1932 = vmul.f32 %v1899, %v1912
    %v1933 = vmul.f32 %v1900, %v1912
    %v1934 = vadd.f32 %v1913, %v1777
    %v1935 = vadd.f32 %v1914, %v1777
    %v1936 = vadd.f32 %v1915, %v1777
    %v1937 = vadd.f32 %v1916, %v1777
    %v1938 = vadd.f32 %v1917, %v1777
    %v1939 = vadd.f32 %v1918, %v1777
    %v1940 = vadd.f32 %v1919, %v1777
    %v1941 = vadd.f32 %v1920, %v1777
    %v1942 = vadd.f32 %v1921, %v1777
    %v1943 = vadd.f32 %v1922, %v1777
    %v1944 = vadd.f32 %v1923, %v1777
    %v1945 = vadd.f32 %v1924, %v1777
    %v1946 = vadd.f32 %v1925, %v1777
    %v1947 = vadd.f32 %v1926, %v1777
    %v1948 = vadd.f32 %v1927, %v1777
    %v1949 = vadd.f32 %v1928, %v1777
    %v1950 = vadd.f32 %v1929, %v1777
    %v1951 = vadd.f32 %v1930, %v1777
    %v1952 = vadd.f32 %v1931, %v1777
    %v1953 = vadd.f32 %v1932, %v1777
    %v1954 = vadd.f32 %v1933, %v1777
    %v1955 = vmax.f32 %v1934, 0.0
    %v1956 = vmax.f32 %v1935, 0.0
    %v1957 = vmax.f32 %v1936, 0.0
    %v1958 = vmax.f32 %v1937, 0.0
    %v1959 = vmax.f32 %v1938, 0.0
    %v1960 = vmax.f32 %v1939, 0.0
    %v1961 = vmax.f32 %v1940, 0.0
    %v1962 = vmax.f32 %v1941, 0.0
    %v1963 = vmax.f32 %v1942, 0.0
    %v1964 = vmax.f32 %v1943, 0.0
    %v1965 = vmax.f32 %v1944, 0.0
    %v1966 = vmax.f32 %v1945, 0.0
    %v1967 = vmax.f32 %v1946, 0.0
    %v1968 = vmax.f32 %v1947, 0.0
    %v1969 = vmax.f32 %v1948, 0.0
    %v1970 = vmax.f32 %v1949, 0.0
    %v1971 = vmax.f32 %v1950, 0.0
    %v1972 = vmax.f32 %v1951, 0.0
    %v1973 = vmax.f32 %v1952, 0.0
    %v1974 = vmax.f32 %v1953, 0.0
    %v1975 = vmax.f32 %v1954, 0.0
    %v1976 = vmul.f32 %v1955, %v336
    %v1977 = vmul.f32 %v1956, %v341
    %v1978 = vmul.f32 %v1957, %v346
    %v1979 = vmul.f32 %v1958, %v351
    %v1980 = vmul.f32 %v1959, %v356
    %v1981 = vmul.f32 %v1960, %v361
    %v1982 = vmul.f32 %v1961, %v366
    %v1983 = vmul.f32 %v1962, %v371
    %v1984 = vmul.f32 %v1963, %v376
    %v1985 = vmul.f32 %v1964, %v381
    %v1986 = vmul.f32 %v1965, %v386
    %v1987 = vmul.f32 %v1966, %v391
    %v1988 = vmul.f32 %v1967, %v396
    %v1989 = vmul.f32 %v1968, %v401
    %v1990 = vmul.f32 %v1969, %v406
    %v1991 = vmul.f32 %v1970, %v411
    %v1992 = vmul.f32 %v1971, %v416
    %v1993 = vmul.f32 %v1972, %v421
    %v1994 = vmul.f32 %v1973, %v426
    %v1995 = vmul.f32 %v1974, %v431
    %v1996 = vmul.f32 %v1975, %v436
    %1997 = vst [vmem:[#allocation3] sm:$0xff] 0.0
    %1998 = vst [vmem:[#allocation3 + $0x8] sm:$0x3] 0.0
    %1999 = vst [vmem:[#allocation3 + $0xac] sm:$0xff] 0.0
    %2000 = vst [vmem:[#allocation3 + $0xb4] sm:$0x3] 0.0
    %2001 = vst [vmem:[#allocation3 + $0xa] sm:$0xff] %v1976
    %2002 = vst [vmem:[#allocation3 + $0x12] sm:$0xff] %v1977
    %2003 = vst [vmem:[#allocation3 + $0x1a] sm:$0xff] %v1978
    %2004 = vst [vmem:[#allocation3 + $0x22] sm:$0xff] %v1979
    %2005 = vst [vmem:[#allocation3 + $0x2a] sm:$0xff] %v1980
    %2006 = vst [vmem:[#allocation3 + $0x32] sm:$0xff] %v1981
    %2007 = vst [vmem:[#allocation3 + $0x3a] sm:$0xff] %v1982
    %2008 = vst [vmem:[#allocation3 + $0x42] sm:$0xff] %v1983
    %2009 = vst [vmem:[#allocation3 + $0x4a] sm:$0xff] %v1984
    %2010 = vst [vmem:[#allocation3 + $0x52] sm:$0xff] %v1985
    %2011 = vst [vmem:[#allocation3 + $0x5a] sm:$0xff] %v1986
    %2012 = vst [vmem:[#allocation3 + $0x62] sm:$0xff] %v1987
    %2013 = vst [vmem:[#allocation3 + $0x6a] sm:$0xff] %v1988
    %2014 = vst [vmem:[#allocation3 + $0x72] sm:$0xff] %v1989
    %2015 = vst [vmem:[#allocation3 + $0x7a] sm:$0xff] %v1990
    %2016 = vst [vmem:[#allocation3 + $0x82] sm:$0xff] %v1991
    %2017 = vst [vmem:[#allocation3 + $0x8a] sm:$0xff] %v1992
    %2018 = vst [vmem:[#allocation3 + $0x92] sm:$0xff] %v1993
    %2019 = vst [vmem:[#allocation3 + $0x9a] sm:$0xff] %v1994
    %2020 = vst [vmem:[#allocation3 + $0xa2] sm:$0xff] %v1995
    %2021 = vst [vmem:[#allocation3 + $0xaa] sm:$0x3] %v1996
    %v2022 = vld [vmem:[#allocation3] sm:$0xff]
    %v2023 = vld [vmem:[#allocation3 + $0x8] sm:$0xff]
    %v2024 = vld [vmem:[#allocation3 + $0x10] sm:$0xff]
    %v2025 = vld [vmem:[#allocation3 + $0x18] sm:$0xff]
    %v2026 = vld [vmem:[#allocation3 + $0x20] sm:$0xff]
    %v2027 = vld [vmem:[#allocation3 + $0x28] sm:$0xff]
    %v2028 = vld [vmem:[#allocation3 + $0x30] sm:$0xff]
    %v2029 = vld [vmem:[#allocation3 + $0x38] sm:$0xff]
    %v2030 = vld [vmem:[#allocation3 + $0x40] sm:$0xff]
    %v2031 = vld [vmem:[#allocation3 + $0x48] sm:$0xff]
    %v2032 = vld [vmem:[#allocation3 + $0x50] sm:$0xff]
    %v2033 = vld [vmem:[#allocation3 + $0x58] sm:$0xff]
    %v2034 = vld [vmem:[#allocation3 + $0x60] sm:$0xff]
    %v2035 = vld [vmem:[#allocation3 + $0x68] sm:$0xff]
    %v2036 = vld [vmem:[#allocation3 + $0x70] sm:$0xff]
    %v2037 = vld [vmem:[#allocation3 + $0x78] sm:$0xff]
    %v2038 = vld [vmem:[#allocation3 + $0x80] sm:$0xff]
    %v2039 = vld [vmem:[#allocation3 + $0x88] sm:$0xff]
    %v2040 = vld [vmem:[#allocation3 + $0x90] sm:$0xff]
    %v2041 = vld [vmem:[#allocation3 + $0x98] sm:$0xff]
    %v2042 = vld [vmem:[#allocation3 + $0xa0] sm:$0x3]
    %v2043 = vld [vmem:[#allocation3 + $0x1] sm:$0xff]
    %v2044 = vld [vmem:[#allocation3 + $0x9] sm:$0xff]
    %v2045 = vld [vmem:[#allocation3 + $0x11] sm:$0xff]
    %v2046 = vld [vmem:[#allocation3 + $0x19] sm:$0xff]
    %v2047 = vld [vmem:[#allocation3 + $0x21] sm:$0xff]
    %v2048 = vld [vmem:[#allocation3 + $0x29] sm:$0xff]
    %v2049 = vld [vmem:[#allocation3 + $0x31] sm:$0xff]
    %v2050 = vld [vmem:[#allocation3 + $0x39] sm:$0xff]
    %v2051 = vld [vmem:[#allocation3 + $0x41] sm:$0xff]
    %v2052 = vld [vmem:[#allocation3 + $0x49] sm:$0xff]
    %v2053 = vld [vmem:[#allocation3 + $0x51] sm:$0xff]
    %v2054 = vld [vmem:[#allocation3 + $0x59] sm:$0xff]
    %v2055 = vld [vmem:[#allocation3 + $0x61] sm:$0xff]
    %v2056 = vld [vmem:[#allocation3 + $0x69] sm:$0xff]
    %v2057 = vld [vmem:[#allocation3 + $0x71] sm:$0xff]
    %v2058 = vld [vmem:[#allocation3 + $0x79] sm:$0xff]
    %v2059 = vld [vmem:[#allocation3 + $0x81] sm:$0xff]
    %v2060 = vld [vmem:[#allocation3 + $0x89] sm:$0xff]
    %v2061 = vld [vmem:[#allocation3 + $0x91] sm:$0xff]
    %v2062 = vld [vmem:[#allocation3 + $0x99] sm:$0xff]
    %v2063 = vld [vmem:[#allocation3 + $0xa1] sm:$0x3]
    %v2064 = vld [vmem:[#allocation3 + $0x2] sm:$0xff]
    %v2065 = vld [vmem:[#allocation3 + $0xa] sm:$0xff]
    %v2066 = vld [vmem:[#allocation3 + $0x12] sm:$0xff]
    %v2067 = vld [vmem:[#allocation3 + $0x1a] sm:$0xff]
    %v2068 = vld [vmem:[#allocation3 + $0x22] sm:$0xff]
    %v2069 = vld [vmem:[#allocation3 + $0x2a] sm:$0xff]
    %v2070 = vld [vmem:[#allocation3 + $0x32] sm:$0xff]
    %v2071 = vld [vmem:[#allocation3 + $0x3a] sm:$0xff]
    %v2072 = vld [vmem:[#allocation3 + $0x42] sm:$0xff]
    %v2073 = vld [vmem:[#allocation3 + $0x4a] sm:$0xff]
    %v2074 = vld [vmem:[#allocation3 + $0x52] sm:$0xff]
    %v2075 = vld [vmem:[#allocation3 + $0x5a] sm:$0xff]
    %v2076 = vld [vmem:[#allocation3 + $0x62] sm:$0xff]
    %v2077 = vld [vmem:[#allocation3 + $0x6a] sm:$0xff]
    %v2078 = vld [vmem:[#allocation3 + $0x72] sm:$0xff]
    %v2079 = vld [vmem:[#allocation3 + $0x7a] sm:$0xff]
    %v2080 = vld [vmem:[#allocation3 + $0x82] sm:$0xff]
    %v2081 = vld [vmem:[#allocation3 + $0x8a] sm:$0xff]
    %v2082 = vld [vmem:[#allocation3 + $0x92] sm:$0xff]
    %v2083 = vld [vmem:[#allocation3 + $0x9a] sm:$0xff]
    %v2084 = vld [vmem:[#allocation3 + $0xa2] sm:$0x3]
    %v2085 = vld [vmem:[#allocation3 + $0xa1] sm:$0xff]
    %v2086 = vld [vmem:[#allocation3 + $0xa9] sm:$0x3]
    %v2087 = vld [vmem:[#allocation3 + $0xa2] sm:$0xff]
    %v2088 = vld [vmem:[#allocation3 + $0xaa] sm:$0x3]
    %v2089 = vld [vmem:[#allocation3 + $0xb] sm:$0xff]
    %v2090 = vld [vmem:[#allocation3 + $0x13] sm:$0xff]
    %v2091 = vld [vmem:[#allocation3 + $0x1b] sm:$0xff]
    %v2092 = vld [vmem:[#allocation3 + $0x23] sm:$0xff]
    %v2093 = vld [vmem:[#allocation3 + $0x2b] sm:$0xff]
    %v2094 = vld [vmem:[#allocation3 + $0x33] sm:$0xff]
    %v2095 = vld [vmem:[#allocation3 + $0x3b] sm:$0xff]
    %v2096 = vld [vmem:[#allocation3 + $0x43] sm:$0xff]
    %v2097 = vld [vmem:[#allocation3 + $0x4b] sm:$0xff]
    %v2098 = vld [vmem:[#allocation3 + $0x53] sm:$0xff]
    %v2099 = vld [vmem:[#allocation3 + $0x5b] sm:$0xff]
    %v2100 = vld [vmem:[#allocation3 + $0x63] sm:$0xff]
    %v2101 = vld [vmem:[#allocation3 + $0x6b] sm:$0xff]
    %v2102 = vld [vmem:[#allocation3 + $0x73] sm:$0xff]
    %v2103 = vld [vmem:[#allocation3 + $0x7b] sm:$0xff]
    %v2104 = vld [vmem:[#allocation3 + $0x83] sm:$0xff]
    %v2105 = vld [vmem:[#allocation3 + $0x8b] sm:$0xff]
    %v2106 = vld [vmem:[#allocation3 + $0x93] sm:$0xff]
    %v2107 = vld [vmem:[#allocation3 + $0x9b] sm:$0xff]
    %v2108 = vld [vmem:[#allocation3 + $0xa3] sm:$0xff]
    %v2109 = vld [vmem:[#allocation3 + $0xab] sm:$0x3]
    %v2110 = vld [vmem:[#allocation3 + $0xaa] sm:$0xff]
    %v2111 = vld [vmem:[#allocation3 + $0xb2] sm:$0x3]
    %v2112 = vld [vmem:[#allocation3 + $0xab] sm:$0xff]
    %v2113 = vld [vmem:[#allocation3 + $0xb3] sm:$0x3]
    %v2114 = vld [vmem:[#allocation3 + $0x14] sm:$0xff]
    %v2115 = vld [vmem:[#allocation3 + $0x1c] sm:$0xff]
    %v2116 = vld [vmem:[#allocation3 + $0x24] sm:$0xff]
    %v2117 = vld [vmem:[#allocation3 + $0x2c] sm:$0xff]
    %v2118 = vld [vmem:[#allocation3 + $0x34] sm:$0xff]
    %v2119 = vld [vmem:[#allocation3 + $0x3c] sm:$0xff]
    %v2120 = vld [vmem:[#allocation3 + $0x44] sm:$0xff]
    %v2121 = vld [vmem:[#allocation3 + $0x4c] sm:$0xff]
    %v2122 = vld [vmem:[#allocation3 + $0x54] sm:$0xff]
    %v2123 = vld [vmem:[#allocation3 + $0x5c] sm:$0xff]
    %v2124 = vld [vmem:[#allocation3 + $0x64] sm:$0xff]
    %v2125 = vld [vmem:[#allocation3 + $0x6c] sm:$0xff]
    %v2126 = vld [vmem:[#allocation3 + $0x74] sm:$0xff]
    %v2127 = vld [vmem:[#allocation3 + $0x7c] sm:$0xff]
    %v2128 = vld [vmem:[#allocation3 + $0x84] sm:$0xff]
    %v2129 = vld [vmem:[#allocation3 + $0x8c] sm:$0xff]
    %v2130 = vld [vmem:[#allocation3 + $0x94] sm:$0xff]
    %v2131 = vld [vmem:[#allocation3 + $0x9c] sm:$0xff]
    %v2132 = vld [vmem:[#allocation3 + $0xa4] sm:$0xff]
    %v2133 = vld [vmem:[#allocation3 + $0xac] sm:$0xff]
    %v2134 = vld [vmem:[#allocation3 + $0xb4] sm:$0x3]
    %v2135 = vpack.c.bf16 %v2023, %v2022
    %v2136 = vpack.c.bf16 %v2044, %v2043
    %v2137 = vpack.c.bf16 %v2065, %v2064
    %v2138 = vpack.c.bf16 %v2045, %v2044
    %v2139 = vpack.c.bf16 %v2066, %v2065
    %v2140 = vpack.c.bf16 %v2090, %v2089
    %v2141 = vpack.c.bf16 %v2067, %v2066
    %v2142 = vpack.c.bf16 %v2091, %v2090
    %v2143 = vpack.c.bf16 %v2115, %v2114
    %v2144 = vpack.c.bf16 %v2025, %v2024
    %v2145 = vpack.c.bf16 %v2046, %v2045
    %v2146 = vpack.c.bf16 %v2047, %v2046
    %v2147 = vpack.c.bf16 %v2068, %v2067
    %v2148 = vpack.c.bf16 %v2092, %v2091
    %v2149 = vpack.c.bf16 %v2069, %v2068
    %v2150 = vpack.c.bf16 %v2093, %v2092
    %v2151 = vpack.c.bf16 %v2117, %v2116
    %v2152 = vpack.c.bf16 %v2027, %v2026
    %v2153 = vpack.c.bf16 %v2048, %v2047
    %v2154 = vpack.c.bf16 %v2049, %v2048
    %v2155 = vpack.c.bf16 %v2070, %v2069
    %v2156 = vpack.c.bf16 %v2094, %v2093
    %v2157 = vpack.c.bf16 %v2071, %v2070
    %v2158 = vpack.c.bf16 %v2095, %v2094
    %v2159 = vpack.c.bf16 %v2119, %v2118
    %v2160 = vpack.c.bf16 %v2029, %v2028
    %v2161 = vpack.c.bf16 %v2050, %v2049
    %v2162 = vpack.c.bf16 %v2051, %v2050
    %v2163 = vpack.c.bf16 %v2072, %v2071
    %v2164 = vpack.c.bf16 %v2096, %v2095
    %v2165 = vpack.c.bf16 %v2073, %v2072
    %v2166 = vpack.c.bf16 %v2097, %v2096
    %v2167 = vpack.c.bf16 %v2121, %v2120
    %v2168 = vpack.c.bf16 %v2031, %v2030
    %v2169 = vpack.c.bf16 %v2052, %v2051
    %v2170 = vpack.c.bf16 %v2053, %v2052
    %v2171 = vpack.c.bf16 %v2074, %v2073
    %v2172 = vpack.c.bf16 %v2098, %v2097
    %v2173 = vpack.c.bf16 %v2075, %v2074
    %v2174 = vpack.c.bf16 %v2099, %v2098
    %v2175 = vpack.c.bf16 %v2123, %v2122
    %v2176 = vpack.c.bf16 %v2033, %v2032
    %v2177 = vpack.c.bf16 %v2054, %v2053
    %v2178 = vpack.c.bf16 %v2055, %v2054
    %v2179 = vpack.c.bf16 %v2076, %v2075
    %v2180 = vpack.c.bf16 %v2100, %v2099
    %v2181 = vpack.c.bf16 %v2077, %v2076
    %v2182 = vpack.c.bf16 %v2101, %v2100
    %v2183 = vpack.c.bf16 %v2125, %v2124
    %v2184 = vpack.c.bf16 %v2035, %v2034
    %v2185 = vpack.c.bf16 %v2056, %v2055
    %v2186 = vpack.c.bf16 %v2057, %v2056
    %v2187 = vpack.c.bf16 %v2078, %v2077
    %v2188 = vpack.c.bf16 %v2102, %v2101
    %v2189 = vpack.c.bf16 %v2079, %v2078
    %v2190 = vpack.c.bf16 %v2103, %v2102
    %v2191 = vpack.c.bf16 %v2127, %v2126
    %v2192 = vpack.c.bf16 %v2037, %v2036
    %v2193 = vpack.c.bf16 %v2058, %v2057
    %v2194 = vpack.c.bf16 %v2059, %v2058
    %v2195 = vpack.c.bf16 %v2080, %v2079
    %v2196 = vpack.c.bf16 %v2104, %v2103
    %v2197 = vpack.c.bf16 %v2081, %v2080
    %v2198 = vpack.c.bf16 %v2105, %v2104
    %v2199 = vpack.c.bf16 %v2129, %v2128
    %v2200 = vpack.c.bf16 %v2039, %v2038
    %v2201 = vpack.c.bf16 %v2060, %v2059
    %v2202 = vpack.c.bf16 %v2061, %v2060
    %v2203 = vpack.c.bf16 %v2082, %v2081
    %v2204 = vpack.c.bf16 %v2106, %v2105
    %v2205 = vpack.c.bf16 %v2083, %v2082
    %v2206 = vpack.c.bf16 %v2107, %v2106
    %v2207 = vpack.c.bf16 %v2131, %v2130
    %v2208 = vpack.c.bf16 %v2041, %v2040
    %v2209 = vpack.c.bf16 %v2062, %v2061
    %v2210 = vpack.c.bf16 %v2085, %v2062
    %v2211 = vpack.c.bf16 %v2087, %v2083
    %v2212 = vpack.c.bf16 %v2108, %v2107
    %v2213 = vpack.c.bf16 %v2110, %v2087
    %v2214 = vpack.c.bf16 %v2112, %v2108
    %v2215 = vpack.c.bf16 %v2133, %v2132
    %v2216 = vpack.c.bf16 %v2042, %v2042
    %v2217 = vpack.c.bf16 %v2063, %v2063
    %v2218 = vpack.c.bf16 %v2084, %v2084
    %v2219 = vpack.c.bf16 %v2086, %v2086
    %v2220 = vpack.c.bf16 %v2088, %v2088
    %v2221 = vpack.c.bf16 %v2109, %v2109
    %v2222 = vpack.c.bf16 %v2111, %v2111
    %v2223 = vpack.c.bf16 %v2113, %v2113
    %v2224 = vpack.c.bf16 %v2134, %v2134
    %v2225 = vld [vmem:[#allocation11] sm:$0xff]
    %v2226 = vld [vmem:[#allocation11 + $0x8] sm:$0xff]
    %v2227 = vld [vmem:[#allocation11 + $0x10] sm:$0xff]
    %v2228 = vld [vmem:[#allocation11 + $0x18] sm:$0xff]
    %v2229 = vld [vmem:[#allocation11 + $0x20] sm:$0xff]
    %v2230 = vld [vmem:[#allocation11 + $0x28] sm:$0xff]
    %v2231 = vld [vmem:[#allocation11 + $0x30] sm:$0xff]
    %v2232 = vld [vmem:[#allocation11 + $0x38] sm:$0xff]
    %v2233 = vld [vmem:[#allocation11 + $0x40] sm:$0xff]
    %v2234 = vld [vmem:[#allocation11 + $0x48] sm:$0xff]
    %v2235 = vld [vmem:[#allocation11 + $0x50] sm:$0xff]
    %v2236 = vld [vmem:[#allocation11 + $0x58] sm:$0xff]
    %v2237 = vld [vmem:[#allocation11 + $0x60] sm:$0xff]
    %v2238 = vld [vmem:[#allocation11 + $0x68] sm:$0xff]
    %v2239 = vld [vmem:[#allocation11 + $0x70] sm:$0xff]
    %v2240 = vld [vmem:[#allocation11 + $0x78] sm:$0xff]
    %v2241 = vld [vmem:[#allocation11 + $0x80] sm:$0xff]
    %v2242 = vld [vmem:[#allocation11 + $0x88] sm:$0xff]
    %v2243 = vld [vmem:[#allocation11 + $0x90] sm:$0xff]
    %v2244 = vld [vmem:[#allocation11 + $0x98] sm:$0xff]
    %v2245 = vld [vmem:[#allocation11 + $0xa0] sm:$0xff]
    %v2246 = vld [vmem:[#allocation11 + $0xa8] sm:$0xff]
    %v2247 = vld [vmem:[#allocation11 + $0xb0] sm:$0xff]
    %v2248 = vld [vmem:[#allocation11 + $0xb8] sm:$0xff]
    %v2249 = vld [vmem:[#allocation11 + $0xc0] sm:$0xff]
    %v2250 = vld [vmem:[#allocation11 + $0xc8] sm:$0xff]
    %v2251 = vld [vmem:[#allocation11 + $0xd0] sm:$0xff]
    %v2252 = vld [vmem:[#allocation11 + $0xd8] sm:$0xff]
    %v2253 = vld [vmem:[#allocation11 + $0xe0] sm:$0xff]
    %v2254 = vld [vmem:[#allocation11 + $0xe8] sm:$0xff]
    %v2255 = vld [vmem:[#allocation11 + $0xf0] sm:$0xff]
    %v2256 = vld [vmem:[#allocation11 + $0xf8] sm:$0xff]
    %v2257 = vld [vmem:[#allocation11 + $0x100] sm:$0xff]
    %v2258 = vld [vmem:[#allocation11 + $0x108] sm:$0xff]
    %v2259 = vld [vmem:[#allocation11 + $0x110] sm:$0xff]
    %v2260 = vld [vmem:[#allocation11 + $0x118] sm:$0xff]
    %v2261 = vld [vmem:[#allocation11 + $0x120] sm:$0xff]
    %v2262 = vld [vmem:[#allocation11 + $0x128] sm:$0xff]
    %v2263 = vld [vmem:[#allocation11 + $0x130] sm:$0xff]
    %v2264 = vld [vmem:[#allocation11 + $0x138] sm:$0xff]
    %v2265 = vld [vmem:[#allocation11 + $0x140] sm:$0xff]
    %v2266 = vld [vmem:[#allocation11 + $0x148] sm:$0xff]
    %v2267 = vld [vmem:[#allocation11 + $0x150] sm:$0xff]
    %v2268 = vld [vmem:[#allocation11 + $0x158] sm:$0xff]
    %v2269 = vld [vmem:[#allocation11 + $0x160] sm:$0xff]
    %v2270 = vld [vmem:[#allocation11 + $0x168] sm:$0xff]
    %v2271 = vld [vmem:[#allocation11 + $0x170] sm:$0xff]
    %v2272 = vld [vmem:[#allocation11 + $0x178] sm:$0xff]
    %v2273 = vld [vmem:[#allocation11 + $0x180] sm:$0xff]
    %v2274 = vld [vmem:[#allocation11 + $0x188] sm:$0xff]
    %v2275 = vld [vmem:[#allocation11 + $0x190] sm:$0xff]
    %v2276 = vld [vmem:[#allocation11 + $0x198] sm:$0xff]
    %v2277 = vld [vmem:[#allocation11 + $0x1a0] sm:$0xff]
    %v2278 = vld [vmem:[#allocation11 + $0x1a8] sm:$0xff]
    %v2279 = vld [vmem:[#allocation11 + $0x1b0] sm:$0xff]
    %v2280 = vld [vmem:[#allocation11 + $0x1b8] sm:$0xff]
    %v2281 = vld [vmem:[#allocation11 + $0x1c0] sm:$0xff]
    %v2282 = vld [vmem:[#allocation11 + $0x1c8] sm:$0xff]
    %v2283 = vld [vmem:[#allocation11 + $0x1d0] sm:$0xff]
    %v2284 = vld [vmem:[#allocation11 + $0x1d8] sm:$0xff]
    %v2285 = vld [vmem:[#allocation11 + $0x1e0] sm:$0xff]
    %v2286 = vld [vmem:[#allocation11 + $0x1e8] sm:$0xff]
    %v2287 = vld [vmem:[#allocation11 + $0x1f0] sm:$0xff]
    %v2288 = vld [vmem:[#allocation11 + $0x1f8] sm:$0xff]
    %v2289 = vld [vmem:[#allocation11 + $0x200] sm:$0xff]
    %v2290 = vld [vmem:[#allocation11 + $0x208] sm:$0xff]
    %v2291 = vld [vmem:[#allocation11 + $0x210] sm:$0xff]
    %v2292 = vld [vmem:[#allocation11 + $0x218] sm:$0xff]
    %v2293 = vld [vmem:[#allocation11 + $0x220] sm:$0xff]
    %v2294 = vld [vmem:[#allocation11 + $0x228] sm:$0xff]
    %v2295 = vld [vmem:[#allocation11 + $0x230] sm:$0xff]
    %v2296 = vld [vmem:[#allocation11 + $0x238] sm:$0xff]
    %v2297 = vld [vmem:[#allocation11 + $0x240] sm:$0xff]
    %v2298 = vld [vmem:[#allocation11 + $0x248] sm:$0xff]
    %v2299 = vld [vmem:[#allocation11 + $0x250] sm:$0xff]
    %v2300 = vld [vmem:[#allocation11 + $0x258] sm:$0xff]
    %v2301 = vld [vmem:[#allocation11 + $0x260] sm:$0xff]
    %v2302 = vld [vmem:[#allocation11 + $0x268] sm:$0xff]
    %v2303 = vld [vmem:[#allocation11 + $0x270] sm:$0xff]
    %v2304 = vld [vmem:[#allocation11 + $0x278] sm:$0xff]
    %v2305 = vld [vmem:[#allocation11 + $0x280] sm:$0xff]
    %v2306 = vld [vmem:[#allocation11 + $0x288] sm:$0xff]
    %v2307 = vld [vmem:[#allocation11 + $0x290] sm:$0xff]
    %v2308 = vld [vmem:[#allocation11 + $0x298] sm:$0xff]
    %v2309 = vld [vmem:[#allocation11 + $0x2a0] sm:$0xff]
    %v2310 = vld [vmem:[#allocation11 + $0x2a8] sm:$0xff]
    %v2311 = vld [vmem:[#allocation11 + $0x2b0] sm:$0xff]
    %v2312 = vld [vmem:[#allocation11 + $0x2b8] sm:$0xff]
    %v2313 = vld [vmem:[#allocation11 + $0x2c0] sm:$0xff]
    %v2314 = vld [vmem:[#allocation11 + $0x2c8] sm:$0xff]
    %v2315 = vld [vmem:[#allocation11 + $0x2d0] sm:$0xff]
    %v2316 = vld [vmem:[#allocation11 + $0x2d8] sm:$0xff]
    %v2317 = vld [vmem:[#allocation11 + $0x2e0] sm:$0xff]
    %v2318 = vld [vmem:[#allocation11 + $0x2e8] sm:$0xff]
    %v2319 = vld [vmem:[#allocation11 + $0x2f0] sm:$0xff]
    %v2320 = vld [vmem:[#allocation11 + $0x2f8] sm:$0xff]
    %v2321 = vld [vmem:[#allocation11 + $0x300] sm:$0xff]
    %v2322 = vld [vmem:[#allocation11 + $0x308] sm:$0xff]
    %v2323 = vld [vmem:[#allocation11 + $0x310] sm:$0xff]
    %v2324 = vld [vmem:[#allocation11 + $0x318] sm:$0xff]
    %v2325 = vld [vmem:[#allocation11 + $0x320] sm:$0xff]
    %v2326 = vld [vmem:[#allocation11 + $0x328] sm:$0xff]
    %v2327 = vld [vmem:[#allocation11 + $0x330] sm:$0xff]
    %v2328 = vld [vmem:[#allocation11 + $0x338] sm:$0xff]
    %v2329 = vld [vmem:[#allocation11 + $0x340] sm:$0xff]
    %v2330 = vld [vmem:[#allocation11 + $0x348] sm:$0xff]
    %v2331 = vld [vmem:[#allocation11 + $0x350] sm:$0xff]
    %v2332 = vld [vmem:[#allocation11 + $0x358] sm:$0xff]
    %v2333 = vld [vmem:[#allocation11 + $0x360] sm:$0xff]
    %v2334 = vld [vmem:[#allocation11 + $0x368] sm:$0xff]
    %v2335 = vld [vmem:[#allocation11 + $0x370] sm:$0xff]
    %v2336 = vld [vmem:[#allocation11 + $0x378] sm:$0xff]
    %v2337 = vld [vmem:[#allocation11 + $0x380] sm:$0xff]
    %v2338 = vld [vmem:[#allocation11 + $0x388] sm:$0xff]
    %v2339 = vld [vmem:[#allocation11 + $0x390] sm:$0xff]
    %v2340 = vld [vmem:[#allocation11 + $0x398] sm:$0xff]
    %v2341 = vld [vmem:[#allocation11 + $0x3a0] sm:$0xff]
    %v2342 = vld [vmem:[#allocation11 + $0x3a8] sm:$0xff]
    %v2343 = vld [vmem:[#allocation11 + $0x3b0] sm:$0xff]
    %v2344 = vld [vmem:[#allocation11 + $0x3b8] sm:$0xff]
    %v2345 = vld [vmem:[#allocation11 + $0x3c0] sm:$0xff]
    %v2346 = vld [vmem:[#allocation11 + $0x3c8] sm:$0xff]
    %v2347 = vld [vmem:[#allocation11 + $0x3d0] sm:$0xff]
    %v2348 = vld [vmem:[#allocation11 + $0x3d8] sm:$0xff]
    %v2349 = vld [vmem:[#allocation11 + $0x3e0] sm:$0xff]
    %v2350 = vld [vmem:[#allocation11 + $0x3e8] sm:$0xff]
    %v2351 = vld [vmem:[#allocation11 + $0x3f0] sm:$0xff]
    %v2352 = vld [vmem:[#allocation11 + $0x3f8] sm:$0xff]
    %v2353 = vld [vmem:[#allocation11 + $0x400] sm:$0xff]
    %v2354 = vld [vmem:[#allocation11 + $0x408] sm:$0xff]
    %v2355 = vld [vmem:[#allocation11 + $0x410] sm:$0xff]
    %v2356 = vld [vmem:[#allocation11 + $0x418] sm:$0xff]
    %v2357 = vld [vmem:[#allocation11 + $0x420] sm:$0xff]
    %v2358 = vld [vmem:[#allocation11 + $0x428] sm:$0xff]
    %v2359 = vld [vmem:[#allocation11 + $0x430] sm:$0xff]
    %v2360 = vld [vmem:[#allocation11 + $0x438] sm:$0xff]
    %v2361 = vld [vmem:[#allocation11 + $0x440] sm:$0xff]
    %v2362 = vld [vmem:[#allocation11 + $0x448] sm:$0xff]
    %v2363 = vld [vmem:[#allocation11 + $0x450] sm:$0xff]
    %v2364 = vld [vmem:[#allocation11 + $0x458] sm:$0xff]
    %v2365 = vld [vmem:[#allocation11 + $0x460] sm:$0xff]
    %v2366 = vld [vmem:[#allocation11 + $0x468] sm:$0xff]
    %v2367 = vld [vmem:[#allocation11 + $0x470] sm:$0xff]
    %v2368 = vld [vmem:[#allocation11 + $0x478] sm:$0xff]
    %v2513 = vunpack.c.l.b16 %v2225
    %v2514 = vunpack.c.h.b16 %v2225
    %v2515 = vunpack.c.l.b16 %v2226
    %v2516 = vunpack.c.h.b16 %v2226
    %v2517 = vunpack.c.l.b16 %v2227
    %v2518 = vunpack.c.h.b16 %v2227
    %v2519 = vunpack.c.l.b16 %v2228
    %v2520 = vunpack.c.h.b16 %v2228
    %v2521 = vunpack.c.l.b16 %v2229
    %v2522 = vunpack.c.h.b16 %v2229
    %v2523 = vunpack.c.l.b16 %v2230
    %v2524 = vunpack.c.h.b16 %v2230
    %v2525 = vunpack.c.l.b16 %v2231
    %v2526 = vunpack.c.h.b16 %v2231
    %v2527 = vunpack.c.l.b16 %v2232
    %v2528 = vunpack.c.h.b16 %v2232
    %v2529 = vunpack.c.l.b16 %v2233
    %v2530 = vunpack.c.h.b16 %v2233
    %v2531 = vunpack.c.l.b16 %v2234
    %v2532 = vunpack.c.h.b16 %v2234
    %v2533 = vunpack.c.l.b16 %v2235
    %v2534 = vunpack.c.h.b16 %v2235
    %v2535 = vunpack.c.l.b16 %v2236
    %v2536 = vunpack.c.h.b16 %v2236
    %v2537 = vunpack.c.l.b16 %v2237
    %v2538 = vunpack.c.h.b16 %v2237
    %v2539 = vunpack.c.l.b16 %v2238
    %v2540 = vunpack.c.h.b16 %v2238
    %v2541 = vunpack.c.l.b16 %v2239
    %v2542 = vunpack.c.h.b16 %v2239
    %v2543 = vunpack.c.l.b16 %v2240
    %v2544 = vunpack.c.h.b16 %v2240
    %v2545 = vunpack.c.l.b16 %v2241
    %v2546 = vunpack.c.h.b16 %v2241
    %v2547 = vunpack.c.l.b16 %v2242
    %v2548 = vunpack.c.h.b16 %v2242
    %v2549 = vunpack.c.l.b16 %v2243
    %v2550 = vunpack.c.h.b16 %v2243
    %v2551 = vunpack.c.l.b16 %v2244
    %v2552 = vunpack.c.h.b16 %v2244
    %v2553 = vunpack.c.l.b16 %v2245
    %v2554 = vunpack.c.h.b16 %v2245
    %v2555 = vunpack.c.l.b16 %v2246
    %v2556 = vunpack.c.h.b16 %v2246
    %v2557 = vunpack.c.l.b16 %v2247
    %v2558 = vunpack.c.h.b16 %v2247
    %v2559 = vunpack.c.l.b16 %v2248
    %v2560 = vunpack.c.h.b16 %v2248
    %v2561 = vunpack.c.l.b16 %v2249
    %v2562 = vunpack.c.h.b16 %v2249
    %v2563 = vunpack.c.l.b16 %v2250
    %v2564 = vunpack.c.h.b16 %v2250
    %v2565 = vunpack.c.l.b16 %v2251
    %v2566 = vunpack.c.h.b16 %v2251
    %v2567 = vunpack.c.l.b16 %v2252
    %v2568 = vunpack.c.h.b16 %v2252
    %v2569 = vunpack.c.l.b16 %v2253
    %v2570 = vunpack.c.h.b16 %v2253
    %v2571 = vunpack.c.l.b16 %v2254
    %v2572 = vunpack.c.h.b16 %v2254
    %v2573 = vunpack.c.l.b16 %v2255
    %v2574 = vunpack.c.h.b16 %v2255
    %v2575 = vunpack.c.l.b16 %v2256
    %v2576 = vunpack.c.h.b16 %v2256
    %v2577 = vunpack.c.l.b16 %v2257
    %v2578 = vunpack.c.h.b16 %v2257
    %v2579 = vunpack.c.l.b16 %v2258
    %v2580 = vunpack.c.h.b16 %v2258
    %v2581 = vunpack.c.l.b16 %v2259
    %v2582 = vunpack.c.h.b16 %v2259
    %v2583 = vunpack.c.l.b16 %v2260
    %v2584 = vunpack.c.h.b16 %v2260
    %v2585 = vunpack.c.l.b16 %v2261
    %v2586 = vunpack.c.h.b16 %v2261
    %v2587 = vunpack.c.l.b16 %v2262
    %v2588 = vunpack.c.h.b16 %v2262
    %v2589 = vunpack.c.l.b16 %v2263
    %v2590 = vunpack.c.h.b16 %v2263
    %v2591 = vunpack.c.l.b16 %v2264
    %v2592 = vunpack.c.h.b16 %v2264
    %v2593 = vunpack.c.l.b16 %v2265
    %v2594 = vunpack.c.h.b16 %v2265
    %v2595 = vunpack.c.l.b16 %v2266
    %v2596 = vunpack.c.h.b16 %v2266
    %v2597 = vunpack.c.l.b16 %v2267
    %v2598 = vunpack.c.h.b16 %v2267
    %v2599 = vunpack.c.l.b16 %v2268
    %v2600 = vunpack.c.h.b16 %v2268
    %v2601 = vunpack.c.l.b16 %v2269
    %v2602 = vunpack.c.h.b16 %v2269
    %v2603 = vunpack.c.l.b16 %v2270
    %v2604 = vunpack.c.h.b16 %v2270
    %v2605 = vunpack.c.l.b16 %v2271
    %v2606 = vunpack.c.h.b16 %v2271
    %v2607 = vunpack.c.l.b16 %v2272
    %v2608 = vunpack.c.h.b16 %v2272
    %v2609 = vunpack.c.l.b16 %v2273
    %v2610 = vunpack.c.h.b16 %v2273
    %v2611 = vunpack.c.l.b16 %v2274
    %v2612 = vunpack.c.h.b16 %v2274
    %v2613 = vunpack.c.l.b16 %v2275
    %v2614 = vunpack.c.h.b16 %v2275
    %v2615 = vunpack.c.l.b16 %v2276
    %v2616 = vunpack.c.h.b16 %v2276
    %v2617 = vunpack.c.l.b16 %v2277
    %v2618 = vunpack.c.h.b16 %v2277
    %v2619 = vunpack.c.l.b16 %v2278
    %v2620 = vunpack.c.h.b16 %v2278
    %v2621 = vunpack.c.l.b16 %v2279
    %v2622 = vunpack.c.h.b16 %v2279
    %v2623 = vunpack.c.l.b16 %v2280
    %v2624 = vunpack.c.h.b16 %v2280
    %v2625 = vunpack.c.l.b16 %v2281
    %v2626 = vunpack.c.h.b16 %v2281
    %v2627 = vunpack.c.l.b16 %v2282
    %v2628 = vunpack.c.h.b16 %v2282
    %v2629 = vunpack.c.l.b16 %v2283
    %v2630 = vunpack.c.h.b16 %v2283
    %v2631 = vunpack.c.l.b16 %v2284
    %v2632 = vunpack.c.h.b16 %v2284
    %v2633 = vunpack.c.l.b16 %v2285
    %v2634 = vunpack.c.h.b16 %v2285
    %v2635 = vunpack.c.l.b16 %v2286
    %v2636 = vunpack.c.h.b16 %v2286
    %v2637 = vunpack.c.l.b16 %v2287
    %v2638 = vunpack.c.h.b16 %v2287
    %v2639 = vunpack.c.l.b16 %v2288
    %v2640 = vunpack.c.h.b16 %v2288
    %v2641 = vunpack.c.l.b16 %v2289
    %v2642 = vunpack.c.h.b16 %v2289
    %v2643 = vunpack.c.l.b16 %v2290
    %v2644 = vunpack.c.h.b16 %v2290
    %v2645 = vunpack.c.l.b16 %v2291
    %v2646 = vunpack.c.h.b16 %v2291
    %v2647 = vunpack.c.l.b16 %v2292
    %v2648 = vunpack.c.h.b16 %v2292
    %v2649 = vunpack.c.l.b16 %v2293
    %v2650 = vunpack.c.h.b16 %v2293
    %v2651 = vunpack.c.l.b16 %v2294
    %v2652 = vunpack.c.h.b16 %v2294
    %v2653 = vunpack.c.l.b16 %v2295
    %v2654 = vunpack.c.h.b16 %v2295
    %v2655 = vunpack.c.l.b16 %v2296
    %v2656 = vunpack.c.h.b16 %v2296
    %v2657 = vunpack.c.l.b16 %v2297
    %v2658 = vunpack.c.h.b16 %v2297
    %v2659 = vunpack.c.l.b16 %v2298
    %v2660 = vunpack.c.h.b16 %v2298
    %v2661 = vunpack.c.l.b16 %v2299
    %v2662 = vunpack.c.h.b16 %v2299
    %v2663 = vunpack.c.l.b16 %v2300
    %v2664 = vunpack.c.h.b16 %v2300
    %v2665 = vunpack.c.l.b16 %v2301
    %v2666 = vunpack.c.h.b16 %v2301
    %v2667 = vunpack.c.l.b16 %v2302
    %v2668 = vunpack.c.h.b16 %v2302
    %v2669 = vunpack.c.l.b16 %v2303
    %v2670 = vunpack.c.h.b16 %v2303
    %v2671 = vunpack.c.l.b16 %v2304
    %v2672 = vunpack.c.h.b16 %v2304
    %v2673 = vunpack.c.l.b16 %v2305
    %v2674 = vunpack.c.h.b16 %v2305
    %v2675 = vunpack.c.l.b16 %v2306
    %v2676 = vunpack.c.h.b16 %v2306
    %v2677 = vunpack.c.l.b16 %v2307
    %v2678 = vunpack.c.h.b16 %v2307
    %v2679 = vunpack.c.l.b16 %v2308
    %v2680 = vunpack.c.h.b16 %v2308
    %v2681 = vunpack.c.l.b16 %v2309
    %v2682 = vunpack.c.h.b16 %v2309
    %v2683 = vunpack.c.l.b16 %v2310
    %v2684 = vunpack.c.h.b16 %v2310
    %v2685 = vunpack.c.l.b16 %v2311
    %v2686 = vunpack.c.h.b16 %v2311
    %v2687 = vunpack.c.l.b16 %v2312
    %v2688 = vunpack.c.h.b16 %v2312
    %v2689 = vunpack.c.l.b16 %v2313
    %v2690 = vunpack.c.h.b16 %v2313
    %v2691 = vunpack.c.l.b16 %v2314
    %v2692 = vunpack.c.h.b16 %v2314
    %v2693 = vunpack.c.l.b16 %v2315
    %v2694 = vunpack.c.h.b16 %v2315
    %v2695 = vunpack.c.l.b16 %v2316
    %v2696 = vunpack.c.h.b16 %v2316
    %v2697 = vunpack.c.l.b16 %v2317
    %v2698 = vunpack.c.h.b16 %v2317
    %v2699 = vunpack.c.l.b16 %v2318
    %v2700 = vunpack.c.h.b16 %v2318
    %v2701 = vunpack.c.l.b16 %v2319
    %v2702 = vunpack.c.h.b16 %v2319
    %v2703 = vunpack.c.l.b16 %v2320
    %v2704 = vunpack.c.h.b16 %v2320
    %v2705 = vunpack.c.l.b16 %v2321
    %v2706 = vunpack.c.h.b16 %v2321
    %v2707 = vunpack.c.l.b16 %v2322
    %v2708 = vunpack.c.h.b16 %v2322
    %v2709 = vunpack.c.l.b16 %v2323
    %v2710 = vunpack.c.h.b16 %v2323
    %v2711 = vunpack.c.l.b16 %v2324
    %v2712 = vunpack.c.h.b16 %v2324
    %v2713 = vunpack.c.l.b16 %v2325
    %v2714 = vunpack.c.h.b16 %v2325
    %v2715 = vunpack.c.l.b16 %v2326
    %v2716 = vunpack.c.h.b16 %v2326
    %v2717 = vunpack.c.l.b16 %v2327
    %v2718 = vunpack.c.h.b16 %v2327
    %v2719 = vunpack.c.l.b16 %v2328
    %v2720 = vunpack.c.h.b16 %v2328
    %v2721 = vunpack.c.l.b16 %v2329
    %v2722 = vunpack.c.h.b16 %v2329
    %v2723 = vunpack.c.l.b16 %v2330
    %v2724 = vunpack.c.h.b16 %v2330
    %v2725 = vunpack.c.l.b16 %v2331
    %v2726 = vunpack.c.h.b16 %v2331
    %v2727 = vunpack.c.l.b16 %v2332
    %v2728 = vunpack.c.h.b16 %v2332
    %v2729 = vunpack.c.l.b16 %v2333
    %v2730 = vunpack.c.h.b16 %v2333
    %v2731 = vunpack.c.l.b16 %v2334
    %v2732 = vunpack.c.h.b16 %v2334
    %v2733 = vunpack.c.l.b16 %v2335
    %v2734 = vunpack.c.h.b16 %v2335
    %v2735 = vunpack.c.l.b16 %v2336
    %v2736 = vunpack.c.h.b16 %v2336
    %v2737 = vunpack.c.l.b16 %v2337
    %v2738 = vunpack.c.h.b16 %v2337
    %v2739 = vunpack.c.l.b16 %v2338
    %v2740 = vunpack.c.h.b16 %v2338
    %v2741 = vunpack.c.l.b16 %v2339
    %v2742 = vunpack.c.h.b16 %v2339
    %v2743 = vunpack.c.l.b16 %v2340
    %v2744 = vunpack.c.h.b16 %v2340
    %v2745 = vunpack.c.l.b16 %v2341
    %v2746 = vunpack.c.h.b16 %v2341
    %v2747 = vunpack.c.l.b16 %v2342
    %v2748 = vunpack.c.h.b16 %v2342
    %v2749 = vunpack.c.l.b16 %v2343
    %v2750 = vunpack.c.h.b16 %v2343
    %v2751 = vunpack.c.l.b16 %v2344
    %v2752 = vunpack.c.h.b16 %v2344
    %v2753 = vunpack.c.l.b16 %v2345
    %v2754 = vunpack.c.h.b16 %v2345
    %v2755 = vunpack.c.l.b16 %v2346
    %v2756 = vunpack.c.h.b16 %v2346
    %v2757 = vunpack.c.l.b16 %v2347
    %v2758 = vunpack.c.h.b16 %v2347
    %v2759 = vunpack.c.l.b16 %v2348
    %v2760 = vunpack.c.h.b16 %v2348
    %v2761 = vunpack.c.l.b16 %v2349
    %v2762 = vunpack.c.h.b16 %v2349
    %v2763 = vunpack.c.l.b16 %v2350
    %v2764 = vunpack.c.h.b16 %v2350
    %v2765 = vunpack.c.l.b16 %v2351
    %v2766 = vunpack.c.h.b16 %v2351
    %v2767 = vunpack.c.l.b16 %v2352
    %v2768 = vunpack.c.h.b16 %v2352
    %v2769 = vunpack.c.l.b16 %v2353
    %v2770 = vunpack.c.h.b16 %v2353
    %v2771 = vunpack.c.l.b16 %v2354
    %v2772 = vunpack.c.h.b16 %v2354
    %v2773 = vunpack.c.l.b16 %v2355
    %v2774 = vunpack.c.h.b16 %v2355
    %v2775 = vunpack.c.l.b16 %v2356
    %v2776 = vunpack.c.h.b16 %v2356
    %v2777 = vunpack.c.l.b16 %v2357
    %v2778 = vunpack.c.h.b16 %v2357
    %v2779 = vunpack.c.l.b16 %v2358
    %v2780 = vunpack.c.h.b16 %v2358
    %v2781 = vunpack.c.l.b16 %v2359
    %v2782 = vunpack.c.h.b16 %v2359
    %v2783 = vunpack.c.l.b16 %v2360
    %v2784 = vunpack.c.h.b16 %v2360
    %v2785 = vunpack.c.l.b16 %v2361
    %v2786 = vunpack.c.h.b16 %v2361
    %v2787 = vunpack.c.l.b16 %v2362
    %v2788 = vunpack.c.h.b16 %v2362
    %v2789 = vunpack.c.l.b16 %v2363
    %v2790 = vunpack.c.h.b16 %v2363
    %v2791 = vunpack.c.l.b16 %v2364
    %v2792 = vunpack.c.h.b16 %v2364
    %v2793 = vunpack.c.l.b16 %v2365
    %v2794 = vunpack.c.h.b16 %v2365
    %v2795 = vunpack.c.l.b16 %v2366
    %v2796 = vunpack.c.h.b16 %v2366
    %v2797 = vunpack.c.l.b16 %v2367
    %v2798 = vunpack.c.h.b16 %v2367
    %v2799 = vunpack.c.l.b16 %v2368
    %v2800 = vunpack.c.h.b16 %v2368
    %v2801 = vpack.c.b16 %v2515, %v2513
    %v2802 = vpack.c.b16 %v2516, %v2514
    %v2803 = vpack.c.b16 %v2519, %v2517
    %v2804 = vpack.c.b16 %v2520, %v2518
    %v2805 = vpack.c.b16 %v2523, %v2521
    %v2806 = vpack.c.b16 %v2524, %v2522
    %v2807 = vpack.c.b16 %v2527, %v2525
    %v2808 = vpack.c.b16 %v2528, %v2526
    %v2809 = vpack.c.b16 %v2531, %v2529
    %v2810 = vpack.c.b16 %v2532, %v2530
    %v2811 = vpack.c.b16 %v2535, %v2533
    %v2812 = vpack.c.b16 %v2536, %v2534
    %v2813 = vpack.c.b16 %v2539, %v2537
    %v2814 = vpack.c.b16 %v2540, %v2538
    %v2815 = vpack.c.b16 %v2543, %v2541
    %v2816 = vpack.c.b16 %v2544, %v2542
    %v2817 = vpack.c.b16 %v2547, %v2545
    %v2818 = vpack.c.b16 %v2548, %v2546
    %v2819 = vpack.c.b16 %v2551, %v2549
    %v2820 = vpack.c.b16 %v2552, %v2550
    %v2821 = vpack.c.b16 %v2555, %v2553
    %v2822 = vpack.c.b16 %v2556, %v2554
    %v2823 = vpack.c.b16 %v2559, %v2557
    %v2824 = vpack.c.b16 %v2560, %v2558
    %v2825 = vpack.c.b16 %v2563, %v2561
    %v2826 = vpack.c.b16 %v2564, %v2562
    %v2827 = vpack.c.b16 %v2567, %v2565
    %v2828 = vpack.c.b16 %v2568, %v2566
    %v2829 = vpack.c.b16 %v2571, %v2569
    %v2830 = vpack.c.b16 %v2572, %v2570
    %v2831 = vpack.c.b16 %v2575, %v2573
    %v2832 = vpack.c.b16 %v2576, %v2574
    %v2833 = vpack.c.b16 %v2579, %v2577
    %v2834 = vpack.c.b16 %v2580, %v2578
    %v2835 = vpack.c.b16 %v2583, %v2581
    %v2836 = vpack.c.b16 %v2584, %v2582
    %v2837 = vpack.c.b16 %v2587, %v2585
    %v2838 = vpack.c.b16 %v2588, %v2586
    %v2839 = vpack.c.b16 %v2591, %v2589
    %v2840 = vpack.c.b16 %v2592, %v2590
    %v2841 = vpack.c.b16 %v2595, %v2593
    %v2842 = vpack.c.b16 %v2596, %v2594
    %v2843 = vpack.c.b16 %v2599, %v2597
    %v2844 = vpack.c.b16 %v2600, %v2598
    %v2845 = vpack.c.b16 %v2603, %v2601
    %v2846 = vpack.c.b16 %v2604, %v2602
    %v2847 = vpack.c.b16 %v2607, %v2605
    %v2848 = vpack.c.b16 %v2608, %v2606
    %v2849 = vpack.c.b16 %v2611, %v2609
    %v2850 = vpack.c.b16 %v2612, %v2610
    %v2851 = vpack.c.b16 %v2615, %v2613
    %v2852 = vpack.c.b16 %v2616, %v2614
    %v2853 = vpack.c.b16 %v2619, %v2617
    %v2854 = vpack.c.b16 %v2620, %v2618
    %v2855 = vpack.c.b16 %v2623, %v2621
    %v2856 = vpack.c.b16 %v2624, %v2622
    %v2857 = vpack.c.b16 %v2627, %v2625
    %v2858 = vpack.c.b16 %v2628, %v2626
    %v2859 = vpack.c.b16 %v2631, %v2629
    %v2860 = vpack.c.b16 %v2632, %v2630
    %v2861 = vpack.c.b16 %v2635, %v2633
    %v2862 = vpack.c.b16 %v2636, %v2634
    %v2863 = vpack.c.b16 %v2639, %v2637
    %v2864 = vpack.c.b16 %v2640, %v2638
    %v2865 = vpack.c.b16 %v2643, %v2641
    %v2866 = vpack.c.b16 %v2644, %v2642
    %v2867 = vpack.c.b16 %v2647, %v2645
    %v2868 = vpack.c.b16 %v2648, %v2646
    %v2869 = vpack.c.b16 %v2651, %v2649
    %v2870 = vpack.c.b16 %v2652, %v2650
    %v2871 = vpack.c.b16 %v2655, %v2653
    %v2872 = vpack.c.b16 %v2656, %v2654
    %v2873 = vpack.c.b16 %v2659, %v2657
    %v2874 = vpack.c.b16 %v2660, %v2658
    %v2875 = vpack.c.b16 %v2663, %v2661
    %v2876 = vpack.c.b16 %v2664, %v2662
    %v2877 = vpack.c.b16 %v2667, %v2665
    %v2878 = vpack.c.b16 %v2668, %v2666
    %v2879 = vpack.c.b16 %v2671, %v2669
    %v2880 = vpack.c.b16 %v2672, %v2670
    %v2881 = vpack.c.b16 %v2675, %v2673
    %v2882 = vpack.c.b16 %v2676, %v2674
    %v2883 = vpack.c.b16 %v2679, %v2677
    %v2884 = vpack.c.b16 %v2680, %v2678
    %v2885 = vpack.c.b16 %v2683, %v2681
    %v2886 = vpack.c.b16 %v2684, %v2682
    %v2887 = vpack.c.b16 %v2687, %v2685
    %v2888 = vpack.c.b16 %v2688, %v2686
    %v2889 = vpack.c.b16 %v2691, %v2689
    %v2890 = vpack.c.b16 %v2692, %v2690
    %v2891 = vpack.c.b16 %v2695, %v2693
    %v2892 = vpack.c.b16 %v2696, %v2694
    %v2893 = vpack.c.b16 %v2699, %v2697
    %v2894 = vpack.c.b16 %v2700, %v2698
    %v2895 = vpack.c.b16 %v2703, %v2701
    %v2896 = vpack.c.b16 %v2704, %v2702
    %v2897 = vpack.c.b16 %v2707, %v2705
    %v2898 = vpack.c.b16 %v2708, %v2706
    %v2899 = vpack.c.b16 %v2711, %v2709
    %v2900 = vpack.c.b16 %v2712, %v2710
    %v2901 = vpack.c.b16 %v2715, %v2713
    %v2902 = vpack.c.b16 %v2716, %v2714
    %v2903 = vpack.c.b16 %v2719, %v2717
    %v2904 = vpack.c.b16 %v2720, %v2718
    %v2905 = vpack.c.b16 %v2723, %v2721
    %v2906 = vpack.c.b16 %v2724, %v2722
    %v2907 = vpack.c.b16 %v2727, %v2725
    %v2908 = vpack.c.b16 %v2728, %v2726
    %v2909 = vpack.c.b16 %v2731, %v2729
    %v2910 = vpack.c.b16 %v2732, %v2730
    %v2911 = vpack.c.b16 %v2735, %v2733
    %v2912 = vpack.c.b16 %v2736, %v2734
    %v2913 = vpack.c.b16 %v2739, %v2737
    %v2914 = vpack.c.b16 %v2740, %v2738
    %v2915 = vpack.c.b16 %v2743, %v2741
    %v2916 = vpack.c.b16 %v2744, %v2742
    %v2917 = vpack.c.b16 %v2747, %v2745
    %v2918 = vpack.c.b16 %v2748, %v2746
    %v2919 = vpack.c.b16 %v2751, %v2749
    %v2920 = vpack.c.b16 %v2752, %v2750
    %v2921 = vpack.c.b16 %v2755, %v2753
    %v2922 = vpack.c.b16 %v2756, %v2754
    %v2923 = vpack.c.b16 %v2759, %v2757
    %v2924 = vpack.c.b16 %v2760, %v2758
    %v2925 = vpack.c.b16 %v2763, %v2761
    %v2926 = vpack.c.b16 %v2764, %v2762
    %v2927 = vpack.c.b16 %v2767, %v2765
    %v2928 = vpack.c.b16 %v2768, %v2766
    %v2929 = vpack.c.b16 %v2771, %v2769
    %v2930 = vpack.c.b16 %v2772, %v2770
    %v2931 = vpack.c.b16 %v2775, %v2773
    %v2932 = vpack.c.b16 %v2776, %v2774
    %v2933 = vpack.c.b16 %v2779, %v2777
    %v2934 = vpack.c.b16 %v2780, %v2778
    %v2935 = vpack.c.b16 %v2783, %v2781
    %v2936 = vpack.c.b16 %v2784, %v2782
    %v2937 = vpack.c.b16 %v2787, %v2785
    %v2938 = vpack.c.b16 %v2788, %v2786
    %v2939 = vpack.c.b16 %v2791, %v2789
    %v2940 = vpack.c.b16 %v2792, %v2790
    %v2941 = vpack.c.b16 %v2795, %v2793
    %v2942 = vpack.c.b16 %v2796, %v2794
    %v2943 = vpack.c.b16 %v2799, %v2797
    %v2944 = vpack.c.b16 %v2800, %v2798
    %3089 = vmatpush.bf16.msra.mxu0 %v2815
    %3090 = vmatpush.bf16.msra.mxu0 %v2813
    %3091 = vmatpush.bf16.msra.mxu0 %v2811
    %3092 = vmatpush.bf16.msra.mxu0 %v2809
    %3093 = vmatpush.bf16.msra.mxu0 %v2807
    %3094 = vmatpush.bf16.msra.mxu0 %v2805
    %3095 = vmatpush.bf16.msra.mxu0 %v2803
    %3096 = vmatpush.bf16.msra.mxu0 %v2801
    %3097 = vmatmul.bf16.gmra.mxu0 %v2135
    %v3098 = vpop.f32.mrf.mxu0
    %v3099 = vadd.f32 0.0, %v3098
    %v3100 = vpop.f32.mrf.mxu0
    %v3101 = vadd.f32 0.0, %v3100
    %3102 = vmatmul.bf16.gmra.mxu0 %v2144
    %v3103 = vpop.f32.mrf.mxu0
    %v3104 = vadd.f32 0.0, %v3103
    %v3105 = vpop.f32.mrf.mxu0
    %v3106 = vadd.f32 0.0, %v3105
    %3107 = vmatmul.bf16.gmra.mxu0 %v2152
    %v3108 = vpop.f32.mrf.mxu0
    %v3109 = vadd.f32 0.0, %v3108
    %v3110 = vpop.f32.mrf.mxu0
    %v3111 = vadd.f32 0.0, %v3110
    %3112 = vmatmul.bf16.gmra.mxu0 %v2160
    %v3113 = vpop.f32.mrf.mxu0
    %v3114 = vadd.f32 0.0, %v3113
    %v3115 = vpop.f32.mrf.mxu0
    %v3116 = vadd.f32 0.0, %v3115
    %3117 = vmatmul.bf16.gmra.mxu0 %v2168
    %v3118 = vpop.f32.mrf.mxu0
    %v3119 = vadd.f32 0.0, %v3118
    %v3120 = vpop.f32.mrf.mxu0
    %v3121 = vadd.f32 0.0, %v3120
    %3122 = vmatmul.bf16.gmra.mxu0 %v2176
    %v3123 = vpop.f32.mrf.mxu0
    %v3124 = vadd.f32 0.0, %v3123
    %v3125 = vpop.f32.mrf.mxu0
    %v3126 = vadd.f32 0.0, %v3125
    %3127 = vmatmul.bf16.gmra.mxu0 %v2184
    %v3128 = vpop.f32.mrf.mxu0
    %v3129 = vadd.f32 0.0, %v3128
    %v3130 = vpop.f32.mrf.mxu0
    %v3131 = vadd.f32 0.0, %v3130
    %3132 = vmatmul.bf16.gmra.mxu0 %v2192
    %v3133 = vpop.f32.mrf.mxu0
    %v3134 = vadd.f32 0.0, %v3133
    %v3135 = vpop.f32.mrf.mxu0
    %v3136 = vadd.f32 0.0, %v3135
    %3137 = vmatmul.bf16.gmra.mxu0 %v2200
    %v3138 = vpop.f32.mrf.mxu0
    %v3139 = vadd.f32 0.0, %v3138
    %v3140 = vpop.f32.mrf.mxu0
    %v3141 = vadd.f32 0.0, %v3140
    %3142 = vmatmul.bf16.gmra.mxu0 %v2208
    %v3143 = vpop.f32.mrf.mxu0
    %v3144 = vadd.f32 0.0, %v3143
    %v3145 = vpop.f32.mrf.mxu0
    %v3146 = vadd.f32 0.0, %v3145
    %3147 = vmatmul.bf16.gmra.mxu0 %v2216
    %v3148 = vpop.f32.mrf.mxu0
    %v3149 = vadd.f32 0.0, %v3148
    %v3150 = vpop.f32.mrf.mxu0
    %3151 = vdwg.mxu0
    %3152 = vmatpush.bf16.msra.mxu0 %v2831
    %3153 = vmatpush.bf16.msra.mxu0 %v2829
    %3154 = vmatpush.bf16.msra.mxu0 %v2827
    %3155 = vmatpush.bf16.msra.mxu0 %v2825
    %3156 = vmatpush.bf16.msra.mxu0 %v2823
    %3157 = vmatpush.bf16.msra.mxu0 %v2821
    %3158 = vmatpush.bf16.msra.mxu0 %v2819
    %3159 = vmatpush.bf16.msra.mxu0 %v2817
    %3160 = vmatmul.bf16.gmra.mxu0 %v2136
    %v3161 = vpop.f32.mrf.mxu0
    %v3162 = vadd.f32 %v3099, %v3161
    %v3163 = vpop.f32.mrf.mxu0
    %v3164 = vadd.f32 %v3101, %v3163
    %3165 = vmatmul.bf16.gmra.mxu0 %v2145
    %v3166 = vpop.f32.mrf.mxu0
    %v3167 = vadd.f32 %v3104, %v3166
    %v3168 = vpop.f32.mrf.mxu0
    %v3169 = vadd.f32 %v3106, %v3168
    %3170 = vmatmul.bf16.gmra.mxu0 %v2153
    %v3171 = vpop.f32.mrf.mxu0
    %v3172 = vadd.f32 %v3109, %v3171
    %v3173 = vpop.f32.mrf.mxu0
    %v3174 = vadd.f32 %v3111, %v3173
    %3175 = vmatmul.bf16.gmra.mxu0 %v2161
    %v3176 = vpop.f32.mrf.mxu0
    %v3177 = vadd.f32 %v3114, %v3176
    %v3178 = vpop.f32.mrf.mxu0
    %v3179 = vadd.f32 %v3116, %v3178
    %3180 = vmatmul.bf16.gmra.mxu0 %v2169
    %v3181 = vpop.f32.mrf.mxu0
    %v3182 = vadd.f32 %v3119, %v3181
    %v3183 = vpop.f32.mrf.mxu0
    %v3184 = vadd.f32 %v3121, %v3183
    %3185 = vmatmul.bf16.gmra.mxu0 %v2177
    %v3186 = vpop.f32.mrf.mxu0
    %v3187 = vadd.f32 %v3124, %v3186
    %v3188 = vpop.f32.mrf.mxu0
    %v3189 = vadd.f32 %v3126, %v3188
    %3190 = vmatmul.bf16.gmra.mxu0 %v2185
    %v3191 = vpop.f32.mrf.mxu0
    %v3192 = vadd.f32 %v3129, %v3191
    %v3193 = vpop.f32.mrf.mxu0
    %v3194 = vadd.f32 %v3131, %v3193
    %3195 = vmatmul.bf16.gmra.mxu0 %v2193
    %v3196 = vpop.f32.mrf.mxu0
    %v3197 = vadd.f32 %v3134, %v3196
    %v3198 = vpop.f32.mrf.mxu0
    %v3199 = vadd.f32 %v3136, %v3198
    %3200 = vmatmul.bf16.gmra.mxu0 %v2201
    %v3201 = vpop.f32.mrf.mxu0
    %v3202 = vadd.f32 %v3139, %v3201
    %v3203 = vpop.f32.mrf.mxu0
    %v3204 = vadd.f32 %v3141, %v3203
    %3205 = vmatmul.bf16.gmra.mxu0 %v2209
    %v3206 = vpop.f32.mrf.mxu0
    %v3207 = vadd.f32 %v3144, %v3206
    %v3208 = vpop.f32.mrf.mxu0
    %v3209 = vadd.f32 %v3146, %v3208
    %3210 = vmatmul.bf16.gmra.mxu0 %v2217
    %v3211 = vpop.f32.mrf.mxu0
    %v3212 = vadd.f32 %v3149, %v3211
    %v3213 = vpop.f32.mrf.mxu0
    %3214 = vdwg.mxu0
    %3215 = vmatpush.bf16.msra.mxu0 %v2847
    %3216 = vmatpush.bf16.msra.mxu0 %v2845
    %3217 = vmatpush.bf16.msra.mxu0 %v2843
    %3218 = vmatpush.bf16.msra.mxu0 %v2841
    %3219 = vmatpush.bf16.msra.mxu0 %v2839
    %3220 = vmatpush.bf16.msra.mxu0 %v2837
    %3221 = vmatpush.bf16.msra.mxu0 %v2835
    %3222 = vmatpush.bf16.msra.mxu0 %v2833
    %3223 = vmatmul.bf16.gmra.mxu0 %v2137
    %v3224 = vpop.f32.mrf.mxu0
    %v3225 = vadd.f32 %v3162, %v3224
    %v3226 = vpop.f32.mrf.mxu0
    %v3227 = vadd.f32 %v3164, %v3226
    %3228 = vmatmul.bf16.gmra.mxu0 %v2141
    %v3229 = vpop.f32.mrf.mxu0
    %v3230 = vadd.f32 %v3167, %v3229
    %v3231 = vpop.f32.mrf.mxu0
    %v3232 = vadd.f32 %v3169, %v3231
    %3233 = vmatmul.bf16.gmra.mxu0 %v2149
    %v3234 = vpop.f32.mrf.mxu0
    %v3235 = vadd.f32 %v3172, %v3234
    %v3236 = vpop.f32.mrf.mxu0
    %v3237 = vadd.f32 %v3174, %v3236
    %3238 = vmatmul.bf16.gmra.mxu0 %v2157
    %v3239 = vpop.f32.mrf.mxu0
    %v3240 = vadd.f32 %v3177, %v3239
    %v3241 = vpop.f32.mrf.mxu0
    %v3242 = vadd.f32 %v3179, %v3241
    %3243 = vmatmul.bf16.gmra.mxu0 %v2165
    %v3244 = vpop.f32.mrf.mxu0
    %v3245 = vadd.f32 %v3182, %v3244
    %v3246 = vpop.f32.mrf.mxu0
    %v3247 = vadd.f32 %v3184, %v3246
    %3248 = vmatmul.bf16.gmra.mxu0 %v2173
    %v3249 = vpop.f32.mrf.mxu0
    %v3250 = vadd.f32 %v3187, %v3249
    %v3251 = vpop.f32.mrf.mxu0
    %v3252 = vadd.f32 %v3189, %v3251
    %3253 = vmatmul.bf16.gmra.mxu0 %v2181
    %v3254 = vpop.f32.mrf.mxu0
    %v3255 = vadd.f32 %v3192, %v3254
    %v3256 = vpop.f32.mrf.mxu0
    %v3257 = vadd.f32 %v3194, %v3256
    %3258 = vmatmul.bf16.gmra.mxu0 %v2189
    %v3259 = vpop.f32.mrf.mxu0
    %v3260 = vadd.f32 %v3197, %v3259
    %v3261 = vpop.f32.mrf.mxu0
    %v3262 = vadd.f32 %v3199, %v3261
    %3263 = vmatmul.bf16.gmra.mxu0 %v2197
    %v3264 = vpop.f32.mrf.mxu0
    %v3265 = vadd.f32 %v3202, %v3264
    %v3266 = vpop.f32.mrf.mxu0
    %v3267 = vadd.f32 %v3204, %v3266
    %3268 = vmatmul.bf16.gmra.mxu0 %v2205
    %v3269 = vpop.f32.mrf.mxu0
    %v3270 = vadd.f32 %v3207, %v3269
    %v3271 = vpop.f32.mrf.mxu0
    %v3272 = vadd.f32 %v3209, %v3271
    %3273 = vmatmul.bf16.gmra.mxu0 %v2218
    %v3274 = vpop.f32.mrf.mxu0
    %v3275 = vadd.f32 %v3212, %v3274
    %v3276 = vpop.f32.mrf.mxu0
    %3277 = vdwg.mxu0
    %3278 = vmatpush.bf16.msra.mxu0 %v2863
    %3279 = vmatpush.bf16.msra.mxu0 %v2861
    %3280 = vmatpush.bf16.msra.mxu0 %v2859
    %3281 = vmatpush.bf16.msra.mxu0 %v2857
    %3282 = vmatpush.bf16.msra.mxu0 %v2855
    %3283 = vmatpush.bf16.msra.mxu0 %v2853
    %3284 = vmatpush.bf16.msra.mxu0 %v2851
    %3285 = vmatpush.bf16.msra.mxu0 %v2849
    %3286 = vmatmul.bf16.gmra.mxu0 %v2138
    %v3287 = vpop.f32.mrf.mxu0
    %v3288 = vadd.f32 %v3225, %v3287
    %v3289 = vpop.f32.mrf.mxu0
    %v3290 = vadd.f32 %v3227, %v3289
    %3291 = vmatmul.bf16.gmra.mxu0 %v2146
    %v3292 = vpop.f32.mrf.mxu0
    %v3293 = vadd.f32 %v3230, %v3292
    %v3294 = vpop.f32.mrf.mxu0
    %v3295 = vadd.f32 %v3232, %v3294
    %3296 = vmatmul.bf16.gmra.mxu0 %v2154
    %v3297 = vpop.f32.mrf.mxu0
    %v3298 = vadd.f32 %v3235, %v3297
    %v3299 = vpop.f32.mrf.mxu0
    %v3300 = vadd.f32 %v3237, %v3299
    %3301 = vmatmul.bf16.gmra.mxu0 %v2162
    %v3302 = vpop.f32.mrf.mxu0
    %v3303 = vadd.f32 %v3240, %v3302
    %v3304 = vpop.f32.mrf.mxu0
    %v3305 = vadd.f32 %v3242, %v3304
    %3306 = vmatmul.bf16.gmra.mxu0 %v2170
    %v3307 = vpop.f32.mrf.mxu0
    %v3308 = vadd.f32 %v3245, %v3307
    %v3309 = vpop.f32.mrf.mxu0
    %v3310 = vadd.f32 %v3247, %v3309
    %3311 = vmatmul.bf16.gmra.mxu0 %v2178
    %v3312 = vpop.f32.mrf.mxu0
    %v3313 = vadd.f32 %v3250, %v3312
    %v3314 = vpop.f32.mrf.mxu0
    %v3315 = vadd.f32 %v3252, %v3314
    %3316 = vmatmul.bf16.gmra.mxu0 %v2186
    %v3317 = vpop.f32.mrf.mxu0
    %v3318 = vadd.f32 %v3255, %v3317
    %v3319 = vpop.f32.mrf.mxu0
    %v3320 = vadd.f32 %v3257, %v3319
    %3321 = vmatmul.bf16.gmra.mxu0 %v2194
    %v3322 = vpop.f32.mrf.mxu0
    %v3323 = vadd.f32 %v3260, %v3322
    %v3324 = vpop.f32.mrf.mxu0
    %v3325 = vadd.f32 %v3262, %v3324
    %3326 = vmatmul.bf16.gmra.mxu0 %v2202
    %v3327 = vpop.f32.mrf.mxu0
    %v3328 = vadd.f32 %v3265, %v3327
    %v3329 = vpop.f32.mrf.mxu0
    %v3330 = vadd.f32 %v3267, %v3329
    %3331 = vmatmul.bf16.gmra.mxu0 %v2210
    %v3332 = vpop.f32.mrf.mxu0
    %v3333 = vadd.f32 %v3270, %v3332
    %v3334 = vpop.f32.mrf.mxu0
    %v3335 = vadd.f32 %v3272, %v3334
    %3336 = vmatmul.bf16.gmra.mxu0 %v2219
    %v3337 = vpop.f32.mrf.mxu0
    %v3338 = vadd.f32 %v3275, %v3337
    %v3339 = vpop.f32.mrf.mxu0
    %3340 = vdwg.mxu0
    %3341 = vmatpush.bf16.msra.mxu0 %v2879
    %3342 = vmatpush.bf16.msra.mxu0 %v2877
    %3343 = vmatpush.bf16.msra.mxu0 %v2875
    %3344 = vmatpush.bf16.msra.mxu0 %v2873
    %3345 = vmatpush.bf16.msra.mxu0 %v2871
    %3346 = vmatpush.bf16.msra.mxu0 %v2869
    %3347 = vmatpush.bf16.msra.mxu0 %v2867
    %3348 = vmatpush.bf16.msra.mxu0 %v2865
    %3349 = vmatmul.bf16.gmra.mxu0 %v2139
    %v3350 = vpop.f32.mrf.mxu0
    %v3351 = vadd.f32 %v3288, %v3350
    %v3352 = vpop.f32.mrf.mxu0
    %v3353 = vadd.f32 %v3290, %v3352
    %3354 = vmatmul.bf16.gmra.mxu0 %v2147
    %v3355 = vpop.f32.mrf.mxu0
    %v3356 = vadd.f32 %v3293, %v3355
    %v3357 = vpop.f32.mrf.mxu0
    %v3358 = vadd.f32 %v3295, %v3357
    %3359 = vmatmul.bf16.gmra.mxu0 %v2155
    %v3360 = vpop.f32.mrf.mxu0
    %v3361 = vadd.f32 %v3298, %v3360
    %v3362 = vpop.f32.mrf.mxu0
    %v3363 = vadd.f32 %v3300, %v3362
    %3364 = vmatmul.bf16.gmra.mxu0 %v2163
    %v3365 = vpop.f32.mrf.mxu0
    %v3366 = vadd.f32 %v3303, %v3365
    %v3367 = vpop.f32.mrf.mxu0
    %v3368 = vadd.f32 %v3305, %v3367
    %3369 = vmatmul.bf16.gmra.mxu0 %v2171
    %v3370 = vpop.f32.mrf.mxu0
    %v3371 = vadd.f32 %v3308, %v3370
    %v3372 = vpop.f32.mrf.mxu0
    %v3373 = vadd.f32 %v3310, %v3372
    %3374 = vmatmul.bf16.gmra.mxu0 %v2179
    %v3375 = vpop.f32.mrf.mxu0
    %v3376 = vadd.f32 %v3313, %v3375
    %v3377 = vpop.f32.mrf.mxu0
    %v3378 = vadd.f32 %v3315, %v3377
    %3379 = vmatmul.bf16.gmra.mxu0 %v2187
    %v3380 = vpop.f32.mrf.mxu0
    %v3381 = vadd.f32 %v3318, %v3380
    %v3382 = vpop.f32.mrf.mxu0
    %v3383 = vadd.f32 %v3320, %v3382
    %3384 = vmatmul.bf16.gmra.mxu0 %v2195
    %v3385 = vpop.f32.mrf.mxu0
    %v3386 = vadd.f32 %v3323, %v3385
    %v3387 = vpop.f32.mrf.mxu0
    %v3388 = vadd.f32 %v3325, %v3387
    %3389 = vmatmul.bf16.gmra.mxu0 %v2203
    %v3390 = vpop.f32.mrf.mxu0
    %v3391 = vadd.f32 %v3328, %v3390
    %v3392 = vpop.f32.mrf.mxu0
    %v3393 = vadd.f32 %v3330, %v3392
    %3394 = vmatmul.bf16.gmra.mxu0 %v2211
    %v3395 = vpop.f32.mrf.mxu0
    %v3396 = vadd.f32 %v3333, %v3395
    %v3397 = vpop.f32.mrf.mxu0
    %v3398 = vadd.f32 %v3335, %v3397
    %3399 = vmatmul.bf16.gmra.mxu0 %v2220
    %v3400 = vpop.f32.mrf.mxu0
    %v3401 = vadd.f32 %v3338, %v3400
    %v3402 = vpop.f32.mrf.mxu0
    %3403 = vdwg.mxu0
    %3404 = vmatpush.bf16.msra.mxu0 %v2895
    %3405 = vmatpush.bf16.msra.mxu0 %v2893
    %3406 = vmatpush.bf16.msra.mxu0 %v2891
    %3407 = vmatpush.bf16.msra.mxu0 %v2889
    %3408 = vmatpush.bf16.msra.mxu0 %v2887
    %3409 = vmatpush.bf16.msra.mxu0 %v2885
    %3410 = vmatpush.bf16.msra.mxu0 %v2883
    %3411 = vmatpush.bf16.msra.mxu0 %v2881
    %3412 = vmatmul.bf16.gmra.mxu0 %v2140
    %v3413 = vpop.f32.mrf.mxu0
    %v3414 = vadd.f32 %v3351, %v3413
    %v3415 = vpop.f32.mrf.mxu0
    %v3416 = vadd.f32 %v3353, %v3415
    %3417 = vmatmul.bf16.gmra.mxu0 %v2148
    %v3418 = vpop.f32.mrf.mxu0
    %v3419 = vadd.f32 %v3356, %v3418
    %v3420 = vpop.f32.mrf.mxu0
    %v3421 = vadd.f32 %v3358, %v3420
    %3422 = vmatmul.bf16.gmra.mxu0 %v2156
    %v3423 = vpop.f32.mrf.mxu0
    %v3424 = vadd.f32 %v3361, %v3423
    %v3425 = vpop.f32.mrf.mxu0
    %v3426 = vadd.f32 %v3363, %v3425
    %3427 = vmatmul.bf16.gmra.mxu0 %v2164
    %v3428 = vpop.f32.mrf.mxu0
    %v3429 = vadd.f32 %v3366, %v3428
    %v3430 = vpop.f32.mrf.mxu0
    %v3431 = vadd.f32 %v3368, %v3430
    %3432 = vmatmul.bf16.gmra.mxu0 %v2172
    %v3433 = vpop.f32.mrf.mxu0
    %v3434 = vadd.f32 %v3371, %v3433
    %v3435 = vpop.f32.mrf.mxu0
    %v3436 = vadd.f32 %v3373, %v3435
    %3437 = vmatmul.bf16.gmra.mxu0 %v2180
    %v3438 = vpop.f32.mrf.mxu0
    %v3439 = vadd.f32 %v3376, %v3438
    %v3440 = vpop.f32.mrf.mxu0
    %v3441 = vadd.f32 %v3378, %v3440
    %3442 = vmatmul.bf16.gmra.mxu0 %v2188
    %v3443 = vpop.f32.mrf.mxu0
    %v3444 = vadd.f32 %v3381, %v3443
    %v3445 = vpop.f32.mrf.mxu0
    %v3446 = vadd.f32 %v3383, %v3445
    %3447 = vmatmul.bf16.gmra.mxu0 %v2196
    %v3448 = vpop.f32.mrf.mxu0
    %v3449 = vadd.f32 %v3386, %v3448
    %v3450 = vpop.f32.mrf.mxu0
    %v3451 = vadd.f32 %v3388, %v3450
    %3452 = vmatmul.bf16.gmra.mxu0 %v2204
    %v3453 = vpop.f32.mrf.mxu0
    %v3454 = vadd.f32 %v3391, %v3453
    %v3455 = vpop.f32.mrf.mxu0
    %v3456 = vadd.f32 %v3393, %v3455
    %3457 = vmatmul.bf16.gmra.mxu0 %v2212
    %v3458 = vpop.f32.mrf.mxu0
    %v3459 = vadd.f32 %v3396, %v3458
    %v3460 = vpop.f32.mrf.mxu0
    %v3461 = vadd.f32 %v3398, %v3460
    %3462 = vmatmul.bf16.gmra.mxu0 %v2221
    %v3463 = vpop.f32.mrf.mxu0
    %v3464 = vadd.f32 %v3401, %v3463
    %v3465 = vpop.f32.mrf.mxu0
    %3466 = vdwg.mxu0
    %3467 = vmatpush.bf16.msra.mxu0 %v2911
    %3468 = vmatpush.bf16.msra.mxu0 %v2909
    %3469 = vmatpush.bf16.msra.mxu0 %v2907
    %3470 = vmatpush.bf16.msra.mxu0 %v2905
    %3471 = vmatpush.bf16.msra.mxu0 %v2903
    %3472 = vmatpush.bf16.msra.mxu0 %v2901
    %3473 = vmatpush.bf16.msra.mxu0 %v2899
    %3474 = vmatpush.bf16.msra.mxu0 %v2897
    %3475 = vmatmul.bf16.gmra.mxu0 %v2141
    %v3476 = vpop.f32.mrf.mxu0
    %v3477 = vadd.f32 %v3414, %v3476
    %v3478 = vpop.f32.mrf.mxu0
    %v3479 = vadd.f32 %v3416, %v3478
    %3480 = vmatmul.bf16.gmra.mxu0 %v2149
    %v3481 = vpop.f32.mrf.mxu0
    %v3482 = vadd.f32 %v3419, %v3481
    %v3483 = vpop.f32.mrf.mxu0
    %v3484 = vadd.f32 %v3421, %v3483
    %3485 = vmatmul.bf16.gmra.mxu0 %v2157
    %v3486 = vpop.f32.mrf.mxu0
    %v3487 = vadd.f32 %v3424, %v3486
    %v3488 = vpop.f32.mrf.mxu0
    %v3489 = vadd.f32 %v3426, %v3488
    %3490 = vmatmul.bf16.gmra.mxu0 %v2165
    %v3491 = vpop.f32.mrf.mxu0
    %v3492 = vadd.f32 %v3429, %v3491
    %v3493 = vpop.f32.mrf.mxu0
    %v3494 = vadd.f32 %v3431, %v3493
    %3495 = vmatmul.bf16.gmra.mxu0 %v2173
    %v3496 = vpop.f32.mrf.mxu0
    %v3497 = vadd.f32 %v3434, %v3496
    %v3498 = vpop.f32.mrf.mxu0
    %v3499 = vadd.f32 %v3436, %v3498
    %3500 = vmatmul.bf16.gmra.mxu0 %v2181
    %v3501 = vpop.f32.mrf.mxu0
    %v3502 = vadd.f32 %v3439, %v3501
    %v3503 = vpop.f32.mrf.mxu0
    %v3504 = vadd.f32 %v3441, %v3503
    %3505 = vmatmul.bf16.gmra.mxu0 %v2189
    %v3506 = vpop.f32.mrf.mxu0
    %v3507 = vadd.f32 %v3444, %v3506
    %v3508 = vpop.f32.mrf.mxu0
    %v3509 = vadd.f32 %v3446, %v3508
    %3510 = vmatmul.bf16.gmra.mxu0 %v2197
    %v3511 = vpop.f32.mrf.mxu0
    %v3512 = vadd.f32 %v3449, %v3511
    %v3513 = vpop.f32.mrf.mxu0
    %v3514 = vadd.f32 %v3451, %v3513
    %3515 = vmatmul.bf16.gmra.mxu0 %v2205
    %v3516 = vpop.f32.mrf.mxu0
    %v3517 = vadd.f32 %v3454, %v3516
    %v3518 = vpop.f32.mrf.mxu0
    %v3519 = vadd.f32 %v3456, %v3518
    %3520 = vmatmul.bf16.gmra.mxu0 %v2213
    %v3521 = vpop.f32.mrf.mxu0
    %v3522 = vadd.f32 %v3459, %v3521
    %v3523 = vpop.f32.mrf.mxu0
    %v3524 = vadd.f32 %v3461, %v3523
    %3525 = vmatmul.bf16.gmra.mxu0 %v2222
    %v3526 = vpop.f32.mrf.mxu0
    %v3527 = vadd.f32 %v3464, %v3526
    %v3528 = vpop.f32.mrf.mxu0
    %3529 = vdwg.mxu0
    %3530 = vmatpush.bf16.msra.mxu0 %v2927
    %3531 = vmatpush.bf16.msra.mxu0 %v2925
    %3532 = vmatpush.bf16.msra.mxu0 %v2923
    %3533 = vmatpush.bf16.msra.mxu0 %v2921
    %3534 = vmatpush.bf16.msra.mxu0 %v2919
    %3535 = vmatpush.bf16.msra.mxu0 %v2917
    %3536 = vmatpush.bf16.msra.mxu0 %v2915
    %3537 = vmatpush.bf16.msra.mxu0 %v2913
    %3538 = vmatmul.bf16.gmra.mxu0 %v2142
    %v3539 = vpop.f32.mrf.mxu0
    %v3540 = vadd.f32 %v3477, %v3539
    %v3541 = vpop.f32.mrf.mxu0
    %v3542 = vadd.f32 %v3479, %v3541
    %3543 = vmatmul.bf16.gmra.mxu0 %v2150
    %v3544 = vpop.f32.mrf.mxu0
    %v3545 = vadd.f32 %v3482, %v3544
    %v3546 = vpop.f32.mrf.mxu0
    %v3547 = vadd.f32 %v3484, %v3546
    %3548 = vmatmul.bf16.gmra.mxu0 %v2158
    %v3549 = vpop.f32.mrf.mxu0
    %v3550 = vadd.f32 %v3487, %v3549
    %v3551 = vpop.f32.mrf.mxu0
    %v3552 = vadd.f32 %v3489, %v3551
    %3553 = vmatmul.bf16.gmra.mxu0 %v2166
    %v3554 = vpop.f32.mrf.mxu0
    %v3555 = vadd.f32 %v3492, %v3554
    %v3556 = vpop.f32.mrf.mxu0
    %v3557 = vadd.f32 %v3494, %v3556
    %3558 = vmatmul.bf16.gmra.mxu0 %v2174
    %v3559 = vpop.f32.mrf.mxu0
    %v3560 = vadd.f32 %v3497, %v3559
    %v3561 = vpop.f32.mrf.mxu0
    %v3562 = vadd.f32 %v3499, %v3561
    %3563 = vmatmul.bf16.gmra.mxu0 %v2182
    %v3564 = vpop.f32.mrf.mxu0
    %v3565 = vadd.f32 %v3502, %v3564
    %v3566 = vpop.f32.mrf.mxu0
    %v3567 = vadd.f32 %v3504, %v3566
    %3568 = vmatmul.bf16.gmra.mxu0 %v2190
    %v3569 = vpop.f32.mrf.mxu0
    %v3570 = vadd.f32 %v3507, %v3569
    %v3571 = vpop.f32.mrf.mxu0
    %v3572 = vadd.f32 %v3509, %v3571
    %3573 = vmatmul.bf16.gmra.mxu0 %v2198
    %v3574 = vpop.f32.mrf.mxu0
    %v3575 = vadd.f32 %v3512, %v3574
    %v3576 = vpop.f32.mrf.mxu0
    %v3577 = vadd.f32 %v3514, %v3576
    %3578 = vmatmul.bf16.gmra.mxu0 %v2206
    %v3579 = vpop.f32.mrf.mxu0
    %v3580 = vadd.f32 %v3517, %v3579
    %v3581 = vpop.f32.mrf.mxu0
    %v3582 = vadd.f32 %v3519, %v3581
    %3583 = vmatmul.bf16.gmra.mxu0 %v2214
    %v3584 = vpop.f32.mrf.mxu0
    %v3585 = vadd.f32 %v3522, %v3584
    %v3586 = vpop.f32.mrf.mxu0
    %v3587 = vadd.f32 %v3524, %v3586
    %3588 = vmatmul.bf16.gmra.mxu0 %v2223
    %v3589 = vpop.f32.mrf.mxu0
    %v3590 = vadd.f32 %v3527, %v3589
    %v3591 = vpop.f32.mrf.mxu0
    %3592 = vdwg.mxu0
    %3593 = vmatpush.bf16.msra.mxu0 %v2943
    %3594 = vmatpush.bf16.msra.mxu0 %v2941
    %3595 = vmatpush.bf16.msra.mxu0 %v2939
    %3596 = vmatpush.bf16.msra.mxu0 %v2937
    %3597 = vmatpush.bf16.msra.mxu0 %v2935
    %3598 = vmatpush.bf16.msra.mxu0 %v2933
    %3599 = vmatpush.bf16.msra.mxu0 %v2931
    %3600 = vmatpush.bf16.msra.mxu0 %v2929
    %3601 = vmatmul.bf16.gmra.mxu0 %v2143
    %v3602 = vpop.f32.mrf.mxu0
    %v3603 = vadd.f32 %v3540, %v3602
    %v3604 = vpop.f32.mrf.mxu0
    %v3605 = vadd.f32 %v3542, %v3604
    %3606 = vmatmul.bf16.gmra.mxu0 %v2151
    %v3607 = vpop.f32.mrf.mxu0
    %v3608 = vadd.f32 %v3545, %v3607
    %v3609 = vpop.f32.mrf.mxu0
    %v3610 = vadd.f32 %v3547, %v3609
    %3611 = vmatmul.bf16.gmra.mxu0 %v2159
    %v3612 = vpop.f32.mrf.mxu0
    %v3613 = vadd.f32 %v3550, %v3612
    %v3614 = vpop.f32.mrf.mxu0
    %v3615 = vadd.f32 %v3552, %v3614
    %3616 = vmatmul.bf16.gmra.mxu0 %v2167
    %v3617 = vpop.f32.mrf.mxu0
    %v3618 = vadd.f32 %v3555, %v3617
    %v3619 = vpop.f32.mrf.mxu0
    %v3620 = vadd.f32 %v3557, %v3619
    %3621 = vmatmul.bf16.gmra.mxu0 %v2175
    %v3622 = vpop.f32.mrf.mxu0
    %v3623 = vadd.f32 %v3560, %v3622
    %v3624 = vpop.f32.mrf.mxu0
    %v3625 = vadd.f32 %v3562, %v3624
    %3626 = vmatmul.bf16.gmra.mxu0 %v2183
    %v3627 = vpop.f32.mrf.mxu0
    %v3628 = vadd.f32 %v3565, %v3627
    %v3629 = vpop.f32.mrf.mxu0
    %v3630 = vadd.f32 %v3567, %v3629
    %3631 = vmatmul.bf16.gmra.mxu0 %v2191
    %v3632 = vpop.f32.mrf.mxu0
    %v3633 = vadd.f32 %v3570, %v3632
    %v3634 = vpop.f32.mrf.mxu0
    %v3635 = vadd.f32 %v3572, %v3634
    %3636 = vmatmul.bf16.gmra.mxu0 %v2199
    %v3637 = vpop.f32.mrf.mxu0
    %v3638 = vadd.f32 %v3575, %v3637
    %v3639 = vpop.f32.mrf.mxu0
    %v3640 = vadd.f32 %v3577, %v3639
    %3641 = vmatmul.bf16.gmra.mxu0 %v2207
    %v3642 = vpop.f32.mrf.mxu0
    %v3643 = vadd.f32 %v3580, %v3642
    %v3644 = vpop.f32.mrf.mxu0
    %v3645 = vadd.f32 %v3582, %v3644
    %3646 = vmatmul.bf16.gmra.mxu0 %v2215
    %v3647 = vpop.f32.mrf.mxu0
    %v3648 = vadd.f32 %v3585, %v3647
    %v3649 = vpop.f32.mrf.mxu0
    %v3650 = vadd.f32 %v3587, %v3649
    %3651 = vmatmul.bf16.gmra.mxu0 %v2224
    %v3652 = vpop.f32.mrf.mxu0
    %v3653 = vadd.f32 %v3590, %v3652
    %v3654 = vpop.f32.mrf.mxu0
    %3655 = vdwg.mxu0
    %3656 = vmatpush.bf16.msra.mxu0 %v2816
    %3657 = vmatpush.bf16.msra.mxu0 %v2814
    %3658 = vmatpush.bf16.msra.mxu0 %v2812
    %3659 = vmatpush.bf16.msra.mxu0 %v2810
    %3660 = vmatpush.bf16.msra.mxu0 %v2808
    %3661 = vmatpush.bf16.msra.mxu0 %v2806
    %3662 = vmatpush.bf16.msra.mxu0 %v2804
    %3663 = vmatpush.bf16.msra.mxu0 %v2802
    %3664 = vmatmul.bf16.gmra.mxu0 %v2135
    %v3665 = vpop.f32.mrf.mxu0
    %v3666 = vadd.f32 0.0, %v3665
    %v3667 = vpop.f32.mrf.mxu0
    %v3668 = vadd.f32 0.0, %v3667
    %3669 = vmatmul.bf16.gmra.mxu0 %v2144
    %v3670 = vpop.f32.mrf.mxu0
    %v3671 = vadd.f32 0.0, %v3670
    %v3672 = vpop.f32.mrf.mxu0
    %v3673 = vadd.f32 0.0, %v3672
    %3674 = vmatmul.bf16.gmra.mxu0 %v2152
    %v3675 = vpop.f32.mrf.mxu0
    %v3676 = vadd.f32 0.0, %v3675
    %v3677 = vpop.f32.mrf.mxu0
    %v3678 = vadd.f32 0.0, %v3677
    %3679 = vmatmul.bf16.gmra.mxu0 %v2160
    %v3680 = vpop.f32.mrf.mxu0
    %v3681 = vadd.f32 0.0, %v3680
    %v3682 = vpop.f32.mrf.mxu0
    %v3683 = vadd.f32 0.0, %v3682
    %3684 = vmatmul.bf16.gmra.mxu0 %v2168
    %v3685 = vpop.f32.mrf.mxu0
    %v3686 = vadd.f32 0.0, %v3685
    %v3687 = vpop.f32.mrf.mxu0
    %v3688 = vadd.f32 0.0, %v3687
    %3689 = vmatmul.bf16.gmra.mxu0 %v2176
    %v3690 = vpop.f32.mrf.mxu0
    %v3691 = vadd.f32 0.0, %v3690
    %v3692 = vpop.f32.mrf.mxu0
    %v3693 = vadd.f32 0.0, %v3692
    %3694 = vmatmul.bf16.gmra.mxu0 %v2184
    %v3695 = vpop.f32.mrf.mxu0
    %v3696 = vadd.f32 0.0, %v3695
    %v3697 = vpop.f32.mrf.mxu0
    %v3698 = vadd.f32 0.0, %v3697
    %3699 = vmatmul.bf16.gmra.mxu0 %v2192
    %v3700 = vpop.f32.mrf.mxu0
    %v3701 = vadd.f32 0.0, %v3700
    %v3702 = vpop.f32.mrf.mxu0
    %v3703 = vadd.f32 0.0, %v3702
    %3704 = vmatmul.bf16.gmra.mxu0 %v2200
    %v3705 = vpop.f32.mrf.mxu0
    %v3706 = vadd.f32 0.0, %v3705
    %v3707 = vpop.f32.mrf.mxu0
    %v3708 = vadd.f32 0.0, %v3707
    %3709 = vmatmul.bf16.gmra.mxu0 %v2208
    %v3710 = vpop.f32.mrf.mxu0
    %v3711 = vadd.f32 0.0, %v3710
    %v3712 = vpop.f32.mrf.mxu0
    %v3713 = vadd.f32 0.0, %v3712
    %3714 = vmatmul.bf16.gmra.mxu0 %v2216
    %v3715 = vpop.f32.mrf.mxu0
    %v3716 = vadd.f32 0.0, %v3715
    %v3717 = vpop.f32.mrf.mxu0
    %3718 = vdwg.mxu0
    %3719 = vmatpush.bf16.msra.mxu0 %v2832
    %3720 = vmatpush.bf16.msra.mxu0 %v2830
    %3721 = vmatpush.bf16.msra.mxu0 %v2828
    %3722 = vmatpush.bf16.msra.mxu0 %v2826
    %3723 = vmatpush.bf16.msra.mxu0 %v2824
    %3724 = vmatpush.bf16.msra.mxu0 %v2822
    %3725 = vmatpush.bf16.msra.mxu0 %v2820
    %3726 = vmatpush.bf16.msra.mxu0 %v2818
    %3727 = vmatmul.bf16.gmra.mxu0 %v2136
    %v3728 = vpop.f32.mrf.mxu0
    %v3729 = vadd.f32 %v3666, %v3728
    %v3730 = vpop.f32.mrf.mxu0
    %v3731 = vadd.f32 %v3668, %v3730
    %3732 = vmatmul.bf16.gmra.mxu0 %v2145
    %v3733 = vpop.f32.mrf.mxu0
    %v3734 = vadd.f32 %v3671, %v3733
    %v3735 = vpop.f32.mrf.mxu0
    %v3736 = vadd.f32 %v3673, %v3735
    %3737 = vmatmul.bf16.gmra.mxu0 %v2153
    %v3738 = vpop.f32.mrf.mxu0
    %v3739 = vadd.f32 %v3676, %v3738
    %v3740 = vpop.f32.mrf.mxu0
    %v3741 = vadd.f32 %v3678, %v3740
    %3742 = vmatmul.bf16.gmra.mxu0 %v2161
    %v3743 = vpop.f32.mrf.mxu0
    %v3744 = vadd.f32 %v3681, %v3743
    %v3745 = vpop.f32.mrf.mxu0
    %v3746 = vadd.f32 %v3683, %v3745
    %3747 = vmatmul.bf16.gmra.mxu0 %v2169
    %v3748 = vpop.f32.mrf.mxu0
    %v3749 = vadd.f32 %v3686, %v3748
    %v3750 = vpop.f32.mrf.mxu0
    %v3751 = vadd.f32 %v3688, %v3750
    %3752 = vmatmul.bf16.gmra.mxu0 %v2177
    %v3753 = vpop.f32.mrf.mxu0
    %v3754 = vadd.f32 %v3691, %v3753
    %v3755 = vpop.f32.mrf.mxu0
    %v3756 = vadd.f32 %v3693, %v3755
    %3757 = vmatmul.bf16.gmra.mxu0 %v2185
    %v3758 = vpop.f32.mrf.mxu0
    %v3759 = vadd.f32 %v3696, %v3758
    %v3760 = vpop.f32.mrf.mxu0
    %v3761 = vadd.f32 %v3698, %v3760
    %3762 = vmatmul.bf16.gmra.mxu0 %v2193
    %v3763 = vpop.f32.mrf.mxu0
    %v3764 = vadd.f32 %v3701, %v3763
    %v3765 = vpop.f32.mrf.mxu0
    %v3766 = vadd.f32 %v3703, %v3765
    %3767 = vmatmul.bf16.gmra.mxu0 %v2201
    %v3768 = vpop.f32.mrf.mxu0
    %v3769 = vadd.f32 %v3706, %v3768
    %v3770 = vpop.f32.mrf.mxu0
    %v3771 = vadd.f32 %v3708, %v3770
    %3772 = vmatmul.bf16.gmra.mxu0 %v2209
    %v3773 = vpop.f32.mrf.mxu0
    %v3774 = vadd.f32 %v3711, %v3773
    %v3775 = vpop.f32.mrf.mxu0
    %v3776 = vadd.f32 %v3713, %v3775
    %3777 = vmatmul.bf16.gmra.mxu0 %v2217
    %v3778 = vpop.f32.mrf.mxu0
    %v3779 = vadd.f32 %v3716, %v3778
    %v3780 = vpop.f32.mrf.mxu0
    %3781 = vdwg.mxu0
    %3782 = vmatpush.bf16.msra.mxu0 %v2848
    %3783 = vmatpush.bf16.msra.mxu0 %v2846
    %3784 = vmatpush.bf16.msra.mxu0 %v2844
    %3785 = vmatpush.bf16.msra.mxu0 %v2842
    %3786 = vmatpush.bf16.msra.mxu0 %v2840
    %3787 = vmatpush.bf16.msra.mxu0 %v2838
    %3788 = vmatpush.bf16.msra.mxu0 %v2836
    %3789 = vmatpush.bf16.msra.mxu0 %v2834
    %3790 = vmatmul.bf16.gmra.mxu0 %v2137
    %v3791 = vpop.f32.mrf.mxu0
    %v3792 = vadd.f32 %v3729, %v3791
    %v3793 = vpop.f32.mrf.mxu0
    %v3794 = vadd.f32 %v3731, %v3793
    %3795 = vmatmul.bf16.gmra.mxu0 %v2141
    %v3796 = vpop.f32.mrf.mxu0
    %v3797 = vadd.f32 %v3734, %v3796
    %v3798 = vpop.f32.mrf.mxu0
    %v3799 = vadd.f32 %v3736, %v3798
    %3800 = vmatmul.bf16.gmra.mxu0 %v2149
    %v3801 = vpop.f32.mrf.mxu0
    %v3802 = vadd.f32 %v3739, %v3801
    %v3803 = vpop.f32.mrf.mxu0
    %v3804 = vadd.f32 %v3741, %v3803
    %3805 = vmatmul.bf16.gmra.mxu0 %v2157
    %v3806 = vpop.f32.mrf.mxu0
    %v3807 = vadd.f32 %v3744, %v3806
    %v3808 = vpop.f32.mrf.mxu0
    %v3809 = vadd.f32 %v3746, %v3808
    %3810 = vmatmul.bf16.gmra.mxu0 %v2165
    %v3811 = vpop.f32.mrf.mxu0
    %v3812 = vadd.f32 %v3749, %v3811
    %v3813 = vpop.f32.mrf.mxu0
    %v3814 = vadd.f32 %v3751, %v3813
    %3815 = vmatmul.bf16.gmra.mxu0 %v2173
    %v3816 = vpop.f32.mrf.mxu0
    %v3817 = vadd.f32 %v3754, %v3816
    %v3818 = vpop.f32.mrf.mxu0
    %v3819 = vadd.f32 %v3756, %v3818
    %3820 = vmatmul.bf16.gmra.mxu0 %v2181
    %v3821 = vpop.f32.mrf.mxu0
    %v3822 = vadd.f32 %v3759, %v3821
    %v3823 = vpop.f32.mrf.mxu0
    %v3824 = vadd.f32 %v3761, %v3823
    %3825 = vmatmul.bf16.gmra.mxu0 %v2189
    %v3826 = vpop.f32.mrf.mxu0
    %v3827 = vadd.f32 %v3764, %v3826
    %v3828 = vpop.f32.mrf.mxu0
    %v3829 = vadd.f32 %v3766, %v3828
    %3830 = vmatmul.bf16.gmra.mxu0 %v2197
    %v3831 = vpop.f32.mrf.mxu0
    %v3832 = vadd.f32 %v3769, %v3831
    %v3833 = vpop.f32.mrf.mxu0
    %v3834 = vadd.f32 %v3771, %v3833
    %3835 = vmatmul.bf16.gmra.mxu0 %v2205
    %v3836 = vpop.f32.mrf.mxu0
    %v3837 = vadd.f32 %v3774, %v3836
    %v3838 = vpop.f32.mrf.mxu0
    %v3839 = vadd.f32 %v3776, %v3838
    %3840 = vmatmul.bf16.gmra.mxu0 %v2218
    %v3841 = vpop.f32.mrf.mxu0
    %v3842 = vadd.f32 %v3779, %v3841
    %v3843 = vpop.f32.mrf.mxu0
    %3844 = vdwg.mxu0
    %3845 = vmatpush.bf16.msra.mxu0 %v2864
    %3846 = vmatpush.bf16.msra.mxu0 %v2862
    %3847 = vmatpush.bf16.msra.mxu0 %v2860
    %3848 = vmatpush.bf16.msra.mxu0 %v2858
    %3849 = vmatpush.bf16.msra.mxu0 %v2856
    %3850 = vmatpush.bf16.msra.mxu0 %v2854
    %3851 = vmatpush.bf16.msra.mxu0 %v2852
    %3852 = vmatpush.bf16.msra.mxu0 %v2850
    %3853 = vmatmul.bf16.gmra.mxu0 %v2138
    %v3854 = vpop.f32.mrf.mxu0
    %v3855 = vadd.f32 %v3792, %v3854
    %v3856 = vpop.f32.mrf.mxu0
    %v3857 = vadd.f32 %v3794, %v3856
    %3858 = vmatmul.bf16.gmra.mxu0 %v2146
    %v3859 = vpop.f32.mrf.mxu0
    %v3860 = vadd.f32 %v3797, %v3859
    %v3861 = vpop.f32.mrf.mxu0
    %v3862 = vadd.f32 %v3799, %v3861
    %3863 = vmatmul.bf16.gmra.mxu0 %v2154
    %v3864 = vpop.f32.mrf.mxu0
    %v3865 = vadd.f32 %v3802, %v3864
    %v3866 = vpop.f32.mrf.mxu0
    %v3867 = vadd.f32 %v3804, %v3866
    %3868 = vmatmul.bf16.gmra.mxu0 %v2162
    %v3869 = vpop.f32.mrf.mxu0
    %v3870 = vadd.f32 %v3807, %v3869
    %v3871 = vpop.f32.mrf.mxu0
    %v3872 = vadd.f32 %v3809, %v3871
    %3873 = vmatmul.bf16.gmra.mxu0 %v2170
    %v3874 = vpop.f32.mrf.mxu0
    %v3875 = vadd.f32 %v3812, %v3874
    %v3876 = vpop.f32.mrf.mxu0
    %v3877 = vadd.f32 %v3814, %v3876
    %3878 = vmatmul.bf16.gmra.mxu0 %v2178
    %v3879 = vpop.f32.mrf.mxu0
    %v3880 = vadd.f32 %v3817, %v3879
    %v3881 = vpop.f32.mrf.mxu0
    %v3882 = vadd.f32 %v3819, %v3881
    %3883 = vmatmul.bf16.gmra.mxu0 %v2186
    %v3884 = vpop.f32.mrf.mxu0
    %v3885 = vadd.f32 %v3822, %v3884
    %v3886 = vpop.f32.mrf.mxu0
    %v3887 = vadd.f32 %v3824, %v3886
    %3888 = vmatmul.bf16.gmra.mxu0 %v2194
    %v3889 = vpop.f32.mrf.mxu0
    %v3890 = vadd.f32 %v3827, %v3889
    %v3891 = vpop.f32.mrf.mxu0
    %v3892 = vadd.f32 %v3829, %v3891
    %3893 = vmatmul.bf16.gmra.mxu0 %v2202
    %v3894 = vpop.f32.mrf.mxu0
    %v3895 = vadd.f32 %v3832, %v3894
    %v3896 = vpop.f32.mrf.mxu0
    %v3897 = vadd.f32 %v3834, %v3896
    %3898 = vmatmul.bf16.gmra.mxu0 %v2210
    %v3899 = vpop.f32.mrf.mxu0
    %v3900 = vadd.f32 %v3837, %v3899
    %v3901 = vpop.f32.mrf.mxu0
    %v3902 = vadd.f32 %v3839, %v3901
    %3903 = vmatmul.bf16.gmra.mxu0 %v2219
    %v3904 = vpop.f32.mrf.mxu0
    %v3905 = vadd.f32 %v3842, %v3904
    %v3906 = vpop.f32.mrf.mxu0
    %3907 = vdwg.mxu0
    %3908 = vmatpush.bf16.msra.mxu0 %v2880
    %3909 = vmatpush.bf16.msra.mxu0 %v2878
    %3910 = vmatpush.bf16.msra.mxu0 %v2876
    %3911 = vmatpush.bf16.msra.mxu0 %v2874
    %3912 = vmatpush.bf16.msra.mxu0 %v2872
    %3913 = vmatpush.bf16.msra.mxu0 %v2870
    %3914 = vmatpush.bf16.msra.mxu0 %v2868
    %3915 = vmatpush.bf16.msra.mxu0 %v2866
    %3916 = vmatmul.bf16.gmra.mxu0 %v2139
    %v3917 = vpop.f32.mrf.mxu0
    %v3918 = vadd.f32 %v3855, %v3917
    %v3919 = vpop.f32.mrf.mxu0
    %v3920 = vadd.f32 %v3857, %v3919
    %3921 = vmatmul.bf16.gmra.mxu0 %v2147
    %v3922 = vpop.f32.mrf.mxu0
    %v3923 = vadd.f32 %v3860, %v3922
    %v3924 = vpop.f32.mrf.mxu0
    %v3925 = vadd.f32 %v3862, %v3924
    %3926 = vmatmul.bf16.gmra.mxu0 %v2155
    %v3927 = vpop.f32.mrf.mxu0
    %v3928 = vadd.f32 %v3865, %v3927
    %v3929 = vpop.f32.mrf.mxu0
    %v3930 = vadd.f32 %v3867, %v3929
    %3931 = vmatmul.bf16.gmra.mxu0 %v2163
    %v3932 = vpop.f32.mrf.mxu0
    %v3933 = vadd.f32 %v3870, %v3932
    %v3934 = vpop.f32.mrf.mxu0
    %v3935 = vadd.f32 %v3872, %v3934
    %3936 = vmatmul.bf16.gmra.mxu0 %v2171
    %v3937 = vpop.f32.mrf.mxu0
    %v3938 = vadd.f32 %v3875, %v3937
    %v3939 = vpop.f32.mrf.mxu0
    %v3940 = vadd.f32 %v3877, %v3939
    %3941 = vmatmul.bf16.gmra.mxu0 %v2179
    %v3942 = vpop.f32.mrf.mxu0
    %v3943 = vadd.f32 %v3880, %v3942
    %v3944 = vpop.f32.mrf.mxu0
    %v3945 = vadd.f32 %v3882, %v3944
    %3946 = vmatmul.bf16.gmra.mxu0 %v2187
    %v3947 = vpop.f32.mrf.mxu0
    %v3948 = vadd.f32 %v3885, %v3947
    %v3949 = vpop.f32.mrf.mxu0
    %v3950 = vadd.f32 %v3887, %v3949
    %3951 = vmatmul.bf16.gmra.mxu0 %v2195
    %v3952 = vpop.f32.mrf.mxu0
    %v3953 = vadd.f32 %v3890, %v3952
    %v3954 = vpop.f32.mrf.mxu0
    %v3955 = vadd.f32 %v3892, %v3954
    %3956 = vmatmul.bf16.gmra.mxu0 %v2203
    %v3957 = vpop.f32.mrf.mxu0
    %v3958 = vadd.f32 %v3895, %v3957
    %v3959 = vpop.f32.mrf.mxu0
    %v3960 = vadd.f32 %v3897, %v3959
    %3961 = vmatmul.bf16.gmra.mxu0 %v2211
    %v3962 = vpop.f32.mrf.mxu0
    %v3963 = vadd.f32 %v3900, %v3962
    %v3964 = vpop.f32.mrf.mxu0
    %v3965 = vadd.f32 %v3902, %v3964
    %3966 = vmatmul.bf16.gmra.mxu0 %v2220
    %v3967 = vpop.f32.mrf.mxu0
    %v3968 = vadd.f32 %v3905, %v3967
    %v3969 = vpop.f32.mrf.mxu0
    %3970 = vdwg.mxu0
    %3971 = vmatpush.bf16.msra.mxu0 %v2896
    %3972 = vmatpush.bf16.msra.mxu0 %v2894
    %3973 = vmatpush.bf16.msra.mxu0 %v2892
    %3974 = vmatpush.bf16.msra.mxu0 %v2890
    %3975 = vmatpush.bf16.msra.mxu0 %v2888
    %3976 = vmatpush.bf16.msra.mxu0 %v2886
    %3977 = vmatpush.bf16.msra.mxu0 %v2884
    %3978 = vmatpush.bf16.msra.mxu0 %v2882
    %3979 = vmatmul.bf16.gmra.mxu0 %v2140
    %v3980 = vpop.f32.mrf.mxu0
    %v3981 = vadd.f32 %v3918, %v3980
    %v3982 = vpop.f32.mrf.mxu0
    %v3983 = vadd.f32 %v3920, %v3982
    %3984 = vmatmul.bf16.gmra.mxu0 %v2148
    %v3985 = vpop.f32.mrf.mxu0
    %v3986 = vadd.f32 %v3923, %v3985
    %v3987 = vpop.f32.mrf.mxu0
    %v3988 = vadd.f32 %v3925, %v3987
    %3989 = vmatmul.bf16.gmra.mxu0 %v2156
    %v3990 = vpop.f32.mrf.mxu0
    %v3991 = vadd.f32 %v3928, %v3990
    %v3992 = vpop.f32.mrf.mxu0
    %v3993 = vadd.f32 %v3930, %v3992
    %3994 = vmatmul.bf16.gmra.mxu0 %v2164
    %v3995 = vpop.f32.mrf.mxu0
    %v3996 = vadd.f32 %v3933, %v3995
    %v3997 = vpop.f32.mrf.mxu0
    %v3998 = vadd.f32 %v3935, %v3997
    %3999 = vmatmul.bf16.gmra.mxu0 %v2172
    %v4000 = vpop.f32.mrf.mxu0
    %v4001 = vadd.f32 %v3938, %v4000
    %v4002 = vpop.f32.mrf.mxu0
    %v4003 = vadd.f32 %v3940, %v4002
    %4004 = vmatmul.bf16.gmra.mxu0 %v2180
    %v4005 = vpop.f32.mrf.mxu0
    %v4006 = vadd.f32 %v3943, %v4005
    %v4007 = vpop.f32.mrf.mxu0
    %v4008 = vadd.f32 %v3945, %v4007
    %4009 = vmatmul.bf16.gmra.mxu0 %v2188
    %v4010 = vpop.f32.mrf.mxu0
    %v4011 = vadd.f32 %v3948, %v4010
    %v4012 = vpop.f32.mrf.mxu0
    %v4013 = vadd.f32 %v3950, %v4012
    %4014 = vmatmul.bf16.gmra.mxu0 %v2196
    %v4015 = vpop.f32.mrf.mxu0
    %v4016 = vadd.f32 %v3953, %v4015
    %v4017 = vpop.f32.mrf.mxu0
    %v4018 = vadd.f32 %v3955, %v4017
    %4019 = vmatmul.bf16.gmra.mxu0 %v2204
    %v4020 = vpop.f32.mrf.mxu0
    %v4021 = vadd.f32 %v3958, %v4020
    %v4022 = vpop.f32.mrf.mxu0
    %v4023 = vadd.f32 %v3960, %v4022
    %4024 = vmatmul.bf16.gmra.mxu0 %v2212
    %v4025 = vpop.f32.mrf.mxu0
    %v4026 = vadd.f32 %v3963, %v4025
    %v4027 = vpop.f32.mrf.mxu0
    %v4028 = vadd.f32 %v3965, %v4027
    %4029 = vmatmul.bf16.gmra.mxu0 %v2221
    %v4030 = vpop.f32.mrf.mxu0
    %v4031 = vadd.f32 %v3968, %v4030
    %v4032 = vpop.f32.mrf.mxu0
    %4033 = vdwg.mxu0
    %4034 = vmatpush.bf16.msra.mxu0 %v2912
    %4035 = vmatpush.bf16.msra.mxu0 %v2910
    %4036 = vmatpush.bf16.msra.mxu0 %v2908
    %4037 = vmatpush.bf16.msra.mxu0 %v2906
    %4038 = vmatpush.bf16.msra.mxu0 %v2904
    %4039 = vmatpush.bf16.msra.mxu0 %v2902
    %4040 = vmatpush.bf16.msra.mxu0 %v2900
    %4041 = vmatpush.bf16.msra.mxu0 %v2898
    %4042 = vmatmul.bf16.gmra.mxu0 %v2141
    %v4043 = vpop.f32.mrf.mxu0
    %v4044 = vadd.f32 %v3981, %v4043
    %v4045 = vpop.f32.mrf.mxu0
    %v4046 = vadd.f32 %v3983, %v4045
    %4047 = vmatmul.bf16.gmra.mxu0 %v2149
    %v4048 = vpop.f32.mrf.mxu0
    %v4049 = vadd.f32 %v3986, %v4048
    %v4050 = vpop.f32.mrf.mxu0
    %v4051 = vadd.f32 %v3988, %v4050
    %4052 = vmatmul.bf16.gmra.mxu0 %v2157
    %v4053 = vpop.f32.mrf.mxu0
    %v4054 = vadd.f32 %v3991, %v4053
    %v4055 = vpop.f32.mrf.mxu0
    %v4056 = vadd.f32 %v3993, %v4055
    %4057 = vmatmul.bf16.gmra.mxu0 %v2165
    %v4058 = vpop.f32.mrf.mxu0
    %v4059 = vadd.f32 %v3996, %v4058
    %v4060 = vpop.f32.mrf.mxu0
    %v4061 = vadd.f32 %v3998, %v4060
    %4062 = vmatmul.bf16.gmra.mxu0 %v2173
    %v4063 = vpop.f32.mrf.mxu0
    %v4064 = vadd.f32 %v4001, %v4063
    %v4065 = vpop.f32.mrf.mxu0
    %v4066 = vadd.f32 %v4003, %v4065
    %4067 = vmatmul.bf16.gmra.mxu0 %v2181
    %v4068 = vpop.f32.mrf.mxu0
    %v4069 = vadd.f32 %v4006, %v4068
    %v4070 = vpop.f32.mrf.mxu0
    %v4071 = vadd.f32 %v4008, %v4070
    %4072 = vmatmul.bf16.gmra.mxu0 %v2189
    %v4073 = vpop.f32.mrf.mxu0
    %v4074 = vadd.f32 %v4011, %v4073
    %v4075 = vpop.f32.mrf.mxu0
    %v4076 = vadd.f32 %v4013, %v4075
    %4077 = vmatmul.bf16.gmra.mxu0 %v2197
    %v4078 = vpop.f32.mrf.mxu0
    %v4079 = vadd.f32 %v4016, %v4078
    %v4080 = vpop.f32.mrf.mxu0
    %v4081 = vadd.f32 %v4018, %v4080
    %4082 = vmatmul.bf16.gmra.mxu0 %v2205
    %v4083 = vpop.f32.mrf.mxu0
    %v4084 = vadd.f32 %v4021, %v4083
    %v4085 = vpop.f32.mrf.mxu0
    %v4086 = vadd.f32 %v4023, %v4085
    %4087 = vmatmul.bf16.gmra.mxu0 %v2213
    %v4088 = vpop.f32.mrf.mxu0
    %v4089 = vadd.f32 %v4026, %v4088
    %v4090 = vpop.f32.mrf.mxu0
    %v4091 = vadd.f32 %v4028, %v4090
    %4092 = vmatmul.bf16.gmra.mxu0 %v2222
    %v4093 = vpop.f32.mrf.mxu0
    %v4094 = vadd.f32 %v4031, %v4093
    %v4095 = vpop.f32.mrf.mxu0
    %4096 = vdwg.mxu0
    %4097 = vmatpush.bf16.msra.mxu0 %v2928
    %4098 = vmatpush.bf16.msra.mxu0 %v2926
    %4099 = vmatpush.bf16.msra.mxu0 %v2924
    %4100 = vmatpush.bf16.msra.mxu0 %v2922
    %4101 = vmatpush.bf16.msra.mxu0 %v2920
    %4102 = vmatpush.bf16.msra.mxu0 %v2918
    %4103 = vmatpush.bf16.msra.mxu0 %v2916
    %4104 = vmatpush.bf16.msra.mxu0 %v2914
    %4105 = vmatmul.bf16.gmra.mxu0 %v2142
    %v4106 = vpop.f32.mrf.mxu0
    %v4107 = vadd.f32 %v4044, %v4106
    %v4108 = vpop.f32.mrf.mxu0
    %v4109 = vadd.f32 %v4046, %v4108
    %4110 = vmatmul.bf16.gmra.mxu0 %v2150
    %v4111 = vpop.f32.mrf.mxu0
    %v4112 = vadd.f32 %v4049, %v4111
    %v4113 = vpop.f32.mrf.mxu0
    %v4114 = vadd.f32 %v4051, %v4113
    %4115 = vmatmul.bf16.gmra.mxu0 %v2158
    %v4116 = vpop.f32.mrf.mxu0
    %v4117 = vadd.f32 %v4054, %v4116
    %v4118 = vpop.f32.mrf.mxu0
    %v4119 = vadd.f32 %v4056, %v4118
    %4120 = vmatmul.bf16.gmra.mxu0 %v2166
    %v4121 = vpop.f32.mrf.mxu0
    %v4122 = vadd.f32 %v4059, %v4121
    %v4123 = vpop.f32.mrf.mxu0
    %v4124 = vadd.f32 %v4061, %v4123
    %4125 = vmatmul.bf16.gmra.mxu0 %v2174
    %v4126 = vpop.f32.mrf.mxu0
    %v4127 = vadd.f32 %v4064, %v4126
    %v4128 = vpop.f32.mrf.mxu0
    %v4129 = vadd.f32 %v4066, %v4128
    %4130 = vmatmul.bf16.gmra.mxu0 %v2182
    %v4131 = vpop.f32.mrf.mxu0
    %v4132 = vadd.f32 %v4069, %v4131
    %v4133 = vpop.f32.mrf.mxu0
    %v4134 = vadd.f32 %v4071, %v4133
    %4135 = vmatmul.bf16.gmra.mxu0 %v2190
    %v4136 = vpop.f32.mrf.mxu0
    %v4137 = vadd.f32 %v4074, %v4136
    %v4138 = vpop.f32.mrf.mxu0
    %v4139 = vadd.f32 %v4076, %v4138
    %4140 = vmatmul.bf16.gmra.mxu0 %v2198
    %v4141 = vpop.f32.mrf.mxu0
    %v4142 = vadd.f32 %v4079, %v4141
    %v4143 = vpop.f32.mrf.mxu0
    %v4144 = vadd.f32 %v4081, %v4143
    %4145 = vmatmul.bf16.gmra.mxu0 %v2206
    %v4146 = vpop.f32.mrf.mxu0
    %v4147 = vadd.f32 %v4084, %v4146
    %v4148 = vpop.f32.mrf.mxu0
    %v4149 = vadd.f32 %v4086, %v4148
    %4150 = vmatmul.bf16.gmra.mxu0 %v2214
    %v4151 = vpop.f32.mrf.mxu0
    %v4152 = vadd.f32 %v4089, %v4151
    %v4153 = vpop.f32.mrf.mxu0
    %v4154 = vadd.f32 %v4091, %v4153
    %4155 = vmatmul.bf16.gmra.mxu0 %v2223
    %v4156 = vpop.f32.mrf.mxu0
    %v4157 = vadd.f32 %v4094, %v4156
    %v4158 = vpop.f32.mrf.mxu0
    %4159 = vdwg.mxu0
    %4160 = vmatpush.bf16.msra.mxu0 %v2944
    %4161 = vmatpush.bf16.msra.mxu0 %v2942
    %4162 = vmatpush.bf16.msra.mxu0 %v2940
    %4163 = vmatpush.bf16.msra.mxu0 %v2938
    %4164 = vmatpush.bf16.msra.mxu0 %v2936
    %4165 = vmatpush.bf16.msra.mxu0 %v2934
    %4166 = vmatpush.bf16.msra.mxu0 %v2932
    %4167 = vmatpush.bf16.msra.mxu0 %v2930
    %4168 = vmatmul.bf16.gmra.mxu0 %v2143
    %v4169 = vpop.f32.mrf.mxu0
    %v4170 = vadd.f32 %v4107, %v4169
    %v4171 = vpop.f32.mrf.mxu0
    %v4172 = vadd.f32 %v4109, %v4171
    %4173 = vmatmul.bf16.gmra.mxu0 %v2151
    %v4174 = vpop.f32.mrf.mxu0
    %v4175 = vadd.f32 %v4112, %v4174
    %v4176 = vpop.f32.mrf.mxu0
    %v4177 = vadd.f32 %v4114, %v4176
    %4178 = vmatmul.bf16.gmra.mxu0 %v2159
    %v4179 = vpop.f32.mrf.mxu0
    %v4180 = vadd.f32 %v4117, %v4179
    %v4181 = vpop.f32.mrf.mxu0
    %v4182 = vadd.f32 %v4119, %v4181
    %4183 = vmatmul.bf16.gmra.mxu0 %v2167
    %v4184 = vpop.f32.mrf.mxu0
    %v4185 = vadd.f32 %v4122, %v4184
    %v4186 = vpop.f32.mrf.mxu0
    %v4187 = vadd.f32 %v4124, %v4186
    %4188 = vmatmul.bf16.gmra.mxu0 %v2175
    %v4189 = vpop.f32.mrf.mxu0
    %v4190 = vadd.f32 %v4127, %v4189
    %v4191 = vpop.f32.mrf.mxu0
    %v4192 = vadd.f32 %v4129, %v4191
    %4193 = vmatmul.bf16.gmra.mxu0 %v2183
    %v4194 = vpop.f32.mrf.mxu0
    %v4195 = vadd.f32 %v4132, %v4194
    %v4196 = vpop.f32.mrf.mxu0
    %v4197 = vadd.f32 %v4134, %v4196
    %4198 = vmatmul.bf16.gmra.mxu0 %v2191
    %v4199 = vpop.f32.mrf.mxu0
    %v4200 = vadd.f32 %v4137, %v4199
    %v4201 = vpop.f32.mrf.mxu0
    %v4202 = vadd.f32 %v4139, %v4201
    %4203 = vmatmul.bf16.gmra.mxu0 %v2199
    %v4204 = vpop.f32.mrf.mxu0
    %v4205 = vadd.f32 %v4142, %v4204
    %v4206 = vpop.f32.mrf.mxu0
    %v4207 = vadd.f32 %v4144, %v4206
    %4208 = vmatmul.bf16.gmra.mxu0 %v2207
    %v4209 = vpop.f32.mrf.mxu0
    %v4210 = vadd.f32 %v4147, %v4209
    %v4211 = vpop.f32.mrf.mxu0
    %v4212 = vadd.f32 %v4149, %v4211
    %4213 = vmatmul.bf16.gmra.mxu0 %v2215
    %v4214 = vpop.f32.mrf.mxu0
    %v4215 = vadd.f32 %v4152, %v4214
    %v4216 = vpop.f32.mrf.mxu0
    %v4217 = vadd.f32 %v4154, %v4216
    %4218 = vmatmul.bf16.gmra.mxu0 %v2224
    %v4219 = vpop.f32.mrf.mxu0
    %v4220 = vadd.f32 %v4157, %v4219
    %v4221 = vpop.f32.mrf.mxu0
    %4222 = vdwg.mxu0
    %s4223 = scalar_lea.vmem [#allocation12], 4
    %v4224 = vld [vmem:[%s4223] ss:$8 sm:$0x3]
    %s4225 = scalar_lea.vmem [#allocation12], 5
    %v4226 = vld [vmem:[%s4225] ss:$8 sm:$0x3]
    %v4227 = vmul.f32 %v3603, %v336
    %v4228 = vmul.f32 %v4170, %v336
    %v4229 = vmul.f32 %v3605, %v341
    %v4230 = vmul.f32 %v4172, %v341
    %v4231 = vmul.f32 %v3608, %v346
    %v4232 = vmul.f32 %v4175, %v346
    %v4233 = vmul.f32 %v3610, %v351
    %v4234 = vmul.f32 %v4177, %v351
    %v4235 = vmul.f32 %v3613, %v356
    %v4236 = vmul.f32 %v4180, %v356
    %v4237 = vmul.f32 %v3615, %v361
    %v4238 = vmul.f32 %v4182, %v361
    %v4239 = vmul.f32 %v3618, %v366
    %v4240 = vmul.f32 %v4185, %v366
    %v4241 = vmul.f32 %v3620, %v371
    %v4242 = vmul.f32 %v4187, %v371
    %v4243 = vmul.f32 %v3623, %v376
    %v4244 = vmul.f32 %v4190, %v376
    %v4245 = vmul.f32 %v3625, %v381
    %v4246 = vmul.f32 %v4192, %v381
    %v4247 = vmul.f32 %v3628, %v386
    %v4248 = vmul.f32 %v4195, %v386
    %v4249 = vmul.f32 %v3630, %v391
    %v4250 = vmul.f32 %v4197, %v391
    %v4251 = vmul.f32 %v3633, %v396
    %v4252 = vmul.f32 %v4200, %v396
    %v4253 = vmul.f32 %v3635, %v401
    %v4254 = vmul.f32 %v4202, %v401
    %v4255 = vmul.f32 %v3638, %v406
    %v4256 = vmul.f32 %v4205, %v406
    %v4257 = vmul.f32 %v3640, %v411
    %v4258 = vmul.f32 %v4207, %v411
    %v4259 = vmul.f32 %v3643, %v416
    %v4260 = vmul.f32 %v4210, %v416
    %v4261 = vmul.f32 %v3645, %v421
    %v4262 = vmul.f32 %v4212, %v421
    %v4263 = vmul.f32 %v3648, %v426
    %v4264 = vmul.f32 %v4215, %v426
    %v4265 = vmul.f32 %v3650, %v431
    %v4266 = vmul.f32 %v4217, %v431
    %v4267 = vmul.f32 %v3653, %v436
    %v4268 = vmul.f32 %v4220, %v436
    %v4269 = vadd.f32 %v4227, %v4229
    %v4270 = vadd.f32 %v4269, %v4231
    %v4271 = vadd.f32 %v4270, %v4233
    %v4272 = vadd.f32 %v4271, %v4235
    %v4273 = vadd.f32 %v4272, %v4237
    %v4274 = vadd.f32 %v4273, %v4239
    %v4275 = vadd.f32 %v4274, %v4241
    %v4276 = vadd.f32 %v4275, %v4243
    %v4277 = vadd.f32 %v4276, %v4245
    %v4278 = vadd.f32 %v4277, %v4247
    %v4279 = vadd.f32 %v4278, %v4249
    %v4280 = vadd.f32 %v4279, %v4251
    %v4281 = vadd.f32 %v4280, %v4253
    %v4282 = vadd.f32 %v4281, %v4255
    %v4283 = vadd.f32 %v4282, %v4257
    %v4284 = vadd.f32 %v4283, %v4259
    %v4285 = vadd.f32 %v4284, %v4261
    %v4286 = vadd.f32 %v4285, %v4263
    %v4287 = vadd.f32 %v4286, %v4265
    %v4288 = vsel %vm1818, %v4267, 0.0
    %v4289 = vadd.f32 %v4287, %v4288
    %v4290 = vrot.slane %v4289, 4
    %v4291 = vadd.f32 %v4289, %v4290
    %v4292 = vrot.slane %v4291, 2
    %v4293 = vadd.f32 %v4291, %v4292
    %v4294 = vrot.slane %v4293, 1
    %v4295 = vadd.f32 %v4293, %v4294
    %v4296 = vadd.f32 %v4228, %v4230
    %v4297 = vadd.f32 %v4296, %v4232
    %v4298 = vadd.f32 %v4297, %v4234
    %v4299 = vadd.f32 %v4298, %v4236
    %v4300 = vadd.f32 %v4299, %v4238
    %v4301 = vadd.f32 %v4300, %v4240
    %v4302 = vadd.f32 %v4301, %v4242
    %v4303 = vadd.f32 %v4302, %v4244
    %v4304 = vadd.f32 %v4303, %v4246
    %v4305 = vadd.f32 %v4304, %v4248
    %v4306 = vadd.f32 %v4305, %v4250
    %v4307 = vadd.f32 %v4306, %v4252
    %v4308 = vadd.f32 %v4307, %v4254
    %v4309 = vadd.f32 %v4308, %v4256
    %v4310 = vadd.f32 %v4309, %v4258
    %v4311 = vadd.f32 %v4310, %v4260
    %v4312 = vadd.f32 %v4311, %v4262
    %v4313 = vadd.f32 %v4312, %v4264
    %v4314 = vadd.f32 %v4313, %v4266
    %v4315 = vsel %vm1818, %v4268, 0.0
    %v4316 = vadd.f32 %v4314, %v4315
    %v4317 = vrot.slane %v4316, 4
    %v4318 = vadd.f32 %v4316, %v4317
    %v4319 = vrot.slane %v4318, 2
    %v4320 = vadd.f32 %v4318, %v4319
    %v4321 = vrot.slane %v4320, 1
    %v4322 = vadd.f32 %v4320, %v4321
    %v4323 = vmul.f32 %v4295, 0.010204081
    %v4324 = vmul.f32 %v4322, 0.010204081
    %v4325 = vmul.f32 %v4227, %v3603
    %v4326 = vmul.f32 %v4228, %v4170
    %v4327 = vmul.f32 %v4229, %v3605
    %v4328 = vmul.f32 %v4230, %v4172
    %v4329 = vmul.f32 %v4231, %v3608
    %v4330 = vmul.f32 %v4232, %v4175
    %v4331 = vmul.f32 %v4233, %v3610
    %v4332 = vmul.f32 %v4234, %v4177
    %v4333 = vmul.f32 %v4235, %v3613
    %v4334 = vmul.f32 %v4236, %v4180
    %v4335 = vmul.f32 %v4237, %v3615
    %v4336 = vmul.f32 %v4238, %v4182
    %v4337 = vmul.f32 %v4239, %v3618
    %v4338 = vmul.f32 %v4240, %v4185
    %v4339 = vmul.f32 %v4241, %v3620
    %v4340 = vmul.f32 %v4242, %v4187
    %v4341 = vmul.f32 %v4243, %v3623
    %v4342 = vmul.f32 %v4244, %v4190
    %v4343 = vmul.f32 %v4245, %v3625
    %v4344 = vmul.f32 %v4246, %v4192
    %v4345 = vmul.f32 %v4247, %v3628
    %v4346 = vmul.f32 %v4248, %v4195
    %v4347 = vmul.f32 %v4249, %v3630
    %v4348 = vmul.f32 %v4250, %v4197
    %v4349 = vmul.f32 %v4251, %v3633
    %v4350 = vmul.f32 %v4252, %v4200
    %v4351 = vmul.f32 %v4253, %v3635
    %v4352 = vmul.f32 %v4254, %v4202
    %v4353 = vmul.f32 %v4255, %v3638
    %v4354 = vmul.f32 %v4256, %v4205
    %v4355 = vmul.f32 %v4257, %v3640
    %v4356 = vmul.f32 %v4258, %v4207
    %v4357 = vmul.f32 %v4259, %v3643
    %v4358 = vmul.f32 %v4260, %v4210
    %v4359 = vmul.f32 %v4261, %v3645
    %v4360 = vmul.f32 %v4262, %v4212
    %v4361 = vmul.f32 %v4263, %v3648
    %v4362 = vmul.f32 %v4264, %v4215
    %v4363 = vmul.f32 %v4265, %v3650
    %v4364 = vmul.f32 %v4266, %v4217
    %v4365 = vmul.f32 %v4267, %v3653
    %v4366 = vmul.f32 %v4268, %v4220
    %v4367 = vadd.f32 %v4325, %v4327
    %v4368 = vadd.f32 %v4367, %v4329
    %v4369 = vadd.f32 %v4368, %v4331
    %v4370 = vadd.f32 %v4369, %v4333
    %v4371 = vadd.f32 %v4370, %v4335
    %v4372 = vadd.f32 %v4371, %v4337
    %v4373 = vadd.f32 %v4372, %v4339
    %v4374 = vadd.f32 %v4373, %v4341
    %v4375 = vadd.f32 %v4374, %v4343
    %v4376 = vadd.f32 %v4375, %v4345
    %v4377 = vadd.f32 %v4376, %v4347
    %v4378 = vadd.f32 %v4377, %v4349
    %v4379 = vadd.f32 %v4378, %v4351
    %v4380 = vadd.f32 %v4379, %v4353
    %v4381 = vadd.f32 %v4380, %v4355
    %v4382 = vadd.f32 %v4381, %v4357
    %v4383 = vadd.f32 %v4382, %v4359
    %v4384 = vadd.f32 %v4383, %v4361
    %v4385 = vadd.f32 %v4384, %v4363
    %v4386 = vsel %vm1818, %v4365, 0.0
    %v4387 = vadd.f32 %v4385, %v4386
    %v4388 = vrot.slane %v4387, 4
    %v4389 = vadd.f32 %v4387, %v4388
    %v4390 = vrot.slane %v4389, 2
    %v4391 = vadd.f32 %v4389, %v4390
    %v4392 = vrot.slane %v4391, 1
    %v4393 = vadd.f32 %v4391, %v4392
    %v4394 = vadd.f32 %v4326, %v4328
    %v4395 = vadd.f32 %v4394, %v4330
    %v4396 = vadd.f32 %v4395, %v4332
    %v4397 = vadd.f32 %v4396, %v4334
    %v4398 = vadd.f32 %v4397, %v4336
    %v4399 = vadd.f32 %v4398, %v4338
    %v4400 = vadd.f32 %v4399, %v4340
    %v4401 = vadd.f32 %v4400, %v4342
    %v4402 = vadd.f32 %v4401, %v4344
    %v4403 = vadd.f32 %v4402, %v4346
    %v4404 = vadd.f32 %v4403, %v4348
    %v4405 = vadd.f32 %v4404, %v4350
    %v4406 = vadd.f32 %v4405, %v4352
    %v4407 = vadd.f32 %v4406, %v4354
    %v4408 = vadd.f32 %v4407, %v4356
    %v4409 = vadd.f32 %v4408, %v4358
    %v4410 = vadd.f32 %v4409, %v4360
    %v4411 = vadd.f32 %v4410, %v4362
    %v4412 = vadd.f32 %v4411, %v4364
    %v4413 = vsel %vm1818, %v4366, 0.0
    %v4414 = vadd.f32 %v4412, %v4413
    %v4415 = vrot.slane %v4414, 4
    %v4416 = vadd.f32 %v4414, %v4415
    %v4417 = vrot.slane %v4416, 2
    %v4418 = vadd.f32 %v4416, %v4417
    %v4419 = vrot.slane %v4418, 1
    %v4420 = vadd.f32 %v4418, %v4419
    %v4421 = vmul.f32 %v4393, 0.010204081
    %v4422 = vmul.f32 %v4420, 0.010204081
    %v4423 = vmul.f32 %v4323, %v4323
    %v4424 = vmul.f32 %v4324, %v4324
    %v4425 = vsub.f32 %v4421, %v4423
    %v4426 = vsub.f32 %v4422, %v4424
    %v4427 = vmax.f32 %v4425, 0.0
    %v4428 = vmax.f32 %v4426, 0.0
    %v4429 = vsub.f32 %v3605, %v4323
    %v4430 = vsub.f32 %v4172, %v4324
    %v4431 = vsub.f32 %v3608, %v4323
    %v4432 = vsub.f32 %v4175, %v4324
    %v4433 = vsub.f32 %v3610, %v4323
    %v4434 = vsub.f32 %v4177, %v4324
    %v4435 = vsub.f32 %v3613, %v4323
    %v4436 = vsub.f32 %v4180, %v4324
    %v4437 = vsub.f32 %v3615, %v4323
    %v4438 = vsub.f32 %v4182, %v4324
    %v4439 = vsub.f32 %v3618, %v4323
    %v4440 = vsub.f32 %v4185, %v4324
    %v4441 = vsub.f32 %v3620, %v4323
    %v4442 = vsub.f32 %v4187, %v4324
    %v4443 = vsub.f32 %v3623, %v4323
    %v4444 = vsub.f32 %v4190, %v4324
    %v4445 = vsub.f32 %v3630, %v4323
    %v4446 = vsub.f32 %v4197, %v4324
    %v4447 = vsub.f32 %v3633, %v4323
    %v4448 = vsub.f32 %v4200, %v4324
    %v4449 = vsub.f32 %v3635, %v4323
    %v4450 = vsub.f32 %v4202, %v4324
    %v4451 = vsub.f32 %v3638, %v4323
    %v4452 = vsub.f32 %v4205, %v4324
    %v4453 = vsub.f32 %v3640, %v4323
    %v4454 = vsub.f32 %v4207, %v4324
    %v4455 = vsub.f32 %v3643, %v4323
    %v4456 = vsub.f32 %v4210, %v4324
    %v4457 = vsub.f32 %v3645, %v4323
    %v4458 = vsub.f32 %v4212, %v4324
    %v4459 = vsub.f32 %v3648, %v4323
    %v4460 = vsub.f32 %v4215, %v4324
    %v4461 = vadd.f32 %v4427, 1e-05
    %v4462 = vadd.f32 %v4428, 1e-05
    %v4463 = vrsqrt.pop %v4461
    %v4464 = vmul.f32 %v4463, %v4461
    %v4465 = vmul.f32 %v4464, %v4463
    %v4466 = vmul.f32 0.5, %v4465
    %v4467 = vsub.f32 1.5, %v4466
    %v4468 = vmul.f32 %v4463, %v4467
    %vm4469 = vweird.f32 %v4461
    %vm4470 = vweird.f32 %v4463
    %vm4471 = vmor %vm4469, %vm4470
    %v4472 = vsel %vm4471, %v4463, %v4468
    %v4473 = vrsqrt.pop %v4462
    %v4474 = vmul.f32 %v4473, %v4462
    %v4475 = vmul.f32 %v4474, %v4473
    %v4476 = vmul.f32 0.5, %v4475
    %v4477 = vsub.f32 1.5, %v4476
    %v4478 = vmul.f32 %v4473, %v4477
    %vm4479 = vweird.f32 %v4462
    %vm4480 = vweird.f32 %v4473
    %vm4481 = vmor %vm4479, %vm4480
    %v4482 = vsel %vm4481, %v4473, %v4478
    %v4484 = vperm.slane %v4224, 0
    %v4485 = vperm.slane %v4224, 1
    %v4488 = vmul.f32 %v4472, %v4484
    %v4489 = vmul.f32 %v4482, %v4485
    %v4490 = vperm.slane %v4488, 0
    %v4491 = vperm.slane %v4489, 0
    %v4492 = vmul.f32 %v4429, %v4490
    %v4493 = vmul.f32 %v4430, %v4491
    %v4494 = vmul.f32 %v4431, %v4490
    %v4495 = vmul.f32 %v4432, %v4491
    %v4496 = vmul.f32 %v4433, %v4490
    %v4497 = vmul.f32 %v4434, %v4491
    %v4498 = vmul.f32 %v4435, %v4490
    %v4499 = vmul.f32 %v4436, %v4491
    %v4500 = vmul.f32 %v4437, %v4490
    %v4501 = vmul.f32 %v4438, %v4491
    %v4502 = vmul.f32 %v4439, %v4490
    %v4503 = vmul.f32 %v4440, %v4491
    %v4504 = vmul.f32 %v4441, %v4490
    %v4505 = vmul.f32 %v4442, %v4491
    %v4506 = vmul.f32 %v4443, %v4490
    %v4507 = vmul.f32 %v4444, %v4491
    %v4508 = vmul.f32 %v4445, %v4490
    %v4509 = vmul.f32 %v4446, %v4491
    %v4510 = vmul.f32 %v4447, %v4490
    %v4511 = vmul.f32 %v4448, %v4491
    %v4512 = vmul.f32 %v4449, %v4490
    %v4513 = vmul.f32 %v4450, %v4491
    %v4514 = vmul.f32 %v4451, %v4490
    %v4515 = vmul.f32 %v4452, %v4491
    %v4516 = vmul.f32 %v4453, %v4490
    %v4517 = vmul.f32 %v4454, %v4491
    %v4518 = vmul.f32 %v4455, %v4490
    %v4519 = vmul.f32 %v4456, %v4491
    %v4520 = vmul.f32 %v4457, %v4490
    %v4521 = vmul.f32 %v4458, %v4491
    %v4522 = vmul.f32 %v4459, %v4490
    %v4523 = vmul.f32 %v4460, %v4491
    %v4525 = vperm.slane %v4226, 0
    %v4526 = vperm.slane %v4226, 1
    %v4529 = vadd.f32 %v4492, %v4525
    %v4530 = vadd.f32 %v4493, %v4526
    %v4531 = vadd.f32 %v4494, %v4525
    %v4532 = vadd.f32 %v4495, %v4526
    %v4533 = vadd.f32 %v4496, %v4525
    %v4534 = vadd.f32 %v4497, %v4526
    %v4535 = vadd.f32 %v4498, %v4525
    %v4536 = vadd.f32 %v4499, %v4526
    %v4537 = vadd.f32 %v4500, %v4525
    %v4538 = vadd.f32 %v4501, %v4526
    %v4539 = vadd.f32 %v4502, %v4525
    %v4540 = vadd.f32 %v4503, %v4526
    %v4541 = vadd.f32 %v4504, %v4525
    %v4542 = vadd.f32 %v4505, %v4526
    %v4543 = vadd.f32 %v4506, %v4525
    %v4544 = vadd.f32 %v4507, %v4526
    %v4545 = vadd.f32 %v4508, %v4525
    %v4546 = vadd.f32 %v4509, %v4526
    %v4547 = vadd.f32 %v4510, %v4525
    %v4548 = vadd.f32 %v4511, %v4526
    %v4549 = vadd.f32 %v4512, %v4525
    %v4550 = vadd.f32 %v4513, %v4526
    %v4551 = vadd.f32 %v4514, %v4525
    %v4552 = vadd.f32 %v4515, %v4526
    %v4553 = vadd.f32 %v4516, %v4525
    %v4554 = vadd.f32 %v4517, %v4526
    %v4555 = vadd.f32 %v4518, %v4525
    %v4556 = vadd.f32 %v4519, %v4526
    %v4557 = vadd.f32 %v4520, %v4525
    %v4558 = vadd.f32 %v4521, %v4526
    %v4559 = vadd.f32 %v4522, %v4525
    %v4560 = vadd.f32 %v4523, %v4526
    %v4561 = vmax.f32 %v4529, 0.0
    %v4562 = vmax.f32 %v4530, 0.0
    %v4563 = vmax.f32 %v4531, 0.0
    %v4564 = vmax.f32 %v4532, 0.0
    %v4565 = vmax.f32 %v4533, 0.0
    %v4566 = vmax.f32 %v4534, 0.0
    %v4567 = vmax.f32 %v4535, 0.0
    %v4568 = vmax.f32 %v4536, 0.0
    %v4569 = vmax.f32 %v4537, 0.0
    %v4570 = vmax.f32 %v4538, 0.0
    %v4571 = vmax.f32 %v4539, 0.0
    %v4572 = vmax.f32 %v4540, 0.0
    %v4573 = vmax.f32 %v4541, 0.0
    %v4574 = vmax.f32 %v4542, 0.0
    %v4575 = vmax.f32 %v4543, 0.0
    %v4576 = vmax.f32 %v4544, 0.0
    %v4577 = vmax.f32 %v4545, 0.0
    %v4578 = vmax.f32 %v4546, 0.0
    %v4579 = vmax.f32 %v4547, 0.0
    %v4580 = vmax.f32 %v4548, 0.0
    %v4581 = vmax.f32 %v4549, 0.0
    %v4582 = vmax.f32 %v4550, 0.0
    %v4583 = vmax.f32 %v4551, 0.0
    %v4584 = vmax.f32 %v4552, 0.0
    %v4585 = vmax.f32 %v4553, 0.0
    %v4586 = vmax.f32 %v4554, 0.0
    %v4587 = vmax.f32 %v4555, 0.0
    %v4588 = vmax.f32 %v4556, 0.0
    %v4589 = vmax.f32 %v4557, 0.0
    %v4590 = vmax.f32 %v4558, 0.0
    %v4591 = vmax.f32 %v4559, 0.0
    %v4592 = vmax.f32 %v4560, 0.0
    %v4593 = vmul.f32 %v4561, %v341
    %v4594 = vmul.f32 %v4562, %v341
    %v4595 = vmul.f32 %v4563, %v346
    %v4596 = vmul.f32 %v4564, %v346
    %v4597 = vmul.f32 %v4565, %v351
    %v4598 = vmul.f32 %v4566, %v351
    %v4599 = vmul.f32 %v4567, %v356
    %v4600 = vmul.f32 %v4568, %v356
    %v4601 = vmul.f32 %v4569, %v361
    %v4602 = vmul.f32 %v4570, %v361
    %v4603 = vmul.f32 %v4571, %v366
    %v4604 = vmul.f32 %v4572, %v366
    %v4605 = vmul.f32 %v4573, %v371
    %v4606 = vmul.f32 %v4574, %v371
    %v4607 = vmul.f32 %v4575, %v376
    %v4608 = vmul.f32 %v4576, %v376
    %v4609 = vmul.f32 %v4577, %v391
    %v4610 = vmul.f32 %v4578, %v391
    %v4611 = vmul.f32 %v4579, %v396
    %v4612 = vmul.f32 %v4580, %v396
    %v4613 = vmul.f32 %v4581, %v401
    %v4614 = vmul.f32 %v4582, %v401
    %v4615 = vmul.f32 %v4583, %v406
    %v4616 = vmul.f32 %v4584, %v406
    %v4617 = vmul.f32 %v4585, %v411
    %v4618 = vmul.f32 %v4586, %v411
    %v4619 = vmul.f32 %v4587, %v416
    %v4620 = vmul.f32 %v4588, %v416
    %v4621 = vmul.f32 %v4589, %v421
    %v4622 = vmul.f32 %v4590, %v421
    %v4623 = vmul.f32 %v4591, %v426
    %v4624 = vmul.f32 %v4592, %v426
    %v4625 = vpack.c.bf16 %v4594, %v4593
    %v4626 = vpack.c.bf16 %v4596, %v4595
    %v4627 = vpack.c.bf16 %v4598, %v4597
    %v4628 = vpack.c.bf16 %v4600, %v4599
    %v4629 = vpack.c.bf16 %v4602, %v4601
    %v4630 = vpack.c.bf16 %v4604, %v4603
    %v4631 = vpack.c.bf16 %v4606, %v4605
    %v4632 = vpack.c.bf16 %v4608, %v4607
    %v4633 = vpack.c.bf16 %v4610, %v4609
    %v4634 = vpack.c.bf16 %v4612, %v4611
    %v4635 = vpack.c.bf16 %v4614, %v4613
    %v4636 = vpack.c.bf16 %v4616, %v4615
    %v4637 = vpack.c.bf16 %v4618, %v4617
    %v4638 = vpack.c.bf16 %v4620, %v4619
    %v4639 = vpack.c.bf16 %v4622, %v4621
    %v4640 = vpack.c.bf16 %v4624, %v4623
    %s4641 = smul.u32 4, 7
    %s4642 = smul.u32 %s4641, 224
    %s4643 = smul.u32 %s4642, 1
    %s4644 = sshll.u32 %s4643, 4
    %4645 = dma.done [#allocation5], %s4644
    %v4647 = vunpack.c.l.b16 %v4625
    %v4648 = vunpack.c.h.b16 %v4625
    %v4649 = vpack.c.b16 %v4647, %v4647
    %v4650 = vpack.c.b16 %v4648, %v4648
    %v4652 = vshrl.u32 %v4649, 16
    %v4655 = vshrl.u32 %v4650, 16
    %v4657 = vrot.slane %v4649, 1
    %v4658 = vrot.slane %v4650, 1
    %v4659 = vrot.slane %v4652, 1
    %v4660 = vrot.slane %v4655, 1
    %v4661 = vrot.slane %v4649, 2
    %v4662 = vrot.slane %v4650, 2
    %v4663 = vrot.slane %v4652, 2
    %v4664 = vrot.slane %v4655, 2
    %v4666 = vunpack.c.l.b16 %v4626
    %v4667 = vunpack.c.h.b16 %v4626
    %v4668 = vpack.c.b16 %v4666, %v4666
    %v4669 = vpack.c.b16 %v4667, %v4667
    %v4670 = vrot.slane %v4668, 7
    %v4671 = vrot.slane %v4669, 7
    %v4673 = vunpack.c.l.b16 %v4633
    %v4674 = vunpack.c.h.b16 %v4633
    %v4675 = vpack.c.b16 %v4673, %v4673
    %v4676 = vpack.c.b16 %v4674, %v4674
    %v4678 = vshll.u32 %v4675, 16
    %v4680 = vrot.slane %v4678, 1
    %v4682 = vshll.u32 %v4676, 16
    %v4684 = vrot.slane %v4682, 1
    %v4685 = vrot.slane %v4675, 1
    %v4686 = vrot.slane %v4676, 1
    %v4687 = vrot.slane %v4678, 2
    %v4688 = vrot.slane %v4682, 2
    %v4689 = vrot.slane %v4675, 2
    %v4690 = vrot.slane %v4676, 2
    %v4692 = vunpack.c.l.b16 %v4634
    %v4693 = vunpack.c.h.b16 %v4634
    %v4694 = vpack.c.b16 %v4692, %v4692
    %v4695 = vpack.c.b16 %v4693, %v4693
    %v4697 = vshll.u32 %v4694, 16
    %v4699 = vrot.slane %v4697, 7
    %v4701 = vshll.u32 %v4695, 16
    %v4703 = vrot.slane %v4701, 7
    %v4704 = vrot.slane %v4694, 7
    %v4705 = vrot.slane %v4695, 7
    %v4706 = vrot.slane %v4657, 1
    %v4707 = vrot.slane %v4658, 1
    %v4708 = vrot.slane %v4659, 1
    %v4709 = vrot.slane %v4660, 1
    %v4710 = vrot.slane %v4661, 1
    %v4711 = vrot.slane %v4662, 1
    %v4712 = vrot.slane %v4663, 1
    %v4713 = vrot.slane %v4664, 1
    %v4714 = vrot.slane %v4670, 1
    %v4715 = vrot.slane %v4671, 1
    %v4730 = vrot.slane %v4680, 1
    %v4731 = vrot.slane %v4684, 1
    %v4732 = vrot.slane %v4685, 1
    %v4733 = vrot.slane %v4686, 1
    %v4734 = vrot.slane %v4687, 1
    %v4735 = vrot.slane %v4688, 1
    %v4736 = vrot.slane %v4689, 1
    %v4737 = vrot.slane %v4690, 1
    %v4738 = vrot.slane %v4699, 1
    %v4739 = vrot.slane %v4703, 1
    %v4740 = vrot.slane %v4704, 1
    %v4741 = vrot.slane %v4705, 1
    %vm4756 = vcmask 1040384
    %vm4757 = vsmask.f32 256
    %vm4758 = vmand %vm4756, %vm4757
    %v4759 = vsel %vm4758, %v4657, %v4685
    %v4760 = vsel %vm4758, %v4658, %v4686
    %v4761 = vsel %vm4758, %v4659, %v4730
    %v4762 = vsel %vm4758, %v4660, %v4731
    %v4763 = vsel %vm4758, %v4706, %v4732
    %v4764 = vsel %vm4758, %v4707, %v4733
    %v4765 = vsel %vm4758, %v4708, %v4734
    %v4766 = vsel %vm4758, %v4709, %v4735
    %v4767 = vsel %vm4758, %v4710, %v4736
    %v4768 = vsel %vm4758, %v4711, %v4737
    %v4769 = vsel %vm4758, %v4712, %v4738
    %v4770 = vsel %vm4758, %v4713, %v4739
    %v4771 = vsel %vm4758, %v4714, %v4740
    %v4772 = vsel %vm4758, %v4715, %v4741
    %v4773 = vld [vmem:[#allocation4] sm:$0xf]
    %v4774 = vld [vmem:[#allocation4 + $0x4] sm:$0xf]
    %v4775 = vld [vmem:[#allocation4 + $0x8] sm:$0xf]
    %v4776 = vld [vmem:[#allocation4 + $0xc] sm:$0xf]
    %v4777 = vld [vmem:[#allocation4 + $0x10] sm:$0xf]
    %v4778 = vld [vmem:[#allocation4 + $0x14] sm:$0xf]
    %v4779 = vld [vmem:[#allocation4 + $0x18] sm:$0xf]
    %v4780 = vld [vmem:[#allocation4 + $0x1c] sm:$0xf]
    %v4781 = vld [vmem:[#allocation4 + $0x20] sm:$0xf]
    %v4782 = vld [vmem:[#allocation4 + $0x24] sm:$0xf]
    %v4783 = vld [vmem:[#allocation4 + $0x28] sm:$0xf]
    %v4784 = vld [vmem:[#allocation4 + $0x2c] sm:$0xf]
    %v4785 = vld [vmem:[#allocation4 + $0x30] sm:$0xf]
    %v4786 = vld [vmem:[#allocation4 + $0x34] sm:$0xf]
    %v4787 = vld [vmem:[#allocation4 + $0x38] sm:$0xf]
    %v4788 = vld [vmem:[#allocation4 + $0x3c] sm:$0xf]
    %v4789 = vld [vmem:[#allocation4 + $0x40] sm:$0xf]
    %v4790 = vld [vmem:[#allocation4 + $0x44] sm:$0xf]
    %v4791 = vld [vmem:[#allocation4 + $0x48] sm:$0xf]
    %v4792 = vld [vmem:[#allocation4 + $0x4c] sm:$0xf]
    %v4793 = vld [vmem:[#allocation4 + $0x50] sm:$0xf]
    %v4794 = vld [vmem:[#allocation4 + $0x54] sm:$0xf]
    %v4795 = vld [vmem:[#allocation4 + $0x58] sm:$0xf]
    %v4796 = vld [vmem:[#allocation4 + $0x5c] sm:$0xf]
    %v4797 = vld [vmem:[#allocation4 + $0x60] sm:$0xf]
    %v4798 = vld [vmem:[#allocation4 + $0x64] sm:$0xf]
    %v4799 = vld [vmem:[#allocation4 + $0x68] sm:$0xf]
    %v4800 = vld [vmem:[#allocation4 + $0x6c] sm:$0xf]
    %v4801 = vld [vmem:[#allocation4 + $0x70] sm:$0xf]
    %v4802 = vld [vmem:[#allocation4 + $0x74] sm:$0xf]
    %v4803 = vld [vmem:[#allocation4 + $0x78] sm:$0xf]
    %v4804 = vld [vmem:[#allocation4 + $0x7c] sm:$0xf]
    %v4805 = vld [vmem:[#allocation4 + $0x80] sm:$0xf]
    %v4806 = vld [vmem:[#allocation4 + $0x84] sm:$0xf]
    %v4807 = vld [vmem:[#allocation4 + $0x88] sm:$0xf]
    %v4808 = vld [vmem:[#allocation4 + $0x8c] sm:$0xf]
    %v4809 = vld [vmem:[#allocation4 + $0x90] sm:$0xf]
    %v4810 = vld [vmem:[#allocation4 + $0x94] sm:$0xf]
    %v4811 = vld [vmem:[#allocation4 + $0x98] sm:$0xf]
    %v4812 = vld [vmem:[#allocation4 + $0x9c] sm:$0xf]
    %v4813 = vld [vmem:[#allocation4 + $0xa0] sm:$0xf]
    %v4814 = vld [vmem:[#allocation4 + $0xa4] sm:$0xf]
    %v4815 = vld [vmem:[#allocation4 + $0xa8] sm:$0xf]
    %v4816 = vld [vmem:[#allocation4 + $0xac] sm:$0xf]
    %v4817 = vld [vmem:[#allocation4 + $0xb0] sm:$0xf]
    %v4818 = vld [vmem:[#allocation4 + $0xb4] sm:$0xf]
    %v4819 = vld [vmem:[#allocation4 + $0xb8] sm:$0xf]
    %v4820 = vld [vmem:[#allocation4 + $0xbc] sm:$0xf]
    %v4821 = vld [vmem:[#allocation4 + $0xc0] sm:$0xf]
    %v4822 = vld [vmem:[#allocation4 + $0xc4] sm:$0xf]
    %v4823 = vld [vmem:[#allocation4 + $0xc8] sm:$0xf]
    %v4824 = vld [vmem:[#allocation4 + $0xcc] sm:$0xf]
    %v4825 = vld [vmem:[#allocation4 + $0xd0] sm:$0xf]
    %v4826 = vld [vmem:[#allocation4 + $0xd4] sm:$0xf]
    %v4827 = vld [vmem:[#allocation4 + $0xd8] sm:$0xf]
    %v4828 = vld [vmem:[#allocation4 + $0xdc] sm:$0xf]
    %v4829 = vld [vmem:[#allocation4 + $0xe0] sm:$0xf]
    %v4830 = vld [vmem:[#allocation4 + $0xe4] sm:$0xf]
    %v4831 = vld [vmem:[#allocation4 + $0xe8] sm:$0xf]
    %v4832 = vld [vmem:[#allocation4 + $0xec] sm:$0xf]
    %v4833 = vld [vmem:[#allocation4 + $0xf0] sm:$0xf]
    %v4834 = vld [vmem:[#allocation4 + $0xf4] sm:$0xf]
    %v4835 = vld [vmem:[#allocation4 + $0xf8] sm:$0xf]
    %v4836 = vld [vmem:[#allocation4 + $0xfc] sm:$0xf]
    %v4837 = vld [vmem:[#allocation4 + $0x100] sm:$0xf]
    %v4838 = vld [vmem:[#allocation4 + $0x104] sm:$0xf]
    %v4839 = vld [vmem:[#allocation4 + $0x108] sm:$0xf]
    %v4840 = vld [vmem:[#allocation4 + $0x10c] sm:$0xf]
    %v4841 = vld [vmem:[#allocation4 + $0x110] sm:$0xf]
    %v4842 = vld [vmem:[#allocation4 + $0x114] sm:$0xf]
    %v4843 = vld [vmem:[#allocation4 + $0x118] sm:$0xf]
    %v4844 = vld [vmem:[#allocation4 + $0x11c] sm:$0xf]
    %v4845 = vld [vmem:[#allocation4 + $0x120] sm:$0xf]
    %v4846 = vld [vmem:[#allocation4 + $0x124] sm:$0xf]
    %v4847 = vld [vmem:[#allocation4 + $0x128] sm:$0xf]
    %v4848 = vld [vmem:[#allocation4 + $0x12c] sm:$0xf]
    %v4849 = vld [vmem:[#allocation4 + $0x130] sm:$0xf]
    %v4850 = vld [vmem:[#allocation4 + $0x134] sm:$0xf]
    %v4851 = vld [vmem:[#allocation4 + $0x138] sm:$0xf]
    %v4852 = vld [vmem:[#allocation4 + $0x13c] sm:$0xf]
    %v4853 = vld [vmem:[#allocation4 + $0x140] sm:$0xf]
    %v4854 = vld [vmem:[#allocation4 + $0x144] sm:$0xf]
    %v4855 = vld [vmem:[#allocation4 + $0x148] sm:$0xf]
    %v4856 = vld [vmem:[#allocation4 + $0x14c] sm:$0xf]
    %v4857 = vld [vmem:[#allocation4 + $0x150] sm:$0xf]
    %v4858 = vld [vmem:[#allocation4 + $0x154] sm:$0xf]
    %v4859 = vld [vmem:[#allocation4 + $0x158] sm:$0xf]
    %v4860 = vld [vmem:[#allocation4 + $0x15c] sm:$0xf]
    %v4861 = vld [vmem:[#allocation4 + $0x160] sm:$0xf]
    %v4862 = vld [vmem:[#allocation4 + $0x164] sm:$0xf]
    %v4863 = vld [vmem:[#allocation4 + $0x168] sm:$0xf]
    %v4864 = vld [vmem:[#allocation4 + $0x16c] sm:$0xf]
    %v4865 = vld [vmem:[#allocation4 + $0x170] sm:$0xf]
    %v4866 = vld [vmem:[#allocation4 + $0x174] sm:$0xf]
    %v4867 = vld [vmem:[#allocation4 + $0x178] sm:$0xf]
    %v4868 = vld [vmem:[#allocation4 + $0x17c] sm:$0xf]
    %v4869 = vld [vmem:[#allocation4 + $0x180] sm:$0xf]
    %v4870 = vld [vmem:[#allocation4 + $0x184] sm:$0xf]
    %v4871 = vld [vmem:[#allocation4 + $0x188] sm:$0xf]
    %v4872 = vld [vmem:[#allocation4 + $0x18c] sm:$0xf]
    %v4873 = vld [vmem:[#allocation4 + $0x190] sm:$0xf]
    %v4874 = vld [vmem:[#allocation4 + $0x194] sm:$0xf]
    %v4875 = vld [vmem:[#allocation4 + $0x198] sm:$0xf]
    %v4876 = vld [vmem:[#allocation4 + $0x19c] sm:$0xf]
    %v4877 = vld [vmem:[#allocation4 + $0x1a0] sm:$0xf]
    %v4878 = vld [vmem:[#allocation4 + $0x1a4] sm:$0xf]
    %v4879 = vld [vmem:[#allocation4 + $0x1a8] sm:$0xf]
    %v4880 = vld [vmem:[#allocation4 + $0x1ac] sm:$0xf]
    %v4881 = vld [vmem:[#allocation4 + $0x1b0] sm:$0xf]
    %v4882 = vld [vmem:[#allocation4 + $0x1b4] sm:$0xf]
    %v4883 = vld [vmem:[#allocation4 + $0x1b8] sm:$0xf]
    %v4884 = vld [vmem:[#allocation4 + $0x1bc] sm:$0xf]
    %v4885 = vld [vmem:[#allocation4 + $0x1c0] sm:$0xf]
    %v4886 = vld [vmem:[#allocation4 + $0x1c4] sm:$0xf]
    %v4887 = vld [vmem:[#allocation4 + $0x1c8] sm:$0xf]
    %v4888 = vld [vmem:[#allocation4 + $0x1cc] sm:$0xf]
    %v4889 = vld [vmem:[#allocation4 + $0x1d0] sm:$0xf]
    %v4890 = vld [vmem:[#allocation4 + $0x1d4] sm:$0xf]
    %v4891 = vld [vmem:[#allocation4 + $0x1d8] sm:$0xf]
    %v4892 = vld [vmem:[#allocation4 + $0x1dc] sm:$0xf]
    %v4893 = vld [vmem:[#allocation4 + $0x1e0] sm:$0xf]
    %v4894 = vld [vmem:[#allocation4 + $0x1e4] sm:$0xf]
    %v4895 = vld [vmem:[#allocation4 + $0x1e8] sm:$0xf]
    %v4896 = vld [vmem:[#allocation4 + $0x1ec] sm:$0xf]
    %v4897 = vld [vmem:[#allocation4 + $0x1f0] sm:$0xf]
    %v4898 = vld [vmem:[#allocation4 + $0x1f4] sm:$0xf]
    %v4899 = vld [vmem:[#allocation4 + $0x1f8] sm:$0xf]
    %v4900 = vld [vmem:[#allocation4 + $0x1fc] sm:$0xf]
    %v4901 = vld [vmem:[#allocation4 + $0x200] sm:$0xf]
    %v4902 = vld [vmem:[#allocation4 + $0x204] sm:$0xf]
    %v4903 = vld [vmem:[#allocation4 + $0x208] sm:$0xf]
    %v4904 = vld [vmem:[#allocation4 + $0x20c] sm:$0xf]
    %v4905 = vld [vmem:[#allocation4 + $0x210] sm:$0xf]
    %v4906 = vld [vmem:[#allocation4 + $0x214] sm:$0xf]
    %v4907 = vld [vmem:[#allocation4 + $0x218] sm:$0xf]
    %v4908 = vld [vmem:[#allocation4 + $0x21c] sm:$0xf]
    %v4909 = vld [vmem:[#allocation4 + $0x220] sm:$0xf]
    %v4910 = vld [vmem:[#allocation4 + $0x224] sm:$0xf]
    %v4911 = vld [vmem:[#allocation4 + $0x228] sm:$0xf]
    %v4912 = vld [vmem:[#allocation4 + $0x22c] sm:$0xf]
    %v4913 = vld [vmem:[#allocation4 + $0x230] sm:$0xf]
    %v4914 = vld [vmem:[#allocation4 + $0x234] sm:$0xf]
    %v4915 = vld [vmem:[#allocation4 + $0x238] sm:$0xf]
    %v4916 = vld [vmem:[#allocation4 + $0x23c] sm:$0xf]
    %v4917 = vld [vmem:[#allocation4 + $0x240] sm:$0xf]
    %v4918 = vld [vmem:[#allocation4 + $0x244] sm:$0xf]
    %v4919 = vld [vmem:[#allocation4 + $0x248] sm:$0xf]
    %v4920 = vld [vmem:[#allocation4 + $0x24c] sm:$0xf]
    %v4921 = vld [vmem:[#allocation4 + $0x250] sm:$0xf]
    %v4922 = vld [vmem:[#allocation4 + $0x254] sm:$0xf]
    %v4923 = vld [vmem:[#allocation4 + $0x258] sm:$0xf]
    %v4924 = vld [vmem:[#allocation4 + $0x25c] sm:$0xf]
    %v4925 = vld [vmem:[#allocation4 + $0x260] sm:$0xf]
    %v4926 = vld [vmem:[#allocation4 + $0x264] sm:$0xf]
    %v4927 = vld [vmem:[#allocation4 + $0x268] sm:$0xf]
    %v4928 = vld [vmem:[#allocation4 + $0x26c] sm:$0xf]
    %v4929 = vld [vmem:[#allocation4 + $0x270] sm:$0xf]
    %v4930 = vld [vmem:[#allocation4 + $0x274] sm:$0xf]
    %v4931 = vld [vmem:[#allocation4 + $0x278] sm:$0xf]
    %v4932 = vld [vmem:[#allocation4 + $0x27c] sm:$0xf]
    %v4933 = vld [vmem:[#allocation4 + $0x280] sm:$0xf]
    %v4934 = vld [vmem:[#allocation4 + $0x284] sm:$0xf]
    %v4935 = vld [vmem:[#allocation4 + $0x288] sm:$0xf]
    %v4936 = vld [vmem:[#allocation4 + $0x28c] sm:$0xf]
    %v4937 = vld [vmem:[#allocation4 + $0x290] sm:$0xf]
    %v4938 = vld [vmem:[#allocation4 + $0x294] sm:$0xf]
    %v4939 = vld [vmem:[#allocation4 + $0x298] sm:$0xf]
    %v4940 = vld [vmem:[#allocation4 + $0x29c] sm:$0xf]
    %v4941 = vld [vmem:[#allocation4 + $0x2a0] sm:$0xf]
    %v4942 = vld [vmem:[#allocation4 + $0x2a4] sm:$0xf]
    %v4943 = vld [vmem:[#allocation4 + $0x2a8] sm:$0xf]
    %v4944 = vld [vmem:[#allocation4 + $0x2ac] sm:$0xf]
    %v4945 = vld [vmem:[#allocation4 + $0x2b0] sm:$0xf]
    %v4946 = vld [vmem:[#allocation4 + $0x2b4] sm:$0xf]
    %v4947 = vld [vmem:[#allocation4 + $0x2b8] sm:$0xf]
    %v4948 = vld [vmem:[#allocation4 + $0x2bc] sm:$0xf]
    %v4949 = vld [vmem:[#allocation4 + $0x2c0] sm:$0xf]
    %v4950 = vld [vmem:[#allocation4 + $0x2c4] sm:$0xf]
    %v4951 = vld [vmem:[#allocation4 + $0x2c8] sm:$0xf]
    %v4952 = vld [vmem:[#allocation4 + $0x2cc] sm:$0xf]
    %v4953 = vld [vmem:[#allocation4 + $0x2d0] sm:$0xf]
    %v4954 = vld [vmem:[#allocation4 + $0x2d4] sm:$0xf]
    %v4955 = vld [vmem:[#allocation4 + $0x2d8] sm:$0xf]
    %v4956 = vld [vmem:[#allocation4 + $0x2dc] sm:$0xf]
    %v4957 = vld [vmem:[#allocation4 + $0x2e0] sm:$0xf]
    %v4958 = vld [vmem:[#allocation4 + $0x2e4] sm:$0xf]
    %v4959 = vld [vmem:[#allocation4 + $0x2e8] sm:$0xf]
    %v4960 = vld [vmem:[#allocation4 + $0x2ec] sm:$0xf]
    %v4961 = vld [vmem:[#allocation4 + $0x2f0] sm:$0xf]
    %v4962 = vld [vmem:[#allocation4 + $0x2f4] sm:$0xf]
    %v4963 = vld [vmem:[#allocation4 + $0x2f8] sm:$0xf]
    %v4964 = vld [vmem:[#allocation4 + $0x2fc] sm:$0xf]
    %v4965 = vld [vmem:[#allocation4 + $0x300] sm:$0xf]
    %v4966 = vld [vmem:[#allocation4 + $0x304] sm:$0xf]
    %v4967 = vld [vmem:[#allocation4 + $0x308] sm:$0xf]
    %v4968 = vld [vmem:[#allocation4 + $0x30c] sm:$0xf]
    %v4969 = vld [vmem:[#allocation4 + $0x310] sm:$0xf]
    %v4970 = vld [vmem:[#allocation4 + $0x314] sm:$0xf]
    %v4971 = vld [vmem:[#allocation4 + $0x318] sm:$0xf]
    %v4972 = vld [vmem:[#allocation4 + $0x31c] sm:$0xf]
    %v4973 = vld [vmem:[#allocation4 + $0x320] sm:$0xf]
    %v4974 = vld [vmem:[#allocation4 + $0x324] sm:$0xf]
    %v4975 = vld [vmem:[#allocation4 + $0x328] sm:$0xf]
    %v4976 = vld [vmem:[#allocation4 + $0x32c] sm:$0xf]
    %v4977 = vld [vmem:[#allocation4 + $0x330] sm:$0xf]
    %v4978 = vld [vmem:[#allocation4 + $0x334] sm:$0xf]
    %v4979 = vld [vmem:[#allocation4 + $0x338] sm:$0xf]
    %v4980 = vld [vmem:[#allocation4 + $0x33c] sm:$0xf]
    %v4981 = vld [vmem:[#allocation4 + $0x340] sm:$0xf]
    %v4982 = vld [vmem:[#allocation4 + $0x344] sm:$0xf]
    %v4983 = vld [vmem:[#allocation4 + $0x348] sm:$0xf]
    %v4984 = vld [vmem:[#allocation4 + $0x34c] sm:$0xf]
    %v4985 = vld [vmem:[#allocation4 + $0x350] sm:$0xf]
    %v4986 = vld [vmem:[#allocation4 + $0x354] sm:$0xf]
    %v4987 = vld [vmem:[#allocation4 + $0x358] sm:$0xf]
    %v4988 = vld [vmem:[#allocation4 + $0x35c] sm:$0xf]
    %v4989 = vld [vmem:[#allocation4 + $0x360] sm:$0xf]
    %v4990 = vld [vmem:[#allocation4 + $0x364] sm:$0xf]
    %v4991 = vld [vmem:[#allocation4 + $0x368] sm:$0xf]
    %v4992 = vld [vmem:[#allocation4 + $0x36c] sm:$0xf]
    %v4993 = vld [vmem:[#allocation4 + $0x370] sm:$0xf]
    %v4994 = vld [vmem:[#allocation4 + $0x374] sm:$0xf]
    %v4995 = vld [vmem:[#allocation4 + $0x378] sm:$0xf]
    %v4996 = vld [vmem:[#allocation4 + $0x37c] sm:$0xf]
    %v4998 = vshll.u32 %v4668, 16
    %v5000 = vrot.slane %v4998, 1
    %v5002 = vshll.u32 %v4669, 16
    %v5004 = vrot.slane %v5002, 1
    %v5005 = vrot.slane %v4668, 1
    %v5006 = vrot.slane %v4669, 1
    %v5007 = vrot.slane %v4998, 2
    %v5008 = vrot.slane %v5002, 2
    %v5009 = vrot.slane %v4668, 2
    %v5010 = vrot.slane %v4669, 2
    %v5012 = vunpack.c.l.b16 %v4627
    %v5013 = vunpack.c.h.b16 %v4627
    %v5014 = vpack.c.b16 %v5012, %v5012
    %v5015 = vpack.c.b16 %v5013, %v5013
    %v5017 = vshll.u32 %v5014, 16
    %v5019 = vrot.slane %v5017, 7
    %v5021 = vshll.u32 %v5015, 16
    %v5023 = vrot.slane %v5021, 7
    %v5024 = vrot.slane %v5014, 7
    %v5025 = vrot.slane %v5015, 7
    %v5026 = vshrl.u32 %v4694, 16
    %v5028 = vshrl.u32 %v4695, 16
    %v5030 = vrot.slane %v4694, 1
    %v5031 = vrot.slane %v4695, 1
    %v5032 = vrot.slane %v5026, 1
    %v5033 = vrot.slane %v5028, 1
    %v5035 = vunpack.c.l.b16 %v4635
    %v5036 = vunpack.c.h.b16 %v4635
    %v5037 = vpack.c.b16 %v5035, %v5035
    %v5038 = vpack.c.b16 %v5036, %v5036
    %v5039 = vrot.slane %v5037, 6
    %v5040 = vrot.slane %v5038, 6
    %v5042 = vshrl.u32 %v5037, 16
    %v5044 = vrot.slane %v5042, 6
    %v5046 = vshrl.u32 %v5038, 16
    %v5048 = vrot.slane %v5046, 6
    %v5049 = vrot.slane %v5037, 7
    %v5050 = vrot.slane %v5038, 7
    %v5051 = vshrl.u32 %v4668, 16
    %v5053 = vrot.slane %v5051, 1
    %v5054 = vshrl.u32 %v4669, 16
    %v5056 = vrot.slane %v5054, 1
    %v5058 = vshrl.u32 %v5000, 16
    %v5060 = vrot.slane %v5058, 1
    %v5062 = vshrl.u32 %v5004, 16
    %v5064 = vrot.slane %v5062, 1
    %v5066 = vshrl.u32 %v5005, 16
    %v5068 = vrot.slane %v5066, 1
    %v5070 = vshrl.u32 %v5006, 16
    %v5072 = vrot.slane %v5070, 1
    %v5074 = vshrl.u32 %v5007, 16
    %v5076 = vrot.slane %v5074, 1
    %v5078 = vshrl.u32 %v5008, 16
    %v5080 = vrot.slane %v5078, 1
    %v5082 = vshrl.u32 %v5009, 16
    %v5084 = vrot.slane %v5082, 1
    %v5086 = vshrl.u32 %v5010, 16
    %v5088 = vrot.slane %v5086, 1
    %v5090 = vshrl.u32 %v5019, 16
    %v5092 = vrot.slane %v5090, 1
    %v5094 = vshrl.u32 %v5023, 16
    %v5096 = vrot.slane %v5094, 1
    %v5098 = vshrl.u32 %v5024, 16
    %v5100 = vrot.slane %v5098, 1
    %v5102 = vshrl.u32 %v5025, 16
    %v5104 = vrot.slane %v5102, 1
    %v5119 = vrot.slane %v4697, 2
    %v5120 = vrot.slane %v4701, 2
    %v5122 = vshll.u32 %v5026, 16
    %v5124 = vrot.slane %v5122, 2
    %v5126 = vshll.u32 %v5028, 16
    %v5128 = vrot.slane %v5126, 2
    %v5130 = vshll.u32 %v5030, 16
    %v5132 = vrot.slane %v5130, 2
    %v5134 = vshll.u32 %v5031, 16
    %v5136 = vrot.slane %v5134, 2
    %v5138 = vshll.u32 %v5032, 16
    %v5140 = vrot.slane %v5138, 2
    %v5142 = vshll.u32 %v5033, 16
    %v5144 = vrot.slane %v5142, 2
    %v5146 = vshll.u32 %v5039, 16
    %v5148 = vrot.slane %v5146, 2
    %v5150 = vshll.u32 %v5040, 16
    %v5152 = vrot.slane %v5150, 2
    %v5154 = vshll.u32 %v5044, 16
    %v5156 = vrot.slane %v5154, 2
    %v5158 = vshll.u32 %v5048, 16
    %v5160 = vrot.slane %v5158, 2
    %v5162 = vshll.u32 %v5049, 16
    %v5164 = vrot.slane %v5162, 2
    %v5166 = vshll.u32 %v5050, 16
    %v5168 = vrot.slane %v5166, 2
    %v5183 = vsel %vm4758, %v5053, %v5119
    %v5184 = vsel %vm4758, %v5056, %v5120
    %v5185 = vsel %vm4758, %v5060, %v5124
    %v5186 = vsel %vm4758, %v5064, %v5128
    %v5187 = vsel %vm4758, %v5068, %v5132
    %v5188 = vsel %vm4758, %v5072, %v5136
    %v5189 = vsel %vm4758, %v5076, %v5140
    %v5190 = vsel %vm4758, %v5080, %v5144
    %v5191 = vsel %vm4758, %v5084, %v5148
    %v5192 = vsel %vm4758, %v5088, %v5152
    %v5193 = vsel %vm4758, %v5092, %v5156
    %v5194 = vsel %vm4758, %v5096, %v5160
    %v5195 = vsel %vm4758, %v5100, %v5164
    %v5196 = vsel %vm4758, %v5104, %v5168
    %s5197 = scalar_lea.vmem [#allocation4], 896
    %v5198 = vld [vmem:[%s5197] sm:$0xf]
    %v5199 = vld [vmem:[%s5197 + $0x4] sm:$0xf]
    %v5200 = vld [vmem:[%s5197 + $0x8] sm:$0xf]
    %v5201 = vld [vmem:[%s5197 + $0xc] sm:$0xf]
    %v5202 = vld [vmem:[%s5197 + $0x10] sm:$0xf]
    %v5203 = vld [vmem:[%s5197 + $0x14] sm:$0xf]
    %v5204 = vld [vmem:[%s5197 + $0x18] sm:$0xf]
    %v5205 = vld [vmem:[%s5197 + $0x1c] sm:$0xf]
    %v5206 = vld [vmem:[%s5197 + $0x20] sm:$0xf]
    %v5207 = vld [vmem:[%s5197 + $0x24] sm:$0xf]
    %v5208 = vld [vmem:[%s5197 + $0x28] sm:$0xf]
    %v5209 = vld [vmem:[%s5197 + $0x2c] sm:$0xf]
    %v5210 = vld [vmem:[%s5197 + $0x30] sm:$0xf]
    %v5211 = vld [vmem:[%s5197 + $0x34] sm:$0xf]
    %v5212 = vld [vmem:[%s5197 + $0x38] sm:$0xf]
    %v5213 = vld [vmem:[%s5197 + $0x3c] sm:$0xf]
    %v5214 = vld [vmem:[%s5197 + $0x40] sm:$0xf]
    %v5215 = vld [vmem:[%s5197 + $0x44] sm:$0xf]
    %v5216 = vld [vmem:[%s5197 + $0x48] sm:$0xf]
    %v5217 = vld [vmem:[%s5197 + $0x4c] sm:$0xf]
    %v5218 = vld [vmem:[%s5197 + $0x50] sm:$0xf]
    %v5219 = vld [vmem:[%s5197 + $0x54] sm:$0xf]
    %v5220 = vld [vmem:[%s5197 + $0x58] sm:$0xf]
    %v5221 = vld [vmem:[%s5197 + $0x5c] sm:$0xf]
    %v5222 = vld [vmem:[%s5197 + $0x60] sm:$0xf]
    %v5223 = vld [vmem:[%s5197 + $0x64] sm:$0xf]
    %v5224 = vld [vmem:[%s5197 + $0x68] sm:$0xf]
    %v5225 = vld [vmem:[%s5197 + $0x6c] sm:$0xf]
    %v5226 = vld [vmem:[%s5197 + $0x70] sm:$0xf]
    %v5227 = vld [vmem:[%s5197 + $0x74] sm:$0xf]
    %v5228 = vld [vmem:[%s5197 + $0x78] sm:$0xf]
    %v5229 = vld [vmem:[%s5197 + $0x7c] sm:$0xf]
    %v5230 = vld [vmem:[%s5197 + $0x80] sm:$0xf]
    %v5231 = vld [vmem:[%s5197 + $0x84] sm:$0xf]
    %v5232 = vld [vmem:[%s5197 + $0x88] sm:$0xf]
    %v5233 = vld [vmem:[%s5197 + $0x8c] sm:$0xf]
    %v5234 = vld [vmem:[%s5197 + $0x90] sm:$0xf]
    %v5235 = vld [vmem:[%s5197 + $0x94] sm:$0xf]
    %v5236 = vld [vmem:[%s5197 + $0x98] sm:$0xf]
    %v5237 = vld [vmem:[%s5197 + $0x9c] sm:$0xf]
    %v5238 = vld [vmem:[%s5197 + $0xa0] sm:$0xf]
    %v5239 = vld [vmem:[%s5197 + $0xa4] sm:$0xf]
    %v5240 = vld [vmem:[%s5197 + $0xa8] sm:$0xf]
    %v5241 = vld [vmem:[%s5197 + $0xac] sm:$0xf]
    %v5242 = vld [vmem:[%s5197 + $0xb0] sm:$0xf]
    %v5243 = vld [vmem:[%s5197 + $0xb4] sm:$0xf]
    %v5244 = vld [vmem:[%s5197 + $0xb8] sm:$0xf]
    %v5245 = vld [vmem:[%s5197 + $0xbc] sm:$0xf]
    %v5246 = vld [vmem:[%s5197 + $0xc0] sm:$0xf]
    %v5247 = vld [vmem:[%s5197 + $0xc4] sm:$0xf]
    %v5248 = vld [vmem:[%s5197 + $0xc8] sm:$0xf]
    %v5249 = vld [vmem:[%s5197 + $0xcc] sm:$0xf]
    %v5250 = vld [vmem:[%s5197 + $0xd0] sm:$0xf]
    %v5251 = vld [vmem:[%s5197 + $0xd4] sm:$0xf]
    %v5252 = vld [vmem:[%s5197 + $0xd8] sm:$0xf]
    %v5253 = vld [vmem:[%s5197 + $0xdc] sm:$0xf]
    %v5254 = vld [vmem:[%s5197 + $0xe0] sm:$0xf]
    %v5255 = vld [vmem:[%s5197 + $0xe4] sm:$0xf]
    %v5256 = vld [vmem:[%s5197 + $0xe8] sm:$0xf]
    %v5257 = vld [vmem:[%s5197 + $0xec] sm:$0xf]
    %v5258 = vld [vmem:[%s5197 + $0xf0] sm:$0xf]
    %v5259 = vld [vmem:[%s5197 + $0xf4] sm:$0xf]
    %v5260 = vld [vmem:[%s5197 + $0xf8] sm:$0xf]
    %v5261 = vld [vmem:[%s5197 + $0xfc] sm:$0xf]
    %v5262 = vld [vmem:[%s5197 + $0x100] sm:$0xf]
    %v5263 = vld [vmem:[%s5197 + $0x104] sm:$0xf]
    %v5264 = vld [vmem:[%s5197 + $0x108] sm:$0xf]
    %v5265 = vld [vmem:[%s5197 + $0x10c] sm:$0xf]
    %v5266 = vld [vmem:[%s5197 + $0x110] sm:$0xf]
    %v5267 = vld [vmem:[%s5197 + $0x114] sm:$0xf]
    %v5268 = vld [vmem:[%s5197 + $0x118] sm:$0xf]
    %v5269 = vld [vmem:[%s5197 + $0x11c] sm:$0xf]
    %v5270 = vld [vmem:[%s5197 + $0x120] sm:$0xf]
    %v5271 = vld [vmem:[%s5197 + $0x124] sm:$0xf]
    %v5272 = vld [vmem:[%s5197 + $0x128] sm:$0xf]
    %v5273 = vld [vmem:[%s5197 + $0x12c] sm:$0xf]
    %v5274 = vld [vmem:[%s5197 + $0x130] sm:$0xf]
    %v5275 = vld [vmem:[%s5197 + $0x134] sm:$0xf]
    %v5276 = vld [vmem:[%s5197 + $0x138] sm:$0xf]
    %v5277 = vld [vmem:[%s5197 + $0x13c] sm:$0xf]
    %v5278 = vld [vmem:[%s5197 + $0x140] sm:$0xf]
    %v5279 = vld [vmem:[%s5197 + $0x144] sm:$0xf]
    %v5280 = vld [vmem:[%s5197 + $0x148] sm:$0xf]
    %v5281 = vld [vmem:[%s5197 + $0x14c] sm:$0xf]
    %v5282 = vld [vmem:[%s5197 + $0x150] sm:$0xf]
    %v5283 = vld [vmem:[%s5197 + $0x154] sm:$0xf]
    %v5284 = vld [vmem:[%s5197 + $0x158] sm:$0xf]
    %v5285 = vld [vmem:[%s5197 + $0x15c] sm:$0xf]
    %v5286 = vld [vmem:[%s5197 + $0x160] sm:$0xf]
    %v5287 = vld [vmem:[%s5197 + $0x164] sm:$0xf]
    %v5288 = vld [vmem:[%s5197 + $0x168] sm:$0xf]
    %v5289 = vld [vmem:[%s5197 + $0x16c] sm:$0xf]
    %v5290 = vld [vmem:[%s5197 + $0x170] sm:$0xf]
    %v5291 = vld [vmem:[%s5197 + $0x174] sm:$0xf]
    %v5292 = vld [vmem:[%s5197 + $0x178] sm:$0xf]
    %v5293 = vld [vmem:[%s5197 + $0x17c] sm:$0xf]
    %v5294 = vld [vmem:[%s5197 + $0x180] sm:$0xf]
    %v5295 = vld [vmem:[%s5197 + $0x184] sm:$0xf]
    %v5296 = vld [vmem:[%s5197 + $0x188] sm:$0xf]
    %v5297 = vld [vmem:[%s5197 + $0x18c] sm:$0xf]
    %v5298 = vld [vmem:[%s5197 + $0x190] sm:$0xf]
    %v5299 = vld [vmem:[%s5197 + $0x194] sm:$0xf]
    %v5300 = vld [vmem:[%s5197 + $0x198] sm:$0xf]
    %v5301 = vld [vmem:[%s5197 + $0x19c] sm:$0xf]
    %v5302 = vld [vmem:[%s5197 + $0x1a0] sm:$0xf]
    %v5303 = vld [vmem:[%s5197 + $0x1a4] sm:$0xf]
    %v5304 = vld [vmem:[%s5197 + $0x1a8] sm:$0xf]
    %v5305 = vld [vmem:[%s5197 + $0x1ac] sm:$0xf]
    %v5306 = vld [vmem:[%s5197 + $0x1b0] sm:$0xf]
    %v5307 = vld [vmem:[%s5197 + $0x1b4] sm:$0xf]
    %v5308 = vld [vmem:[%s5197 + $0x1b8] sm:$0xf]
    %v5309 = vld [vmem:[%s5197 + $0x1bc] sm:$0xf]
    %v5310 = vld [vmem:[%s5197 + $0x1c0] sm:$0xf]
    %v5311 = vld [vmem:[%s5197 + $0x1c4] sm:$0xf]
    %v5312 = vld [vmem:[%s5197 + $0x1c8] sm:$0xf]
    %v5313 = vld [vmem:[%s5197 + $0x1cc] sm:$0xf]
    %v5314 = vld [vmem:[%s5197 + $0x1d0] sm:$0xf]
    %v5315 = vld [vmem:[%s5197 + $0x1d4] sm:$0xf]
    %v5316 = vld [vmem:[%s5197 + $0x1d8] sm:$0xf]
    %v5317 = vld [vmem:[%s5197 + $0x1dc] sm:$0xf]
    %v5318 = vld [vmem:[%s5197 + $0x1e0] sm:$0xf]
    %v5319 = vld [vmem:[%s5197 + $0x1e4] sm:$0xf]
    %v5320 = vld [vmem:[%s5197 + $0x1e8] sm:$0xf]
    %v5321 = vld [vmem:[%s5197 + $0x1ec] sm:$0xf]
    %v5322 = vld [vmem:[%s5197 + $0x1f0] sm:$0xf]
    %v5323 = vld [vmem:[%s5197 + $0x1f4] sm:$0xf]
    %v5324 = vld [vmem:[%s5197 + $0x1f8] sm:$0xf]
    %v5325 = vld [vmem:[%s5197 + $0x1fc] sm:$0xf]
    %v5326 = vld [vmem:[%s5197 + $0x200] sm:$0xf]
    %v5327 = vld [vmem:[%s5197 + $0x204] sm:$0xf]
    %v5328 = vld [vmem:[%s5197 + $0x208] sm:$0xf]
    %v5329 = vld [vmem:[%s5197 + $0x20c] sm:$0xf]
    %v5330 = vld [vmem:[%s5197 + $0x210] sm:$0xf]
    %v5331 = vld [vmem:[%s5197 + $0x214] sm:$0xf]
    %v5332 = vld [vmem:[%s5197 + $0x218] sm:$0xf]
    %v5333 = vld [vmem:[%s5197 + $0x21c] sm:$0xf]
    %v5334 = vld [vmem:[%s5197 + $0x220] sm:$0xf]
    %v5335 = vld [vmem:[%s5197 + $0x224] sm:$0xf]
    %v5336 = vld [vmem:[%s5197 + $0x228] sm:$0xf]
    %v5337 = vld [vmem:[%s5197 + $0x22c] sm:$0xf]
    %v5338 = vld [vmem:[%s5197 + $0x230] sm:$0xf]
    %v5339 = vld [vmem:[%s5197 + $0x234] sm:$0xf]
    %v5340 = vld [vmem:[%s5197 + $0x238] sm:$0xf]
    %v5341 = vld [vmem:[%s5197 + $0x23c] sm:$0xf]
    %v5342 = vld [vmem:[%s5197 + $0x240] sm:$0xf]
    %v5343 = vld [vmem:[%s5197 + $0x244] sm:$0xf]
    %v5344 = vld [vmem:[%s5197 + $0x248] sm:$0xf]
    %v5345 = vld [vmem:[%s5197 + $0x24c] sm:$0xf]
    %v5346 = vld [vmem:[%s5197 + $0x250] sm:$0xf]
    %v5347 = vld [vmem:[%s5197 + $0x254] sm:$0xf]
    %v5348 = vld [vmem:[%s5197 + $0x258] sm:$0xf]
    %v5349 = vld [vmem:[%s5197 + $0x25c] sm:$0xf]
    %v5350 = vld [vmem:[%s5197 + $0x260] sm:$0xf]
    %v5351 = vld [vmem:[%s5197 + $0x264] sm:$0xf]
    %v5352 = vld [vmem:[%s5197 + $0x268] sm:$0xf]
    %v5353 = vld [vmem:[%s5197 + $0x26c] sm:$0xf]
    %v5354 = vld [vmem:[%s5197 + $0x270] sm:$0xf]
    %v5355 = vld [vmem:[%s5197 + $0x274] sm:$0xf]
    %v5356 = vld [vmem:[%s5197 + $0x278] sm:$0xf]
    %v5357 = vld [vmem:[%s5197 + $0x27c] sm:$0xf]
    %v5358 = vld [vmem:[%s5197 + $0x280] sm:$0xf]
    %v5359 = vld [vmem:[%s5197 + $0x284] sm:$0xf]
    %v5360 = vld [vmem:[%s5197 + $0x288] sm:$0xf]
    %v5361 = vld [vmem:[%s5197 + $0x28c] sm:$0xf]
    %v5362 = vld [vmem:[%s5197 + $0x290] sm:$0xf]
    %v5363 = vld [vmem:[%s5197 + $0x294] sm:$0xf]
    %v5364 = vld [vmem:[%s5197 + $0x298] sm:$0xf]
    %v5365 = vld [vmem:[%s5197 + $0x29c] sm:$0xf]
    %v5366 = vld [vmem:[%s5197 + $0x2a0] sm:$0xf]
    %v5367 = vld [vmem:[%s5197 + $0x2a4] sm:$0xf]
    %v5368 = vld [vmem:[%s5197 + $0x2a8] sm:$0xf]
    %v5369 = vld [vmem:[%s5197 + $0x2ac] sm:$0xf]
    %v5370 = vld [vmem:[%s5197 + $0x2b0] sm:$0xf]
    %v5371 = vld [vmem:[%s5197 + $0x2b4] sm:$0xf]
    %v5372 = vld [vmem:[%s5197 + $0x2b8] sm:$0xf]
    %v5373 = vld [vmem:[%s5197 + $0x2bc] sm:$0xf]
    %v5374 = vld [vmem:[%s5197 + $0x2c0] sm:$0xf]
    %v5375 = vld [vmem:[%s5197 + $0x2c4] sm:$0xf]
    %v5376 = vld [vmem:[%s5197 + $0x2c8] sm:$0xf]
    %v5377 = vld [vmem:[%s5197 + $0x2cc] sm:$0xf]
    %v5378 = vld [vmem:[%s5197 + $0x2d0] sm:$0xf]
    %v5379 = vld [vmem:[%s5197 + $0x2d4] sm:$0xf]
    %v5380 = vld [vmem:[%s5197 + $0x2d8] sm:$0xf]
    %v5381 = vld [vmem:[%s5197 + $0x2dc] sm:$0xf]
    %v5382 = vld [vmem:[%s5197 + $0x2e0] sm:$0xf]
    %v5383 = vld [vmem:[%s5197 + $0x2e4] sm:$0xf]
    %v5384 = vld [vmem:[%s5197 + $0x2e8] sm:$0xf]
    %v5385 = vld [vmem:[%s5197 + $0x2ec] sm:$0xf]
    %v5386 = vld [vmem:[%s5197 + $0x2f0] sm:$0xf]
    %v5387 = vld [vmem:[%s5197 + $0x2f4] sm:$0xf]
    %v5388 = vld [vmem:[%s5197 + $0x2f8] sm:$0xf]
    %v5389 = vld [vmem:[%s5197 + $0x2fc] sm:$0xf]
    %v5390 = vld [vmem:[%s5197 + $0x300] sm:$0xf]
    %v5391 = vld [vmem:[%s5197 + $0x304] sm:$0xf]
    %v5392 = vld [vmem:[%s5197 + $0x308] sm:$0xf]
    %v5393 = vld [vmem:[%s5197 + $0x30c] sm:$0xf]
    %v5394 = vld [vmem:[%s5197 + $0x310] sm:$0xf]
    %v5395 = vld [vmem:[%s5197 + $0x314] sm:$0xf]
    %v5396 = vld [vmem:[%s5197 + $0x318] sm:$0xf]
    %v5397 = vld [vmem:[%s5197 + $0x31c] sm:$0xf]
    %v5398 = vld [vmem:[%s5197 + $0x320] sm:$0xf]
    %v5399 = vld [vmem:[%s5197 + $0x324] sm:$0xf]
    %v5400 = vld [vmem:[%s5197 + $0x328] sm:$0xf]
    %v5401 = vld [vmem:[%s5197 + $0x32c] sm:$0xf]
    %v5402 = vld [vmem:[%s5197 + $0x330] sm:$0xf]
    %v5403 = vld [vmem:[%s5197 + $0x334] sm:$0xf]
    %v5404 = vld [vmem:[%s5197 + $0x338] sm:$0xf]
    %v5405 = vld [vmem:[%s5197 + $0x33c] sm:$0xf]
    %v5406 = vld [vmem:[%s5197 + $0x340] sm:$0xf]
    %v5407 = vld [vmem:[%s5197 + $0x344] sm:$0xf]
    %v5408 = vld [vmem:[%s5197 + $0x348] sm:$0xf]
    %v5409 = vld [vmem:[%s5197 + $0x34c] sm:$0xf]
    %v5410 = vld [vmem:[%s5197 + $0x350] sm:$0xf]
    %v5411 = vld [vmem:[%s5197 + $0x354] sm:$0xf]
    %v5412 = vld [vmem:[%s5197 + $0x358] sm:$0xf]
    %v5413 = vld [vmem:[%s5197 + $0x35c] sm:$0xf]
    %v5414 = vld [vmem:[%s5197 + $0x360] sm:$0xf]
    %v5415 = vld [vmem:[%s5197 + $0x364] sm:$0xf]
    %v5416 = vld [vmem:[%s5197 + $0x368] sm:$0xf]
    %v5417 = vld [vmem:[%s5197 + $0x36c] sm:$0xf]
    %v5418 = vld [vmem:[%s5197 + $0x370] sm:$0xf]
    %v5419 = vld [vmem:[%s5197 + $0x374] sm:$0xf]
    %v5420 = vld [vmem:[%s5197 + $0x378] sm:$0xf]
    %v5421 = vld [vmem:[%s5197 + $0x37c] sm:$0xf]
    %v5646 = vunpack.c.l.b16 %v5198
    %v5647 = vunpack.c.l.b16 %v5199
    %v5648 = vunpack.c.l.b16 %v5200
    %v5649 = vunpack.c.l.b16 %v5201
    %v5650 = vunpack.c.l.b16 %v5202
    %v5651 = vunpack.c.l.b16 %v5203
    %v5652 = vunpack.c.l.b16 %v5204
    %v5653 = vunpack.c.l.b16 %v5205
    %v5654 = vunpack.c.l.b16 %v5206
    %v5655 = vunpack.c.l.b16 %v5207
    %v5656 = vunpack.c.l.b16 %v5208
    %v5657 = vunpack.c.l.b16 %v5209
    %v5658 = vunpack.c.l.b16 %v5210
    %v5659 = vunpack.c.l.b16 %v5211
    %v5660 = vunpack.c.l.b16 %v5212
    %v5661 = vunpack.c.l.b16 %v5213
    %v5662 = vunpack.c.l.b16 %v5214
    %v5663 = vunpack.c.l.b16 %v5215
    %v5664 = vunpack.c.l.b16 %v5216
    %v5665 = vunpack.c.l.b16 %v5217
    %v5666 = vunpack.c.l.b16 %v5218
    %v5667 = vunpack.c.l.b16 %v5219
    %v5668 = vunpack.c.l.b16 %v5220
    %v5669 = vunpack.c.l.b16 %v5221
    %v5670 = vunpack.c.l.b16 %v5222
    %v5671 = vunpack.c.l.b16 %v5223
    %v5672 = vunpack.c.l.b16 %v5224
    %v5673 = vunpack.c.l.b16 %v5225
    %v5674 = vunpack.c.l.b16 %v5226
    %v5675 = vunpack.c.l.b16 %v5227
    %v5676 = vunpack.c.l.b16 %v5228
    %v5677 = vunpack.c.l.b16 %v5229
    %v5678 = vunpack.c.l.b16 %v5230
    %v5679 = vunpack.c.l.b16 %v5231
    %v5680 = vunpack.c.l.b16 %v5232
    %v5681 = vunpack.c.l.b16 %v5233
    %v5682 = vunpack.c.l.b16 %v5234
    %v5683 = vunpack.c.l.b16 %v5235
    %v5684 = vunpack.c.l.b16 %v5236
    %v5685 = vunpack.c.l.b16 %v5237
    %v5686 = vunpack.c.l.b16 %v5238
    %v5687 = vunpack.c.l.b16 %v5239
    %v5688 = vunpack.c.l.b16 %v5240
    %v5689 = vunpack.c.l.b16 %v5241
    %v5690 = vunpack.c.l.b16 %v5242
    %v5691 = vunpack.c.l.b16 %v5243
    %v5692 = vunpack.c.l.b16 %v5244
    %v5693 = vunpack.c.l.b16 %v5245
    %v5694 = vunpack.c.l.b16 %v5246
    %v5695 = vunpack.c.l.b16 %v5247
    %v5696 = vunpack.c.l.b16 %v5248
    %v5697 = vunpack.c.l.b16 %v5249
    %v5698 = vunpack.c.l.b16 %v5250
    %v5699 = vunpack.c.l.b16 %v5251
    %v5700 = vunpack.c.l.b16 %v5252
    %v5701 = vunpack.c.l.b16 %v5253
    %v5702 = vunpack.c.l.b16 %v5254
    %v5703 = vunpack.c.l.b16 %v5255
    %v5704 = vunpack.c.l.b16 %v5256
    %v5705 = vunpack.c.l.b16 %v5257
    %v5706 = vunpack.c.l.b16 %v5258
    %v5707 = vunpack.c.l.b16 %v5259
    %v5708 = vunpack.c.l.b16 %v5260
    %v5709 = vunpack.c.l.b16 %v5261
    %v5710 = vunpack.c.l.b16 %v5262
    %v5711 = vunpack.c.l.b16 %v5263
    %v5712 = vunpack.c.l.b16 %v5264
    %v5713 = vunpack.c.l.b16 %v5265
    %v5714 = vunpack.c.l.b16 %v5266
    %v5715 = vunpack.c.l.b16 %v5267
    %v5716 = vunpack.c.l.b16 %v5268
    %v5717 = vunpack.c.l.b16 %v5269
    %v5718 = vunpack.c.l.b16 %v5270
    %v5719 = vunpack.c.l.b16 %v5271
    %v5720 = vunpack.c.l.b16 %v5272
    %v5721 = vunpack.c.l.b16 %v5273
    %v5722 = vunpack.c.l.b16 %v5274
    %v5723 = vunpack.c.l.b16 %v5275
    %v5724 = vunpack.c.l.b16 %v5276
    %v5725 = vunpack.c.l.b16 %v5277
    %v5726 = vunpack.c.l.b16 %v5278
    %v5727 = vunpack.c.l.b16 %v5279
    %v5728 = vunpack.c.l.b16 %v5280
    %v5729 = vunpack.c.l.b16 %v5281
    %v5730 = vunpack.c.l.b16 %v5282
    %v5731 = vunpack.c.l.b16 %v5283
    %v5732 = vunpack.c.l.b16 %v5284
    %v5733 = vunpack.c.l.b16 %v5285
    %v5734 = vunpack.c.l.b16 %v5286
    %v5735 = vunpack.c.l.b16 %v5287
    %v5736 = vunpack.c.l.b16 %v5288
    %v5737 = vunpack.c.l.b16 %v5289
    %v5738 = vunpack.c.l.b16 %v5290
    %v5739 = vunpack.c.l.b16 %v5291
    %v5740 = vunpack.c.l.b16 %v5292
    %v5741 = vunpack.c.l.b16 %v5293
    %v5742 = vunpack.c.l.b16 %v5294
    %v5743 = vunpack.c.l.b16 %v5295
    %v5744 = vunpack.c.l.b16 %v5296
    %v5745 = vunpack.c.l.b16 %v5297
    %v5746 = vunpack.c.l.b16 %v5298
    %v5747 = vunpack.c.l.b16 %v5299
    %v5748 = vunpack.c.l.b16 %v5300
    %v5749 = vunpack.c.l.b16 %v5301
    %v5750 = vunpack.c.l.b16 %v5302
    %v5751 = vunpack.c.l.b16 %v5303
    %v5752 = vunpack.c.l.b16 %v5304
    %v5753 = vunpack.c.l.b16 %v5305
    %v5754 = vunpack.c.l.b16 %v5306
    %v5755 = vunpack.c.l.b16 %v5307
    %v5756 = vunpack.c.l.b16 %v5308
    %v5757 = vunpack.c.l.b16 %v5309
    %v5758 = vunpack.c.l.b16 %v5310
    %v5759 = vunpack.c.l.b16 %v5311
    %v5760 = vunpack.c.l.b16 %v5312
    %v5761 = vunpack.c.l.b16 %v5313
    %v5762 = vunpack.c.l.b16 %v5314
    %v5763 = vunpack.c.l.b16 %v5315
    %v5764 = vunpack.c.l.b16 %v5316
    %v5765 = vunpack.c.l.b16 %v5317
    %v5766 = vunpack.c.l.b16 %v5318
    %v5767 = vunpack.c.l.b16 %v5319
    %v5768 = vunpack.c.l.b16 %v5320
    %v5769 = vunpack.c.l.b16 %v5321
    %v5770 = vunpack.c.l.b16 %v5322
    %v5771 = vunpack.c.l.b16 %v5323
    %v5772 = vunpack.c.l.b16 %v5324
    %v5773 = vunpack.c.l.b16 %v5325
    %v5774 = vunpack.c.l.b16 %v5326
    %v5775 = vunpack.c.l.b16 %v5327
    %v5776 = vunpack.c.l.b16 %v5328
    %v5777 = vunpack.c.l.b16 %v5329
    %v5778 = vunpack.c.l.b16 %v5330
    %v5779 = vunpack.c.l.b16 %v5331
    %v5780 = vunpack.c.l.b16 %v5332
    %v5781 = vunpack.c.l.b16 %v5333
    %v5782 = vunpack.c.l.b16 %v5334
    %v5783 = vunpack.c.l.b16 %v5335
    %v5784 = vunpack.c.l.b16 %v5336
    %v5785 = vunpack.c.l.b16 %v5337
    %v5786 = vunpack.c.l.b16 %v5338
    %v5787 = vunpack.c.l.b16 %v5339
    %v5788 = vunpack.c.l.b16 %v5340
    %v5789 = vunpack.c.l.b16 %v5341
    %v5790 = vunpack.c.l.b16 %v5342
    %v5791 = vunpack.c.l.b16 %v5343
    %v5792 = vunpack.c.l.b16 %v5344
    %v5793 = vunpack.c.l.b16 %v5345
    %v5794 = vunpack.c.l.b16 %v5346
    %v5795 = vunpack.c.l.b16 %v5347
    %v5796 = vunpack.c.l.b16 %v5348
    %v5797 = vunpack.c.l.b16 %v5349
    %v5798 = vunpack.c.l.b16 %v5350
    %v5799 = vunpack.c.l.b16 %v5351
    %v5800 = vunpack.c.l.b16 %v5352
    %v5801 = vunpack.c.l.b16 %v5353
    %v5802 = vunpack.c.l.b16 %v5354
    %v5803 = vunpack.c.l.b16 %v5355
    %v5804 = vunpack.c.l.b16 %v5356
    %v5805 = vunpack.c.l.b16 %v5357
    %v5806 = vunpack.c.l.b16 %v5358
    %v5807 = vunpack.c.l.b16 %v5359
    %v5808 = vunpack.c.l.b16 %v5360
    %v5809 = vunpack.c.l.b16 %v5361
    %v5810 = vunpack.c.l.b16 %v5362
    %v5811 = vunpack.c.l.b16 %v5363
    %v5812 = vunpack.c.l.b16 %v5364
    %v5813 = vunpack.c.l.b16 %v5365
    %v5814 = vunpack.c.l.b16 %v5366
    %v5815 = vunpack.c.l.b16 %v5367
    %v5816 = vunpack.c.l.b16 %v5368
    %v5817 = vunpack.c.l.b16 %v5369
    %v5818 = vunpack.c.l.b16 %v5370
    %v5819 = vunpack.c.l.b16 %v5371
    %v5820 = vunpack.c.l.b16 %v5372
    %v5821 = vunpack.c.l.b16 %v5373
    %v5822 = vunpack.c.l.b16 %v5374
    %v5823 = vunpack.c.l.b16 %v5375
    %v5824 = vunpack.c.l.b16 %v5376
    %v5825 = vunpack.c.l.b16 %v5377
    %v5826 = vunpack.c.l.b16 %v5378
    %v5827 = vunpack.c.l.b16 %v5379
    %v5828 = vunpack.c.l.b16 %v5380
    %v5829 = vunpack.c.l.b16 %v5381
    %v5830 = vunpack.c.l.b16 %v5382
    %v5831 = vunpack.c.l.b16 %v5383
    %v5832 = vunpack.c.l.b16 %v5384
    %v5833 = vunpack.c.l.b16 %v5385
    %v5834 = vunpack.c.l.b16 %v5386
    %v5835 = vunpack.c.l.b16 %v5387
    %v5836 = vunpack.c.l.b16 %v5388
    %v5837 = vunpack.c.l.b16 %v5389
    %v5838 = vunpack.c.l.b16 %v5390
    %v5839 = vunpack.c.l.b16 %v5391
    %v5840 = vunpack.c.l.b16 %v5392
    %v5841 = vunpack.c.l.b16 %v5393
    %v5842 = vunpack.c.l.b16 %v5394
    %v5843 = vunpack.c.l.b16 %v5395
    %v5844 = vunpack.c.l.b16 %v5396
    %v5845 = vunpack.c.l.b16 %v5397
    %v5846 = vunpack.c.l.b16 %v5398
    %v5847 = vunpack.c.l.b16 %v5399
    %v5848 = vunpack.c.l.b16 %v5400
    %v5849 = vunpack.c.l.b16 %v5401
    %v5850 = vunpack.c.l.b16 %v5402
    %v5851 = vunpack.c.l.b16 %v5403
    %v5852 = vunpack.c.l.b16 %v5404
    %v5853 = vunpack.c.l.b16 %v5405
    %v5854 = vunpack.c.l.b16 %v5406
    %v5855 = vunpack.c.l.b16 %v5407
    %v5856 = vunpack.c.l.b16 %v5408
    %v5857 = vunpack.c.l.b16 %v5409
    %v5858 = vunpack.c.l.b16 %v5410
    %v5859 = vunpack.c.l.b16 %v5411
    %v5860 = vunpack.c.l.b16 %v5412
    %v5861 = vunpack.c.l.b16 %v5413
    %v5862 = vunpack.c.l.b16 %v5414
    %v5863 = vunpack.c.l.b16 %v5415
    %v5864 = vunpack.c.l.b16 %v5416
    %v5865 = vunpack.c.l.b16 %v5417
    %v5866 = vunpack.c.l.b16 %v5418
    %v5867 = vunpack.c.l.b16 %v5419
    %v5868 = vunpack.c.l.b16 %v5420
    %v5869 = vunpack.c.l.b16 %v5421
    %v5870 = vpack.c.b16 %v5647, %v5646
    %v5871 = vpack.c.b16 %v5649, %v5648
    %v5872 = vpack.c.b16 %v5651, %v5650
    %v5873 = vpack.c.b16 %v5653, %v5652
    %v5874 = vpack.c.b16 %v5655, %v5654
    %v5875 = vpack.c.b16 %v5657, %v5656
    %v5876 = vpack.c.b16 %v5659, %v5658
    %v5877 = vpack.c.b16 %v5661, %v5660
    %v5878 = vpack.c.b16 %v5663, %v5662
    %v5879 = vpack.c.b16 %v5665, %v5664
    %v5880 = vpack.c.b16 %v5667, %v5666
    %v5881 = vpack.c.b16 %v5669, %v5668
    %v5882 = vpack.c.b16 %v5671, %v5670
    %v5883 = vpack.c.b16 %v5673, %v5672
    %v5884 = vpack.c.b16 %v5675, %v5674
    %v5885 = vpack.c.b16 %v5677, %v5676
    %v5886 = vpack.c.b16 %v5679, %v5678
    %v5887 = vpack.c.b16 %v5681, %v5680
    %v5888 = vpack.c.b16 %v5683, %v5682
    %v5889 = vpack.c.b16 %v5685, %v5684
    %v5890 = vpack.c.b16 %v5687, %v5686
    %v5891 = vpack.c.b16 %v5689, %v5688
    %v5892 = vpack.c.b16 %v5691, %v5690
    %v5893 = vpack.c.b16 %v5693, %v5692
    %v5894 = vpack.c.b16 %v5695, %v5694
    %v5895 = vpack.c.b16 %v5697, %v5696
    %v5896 = vpack.c.b16 %v5699, %v5698
    %v5897 = vpack.c.b16 %v5701, %v5700
    %v5898 = vpack.c.b16 %v5703, %v5702
    %v5899 = vpack.c.b16 %v5705, %v5704
    %v5900 = vpack.c.b16 %v5707, %v5706
    %v5901 = vpack.c.b16 %v5709, %v5708
    %v5902 = vpack.c.b16 %v5711, %v5710
    %v5903 = vpack.c.b16 %v5713, %v5712
    %v5904 = vpack.c.b16 %v5715, %v5714
    %v5905 = vpack.c.b16 %v5717, %v5716
    %v5906 = vpack.c.b16 %v5719, %v5718
    %v5907 = vpack.c.b16 %v5721, %v5720
    %v5908 = vpack.c.b16 %v5723, %v5722
    %v5909 = vpack.c.b16 %v5725, %v5724
    %v5910 = vpack.c.b16 %v5727, %v5726
    %v5911 = vpack.c.b16 %v5729, %v5728
    %v5912 = vpack.c.b16 %v5731, %v5730
    %v5913 = vpack.c.b16 %v5733, %v5732
    %v5914 = vpack.c.b16 %v5735, %v5734
    %v5915 = vpack.c.b16 %v5737, %v5736
    %v5916 = vpack.c.b16 %v5739, %v5738
    %v5917 = vpack.c.b16 %v5741, %v5740
    %v5918 = vpack.c.b16 %v5743, %v5742
    %v5919 = vpack.c.b16 %v5745, %v5744
    %v5920 = vpack.c.b16 %v5747, %v5746
    %v5921 = vpack.c.b16 %v5749, %v5748
    %v5922 = vpack.c.b16 %v5751, %v5750
    %v5923 = vpack.c.b16 %v5753, %v5752
    %v5924 = vpack.c.b16 %v5755, %v5754
    %v5925 = vpack.c.b16 %v5757, %v5756
    %v5926 = vpack.c.b16 %v5759, %v5758
    %v5927 = vpack.c.b16 %v5761, %v5760
    %v5928 = vpack.c.b16 %v5763, %v5762
    %v5929 = vpack.c.b16 %v5765, %v5764
    %v5930 = vpack.c.b16 %v5767, %v5766
    %v5931 = vpack.c.b16 %v5769, %v5768
    %v5932 = vpack.c.b16 %v5771, %v5770
    %v5933 = vpack.c.b16 %v5773, %v5772
    %v5934 = vpack.c.b16 %v5775, %v5774
    %v5935 = vpack.c.b16 %v5777, %v5776
    %v5936 = vpack.c.b16 %v5779, %v5778
    %v5937 = vpack.c.b16 %v5781, %v5780
    %v5938 = vpack.c.b16 %v5783, %v5782
    %v5939 = vpack.c.b16 %v5785, %v5784
    %v5940 = vpack.c.b16 %v5787, %v5786
    %v5941 = vpack.c.b16 %v5789, %v5788
    %v5942 = vpack.c.b16 %v5791, %v5790
    %v5943 = vpack.c.b16 %v5793, %v5792
    %v5944 = vpack.c.b16 %v5795, %v5794
    %v5945 = vpack.c.b16 %v5797, %v5796
    %v5946 = vpack.c.b16 %v5799, %v5798
    %v5947 = vpack.c.b16 %v5801, %v5800
    %v5948 = vpack.c.b16 %v5803, %v5802
    %v5949 = vpack.c.b16 %v5805, %v5804
    %v5950 = vpack.c.b16 %v5807, %v5806
    %v5951 = vpack.c.b16 %v5809, %v5808
    %v5952 = vpack.c.b16 %v5811, %v5810
    %v5953 = vpack.c.b16 %v5813, %v5812
    %v5954 = vpack.c.b16 %v5815, %v5814
    %v5955 = vpack.c.b16 %v5817, %v5816
    %v5956 = vpack.c.b16 %v5819, %v5818
    %v5957 = vpack.c.b16 %v5821, %v5820
    %v5958 = vpack.c.b16 %v5823, %v5822
    %v5959 = vpack.c.b16 %v5825, %v5824
    %v5960 = vpack.c.b16 %v5827, %v5826
    %v5961 = vpack.c.b16 %v5829, %v5828
    %v5962 = vpack.c.b16 %v5831, %v5830
    %v5963 = vpack.c.b16 %v5833, %v5832
    %v5964 = vpack.c.b16 %v5835, %v5834
    %v5965 = vpack.c.b16 %v5837, %v5836
    %v5966 = vpack.c.b16 %v5839, %v5838
    %v5967 = vpack.c.b16 %v5841, %v5840
    %v5968 = vpack.c.b16 %v5843, %v5842
    %v5969 = vpack.c.b16 %v5845, %v5844
    %v5970 = vpack.c.b16 %v5847, %v5846
    %v5971 = vpack.c.b16 %v5849, %v5848
    %v5972 = vpack.c.b16 %v5851, %v5850
    %v5973 = vpack.c.b16 %v5853, %v5852
    %v5974 = vpack.c.b16 %v5855, %v5854
    %v5975 = vpack.c.b16 %v5857, %v5856
    %v5976 = vpack.c.b16 %v5859, %v5858
    %v5977 = vpack.c.b16 %v5861, %v5860
    %v5978 = vpack.c.b16 %v5863, %v5862
    %v5979 = vpack.c.b16 %v5865, %v5864
    %v5980 = vpack.c.b16 %v5867, %v5866
    %v5981 = vpack.c.b16 %v5869, %v5868
    %6094 = vmatpush.bf16.msra.mxu0 %v5877
    %6095 = vmatpush.bf16.msra.mxu0 %v5876
    %6096 = vmatpush.bf16.msra.mxu0 %v5875
    %6097 = vmatpush.bf16.msra.mxu0 %v5874
    %6098 = vmatpush.bf16.msra.mxu0 %v5873
    %6099 = vmatpush.bf16.msra.mxu0 %v5872
    %6100 = vmatpush.bf16.msra.mxu0 %v5871
    %6101 = vmatpush.bf16.msra.mxu0 %v5870
    %6102 = vmatmul.bf16.gmra.mxu0 %v5183
    %v6103 = vpop.f32.mrf.mxu0
    %v6104 = vadd.f32 0.0, %v6103
    %v6105 = vpop.f32.mrf.mxu0
    %6106 = vdwg.mxu0
    %6107 = vmatpush.bf16.msra.mxu0 %v5885
    %6108 = vmatpush.bf16.msra.mxu0 %v5884
    %6109 = vmatpush.bf16.msra.mxu0 %v5883
    %6110 = vmatpush.bf16.msra.mxu0 %v5882
    %6111 = vmatpush.bf16.msra.mxu0 %v5881
    %6112 = vmatpush.bf16.msra.mxu0 %v5880
    %6113 = vmatpush.bf16.msra.mxu0 %v5879
    %6114 = vmatpush.bf16.msra.mxu0 %v5878
    %6115 = vmatmul.bf16.gmra.mxu0 %v5184
    %v6116 = vpop.f32.mrf.mxu0
    %v6117 = vadd.f32 %v6104, %v6116
    %v6118 = vpop.f32.mrf.mxu0
    %6119 = vdwg.mxu0
    %6120 = vmatpush.bf16.msra.mxu0 %v5893
    %6121 = vmatpush.bf16.msra.mxu0 %v5892
    %6122 = vmatpush.bf16.msra.mxu0 %v5891
    %6123 = vmatpush.bf16.msra.mxu0 %v5890
    %6124 = vmatpush.bf16.msra.mxu0 %v5889
    %6125 = vmatpush.bf16.msra.mxu0 %v5888
    %6126 = vmatpush.bf16.msra.mxu0 %v5887
    %6127 = vmatpush.bf16.msra.mxu0 %v5886
    %6128 = vmatmul.bf16.gmra.mxu0 %v5185
    %v6129 = vpop.f32.mrf.mxu0
    %v6130 = vadd.f32 %v6117, %v6129
    %v6131 = vpop.f32.mrf.mxu0
    %6132 = vdwg.mxu0
    %6133 = vmatpush.bf16.msra.mxu0 %v5901
    %6134 = vmatpush.bf16.msra.mxu0 %v5900
    %6135 = vmatpush.bf16.msra.mxu0 %v5899
    %6136 = vmatpush.bf16.msra.mxu0 %v5898
    %6137 = vmatpush.bf16.msra.mxu0 %v5897
    %6138 = vmatpush.bf16.msra.mxu0 %v5896
    %6139 = vmatpush.bf16.msra.mxu0 %v5895
    %6140 = vmatpush.bf16.msra.mxu0 %v5894
    %6141 = vmatmul.bf16.gmra.mxu0 %v5186
    %v6142 = vpop.f32.mrf.mxu0
    %v6143 = vadd.f32 %v6130, %v6142
    %v6144 = vpop.f32.mrf.mxu0
    %6145 = vdwg.mxu0
    %6146 = vmatpush.bf16.msra.mxu0 %v5909
    %6147 = vmatpush.bf16.msra.mxu0 %v5908
    %6148 = vmatpush.bf16.msra.mxu0 %v5907
    %6149 = vmatpush.bf16.msra.mxu0 %v5906
    %6150 = vmatpush.bf16.msra.mxu0 %v5905
    %6151 = vmatpush.bf16.msra.mxu0 %v5904
    %6152 = vmatpush.bf16.msra.mxu0 %v5903
    %6153 = vmatpush.bf16.msra.mxu0 %v5902
    %6154 = vmatmul.bf16.gmra.mxu0 %v5187
    %v6155 = vpop.f32.mrf.mxu0
    %v6156 = vadd.f32 %v6143, %v6155
    %v6157 = vpop.f32.mrf.mxu0
    %6158 = vdwg.mxu0
    %6159 = vmatpush.bf16.msra.mxu0 %v5917
    %6160 = vmatpush.bf16.msra.mxu0 %v5916
    %6161 = vmatpush.bf16.msra.mxu0 %v5915
    %6162 = vmatpush.bf16.msra.mxu0 %v5914
    %6163 = vmatpush.bf16.msra.mxu0 %v5913
    %6164 = vmatpush.bf16.msra.mxu0 %v5912
    %6165 = vmatpush.bf16.msra.mxu0 %v5911
    %6166 = vmatpush.bf16.msra.mxu0 %v5910
    %6167 = vmatmul.bf16.gmra.mxu0 %v5188
    %v6168 = vpop.f32.mrf.mxu0
    %v6169 = vadd.f32 %v6156, %v6168
    %v6170 = vpop.f32.mrf.mxu0
    %6171 = vdwg.mxu0
    %6172 = vmatpush.bf16.msra.mxu0 %v5925
    %6173 = vmatpush.bf16.msra.mxu0 %v5924
    %6174 = vmatpush.bf16.msra.mxu0 %v5923
    %6175 = vmatpush.bf16.msra.mxu0 %v5922
    %6176 = vmatpush.bf16.msra.mxu0 %v5921
    %6177 = vmatpush.bf16.msra.mxu0 %v5920
    %6178 = vmatpush.bf16.msra.mxu0 %v5919
    %6179 = vmatpush.bf16.msra.mxu0 %v5918
    %6180 = vmatmul.bf16.gmra.mxu0 %v5189
    %v6181 = vpop.f32.mrf.mxu0
    %v6182 = vadd.f32 %v6169, %v6181
    %v6183 = vpop.f32.mrf.mxu0
    %6184 = vdwg.mxu0
    %6185 = vmatpush.bf16.msra.mxu0 %v5933
    %6186 = vmatpush.bf16.msra.mxu0 %v5932
    %6187 = vmatpush.bf16.msra.mxu0 %v5931
    %6188 = vmatpush.bf16.msra.mxu0 %v5930
    %6189 = vmatpush.bf16.msra.mxu0 %v5929
    %6190 = vmatpush.bf16.msra.mxu0 %v5928
    %6191 = vmatpush.bf16.msra.mxu0 %v5927
    %6192 = vmatpush.bf16.msra.mxu0 %v5926
    %6193 = vmatmul.bf16.gmra.mxu0 %v5190
    %v6194 = vpop.f32.mrf.mxu0
    %v6195 = vadd.f32 %v6182, %v6194
    %v6196 = vpop.f32.mrf.mxu0
    %6197 = vdwg.mxu0
    %6198 = vmatpush.bf16.msra.mxu0 %v5941
    %6199 = vmatpush.bf16.msra.mxu0 %v5940
    %6200 = vmatpush.bf16.msra.mxu0 %v5939
    %6201 = vmatpush.bf16.msra.mxu0 %v5938
    %6202 = vmatpush.bf16.msra.mxu0 %v5937
    %6203 = vmatpush.bf16.msra.mxu0 %v5936
    %6204 = vmatpush.bf16.msra.mxu0 %v5935
    %6205 = vmatpush.bf16.msra.mxu0 %v5934
    %6206 = vmatmul.bf16.gmra.mxu0 %v5191
    %v6207 = vpop.f32.mrf.mxu0
    %v6208 = vadd.f32 %v6195, %v6207
    %v6209 = vpop.f32.mrf.mxu0
    %6210 = vdwg.mxu0
    %6211 = vmatpush.bf16.msra.mxu0 %v5949
    %6212 = vmatpush.bf16.msra.mxu0 %v5948
    %6213 = vmatpush.bf16.msra.mxu0 %v5947
    %6214 = vmatpush.bf16.msra.mxu0 %v5946
    %6215 = vmatpush.bf16.msra.mxu0 %v5945
    %6216 = vmatpush.bf16.msra.mxu0 %v5944
    %6217 = vmatpush.bf16.msra.mxu0 %v5943
    %6218 = vmatpush.bf16.msra.mxu0 %v5942
    %6219 = vmatmul.bf16.gmra.mxu0 %v5192
    %v6220 = vpop.f32.mrf.mxu0
    %v6221 = vadd.f32 %v6208, %v6220
    %v6222 = vpop.f32.mrf.mxu0
    %6223 = vdwg.mxu0
    %6224 = vmatpush.bf16.msra.mxu0 %v5957
    %6225 = vmatpush.bf16.msra.mxu0 %v5956
    %6226 = vmatpush.bf16.msra.mxu0 %v5955
    %6227 = vmatpush.bf16.msra.mxu0 %v5954
    %6228 = vmatpush.bf16.msra.mxu0 %v5953
    %6229 = vmatpush.bf16.msra.mxu0 %v5952
    %6230 = vmatpush.bf16.msra.mxu0 %v5951
    %6231 = vmatpush.bf16.msra.mxu0 %v5950
    %6232 = vmatmul.bf16.gmra.mxu0 %v5193
    %v6233 = vpop.f32.mrf.mxu0
    %v6234 = vadd.f32 %v6221, %v6233
    %v6235 = vpop.f32.mrf.mxu0
    %6236 = vdwg.mxu0
    %6237 = vmatpush.bf16.msra.mxu0 %v5965
    %6238 = vmatpush.bf16.msra.mxu0 %v5964
    %6239 = vmatpush.bf16.msra.mxu0 %v5963
    %6240 = vmatpush.bf16.msra.mxu0 %v5962
    %6241 = vmatpush.bf16.msra.mxu0 %v5961
    %6242 = vmatpush.bf16.msra.mxu0 %v5960
    %6243 = vmatpush.bf16.msra.mxu0 %v5959
    %6244 = vmatpush.bf16.msra.mxu0 %v5958
    %6245 = vmatmul.bf16.gmra.mxu0 %v5194
    %v6246 = vpop.f32.mrf.mxu0
    %v6247 = vadd.f32 %v6234, %v6246
    %v6248 = vpop.f32.mrf.mxu0
    %6249 = vdwg.mxu0
    %6250 = vmatpush.bf16.msra.mxu0 %v5973
    %6251 = vmatpush.bf16.msra.mxu0 %v5972
    %6252 = vmatpush.bf16.msra.mxu0 %v5971
    %6253 = vmatpush.bf16.msra.mxu0 %v5970
    %6254 = vmatpush.bf16.msra.mxu0 %v5969
    %6255 = vmatpush.bf16.msra.mxu0 %v5968
    %6256 = vmatpush.bf16.msra.mxu0 %v5967
    %6257 = vmatpush.bf16.msra.mxu0 %v5966
    %6258 = vmatmul.bf16.gmra.mxu0 %v5195
    %v6259 = vpop.f32.mrf.mxu0
    %v6260 = vadd.f32 %v6247, %v6259
    %v6261 = vpop.f32.mrf.mxu0
    %6262 = vdwg.mxu0
    %6263 = vmatpush.bf16.msra.mxu0 %v5981
    %6264 = vmatpush.bf16.msra.mxu0 %v5980
    %6265 = vmatpush.bf16.msra.mxu0 %v5979
    %6266 = vmatpush.bf16.msra.mxu0 %v5978
    %6267 = vmatpush.bf16.msra.mxu0 %v5977
    %6268 = vmatpush.bf16.msra.mxu0 %v5976
    %6269 = vmatpush.bf16.msra.mxu0 %v5975
    %6270 = vmatpush.bf16.msra.mxu0 %v5974
    %6271 = vmatmul.bf16.gmra.mxu0 %v5196
    %v6272 = vpop.f32.mrf.mxu0
    %v6273 = vadd.f32 %v6260, %v6272
    %v6274 = vpop.f32.mrf.mxu0
    %6275 = vdwg.mxu0
    %v6500 = vunpack.c.l.b16 %v4773
    %v6501 = vunpack.c.l.b16 %v4774
    %v6502 = vunpack.c.l.b16 %v4775
    %v6503 = vunpack.c.l.b16 %v4776
    %v6504 = vunpack.c.l.b16 %v4777
    %v6505 = vunpack.c.l.b16 %v4778
    %v6506 = vunpack.c.l.b16 %v4779
    %v6507 = vunpack.c.l.b16 %v4780
    %v6508 = vunpack.c.l.b16 %v4781
    %v6509 = vunpack.c.l.b16 %v4782
    %v6510 = vunpack.c.l.b16 %v4783
    %v6511 = vunpack.c.l.b16 %v4784
    %v6512 = vunpack.c.l.b16 %v4785
    %v6513 = vunpack.c.l.b16 %v4786
    %v6514 = vunpack.c.l.b16 %v4787
    %v6515 = vunpack.c.l.b16 %v4788
    %v6516 = vunpack.c.l.b16 %v4789
    %v6517 = vunpack.c.l.b16 %v4790
    %v6518 = vunpack.c.l.b16 %v4791
    %v6519 = vunpack.c.l.b16 %v4792
    %v6520 = vunpack.c.l.b16 %v4793
    %v6521 = vunpack.c.l.b16 %v4794
    %v6522 = vunpack.c.l.b16 %v4795
    %v6523 = vunpack.c.l.b16 %v4796
    %v6524 = vunpack.c.l.b16 %v4797
    %v6525 = vunpack.c.l.b16 %v4798
    %v6526 = vunpack.c.l.b16 %v4799
    %v6527 = vunpack.c.l.b16 %v4800
    %v6528 = vunpack.c.l.b16 %v4801
    %v6529 = vunpack.c.l.b16 %v4802
    %v6530 = vunpack.c.l.b16 %v4803
    %v6531 = vunpack.c.l.b16 %v4804
    %v6532 = vunpack.c.l.b16 %v4805
    %v6533 = vunpack.c.l.b16 %v4806
    %v6534 = vunpack.c.l.b16 %v4807
    %v6535 = vunpack.c.l.b16 %v4808
    %v6536 = vunpack.c.l.b16 %v4809
    %v6537 = vunpack.c.l.b16 %v4810
    %v6538 = vunpack.c.l.b16 %v4811
    %v6539 = vunpack.c.l.b16 %v4812
    %v6540 = vunpack.c.l.b16 %v4813
    %v6541 = vunpack.c.l.b16 %v4814
    %v6542 = vunpack.c.l.b16 %v4815
    %v6543 = vunpack.c.l.b16 %v4816
    %v6544 = vunpack.c.l.b16 %v4817
    %v6545 = vunpack.c.l.b16 %v4818
    %v6546 = vunpack.c.l.b16 %v4819
    %v6547 = vunpack.c.l.b16 %v4820
    %v6548 = vunpack.c.l.b16 %v4821
    %v6549 = vunpack.c.l.b16 %v4822
    %v6550 = vunpack.c.l.b16 %v4823
    %v6551 = vunpack.c.l.b16 %v4824
    %v6552 = vunpack.c.l.b16 %v4825
    %v6553 = vunpack.c.l.b16 %v4826
    %v6554 = vunpack.c.l.b16 %v4827
    %v6555 = vunpack.c.l.b16 %v4828
    %v6556 = vunpack.c.l.b16 %v4829
    %v6557 = vunpack.c.l.b16 %v4830
    %v6558 = vunpack.c.l.b16 %v4831
    %v6559 = vunpack.c.l.b16 %v4832
    %v6560 = vunpack.c.l.b16 %v4833
    %v6561 = vunpack.c.l.b16 %v4834
    %v6562 = vunpack.c.l.b16 %v4835
    %v6563 = vunpack.c.l.b16 %v4836
    %v6564 = vunpack.c.l.b16 %v4837
    %v6565 = vunpack.c.l.b16 %v4838
    %v6566 = vunpack.c.l.b16 %v4839
    %v6567 = vunpack.c.l.b16 %v4840
    %v6568 = vunpack.c.l.b16 %v4841
    %v6569 = vunpack.c.l.b16 %v4842
    %v6570 = vunpack.c.l.b16 %v4843
    %v6571 = vunpack.c.l.b16 %v4844
    %v6572 = vunpack.c.l.b16 %v4845
    %v6573 = vunpack.c.l.b16 %v4846
    %v6574 = vunpack.c.l.b16 %v4847
    %v6575 = vunpack.c.l.b16 %v4848
    %v6576 = vunpack.c.l.b16 %v4849
    %v6577 = vunpack.c.l.b16 %v4850
    %v6578 = vunpack.c.l.b16 %v4851
    %v6579 = vunpack.c.l.b16 %v4852
    %v6580 = vunpack.c.l.b16 %v4853
    %v6581 = vunpack.c.l.b16 %v4854
    %v6582 = vunpack.c.l.b16 %v4855
    %v6583 = vunpack.c.l.b16 %v4856
    %v6584 = vunpack.c.l.b16 %v4857
    %v6585 = vunpack.c.l.b16 %v4858
    %v6586 = vunpack.c.l.b16 %v4859
    %v6587 = vunpack.c.l.b16 %v4860
    %v6588 = vunpack.c.l.b16 %v4861
    %v6589 = vunpack.c.l.b16 %v4862
    %v6590 = vunpack.c.l.b16 %v4863
    %v6591 = vunpack.c.l.b16 %v4864
    %v6592 = vunpack.c.l.b16 %v4865
    %v6593 = vunpack.c.l.b16 %v4866
    %v6594 = vunpack.c.l.b16 %v4867
    %v6595 = vunpack.c.l.b16 %v4868
    %v6596 = vunpack.c.l.b16 %v4869
    %v6597 = vunpack.c.l.b16 %v4870
    %v6598 = vunpack.c.l.b16 %v4871
    %v6599 = vunpack.c.l.b16 %v4872
    %v6600 = vunpack.c.l.b16 %v4873
    %v6601 = vunpack.c.l.b16 %v4874
    %v6602 = vunpack.c.l.b16 %v4875
    %v6603 = vunpack.c.l.b16 %v4876
    %v6604 = vunpack.c.l.b16 %v4877
    %v6605 = vunpack.c.l.b16 %v4878
    %v6606 = vunpack.c.l.b16 %v4879
    %v6607 = vunpack.c.l.b16 %v4880
    %v6608 = vunpack.c.l.b16 %v4881
    %v6609 = vunpack.c.l.b16 %v4882
    %v6610 = vunpack.c.l.b16 %v4883
    %v6611 = vunpack.c.l.b16 %v4884
    %v6612 = vunpack.c.l.b16 %v4885
    %v6613 = vunpack.c.l.b16 %v4886
    %v6614 = vunpack.c.l.b16 %v4887
    %v6615 = vunpack.c.l.b16 %v4888
    %v6616 = vunpack.c.l.b16 %v4889
    %v6617 = vunpack.c.l.b16 %v4890
    %v6618 = vunpack.c.l.b16 %v4891
    %v6619 = vunpack.c.l.b16 %v4892
    %v6620 = vunpack.c.l.b16 %v4893
    %v6621 = vunpack.c.l.b16 %v4894
    %v6622 = vunpack.c.l.b16 %v4895
    %v6623 = vunpack.c.l.b16 %v4896
    %v6624 = vunpack.c.l.b16 %v4897
    %v6625 = vunpack.c.l.b16 %v4898
    %v6626 = vunpack.c.l.b16 %v4899
    %v6627 = vunpack.c.l.b16 %v4900
    %v6628 = vunpack.c.l.b16 %v4901
    %v6629 = vunpack.c.l.b16 %v4902
    %v6630 = vunpack.c.l.b16 %v4903
    %v6631 = vunpack.c.l.b16 %v4904
    %v6632 = vunpack.c.l.b16 %v4905
    %v6633 = vunpack.c.l.b16 %v4906
    %v6634 = vunpack.c.l.b16 %v4907
    %v6635 = vunpack.c.l.b16 %v4908
    %v6636 = vunpack.c.l.b16 %v4909
    %v6637 = vunpack.c.l.b16 %v4910
    %v6638 = vunpack.c.l.b16 %v4911
    %v6639 = vunpack.c.l.b16 %v4912
    %v6640 = vunpack.c.l.b16 %v4913
    %v6641 = vunpack.c.l.b16 %v4914
    %v6642 = vunpack.c.l.b16 %v4915
    %v6643 = vunpack.c.l.b16 %v4916
    %v6644 = vunpack.c.l.b16 %v4917
    %v6645 = vunpack.c.l.b16 %v4918
    %v6646 = vunpack.c.l.b16 %v4919
    %v6647 = vunpack.c.l.b16 %v4920
    %v6648 = vunpack.c.l.b16 %v4921
    %v6649 = vunpack.c.l.b16 %v4922
    %v6650 = vunpack.c.l.b16 %v4923
    %v6651 = vunpack.c.l.b16 %v4924
    %v6652 = vunpack.c.l.b16 %v4925
    %v6653 = vunpack.c.l.b16 %v4926
    %v6654 = vunpack.c.l.b16 %v4927
    %v6655 = vunpack.c.l.b16 %v4928
    %v6656 = vunpack.c.l.b16 %v4929
    %v6657 = vunpack.c.l.b16 %v4930
    %v6658 = vunpack.c.l.b16 %v4931
    %v6659 = vunpack.c.l.b16 %v4932
    %v6660 = vunpack.c.l.b16 %v4933
    %v6661 = vunpack.c.l.b16 %v4934
    %v6662 = vunpack.c.l.b16 %v4935
    %v6663 = vunpack.c.l.b16 %v4936
    %v6664 = vunpack.c.l.b16 %v4937
    %v6665 = vunpack.c.l.b16 %v4938
    %v6666 = vunpack.c.l.b16 %v4939
    %v6667 = vunpack.c.l.b16 %v4940
    %v6668 = vunpack.c.l.b16 %v4941
    %v6669 = vunpack.c.l.b16 %v4942
    %v6670 = vunpack.c.l.b16 %v4943
    %v6671 = vunpack.c.l.b16 %v4944
    %v6672 = vunpack.c.l.b16 %v4945
    %v6673 = vunpack.c.l.b16 %v4946
    %v6674 = vunpack.c.l.b16 %v4947
    %v6675 = vunpack.c.l.b16 %v4948
    %v6676 = vunpack.c.l.b16 %v4949
    %v6677 = vunpack.c.l.b16 %v4950
    %v6678 = vunpack.c.l.b16 %v4951
    %v6679 = vunpack.c.l.b16 %v4952
    %v6680 = vunpack.c.l.b16 %v4953
    %v6681 = vunpack.c.l.b16 %v4954
    %v6682 = vunpack.c.l.b16 %v4955
    %v6683 = vunpack.c.l.b16 %v4956
    %v6684 = vunpack.c.l.b16 %v4957
    %v6685 = vunpack.c.l.b16 %v4958
    %v6686 = vunpack.c.l.b16 %v4959
    %v6687 = vunpack.c.l.b16 %v4960
    %v6688 = vunpack.c.l.b16 %v4961
    %v6689 = vunpack.c.l.b16 %v4962
    %v6690 = vunpack.c.l.b16 %v4963
    %v6691 = vunpack.c.l.b16 %v4964
    %v6692 = vunpack.c.l.b16 %v4965
    %v6693 = vunpack.c.l.b16 %v4966
    %v6694 = vunpack.c.l.b16 %v4967
    %v6695 = vunpack.c.l.b16 %v4968
    %v6696 = vunpack.c.l.b16 %v4969
    %v6697 = vunpack.c.l.b16 %v4970
    %v6698 = vunpack.c.l.b16 %v4971
    %v6699 = vunpack.c.l.b16 %v4972
    %v6700 = vunpack.c.l.b16 %v4973
    %v6701 = vunpack.c.l.b16 %v4974
    %v6702 = vunpack.c.l.b16 %v4975
    %v6703 = vunpack.c.l.b16 %v4976
    %v6704 = vunpack.c.l.b16 %v4977
    %v6705 = vunpack.c.l.b16 %v4978
    %v6706 = vunpack.c.l.b16 %v4979
    %v6707 = vunpack.c.l.b16 %v4980
    %v6708 = vunpack.c.l.b16 %v4981
    %v6709 = vunpack.c.l.b16 %v4982
    %v6710 = vunpack.c.l.b16 %v4983
    %v6711 = vunpack.c.l.b16 %v4984
    %v6712 = vunpack.c.l.b16 %v4985
    %v6713 = vunpack.c.l.b16 %v4986
    %v6714 = vunpack.c.l.b16 %v4987
    %v6715 = vunpack.c.l.b16 %v4988
    %v6716 = vunpack.c.l.b16 %v4989
    %v6717 = vunpack.c.l.b16 %v4990
    %v6718 = vunpack.c.l.b16 %v4991
    %v6719 = vunpack.c.l.b16 %v4992
    %v6720 = vunpack.c.l.b16 %v4993
    %v6721 = vunpack.c.l.b16 %v4994
    %v6722 = vunpack.c.l.b16 %v4995
    %v6723 = vunpack.c.l.b16 %v4996
    %v6724 = vpack.c.b16 %v6501, %v6500
    %v6725 = vpack.c.b16 %v6503, %v6502
    %v6726 = vpack.c.b16 %v6505, %v6504
    %v6727 = vpack.c.b16 %v6507, %v6506
    %v6728 = vpack.c.b16 %v6509, %v6508
    %v6729 = vpack.c.b16 %v6511, %v6510
    %v6730 = vpack.c.b16 %v6513, %v6512
    %v6731 = vpack.c.b16 %v6515, %v6514
    %v6732 = vpack.c.b16 %v6517, %v6516
    %v6733 = vpack.c.b16 %v6519, %v6518
    %v6734 = vpack.c.b16 %v6521, %v6520
    %v6735 = vpack.c.b16 %v6523, %v6522
    %v6736 = vpack.c.b16 %v6525, %v6524
    %v6737 = vpack.c.b16 %v6527, %v6526
    %v6738 = vpack.c.b16 %v6529, %v6528
    %v6739 = vpack.c.b16 %v6531, %v6530
    %v6740 = vpack.c.b16 %v6533, %v6532
    %v6741 = vpack.c.b16 %v6535, %v6534
    %v6742 = vpack.c.b16 %v6537, %v6536
    %v6743 = vpack.c.b16 %v6539, %v6538
    %v6744 = vpack.c.b16 %v6541, %v6540
    %v6745 = vpack.c.b16 %v6543, %v6542
    %v6746 = vpack.c.b16 %v6545, %v6544
    %v6747 = vpack.c.b16 %v6547, %v6546
    %v6748 = vpack.c.b16 %v6549, %v6548
    %v6749 = vpack.c.b16 %v6551, %v6550
    %v6750 = vpack.c.b16 %v6553, %v6552
    %v6751 = vpack.c.b16 %v6555, %v6554
    %v6752 = vpack.c.b16 %v6557, %v6556
    %v6753 = vpack.c.b16 %v6559, %v6558
    %v6754 = vpack.c.b16 %v6561, %v6560
    %v6755 = vpack.c.b16 %v6563, %v6562
    %v6756 = vpack.c.b16 %v6565, %v6564
    %v6757 = vpack.c.b16 %v6567, %v6566
    %v6758 = vpack.c.b16 %v6569, %v6568
    %v6759 = vpack.c.b16 %v6571, %v6570
    %v6760 = vpack.c.b16 %v6573, %v6572
    %v6761 = vpack.c.b16 %v6575, %v6574
    %v6762 = vpack.c.b16 %v6577, %v6576
    %v6763 = vpack.c.b16 %v6579, %v6578
    %v6764 = vpack.c.b16 %v6581, %v6580
    %v6765 = vpack.c.b16 %v6583, %v6582
    %v6766 = vpack.c.b16 %v6585, %v6584
    %v6767 = vpack.c.b16 %v6587, %v6586
    %v6768 = vpack.c.b16 %v6589, %v6588
    %v6769 = vpack.c.b16 %v6591, %v6590
    %v6770 = vpack.c.b16 %v6593, %v6592
    %v6771 = vpack.c.b16 %v6595, %v6594
    %v6772 = vpack.c.b16 %v6597, %v6596
    %v6773 = vpack.c.b16 %v6599, %v6598
    %v6774 = vpack.c.b16 %v6601, %v6600
    %v6775 = vpack.c.b16 %v6603, %v6602
    %v6776 = vpack.c.b16 %v6605, %v6604
    %v6777 = vpack.c.b16 %v6607, %v6606
    %v6778 = vpack.c.b16 %v6609, %v6608
    %v6779 = vpack.c.b16 %v6611, %v6610
    %v6780 = vpack.c.b16 %v6613, %v6612
    %v6781 = vpack.c.b16 %v6615, %v6614
    %v6782 = vpack.c.b16 %v6617, %v6616
    %v6783 = vpack.c.b16 %v6619, %v6618
    %v6784 = vpack.c.b16 %v6621, %v6620
    %v6785 = vpack.c.b16 %v6623, %v6622
    %v6786 = vpack.c.b16 %v6625, %v6624
    %v6787 = vpack.c.b16 %v6627, %v6626
    %v6788 = vpack.c.b16 %v6629, %v6628
    %v6789 = vpack.c.b16 %v6631, %v6630
    %v6790 = vpack.c.b16 %v6633, %v6632
    %v6791 = vpack.c.b16 %v6635, %v6634
    %v6792 = vpack.c.b16 %v6637, %v6636
    %v6793 = vpack.c.b16 %v6639, %v6638
    %v6794 = vpack.c.b16 %v6641, %v6640
    %v6795 = vpack.c.b16 %v6643, %v6642
    %v6796 = vpack.c.b16 %v6645, %v6644
    %v6797 = vpack.c.b16 %v6647, %v6646
    %v6798 = vpack.c.b16 %v6649, %v6648
    %v6799 = vpack.c.b16 %v6651, %v6650
    %v6800 = vpack.c.b16 %v6653, %v6652
    %v6801 = vpack.c.b16 %v6655, %v6654
    %v6802 = vpack.c.b16 %v6657, %v6656
    %v6803 = vpack.c.b16 %v6659, %v6658
    %v6804 = vpack.c.b16 %v6661, %v6660
    %v6805 = vpack.c.b16 %v6663, %v6662
    %v6806 = vpack.c.b16 %v6665, %v6664
    %v6807 = vpack.c.b16 %v6667, %v6666
    %v6808 = vpack.c.b16 %v6669, %v6668
    %v6809 = vpack.c.b16 %v6671, %v6670
    %v6810 = vpack.c.b16 %v6673, %v6672
    %v6811 = vpack.c.b16 %v6675, %v6674
    %v6812 = vpack.c.b16 %v6677, %v6676
    %v6813 = vpack.c.b16 %v6679, %v6678
    %v6814 = vpack.c.b16 %v6681, %v6680
    %v6815 = vpack.c.b16 %v6683, %v6682
    %v6816 = vpack.c.b16 %v6685, %v6684
    %v6817 = vpack.c.b16 %v6687, %v6686
    %v6818 = vpack.c.b16 %v6689, %v6688
    %v6819 = vpack.c.b16 %v6691, %v6690
    %v6820 = vpack.c.b16 %v6693, %v6692
    %v6821 = vpack.c.b16 %v6695, %v6694
    %v6822 = vpack.c.b16 %v6697, %v6696
    %v6823 = vpack.c.b16 %v6699, %v6698
    %v6824 = vpack.c.b16 %v6701, %v6700
    %v6825 = vpack.c.b16 %v6703, %v6702
    %v6826 = vpack.c.b16 %v6705, %v6704
    %v6827 = vpack.c.b16 %v6707, %v6706
    %v6828 = vpack.c.b16 %v6709, %v6708
    %v6829 = vpack.c.b16 %v6711, %v6710
    %v6830 = vpack.c.b16 %v6713, %v6712
    %v6831 = vpack.c.b16 %v6715, %v6714
    %v6832 = vpack.c.b16 %v6717, %v6716
    %v6833 = vpack.c.b16 %v6719, %v6718
    %v6834 = vpack.c.b16 %v6721, %v6720
    %v6835 = vpack.c.b16 %v6723, %v6722
    %6948 = vmatpush.bf16.msra.mxu0 %v6731
    %6949 = vmatpush.bf16.msra.mxu0 %v6730
    %6950 = vmatpush.bf16.msra.mxu0 %v6729
    %6951 = vmatpush.bf16.msra.mxu0 %v6728
    %6952 = vmatpush.bf16.msra.mxu0 %v6727
    %6953 = vmatpush.bf16.msra.mxu0 %v6726
    %6954 = vmatpush.bf16.msra.mxu0 %v6725
    %6955 = vmatpush.bf16.msra.mxu0 %v6724
    %6956 = vmatmul.bf16.gmra.mxu0 %v4759
    %v6957 = vpop.f32.mrf.mxu0
    %v6958 = vadd.f32 %v6273, %v6957
    %v6959 = vpop.f32.mrf.mxu0
    %6960 = vdwg.mxu0
    %6961 = vmatpush.bf16.msra.mxu0 %v6739
    %6962 = vmatpush.bf16.msra.mxu0 %v6738
    %6963 = vmatpush.bf16.msra.mxu0 %v6737
    %6964 = vmatpush.bf16.msra.mxu0 %v6736
    %6965 = vmatpush.bf16.msra.mxu0 %v6735
    %6966 = vmatpush.bf16.msra.mxu0 %v6734
    %6967 = vmatpush.bf16.msra.mxu0 %v6733
    %6968 = vmatpush.bf16.msra.mxu0 %v6732
    %6969 = vmatmul.bf16.gmra.mxu0 %v4760
    %v6970 = vpop.f32.mrf.mxu0
    %v6971 = vadd.f32 %v6958, %v6970
    %v6972 = vpop.f32.mrf.mxu0
    %6973 = vdwg.mxu0
    %6974 = vmatpush.bf16.msra.mxu0 %v6747
    %6975 = vmatpush.bf16.msra.mxu0 %v6746
    %6976 = vmatpush.bf16.msra.mxu0 %v6745
    %6977 = vmatpush.bf16.msra.mxu0 %v6744
    %6978 = vmatpush.bf16.msra.mxu0 %v6743
    %6979 = vmatpush.bf16.msra.mxu0 %v6742
    %6980 = vmatpush.bf16.msra.mxu0 %v6741
    %6981 = vmatpush.bf16.msra.mxu0 %v6740
    %6982 = vmatmul.bf16.gmra.mxu0 %v4761
    %v6983 = vpop.f32.mrf.mxu0
    %v6984 = vadd.f32 %v6971, %v6983
    %v6985 = vpop.f32.mrf.mxu0
    %6986 = vdwg.mxu0
    %6987 = vmatpush.bf16.msra.mxu0 %v6755
    %6988 = vmatpush.bf16.msra.mxu0 %v6754
    %6989 = vmatpush.bf16.msra.mxu0 %v6753
    %6990 = vmatpush.bf16.msra.mxu0 %v6752
    %6991 = vmatpush.bf16.msra.mxu0 %v6751
    %6992 = vmatpush.bf16.msra.mxu0 %v6750
    %6993 = vmatpush.bf16.msra.mxu0 %v6749
    %6994 = vmatpush.bf16.msra.mxu0 %v6748
    %6995 = vmatmul.bf16.gmra.mxu0 %v4762
    %v6996 = vpop.f32.mrf.mxu0
    %v6997 = vadd.f32 %v6984, %v6996
    %v6998 = vpop.f32.mrf.mxu0
    %6999 = vdwg.mxu0
    %7000 = vmatpush.bf16.msra.mxu0 %v6763
    %7001 = vmatpush.bf16.msra.mxu0 %v6762
    %7002 = vmatpush.bf16.msra.mxu0 %v6761
    %7003 = vmatpush.bf16.msra.mxu0 %v6760
    %7004 = vmatpush.bf16.msra.mxu0 %v6759
    %7005 = vmatpush.bf16.msra.mxu0 %v6758
    %7006 = vmatpush.bf16.msra.mxu0 %v6757
    %7007 = vmatpush.bf16.msra.mxu0 %v6756
    %7008 = vmatmul.bf16.gmra.mxu0 %v4763
    %v7009 = vpop.f32.mrf.mxu0
    %v7010 = vadd.f32 %v6997, %v7009
    %v7011 = vpop.f32.mrf.mxu0
    %7012 = vdwg.mxu0
    %7013 = vmatpush.bf16.msra.mxu0 %v6771
    %7014 = vmatpush.bf16.msra.mxu0 %v6770
    %7015 = vmatpush.bf16.msra.mxu0 %v6769
    %7016 = vmatpush.bf16.msra.mxu0 %v6768
    %7017 = vmatpush.bf16.msra.mxu0 %v6767
    %7018 = vmatpush.bf16.msra.mxu0 %v6766
    %7019 = vmatpush.bf16.msra.mxu0 %v6765
    %7020 = vmatpush.bf16.msra.mxu0 %v6764
    %7021 = vmatmul.bf16.gmra.mxu0 %v4764
    %v7022 = vpop.f32.mrf.mxu0
    %v7023 = vadd.f32 %v7010, %v7022
    %v7024 = vpop.f32.mrf.mxu0
    %7025 = vdwg.mxu0
    %7026 = vmatpush.bf16.msra.mxu0 %v6779
    %7027 = vmatpush.bf16.msra.mxu0 %v6778
    %7028 = vmatpush.bf16.msra.mxu0 %v6777
    %7029 = vmatpush.bf16.msra.mxu0 %v6776
    %7030 = vmatpush.bf16.msra.mxu0 %v6775
    %7031 = vmatpush.bf16.msra.mxu0 %v6774
    %7032 = vmatpush.bf16.msra.mxu0 %v6773
    %7033 = vmatpush.bf16.msra.mxu0 %v6772
    %7034 = vmatmul.bf16.gmra.mxu0 %v4765
    %v7035 = vpop.f32.mrf.mxu0
    %v7036 = vadd.f32 %v7023, %v7035
    %v7037 = vpop.f32.mrf.mxu0
    %7038 = vdwg.mxu0
    %7039 = vmatpush.bf16.msra.mxu0 %v6787
    %7040 = vmatpush.bf16.msra.mxu0 %v6786
    %7041 = vmatpush.bf16.msra.mxu0 %v6785
    %7042 = vmatpush.bf16.msra.mxu0 %v6784
    %7043 = vmatpush.bf16.msra.mxu0 %v6783
    %7044 = vmatpush.bf16.msra.mxu0 %v6782
    %7045 = vmatpush.bf16.msra.mxu0 %v6781
    %7046 = vmatpush.bf16.msra.mxu0 %v6780
    %7047 = vmatmul.bf16.gmra.mxu0 %v4766
    %v7048 = vpop.f32.mrf.mxu0
    %v7049 = vadd.f32 %v7036, %v7048
    %v7050 = vpop.f32.mrf.mxu0
    %7051 = vdwg.mxu0
    %7052 = vmatpush.bf16.msra.mxu0 %v6795
    %7053 = vmatpush.bf16.msra.mxu0 %v6794
    %7054 = vmatpush.bf16.msra.mxu0 %v6793
    %7055 = vmatpush.bf16.msra.mxu0 %v6792
    %7056 = vmatpush.bf16.msra.mxu0 %v6791
    %7057 = vmatpush.bf16.msra.mxu0 %v6790
    %7058 = vmatpush.bf16.msra.mxu0 %v6789
    %7059 = vmatpush.bf16.msra.mxu0 %v6788
    %7060 = vmatmul.bf16.gmra.mxu0 %v4767
    %v7061 = vpop.f32.mrf.mxu0
    %v7062 = vadd.f32 %v7049, %v7061
    %v7063 = vpop.f32.mrf.mxu0
    %7064 = vdwg.mxu0
    %7065 = vmatpush.bf16.msra.mxu0 %v6803
    %7066 = vmatpush.bf16.msra.mxu0 %v6802
    %7067 = vmatpush.bf16.msra.mxu0 %v6801
    %7068 = vmatpush.bf16.msra.mxu0 %v6800
    %7069 = vmatpush.bf16.msra.mxu0 %v6799
    %7070 = vmatpush.bf16.msra.mxu0 %v6798
    %7071 = vmatpush.bf16.msra.mxu0 %v6797
    %7072 = vmatpush.bf16.msra.mxu0 %v6796
    %7073 = vmatmul.bf16.gmra.mxu0 %v4768
    %v7074 = vpop.f32.mrf.mxu0
    %v7075 = vadd.f32 %v7062, %v7074
    %v7076 = vpop.f32.mrf.mxu0
    %7077 = vdwg.mxu0
    %7078 = vmatpush.bf16.msra.mxu0 %v6811
    %7079 = vmatpush.bf16.msra.mxu0 %v6810
    %7080 = vmatpush.bf16.msra.mxu0 %v6809
    %7081 = vmatpush.bf16.msra.mxu0 %v6808
    %7082 = vmatpush.bf16.msra.mxu0 %v6807
    %7083 = vmatpush.bf16.msra.mxu0 %v6806
    %7084 = vmatpush.bf16.msra.mxu0 %v6805
    %7085 = vmatpush.bf16.msra.mxu0 %v6804
    %7086 = vmatmul.bf16.gmra.mxu0 %v4769
    %v7087 = vpop.f32.mrf.mxu0
    %v7088 = vadd.f32 %v7075, %v7087
    %v7089 = vpop.f32.mrf.mxu0
    %7090 = vdwg.mxu0
    %7091 = vmatpush.bf16.msra.mxu0 %v6819
    %7092 = vmatpush.bf16.msra.mxu0 %v6818
    %7093 = vmatpush.bf16.msra.mxu0 %v6817
    %7094 = vmatpush.bf16.msra.mxu0 %v6816
    %7095 = vmatpush.bf16.msra.mxu0 %v6815
    %7096 = vmatpush.bf16.msra.mxu0 %v6814
    %7097 = vmatpush.bf16.msra.mxu0 %v6813
    %7098 = vmatpush.bf16.msra.mxu0 %v6812
    %7099 = vmatmul.bf16.gmra.mxu0 %v4770
    %v7100 = vpop.f32.mrf.mxu0
    %v7101 = vadd.f32 %v7088, %v7100
    %v7102 = vpop.f32.mrf.mxu0
    %7103 = vdwg.mxu0
    %7104 = vmatpush.bf16.msra.mxu0 %v6827
    %7105 = vmatpush.bf16.msra.mxu0 %v6826
    %7106 = vmatpush.bf16.msra.mxu0 %v6825
    %7107 = vmatpush.bf16.msra.mxu0 %v6824
    %7108 = vmatpush.bf16.msra.mxu0 %v6823
    %7109 = vmatpush.bf16.msra.mxu0 %v6822
    %7110 = vmatpush.bf16.msra.mxu0 %v6821
    %7111 = vmatpush.bf16.msra.mxu0 %v6820
    %7112 = vmatmul.bf16.gmra.mxu0 %v4771
    %v7113 = vpop.f32.mrf.mxu0
    %v7114 = vadd.f32 %v7101, %v7113
    %v7115 = vpop.f32.mrf.mxu0
    %7116 = vdwg.mxu0
    %7117 = vmatpush.bf16.msra.mxu0 %v6835
    %7118 = vmatpush.bf16.msra.mxu0 %v6834
    %7119 = vmatpush.bf16.msra.mxu0 %v6833
    %7120 = vmatpush.bf16.msra.mxu0 %v6832
    %7121 = vmatpush.bf16.msra.mxu0 %v6831
    %7122 = vmatpush.bf16.msra.mxu0 %v6830
    %7123 = vmatpush.bf16.msra.mxu0 %v6829
    %7124 = vmatpush.bf16.msra.mxu0 %v6828
    %7125 = vmatmul.bf16.gmra.mxu0 %v4772
    %v7126 = vpop.f32.mrf.mxu0
    %v7127 = vadd.f32 %v7114, %v7126
    %v7128 = vpop.f32.mrf.mxu0
    %7129 = vdwg.mxu0
    %v7130 = vshrl.u32 %v5014, 16
    %v7132 = vshrl.u32 %v5015, 16
    %v7134 = vrot.slane %v5014, 1
    %v7135 = vrot.slane %v5015, 1
    %v7136 = vrot.slane %v7130, 1
    %v7137 = vrot.slane %v7132, 1
    %v7139 = vunpack.c.l.b16 %v4628
    %v7140 = vunpack.c.h.b16 %v4628
    %v7141 = vpack.c.b16 %v7139, %v7139
    %v7142 = vpack.c.b16 %v7140, %v7140
    %v7143 = vrot.slane %v7141, 6
    %v7144 = vrot.slane %v7142, 6
    %v7146 = vshrl.u32 %v7141, 16
    %v7148 = vrot.slane %v7146, 6
    %v7150 = vshrl.u32 %v7142, 16
    %v7152 = vrot.slane %v7150, 6
    %v7153 = vrot.slane %v7141, 7
    %v7154 = vrot.slane %v7142, 7
    %v7155 = vshll.u32 %v5037, 16
    %v7157 = vrot.slane %v7155, 1
    %v7158 = vshll.u32 %v5038, 16
    %v7160 = vrot.slane %v7158, 1
    %v7161 = vrot.slane %v5037, 1
    %v7162 = vrot.slane %v5038, 1
    %v7164 = vunpack.c.l.b16 %v4636
    %v7165 = vunpack.c.h.b16 %v4636
    %v7166 = vpack.c.b16 %v7164, %v7164
    %v7167 = vpack.c.b16 %v7165, %v7165
    %v7169 = vshll.u32 %v7166, 16
    %v7171 = vrot.slane %v7169, 6
    %v7173 = vshll.u32 %v7167, 16
    %v7175 = vrot.slane %v7173, 6
    %v7176 = vrot.slane %v7166, 6
    %v7177 = vrot.slane %v7167, 6
    %v7178 = vrot.slane %v7169, 7
    %v7179 = vrot.slane %v7173, 7
    %v7180 = vrot.slane %v7166, 7
    %v7181 = vrot.slane %v7167, 7
    %v7182 = vrot.slane %v5014, 2
    %v7183 = vrot.slane %v5015, 2
    %v7184 = vrot.slane %v7130, 2
    %v7185 = vrot.slane %v7132, 2
    %v7186 = vrot.slane %v7134, 2
    %v7187 = vrot.slane %v7135, 2
    %v7188 = vrot.slane %v7136, 2
    %v7189 = vrot.slane %v7137, 2
    %v7190 = vrot.slane %v7143, 2
    %v7191 = vrot.slane %v7144, 2
    %v7192 = vrot.slane %v7148, 2
    %v7193 = vrot.slane %v7152, 2
    %v7194 = vrot.slane %v7153, 2
    %v7195 = vrot.slane %v7154, 2
    %v7210 = vrot.slane %v5037, 2
    %v7211 = vrot.slane %v5038, 2
    %v7212 = vrot.slane %v7157, 2
    %v7213 = vrot.slane %v7160, 2
    %v7214 = vrot.slane %v7161, 2
    %v7215 = vrot.slane %v7162, 2
    %v7216 = vrot.slane %v7171, 2
    %v7217 = vrot.slane %v7175, 2
    %v7218 = vrot.slane %v7176, 2
    %v7219 = vrot.slane %v7177, 2
    %v7220 = vrot.slane %v7178, 2
    %v7221 = vrot.slane %v7179, 2
    %v7222 = vrot.slane %v7180, 2
    %v7223 = vrot.slane %v7181, 2
    %v7238 = vsel %vm4758, %v7182, %v7210
    %v7239 = vsel %vm4758, %v7183, %v7211
    %v7240 = vsel %vm4758, %v7184, %v7212
    %v7241 = vsel %vm4758, %v7185, %v7213
    %v7242 = vsel %vm4758, %v7186, %v7214
    %v7243 = vsel %vm4758, %v7187, %v7215
    %v7244 = vsel %vm4758, %v7188, %v7216
    %v7245 = vsel %vm4758, %v7189, %v7217
    %v7246 = vsel %vm4758, %v7190, %v7218
    %v7247 = vsel %vm4758, %v7191, %v7219
    %v7248 = vsel %vm4758, %v7192, %v7220
    %v7249 = vsel %vm4758, %v7193, %v7221
    %v7250 = vsel %vm4758, %v7194, %v7222
    %v7251 = vsel %vm4758, %v7195, %v7223
    %s7252 = scalar_lea.vmem [#allocation4], 1792
    %v7253 = vld [vmem:[%s7252] sm:$0xf]
    %v7254 = vld [vmem:[%s7252 + $0x4] sm:$0xf]
    %v7255 = vld [vmem:[%s7252 + $0x8] sm:$0xf]
    %v7256 = vld [vmem:[%s7252 + $0xc] sm:$0xf]
    %v7257 = vld [vmem:[%s7252 + $0x10] sm:$0xf]
    %v7258 = vld [vmem:[%s7252 + $0x14] sm:$0xf]
    %v7259 = vld [vmem:[%s7252 + $0x18] sm:$0xf]
    %v7260 = vld [vmem:[%s7252 + $0x1c] sm:$0xf]
    %v7261 = vld [vmem:[%s7252 + $0x20] sm:$0xf]
    %v7262 = vld [vmem:[%s7252 + $0x24] sm:$0xf]
    %v7263 = vld [vmem:[%s7252 + $0x28] sm:$0xf]
    %v7264 = vld [vmem:[%s7252 + $0x2c] sm:$0xf]
    %v7265 = vld [vmem:[%s7252 + $0x30] sm:$0xf]
    %v7266 = vld [vmem:[%s7252 + $0x34] sm:$0xf]
    %v7267 = vld [vmem:[%s7252 + $0x38] sm:$0xf]
    %v7268 = vld [vmem:[%s7252 + $0x3c] sm:$0xf]
    %v7269 = vld [vmem:[%s7252 + $0x40] sm:$0xf]
    %v7270 = vld [vmem:[%s7252 + $0x44] sm:$0xf]
    %v7271 = vld [vmem:[%s7252 + $0x48] sm:$0xf]
    %v7272 = vld [vmem:[%s7252 + $0x4c] sm:$0xf]
    %v7273 = vld [vmem:[%s7252 + $0x50] sm:$0xf]
    %v7274 = vld [vmem:[%s7252 + $0x54] sm:$0xf]
    %v7275 = vld [vmem:[%s7252 + $0x58] sm:$0xf]
    %v7276 = vld [vmem:[%s7252 + $0x5c] sm:$0xf]
    %v7277 = vld [vmem:[%s7252 + $0x60] sm:$0xf]
    %v7278 = vld [vmem:[%s7252 + $0x64] sm:$0xf]
    %v7279 = vld [vmem:[%s7252 + $0x68] sm:$0xf]
    %v7280 = vld [vmem:[%s7252 + $0x6c] sm:$0xf]
    %v7281 = vld [vmem:[%s7252 + $0x70] sm:$0xf]
    %v7282 = vld [vmem:[%s7252 + $0x74] sm:$0xf]
    %v7283 = vld [vmem:[%s7252 + $0x78] sm:$0xf]
    %v7284 = vld [vmem:[%s7252 + $0x7c] sm:$0xf]
    %v7285 = vld [vmem:[%s7252 + $0x80] sm:$0xf]
    %v7286 = vld [vmem:[%s7252 + $0x84] sm:$0xf]
    %v7287 = vld [vmem:[%s7252 + $0x88] sm:$0xf]
    %v7288 = vld [vmem:[%s7252 + $0x8c] sm:$0xf]
    %v7289 = vld [vmem:[%s7252 + $0x90] sm:$0xf]
    %v7290 = vld [vmem:[%s7252 + $0x94] sm:$0xf]
    %v7291 = vld [vmem:[%s7252 + $0x98] sm:$0xf]
    %v7292 = vld [vmem:[%s7252 + $0x9c] sm:$0xf]
    %v7293 = vld [vmem:[%s7252 + $0xa0] sm:$0xf]
    %v7294 = vld [vmem:[%s7252 + $0xa4] sm:$0xf]
    %v7295 = vld [vmem:[%s7252 + $0xa8] sm:$0xf]
    %v7296 = vld [vmem:[%s7252 + $0xac] sm:$0xf]
    %v7297 = vld [vmem:[%s7252 + $0xb0] sm:$0xf]
    %v7298 = vld [vmem:[%s7252 + $0xb4] sm:$0xf]
    %v7299 = vld [vmem:[%s7252 + $0xb8] sm:$0xf]
    %v7300 = vld [vmem:[%s7252 + $0xbc] sm:$0xf]
    %v7301 = vld [vmem:[%s7252 + $0xc0] sm:$0xf]
    %v7302 = vld [vmem:[%s7252 + $0xc4] sm:$0xf]
    %v7303 = vld [vmem:[%s7252 + $0xc8] sm:$0xf]
    %v7304 = vld [vmem:[%s7252 + $0xcc] sm:$0xf]
    %v7305 = vld [vmem:[%s7252 + $0xd0] sm:$0xf]
    %v7306 = vld [vmem:[%s7252 + $0xd4] sm:$0xf]
    %v7307 = vld [vmem:[%s7252 + $0xd8] sm:$0xf]
    %v7308 = vld [vmem:[%s7252 + $0xdc] sm:$0xf]
    %v7309 = vld [vmem:[%s7252 + $0xe0] sm:$0xf]
    %v7310 = vld [vmem:[%s7252 + $0xe4] sm:$0xf]
    %v7311 = vld [vmem:[%s7252 + $0xe8] sm:$0xf]
    %v7312 = vld [vmem:[%s7252 + $0xec] sm:$0xf]
    %v7313 = vld [vmem:[%s7252 + $0xf0] sm:$0xf]
    %v7314 = vld [vmem:[%s7252 + $0xf4] sm:$0xf]
    %v7315 = vld [vmem:[%s7252 + $0xf8] sm:$0xf]
    %v7316 = vld [vmem:[%s7252 + $0xfc] sm:$0xf]
    %v7317 = vld [vmem:[%s7252 + $0x100] sm:$0xf]
    %v7318 = vld [vmem:[%s7252 + $0x104] sm:$0xf]
    %v7319 = vld [vmem:[%s7252 + $0x108] sm:$0xf]
    %v7320 = vld [vmem:[%s7252 + $0x10c] sm:$0xf]
    %v7321 = vld [vmem:[%s7252 + $0x110] sm:$0xf]
    %v7322 = vld [vmem:[%s7252 + $0x114] sm:$0xf]
    %v7323 = vld [vmem:[%s7252 + $0x118] sm:$0xf]
    %v7324 = vld [vmem:[%s7252 + $0x11c] sm:$0xf]
    %v7325 = vld [vmem:[%s7252 + $0x120] sm:$0xf]
    %v7326 = vld [vmem:[%s7252 + $0x124] sm:$0xf]
    %v7327 = vld [vmem:[%s7252 + $0x128] sm:$0xf]
    %v7328 = vld [vmem:[%s7252 + $0x12c] sm:$0xf]
    %v7329 = vld [vmem:[%s7252 + $0x130] sm:$0xf]
    %v7330 = vld [vmem:[%s7252 + $0x134] sm:$0xf]
    %v7331 = vld [vmem:[%s7252 + $0x138] sm:$0xf]
    %v7332 = vld [vmem:[%s7252 + $0x13c] sm:$0xf]
    %v7333 = vld [vmem:[%s7252 + $0x140] sm:$0xf]
    %v7334 = vld [vmem:[%s7252 + $0x144] sm:$0xf]
    %v7335 = vld [vmem:[%s7252 + $0x148] sm:$0xf]
    %v7336 = vld [vmem:[%s7252 + $0x14c] sm:$0xf]
    %v7337 = vld [vmem:[%s7252 + $0x150] sm:$0xf]
    %v7338 = vld [vmem:[%s7252 + $0x154] sm:$0xf]
    %v7339 = vld [vmem:[%s7252 + $0x158] sm:$0xf]
    %v7340 = vld [vmem:[%s7252 + $0x15c] sm:$0xf]
    %v7341 = vld [vmem:[%s7252 + $0x160] sm:$0xf]
    %v7342 = vld [vmem:[%s7252 + $0x164] sm:$0xf]
    %v7343 = vld [vmem:[%s7252 + $0x168] sm:$0xf]
    %v7344 = vld [vmem:[%s7252 + $0x16c] sm:$0xf]
    %v7345 = vld [vmem:[%s7252 + $0x170] sm:$0xf]
    %v7346 = vld [vmem:[%s7252 + $0x174] sm:$0xf]
    %v7347 = vld [vmem:[%s7252 + $0x178] sm:$0xf]
    %v7348 = vld [vmem:[%s7252 + $0x17c] sm:$0xf]
    %v7349 = vld [vmem:[%s7252 + $0x180] sm:$0xf]
    %v7350 = vld [vmem:[%s7252 + $0x184] sm:$0xf]
    %v7351 = vld [vmem:[%s7252 + $0x188] sm:$0xf]
    %v7352 = vld [vmem:[%s7252 + $0x18c] sm:$0xf]
    %v7353 = vld [vmem:[%s7252 + $0x190] sm:$0xf]
    %v7354 = vld [vmem:[%s7252 + $0x194] sm:$0xf]
    %v7355 = vld [vmem:[%s7252 + $0x198] sm:$0xf]
    %v7356 = vld [vmem:[%s7252 + $0x19c] sm:$0xf]
    %v7357 = vld [vmem:[%s7252 + $0x1a0] sm:$0xf]
    %v7358 = vld [vmem:[%s7252 + $0x1a4] sm:$0xf]
    %v7359 = vld [vmem:[%s7252 + $0x1a8] sm:$0xf]
    %v7360 = vld [vmem:[%s7252 + $0x1ac] sm:$0xf]
    %v7361 = vld [vmem:[%s7252 + $0x1b0] sm:$0xf]
    %v7362 = vld [vmem:[%s7252 + $0x1b4] sm:$0xf]
    %v7363 = vld [vmem:[%s7252 + $0x1b8] sm:$0xf]
    %v7364 = vld [vmem:[%s7252 + $0x1bc] sm:$0xf]
    %v7365 = vld [vmem:[%s7252 + $0x1c0] sm:$0xf]
    %v7366 = vld [vmem:[%s7252 + $0x1c4] sm:$0xf]
    %v7367 = vld [vmem:[%s7252 + $0x1c8] sm:$0xf]
    %v7368 = vld [vmem:[%s7252 + $0x1cc] sm:$0xf]
    %v7369 = vld [vmem:[%s7252 + $0x1d0] sm:$0xf]
    %v7370 = vld [vmem:[%s7252 + $0x1d4] sm:$0xf]
    %v7371 = vld [vmem:[%s7252 + $0x1d8] sm:$0xf]
    %v7372 = vld [vmem:[%s7252 + $0x1dc] sm:$0xf]
    %v7373 = vld [vmem:[%s7252 + $0x1e0] sm:$0xf]
    %v7374 = vld [vmem:[%s7252 + $0x1e4] sm:$0xf]
    %v7375 = vld [vmem:[%s7252 + $0x1e8] sm:$0xf]
    %v7376 = vld [vmem:[%s7252 + $0x1ec] sm:$0xf]
    %v7377 = vld [vmem:[%s7252 + $0x1f0] sm:$0xf]
    %v7378 = vld [vmem:[%s7252 + $0x1f4] sm:$0xf]
    %v7379 = vld [vmem:[%s7252 + $0x1f8] sm:$0xf]
    %v7380 = vld [vmem:[%s7252 + $0x1fc] sm:$0xf]
    %v7381 = vld [vmem:[%s7252 + $0x200] sm:$0xf]
    %v7382 = vld [vmem:[%s7252 + $0x204] sm:$0xf]
    %v7383 = vld [vmem:[%s7252 + $0x208] sm:$0xf]
    %v7384 = vld [vmem:[%s7252 + $0x20c] sm:$0xf]
    %v7385 = vld [vmem:[%s7252 + $0x210] sm:$0xf]
    %v7386 = vld [vmem:[%s7252 + $0x214] sm:$0xf]
    %v7387 = vld [vmem:[%s7252 + $0x218] sm:$0xf]
    %v7388 = vld [vmem:[%s7252 + $0x21c] sm:$0xf]
    %v7389 = vld [vmem:[%s7252 + $0x220] sm:$0xf]
    %v7390 = vld [vmem:[%s7252 + $0x224] sm:$0xf]
    %v7391 = vld [vmem:[%s7252 + $0x228] sm:$0xf]
    %v7392 = vld [vmem:[%s7252 + $0x22c] sm:$0xf]
    %v7393 = vld [vmem:[%s7252 + $0x230] sm:$0xf]
    %v7394 = vld [vmem:[%s7252 + $0x234] sm:$0xf]
    %v7395 = vld [vmem:[%s7252 + $0x238] sm:$0xf]
    %v7396 = vld [vmem:[%s7252 + $0x23c] sm:$0xf]
    %v7397 = vld [vmem:[%s7252 + $0x240] sm:$0xf]
    %v7398 = vld [vmem:[%s7252 + $0x244] sm:$0xf]
    %v7399 = vld [vmem:[%s7252 + $0x248] sm:$0xf]
    %v7400 = vld [vmem:[%s7252 + $0x24c] sm:$0xf]
    %v7401 = vld [vmem:[%s7252 + $0x250] sm:$0xf]
    %v7402 = vld [vmem:[%s7252 + $0x254] sm:$0xf]
    %v7403 = vld [vmem:[%s7252 + $0x258] sm:$0xf]
    %v7404 = vld [vmem:[%s7252 + $0x25c] sm:$0xf]
    %v7405 = vld [vmem:[%s7252 + $0x260] sm:$0xf]
    %v7406 = vld [vmem:[%s7252 + $0x264] sm:$0xf]
    %v7407 = vld [vmem:[%s7252 + $0x268] sm:$0xf]
    %v7408 = vld [vmem:[%s7252 + $0x26c] sm:$0xf]
    %v7409 = vld [vmem:[%s7252 + $0x270] sm:$0xf]
    %v7410 = vld [vmem:[%s7252 + $0x274] sm:$0xf]
    %v7411 = vld [vmem:[%s7252 + $0x278] sm:$0xf]
    %v7412 = vld [vmem:[%s7252 + $0x27c] sm:$0xf]
    %v7413 = vld [vmem:[%s7252 + $0x280] sm:$0xf]
    %v7414 = vld [vmem:[%s7252 + $0x284] sm:$0xf]
    %v7415 = vld [vmem:[%s7252 + $0x288] sm:$0xf]
    %v7416 = vld [vmem:[%s7252 + $0x28c] sm:$0xf]
    %v7417 = vld [vmem:[%s7252 + $0x290] sm:$0xf]
    %v7418 = vld [vmem:[%s7252 + $0x294] sm:$0xf]
    %v7419 = vld [vmem:[%s7252 + $0x298] sm:$0xf]
    %v7420 = vld [vmem:[%s7252 + $0x29c] sm:$0xf]
    %v7421 = vld [vmem:[%s7252 + $0x2a0] sm:$0xf]
    %v7422 = vld [vmem:[%s7252 + $0x2a4] sm:$0xf]
    %v7423 = vld [vmem:[%s7252 + $0x2a8] sm:$0xf]
    %v7424 = vld [vmem:[%s7252 + $0x2ac] sm:$0xf]
    %v7425 = vld [vmem:[%s7252 + $0x2b0] sm:$0xf]
    %v7426 = vld [vmem:[%s7252 + $0x2b4] sm:$0xf]
    %v7427 = vld [vmem:[%s7252 + $0x2b8] sm:$0xf]
    %v7428 = vld [vmem:[%s7252 + $0x2bc] sm:$0xf]
    %v7429 = vld [vmem:[%s7252 + $0x2c0] sm:$0xf]
    %v7430 = vld [vmem:[%s7252 + $0x2c4] sm:$0xf]
    %v7431 = vld [vmem:[%s7252 + $0x2c8] sm:$0xf]
    %v7432 = vld [vmem:[%s7252 + $0x2cc] sm:$0xf]
    %v7433 = vld [vmem:[%s7252 + $0x2d0] sm:$0xf]
    %v7434 = vld [vmem:[%s7252 + $0x2d4] sm:$0xf]
    %v7435 = vld [vmem:[%s7252 + $0x2d8] sm:$0xf]
    %v7436 = vld [vmem:[%s7252 + $0x2dc] sm:$0xf]
    %v7437 = vld [vmem:[%s7252 + $0x2e0] sm:$0xf]
    %v7438 = vld [vmem:[%s7252 + $0x2e4] sm:$0xf]
    %v7439 = vld [vmem:[%s7252 + $0x2e8] sm:$0xf]
    %v7440 = vld [vmem:[%s7252 + $0x2ec] sm:$0xf]
    %v7441 = vld [vmem:[%s7252 + $0x2f0] sm:$0xf]
    %v7442 = vld [vmem:[%s7252 + $0x2f4] sm:$0xf]
    %v7443 = vld [vmem:[%s7252 + $0x2f8] sm:$0xf]
    %v7444 = vld [vmem:[%s7252 + $0x2fc] sm:$0xf]
    %v7445 = vld [vmem:[%s7252 + $0x300] sm:$0xf]
    %v7446 = vld [vmem:[%s7252 + $0x304] sm:$0xf]
    %v7447 = vld [vmem:[%s7252 + $0x308] sm:$0xf]
    %v7448 = vld [vmem:[%s7252 + $0x30c] sm:$0xf]
    %v7449 = vld [vmem:[%s7252 + $0x310] sm:$0xf]
    %v7450 = vld [vmem:[%s7252 + $0x314] sm:$0xf]
    %v7451 = vld [vmem:[%s7252 + $0x318] sm:$0xf]
    %v7452 = vld [vmem:[%s7252 + $0x31c] sm:$0xf]
    %v7453 = vld [vmem:[%s7252 + $0x320] sm:$0xf]
    %v7454 = vld [vmem:[%s7252 + $0x324] sm:$0xf]
    %v7455 = vld [vmem:[%s7252 + $0x328] sm:$0xf]
    %v7456 = vld [vmem:[%s7252 + $0x32c] sm:$0xf]
    %v7457 = vld [vmem:[%s7252 + $0x330] sm:$0xf]
    %v7458 = vld [vmem:[%s7252 + $0x334] sm:$0xf]
    %v7459 = vld [vmem:[%s7252 + $0x338] sm:$0xf]
    %v7460 = vld [vmem:[%s7252 + $0x33c] sm:$0xf]
    %v7461 = vld [vmem:[%s7252 + $0x340] sm:$0xf]
    %v7462 = vld [vmem:[%s7252 + $0x344] sm:$0xf]
    %v7463 = vld [vmem:[%s7252 + $0x348] sm:$0xf]
    %v7464 = vld [vmem:[%s7252 + $0x34c] sm:$0xf]
    %v7465 = vld [vmem:[%s7252 + $0x350] sm:$0xf]
    %v7466 = vld [vmem:[%s7252 + $0x354] sm:$0xf]
    %v7467 = vld [vmem:[%s7252 + $0x358] sm:$0xf]
    %v7468 = vld [vmem:[%s7252 + $0x35c] sm:$0xf]
    %v7469 = vld [vmem:[%s7252 + $0x360] sm:$0xf]
    %v7470 = vld [vmem:[%s7252 + $0x364] sm:$0xf]
    %v7471 = vld [vmem:[%s7252 + $0x368] sm:$0xf]
    %v7472 = vld [vmem:[%s7252 + $0x36c] sm:$0xf]
    %v7473 = vld [vmem:[%s7252 + $0x370] sm:$0xf]
    %v7474 = vld [vmem:[%s7252 + $0x374] sm:$0xf]
    %v7475 = vld [vmem:[%s7252 + $0x378] sm:$0xf]
    %v7476 = vld [vmem:[%s7252 + $0x37c] sm:$0xf]
    %v7701 = vunpack.c.l.b16 %v7253
    %v7702 = vunpack.c.l.b16 %v7254
    %v7703 = vunpack.c.l.b16 %v7255
    %v7704 = vunpack.c.l.b16 %v7256
    %v7705 = vunpack.c.l.b16 %v7257
    %v7706 = vunpack.c.l.b16 %v7258
    %v7707 = vunpack.c.l.b16 %v7259
    %v7708 = vunpack.c.l.b16 %v7260
    %v7709 = vunpack.c.l.b16 %v7261
    %v7710 = vunpack.c.l.b16 %v7262
    %v7711 = vunpack.c.l.b16 %v7263
    %v7712 = vunpack.c.l.b16 %v7264
    %v7713 = vunpack.c.l.b16 %v7265
    %v7714 = vunpack.c.l.b16 %v7266
    %v7715 = vunpack.c.l.b16 %v7267
    %v7716 = vunpack.c.l.b16 %v7268
    %v7717 = vunpack.c.l.b16 %v7269
    %v7718 = vunpack.c.l.b16 %v7270
    %v7719 = vunpack.c.l.b16 %v7271
    %v7720 = vunpack.c.l.b16 %v7272
    %v7721 = vunpack.c.l.b16 %v7273
    %v7722 = vunpack.c.l.b16 %v7274
    %v7723 = vunpack.c.l.b16 %v7275
    %v7724 = vunpack.c.l.b16 %v7276
    %v7725 = vunpack.c.l.b16 %v7277
    %v7726 = vunpack.c.l.b16 %v7278
    %v7727 = vunpack.c.l.b16 %v7279
    %v7728 = vunpack.c.l.b16 %v7280
    %v7729 = vunpack.c.l.b16 %v7281
    %v7730 = vunpack.c.l.b16 %v7282
    %v7731 = vunpack.c.l.b16 %v7283
    %v7732 = vunpack.c.l.b16 %v7284
    %v7733 = vunpack.c.l.b16 %v7285
    %v7734 = vunpack.c.l.b16 %v7286
    %v7735 = vunpack.c.l.b16 %v7287
    %v7736 = vunpack.c.l.b16 %v7288
    %v7737 = vunpack.c.l.b16 %v7289
    %v7738 = vunpack.c.l.b16 %v7290
    %v7739 = vunpack.c.l.b16 %v7291
    %v7740 = vunpack.c.l.b16 %v7292
    %v7741 = vunpack.c.l.b16 %v7293
    %v7742 = vunpack.c.l.b16 %v7294
    %v7743 = vunpack.c.l.b16 %v7295
    %v7744 = vunpack.c.l.b16 %v7296
    %v7745 = vunpack.c.l.b16 %v7297
    %v7746 = vunpack.c.l.b16 %v7298
    %v7747 = vunpack.c.l.b16 %v7299
    %v7748 = vunpack.c.l.b16 %v7300
    %v7749 = vunpack.c.l.b16 %v7301
    %v7750 = vunpack.c.l.b16 %v7302
    %v7751 = vunpack.c.l.b16 %v7303
    %v7752 = vunpack.c.l.b16 %v7304
    %v7753 = vunpack.c.l.b16 %v7305
    %v7754 = vunpack.c.l.b16 %v7306
    %v7755 = vunpack.c.l.b16 %v7307
    %v7756 = vunpack.c.l.b16 %v7308
    %v7757 = vunpack.c.l.b16 %v7309
    %v7758 = vunpack.c.l.b16 %v7310
    %v7759 = vunpack.c.l.b16 %v7311
    %v7760 = vunpack.c.l.b16 %v7312
    %v7761 = vunpack.c.l.b16 %v7313
    %v7762 = vunpack.c.l.b16 %v7314
    %v7763 = vunpack.c.l.b16 %v7315
    %v7764 = vunpack.c.l.b16 %v7316
    %v7765 = vunpack.c.l.b16 %v7317
    %v7766 = vunpack.c.l.b16 %v7318
    %v7767 = vunpack.c.l.b16 %v7319
    %v7768 = vunpack.c.l.b16 %v7320
    %v7769 = vunpack.c.l.b16 %v7321
    %v7770 = vunpack.c.l.b16 %v7322
    %v7771 = vunpack.c.l.b16 %v7323
    %v7772 = vunpack.c.l.b16 %v7324
    %v7773 = vunpack.c.l.b16 %v7325
    %v7774 = vunpack.c.l.b16 %v7326
    %v7775 = vunpack.c.l.b16 %v7327
    %v7776 = vunpack.c.l.b16 %v7328
    %v7777 = vunpack.c.l.b16 %v7329
    %v7778 = vunpack.c.l.b16 %v7330
    %v7779 = vunpack.c.l.b16 %v7331
    %v7780 = vunpack.c.l.b16 %v7332
    %v7781 = vunpack.c.l.b16 %v7333
    %v7782 = vunpack.c.l.b16 %v7334
    %v7783 = vunpack.c.l.b16 %v7335
    %v7784 = vunpack.c.l.b16 %v7336
    %v7785 = vunpack.c.l.b16 %v7337
    %v7786 = vunpack.c.l.b16 %v7338
    %v7787 = vunpack.c.l.b16 %v7339
    %v7788 = vunpack.c.l.b16 %v7340
    %v7789 = vunpack.c.l.b16 %v7341
    %v7790 = vunpack.c.l.b16 %v7342
    %v7791 = vunpack.c.l.b16 %v7343
    %v7792 = vunpack.c.l.b16 %v7344
    %v7793 = vunpack.c.l.b16 %v7345
    %v7794 = vunpack.c.l.b16 %v7346
    %v7795 = vunpack.c.l.b16 %v7347
    %v7796 = vunpack.c.l.b16 %v7348
    %v7797 = vunpack.c.l.b16 %v7349
    %v7798 = vunpack.c.l.b16 %v7350
    %v7799 = vunpack.c.l.b16 %v7351
    %v7800 = vunpack.c.l.b16 %v7352
    %v7801 = vunpack.c.l.b16 %v7353
    %v7802 = vunpack.c.l.b16 %v7354
    %v7803 = vunpack.c.l.b16 %v7355
    %v7804 = vunpack.c.l.b16 %v7356
    %v7805 = vunpack.c.l.b16 %v7357
    %v7806 = vunpack.c.l.b16 %v7358
    %v7807 = vunpack.c.l.b16 %v7359
    %v7808 = vunpack.c.l.b16 %v7360
    %v7809 = vunpack.c.l.b16 %v7361
    %v7810 = vunpack.c.l.b16 %v7362
    %v7811 = vunpack.c.l.b16 %v7363
    %v7812 = vunpack.c.l.b16 %v7364
    %v7813 = vunpack.c.l.b16 %v7365
    %v7814 = vunpack.c.l.b16 %v7366
    %v7815 = vunpack.c.l.b16 %v7367
    %v7816 = vunpack.c.l.b16 %v7368
    %v7817 = vunpack.c.l.b16 %v7369
    %v7818 = vunpack.c.l.b16 %v7370
    %v7819 = vunpack.c.l.b16 %v7371
    %v7820 = vunpack.c.l.b16 %v7372
    %v7821 = vunpack.c.l.b16 %v7373
    %v7822 = vunpack.c.l.b16 %v7374
    %v7823 = vunpack.c.l.b16 %v7375
    %v7824 = vunpack.c.l.b16 %v7376
    %v7825 = vunpack.c.l.b16 %v7377
    %v7826 = vunpack.c.l.b16 %v7378
    %v7827 = vunpack.c.l.b16 %v7379
    %v7828 = vunpack.c.l.b16 %v7380
    %v7829 = vunpack.c.l.b16 %v7381
    %v7830 = vunpack.c.l.b16 %v7382
    %v7831 = vunpack.c.l.b16 %v7383
    %v7832 = vunpack.c.l.b16 %v7384
    %v7833 = vunpack.c.l.b16 %v7385
    %v7834 = vunpack.c.l.b16 %v7386
    %v7835 = vunpack.c.l.b16 %v7387
    %v7836 = vunpack.c.l.b16 %v7388
    %v7837 = vunpack.c.l.b16 %v7389
    %v7838 = vunpack.c.l.b16 %v7390
    %v7839 = vunpack.c.l.b16 %v7391
    %v7840 = vunpack.c.l.b16 %v7392
    %v7841 = vunpack.c.l.b16 %v7393
    %v7842 = vunpack.c.l.b16 %v7394
    %v7843 = vunpack.c.l.b16 %v7395
    %v7844 = vunpack.c.l.b16 %v7396
    %v7845 = vunpack.c.l.b16 %v7397
    %v7846 = vunpack.c.l.b16 %v7398
    %v7847 = vunpack.c.l.b16 %v7399
    %v7848 = vunpack.c.l.b16 %v7400
    %v7849 = vunpack.c.l.b16 %v7401
    %v7850 = vunpack.c.l.b16 %v7402
    %v7851 = vunpack.c.l.b16 %v7403
    %v7852 = vunpack.c.l.b16 %v7404
    %v7853 = vunpack.c.l.b16 %v7405
    %v7854 = vunpack.c.l.b16 %v7406
    %v7855 = vunpack.c.l.b16 %v7407
    %v7856 = vunpack.c.l.b16 %v7408
    %v7857 = vunpack.c.l.b16 %v7409
    %v7858 = vunpack.c.l.b16 %v7410
    %v7859 = vunpack.c.l.b16 %v7411
    %v7860 = vunpack.c.l.b16 %v7412
    %v7861 = vunpack.c.l.b16 %v7413
    %v7862 = vunpack.c.l.b16 %v7414
    %v7863 = vunpack.c.l.b16 %v7415
    %v7864 = vunpack.c.l.b16 %v7416
    %v7865 = vunpack.c.l.b16 %v7417
    %v7866 = vunpack.c.l.b16 %v7418
    %v7867 = vunpack.c.l.b16 %v7419
    %v7868 = vunpack.c.l.b16 %v7420
    %v7869 = vunpack.c.l.b16 %v7421
    %v7870 = vunpack.c.l.b16 %v7422
    %v7871 = vunpack.c.l.b16 %v7423
    %v7872 = vunpack.c.l.b16 %v7424
    %v7873 = vunpack.c.l.b16 %v7425
    %v7874 = vunpack.c.l.b16 %v7426
    %v7875 = vunpack.c.l.b16 %v7427
    %v7876 = vunpack.c.l.b16 %v7428
    %v7877 = vunpack.c.l.b16 %v7429
    %v7878 = vunpack.c.l.b16 %v7430
    %v7879 = vunpack.c.l.b16 %v7431
    %v7880 = vunpack.c.l.b16 %v7432
    %v7881 = vunpack.c.l.b16 %v7433
    %v7882 = vunpack.c.l.b16 %v7434
    %v7883 = vunpack.c.l.b16 %v7435
    %v7884 = vunpack.c.l.b16 %v7436
    %v7885 = vunpack.c.l.b16 %v7437
    %v7886 = vunpack.c.l.b16 %v7438
    %v7887 = vunpack.c.l.b16 %v7439
    %v7888 = vunpack.c.l.b16 %v7440
    %v7889 = vunpack.c.l.b16 %v7441
    %v7890 = vunpack.c.l.b16 %v7442
    %v7891 = vunpack.c.l.b16 %v7443
    %v7892 = vunpack.c.l.b16 %v7444
    %v7893 = vunpack.c.l.b16 %v7445
    %v7894 = vunpack.c.l.b16 %v7446
    %v7895 = vunpack.c.l.b16 %v7447
    %v7896 = vunpack.c.l.b16 %v7448
    %v7897 = vunpack.c.l.b16 %v7449
    %v7898 = vunpack.c.l.b16 %v7450
    %v7899 = vunpack.c.l.b16 %v7451
    %v7900 = vunpack.c.l.b16 %v7452
    %v7901 = vunpack.c.l.b16 %v7453
    %v7902 = vunpack.c.l.b16 %v7454
    %v7903 = vunpack.c.l.b16 %v7455
    %v7904 = vunpack.c.l.b16 %v7456
    %v7905 = vunpack.c.l.b16 %v7457
    %v7906 = vunpack.c.l.b16 %v7458
    %v7907 = vunpack.c.l.b16 %v7459
    %v7908 = vunpack.c.l.b16 %v7460
    %v7909 = vunpack.c.l.b16 %v7461
    %v7910 = vunpack.c.l.b16 %v7462
    %v7911 = vunpack.c.l.b16 %v7463
    %v7912 = vunpack.c.l.b16 %v7464
    %v7913 = vunpack.c.l.b16 %v7465
    %v7914 = vunpack.c.l.b16 %v7466
    %v7915 = vunpack.c.l.b16 %v7467
    %v7916 = vunpack.c.l.b16 %v7468
    %v7917 = vunpack.c.l.b16 %v7469
    %v7918 = vunpack.c.l.b16 %v7470
    %v7919 = vunpack.c.l.b16 %v7471
    %v7920 = vunpack.c.l.b16 %v7472
    %v7921 = vunpack.c.l.b16 %v7473
    %v7922 = vunpack.c.l.b16 %v7474
    %v7923 = vunpack.c.l.b16 %v7475
    %v7924 = vunpack.c.l.b16 %v7476
    %v7925 = vpack.c.b16 %v7702, %v7701
    %v7926 = vpack.c.b16 %v7704, %v7703
    %v7927 = vpack.c.b16 %v7706, %v7705
    %v7928 = vpack.c.b16 %v7708, %v7707
    %v7929 = vpack.c.b16 %v7710, %v7709
    %v7930 = vpack.c.b16 %v7712, %v7711
    %v7931 = vpack.c.b16 %v7714, %v7713
    %v7932 = vpack.c.b16 %v7716, %v7715
    %v7933 = vpack.c.b16 %v7718, %v7717
    %v7934 = vpack.c.b16 %v7720, %v7719
    %v7935 = vpack.c.b16 %v7722, %v7721
    %v7936 = vpack.c.b16 %v7724, %v7723
    %v7937 = vpack.c.b16 %v7726, %v7725
    %v7938 = vpack.c.b16 %v7728, %v7727
    %v7939 = vpack.c.b16 %v7730, %v7729
    %v7940 = vpack.c.b16 %v7732, %v7731
    %v7941 = vpack.c.b16 %v7734, %v7733
    %v7942 = vpack.c.b16 %v7736, %v7735
    %v7943 = vpack.c.b16 %v7738, %v7737
    %v7944 = vpack.c.b16 %v7740, %v7739
    %v7945 = vpack.c.b16 %v7742, %v7741
    %v7946 = vpack.c.b16 %v7744, %v7743
    %v7947 = vpack.c.b16 %v7746, %v7745
    %v7948 = vpack.c.b16 %v7748, %v7747
    %v7949 = vpack.c.b16 %v7750, %v7749
    %v7950 = vpack.c.b16 %v7752, %v7751
    %v7951 = vpack.c.b16 %v7754, %v7753
    %v7952 = vpack.c.b16 %v7756, %v7755
    %v7953 = vpack.c.b16 %v7758, %v7757
    %v7954 = vpack.c.b16 %v7760, %v7759
    %v7955 = vpack.c.b16 %v7762, %v7761
    %v7956 = vpack.c.b16 %v7764, %v7763
    %v7957 = vpack.c.b16 %v7766, %v7765
    %v7958 = vpack.c.b16 %v7768, %v7767
    %v7959 = vpack.c.b16 %v7770, %v7769
    %v7960 = vpack.c.b16 %v7772, %v7771
    %v7961 = vpack.c.b16 %v7774, %v7773
    %v7962 = vpack.c.b16 %v7776, %v7775
    %v7963 = vpack.c.b16 %v7778, %v7777
    %v7964 = vpack.c.b16 %v7780, %v7779
    %v7965 = vpack.c.b16 %v7782, %v7781
    %v7966 = vpack.c.b16 %v7784, %v7783
    %v7967 = vpack.c.b16 %v7786, %v7785
    %v7968 = vpack.c.b16 %v7788, %v7787
    %v7969 = vpack.c.b16 %v7790, %v7789
    %v7970 = vpack.c.b16 %v7792, %v7791
    %v7971 = vpack.c.b16 %v7794, %v7793
    %v7972 = vpack.c.b16 %v7796, %v7795
    %v7973 = vpack.c.b16 %v7798, %v7797
    %v7974 = vpack.c.b16 %v7800, %v7799
    %v7975 = vpack.c.b16 %v7802, %v7801
    %v7976 = vpack.c.b16 %v7804, %v7803
    %v7977 = vpack.c.b16 %v7806, %v7805
    %v7978 = vpack.c.b16 %v7808, %v7807
    %v7979 = vpack.c.b16 %v7810, %v7809
    %v7980 = vpack.c.b16 %v7812, %v7811
    %v7981 = vpack.c.b16 %v7814, %v7813
    %v7982 = vpack.c.b16 %v7816, %v7815
    %v7983 = vpack.c.b16 %v7818, %v7817
    %v7984 = vpack.c.b16 %v7820, %v7819
    %v7985 = vpack.c.b16 %v7822, %v7821
    %v7986 = vpack.c.b16 %v7824, %v7823
    %v7987 = vpack.c.b16 %v7826, %v7825
    %v7988 = vpack.c.b16 %v7828, %v7827
    %v7989 = vpack.c.b16 %v7830, %v7829
    %v7990 = vpack.c.b16 %v7832, %v7831
    %v7991 = vpack.c.b16 %v7834, %v7833
    %v7992 = vpack.c.b16 %v7836, %v7835
    %v7993 = vpack.c.b16 %v7838, %v7837
    %v7994 = vpack.c.b16 %v7840, %v7839
    %v7995 = vpack.c.b16 %v7842, %v7841
    %v7996 = vpack.c.b16 %v7844, %v7843
    %v7997 = vpack.c.b16 %v7846, %v7845
    %v7998 = vpack.c.b16 %v7848, %v7847
    %v7999 = vpack.c.b16 %v7850, %v7849
    %v8000 = vpack.c.b16 %v7852, %v7851
    %v8001 = vpack.c.b16 %v7854, %v7853
    %v8002 = vpack.c.b16 %v7856, %v7855
    %v8003 = vpack.c.b16 %v7858, %v7857
    %v8004 = vpack.c.b16 %v7860, %v7859
    %v8005 = vpack.c.b16 %v7862, %v7861
    %v8006 = vpack.c.b16 %v7864, %v7863
    %v8007 = vpack.c.b16 %v7866, %v7865
    %v8008 = vpack.c.b16 %v7868, %v7867
    %v8009 = vpack.c.b16 %v7870, %v7869
    %v8010 = vpack.c.b16 %v7872, %v7871
    %v8011 = vpack.c.b16 %v7874, %v7873
    %v8012 = vpack.c.b16 %v7876, %v7875
    %v8013 = vpack.c.b16 %v7878, %v7877
    %v8014 = vpack.c.b16 %v7880, %v7879
    %v8015 = vpack.c.b16 %v7882, %v7881
    %v8016 = vpack.c.b16 %v7884, %v7883
    %v8017 = vpack.c.b16 %v7886, %v7885
    %v8018 = vpack.c.b16 %v7888, %v7887
    %v8019 = vpack.c.b16 %v7890, %v7889
    %v8020 = vpack.c.b16 %v7892, %v7891
    %v8021 = vpack.c.b16 %v7894, %v7893
    %v8022 = vpack.c.b16 %v7896, %v7895
    %v8023 = vpack.c.b16 %v7898, %v7897
    %v8024 = vpack.c.b16 %v7900, %v7899
    %v8025 = vpack.c.b16 %v7902, %v7901
    %v8026 = vpack.c.b16 %v7904, %v7903
    %v8027 = vpack.c.b16 %v7906, %v7905
    %v8028 = vpack.c.b16 %v7908, %v7907
    %v8029 = vpack.c.b16 %v7910, %v7909
    %v8030 = vpack.c.b16 %v7912, %v7911
    %v8031 = vpack.c.b16 %v7914, %v7913
    %v8032 = vpack.c.b16 %v7916, %v7915
    %v8033 = vpack.c.b16 %v7918, %v7917
    %v8034 = vpack.c.b16 %v7920, %v7919
    %v8035 = vpack.c.b16 %v7922, %v7921
    %v8036 = vpack.c.b16 %v7924, %v7923
    %8149 = vmatpush.bf16.msra.mxu0 %v7932
    %8150 = vmatpush.bf16.msra.mxu0 %v7931
    %8151 = vmatpush.bf16.msra.mxu0 %v7930
    %8152 = vmatpush.bf16.msra.mxu0 %v7929
    %8153 = vmatpush.bf16.msra.mxu0 %v7928
    %8154 = vmatpush.bf16.msra.mxu0 %v7927
    %8155 = vmatpush.bf16.msra.mxu0 %v7926
    %8156 = vmatpush.bf16.msra.mxu0 %v7925
    %8157 = vmatmul.bf16.gmra.mxu0 %v7238
    %v8158 = vpop.f32.mrf.mxu0
    %v8159 = vadd.f32 0.0, %v8158
    %v8160 = vpop.f32.mrf.mxu0
    %8161 = vdwg.mxu0
    %8162 = vmatpush.bf16.msra.mxu0 %v7940
    %8163 = vmatpush.bf16.msra.mxu0 %v7939
    %8164 = vmatpush.bf16.msra.mxu0 %v7938
    %8165 = vmatpush.bf16.msra.mxu0 %v7937
    %8166 = vmatpush.bf16.msra.mxu0 %v7936
    %8167 = vmatpush.bf16.msra.mxu0 %v7935
    %8168 = vmatpush.bf16.msra.mxu0 %v7934
    %8169 = vmatpush.bf16.msra.mxu0 %v7933
    %8170 = vmatmul.bf16.gmra.mxu0 %v7239
    %v8171 = vpop.f32.mrf.mxu0
    %v8172 = vadd.f32 %v8159, %v8171
    %v8173 = vpop.f32.mrf.mxu0
    %8174 = vdwg.mxu0
    %8175 = vmatpush.bf16.msra.mxu0 %v7948
    %8176 = vmatpush.bf16.msra.mxu0 %v7947
    %8177 = vmatpush.bf16.msra.mxu0 %v7946
    %8178 = vmatpush.bf16.msra.mxu0 %v7945
    %8179 = vmatpush.bf16.msra.mxu0 %v7944
    %8180 = vmatpush.bf16.msra.mxu0 %v7943
    %8181 = vmatpush.bf16.msra.mxu0 %v7942
    %8182 = vmatpush.bf16.msra.mxu0 %v7941
    %8183 = vmatmul.bf16.gmra.mxu0 %v7240
    %v8184 = vpop.f32.mrf.mxu0
    %v8185 = vadd.f32 %v8172, %v8184
    %v8186 = vpop.f32.mrf.mxu0
    %8187 = vdwg.mxu0
    %8188 = vmatpush.bf16.msra.mxu0 %v7956
    %8189 = vmatpush.bf16.msra.mxu0 %v7955
    %8190 = vmatpush.bf16.msra.mxu0 %v7954
    %8191 = vmatpush.bf16.msra.mxu0 %v7953
    %8192 = vmatpush.bf16.msra.mxu0 %v7952
    %8193 = vmatpush.bf16.msra.mxu0 %v7951
    %8194 = vmatpush.bf16.msra.mxu0 %v7950
    %8195 = vmatpush.bf16.msra.mxu0 %v7949
    %8196 = vmatmul.bf16.gmra.mxu0 %v7241
    %v8197 = vpop.f32.mrf.mxu0
    %v8198 = vadd.f32 %v8185, %v8197
    %v8199 = vpop.f32.mrf.mxu0
    %8200 = vdwg.mxu0
    %8201 = vmatpush.bf16.msra.mxu0 %v7964
    %8202 = vmatpush.bf16.msra.mxu0 %v7963
    %8203 = vmatpush.bf16.msra.mxu0 %v7962
    %8204 = vmatpush.bf16.msra.mxu0 %v7961
    %8205 = vmatpush.bf16.msra.mxu0 %v7960
    %8206 = vmatpush.bf16.msra.mxu0 %v7959
    %8207 = vmatpush.bf16.msra.mxu0 %v7958
    %8208 = vmatpush.bf16.msra.mxu0 %v7957
    %8209 = vmatmul.bf16.gmra.mxu0 %v7242
    %v8210 = vpop.f32.mrf.mxu0
    %v8211 = vadd.f32 %v8198, %v8210
    %v8212 = vpop.f32.mrf.mxu0
    %8213 = vdwg.mxu0
    %8214 = vmatpush.bf16.msra.mxu0 %v7972
    %8215 = vmatpush.bf16.msra.mxu0 %v7971
    %8216 = vmatpush.bf16.msra.mxu0 %v7970
    %8217 = vmatpush.bf16.msra.mxu0 %v7969
    %8218 = vmatpush.bf16.msra.mxu0 %v7968
    %8219 = vmatpush.bf16.msra.mxu0 %v7967
    %8220 = vmatpush.bf16.msra.mxu0 %v7966
    %8221 = vmatpush.bf16.msra.mxu0 %v7965
    %8222 = vmatmul.bf16.gmra.mxu0 %v7243
    %v8223 = vpop.f32.mrf.mxu0
    %v8224 = vadd.f32 %v8211, %v8223
    %v8225 = vpop.f32.mrf.mxu0
    %8226 = vdwg.mxu0
    %8227 = vmatpush.bf16.msra.mxu0 %v7980
    %8228 = vmatpush.bf16.msra.mxu0 %v7979
    %8229 = vmatpush.bf16.msra.mxu0 %v7978
    %8230 = vmatpush.bf16.msra.mxu0 %v7977
    %8231 = vmatpush.bf16.msra.mxu0 %v7976
    %8232 = vmatpush.bf16.msra.mxu0 %v7975
    %8233 = vmatpush.bf16.msra.mxu0 %v7974
    %8234 = vmatpush.bf16.msra.mxu0 %v7973
    %8235 = vmatmul.bf16.gmra.mxu0 %v7244
    %v8236 = vpop.f32.mrf.mxu0
    %v8237 = vadd.f32 %v8224, %v8236
    %v8238 = vpop.f32.mrf.mxu0
    %8239 = vdwg.mxu0
    %8240 = vmatpush.bf16.msra.mxu0 %v7988
    %8241 = vmatpush.bf16.msra.mxu0 %v7987
    %8242 = vmatpush.bf16.msra.mxu0 %v7986
    %8243 = vmatpush.bf16.msra.mxu0 %v7985
    %8244 = vmatpush.bf16.msra.mxu0 %v7984
    %8245 = vmatpush.bf16.msra.mxu0 %v7983
    %8246 = vmatpush.bf16.msra.mxu0 %v7982
    %8247 = vmatpush.bf16.msra.mxu0 %v7981
    %8248 = vmatmul.bf16.gmra.mxu0 %v7245
    %v8249 = vpop.f32.mrf.mxu0
    %v8250 = vadd.f32 %v8237, %v8249
    %v8251 = vpop.f32.mrf.mxu0
    %8252 = vdwg.mxu0
    %8253 = vmatpush.bf16.msra.mxu0 %v7996
    %8254 = vmatpush.bf16.msra.mxu0 %v7995
    %8255 = vmatpush.bf16.msra.mxu0 %v7994
    %8256 = vmatpush.bf16.msra.mxu0 %v7993
    %8257 = vmatpush.bf16.msra.mxu0 %v7992
    %8258 = vmatpush.bf16.msra.mxu0 %v7991
    %8259 = vmatpush.bf16.msra.mxu0 %v7990
    %8260 = vmatpush.bf16.msra.mxu0 %v7989
    %8261 = vmatmul.bf16.gmra.mxu0 %v7246
    %v8262 = vpop.f32.mrf.mxu0
    %v8263 = vadd.f32 %v8250, %v8262
    %v8264 = vpop.f32.mrf.mxu0
    %8265 = vdwg.mxu0
    %8266 = vmatpush.bf16.msra.mxu0 %v8004
    %8267 = vmatpush.bf16.msra.mxu0 %v8003
    %8268 = vmatpush.bf16.msra.mxu0 %v8002
    %8269 = vmatpush.bf16.msra.mxu0 %v8001
    %8270 = vmatpush.bf16.msra.mxu0 %v8000
    %8271 = vmatpush.bf16.msra.mxu0 %v7999
    %8272 = vmatpush.bf16.msra.mxu0 %v7998
    %8273 = vmatpush.bf16.msra.mxu0 %v7997
    %8274 = vmatmul.bf16.gmra.mxu0 %v7247
    %v8275 = vpop.f32.mrf.mxu0
    %v8276 = vadd.f32 %v8263, %v8275
    %v8277 = vpop.f32.mrf.mxu0
    %8278 = vdwg.mxu0
    %8279 = vmatpush.bf16.msra.mxu0 %v8012
    %8280 = vmatpush.bf16.msra.mxu0 %v8011
    %8281 = vmatpush.bf16.msra.mxu0 %v8010
    %8282 = vmatpush.bf16.msra.mxu0 %v8009
    %8283 = vmatpush.bf16.msra.mxu0 %v8008
    %8284 = vmatpush.bf16.msra.mxu0 %v8007
    %8285 = vmatpush.bf16.msra.mxu0 %v8006
    %8286 = vmatpush.bf16.msra.mxu0 %v8005
    %8287 = vmatmul.bf16.gmra.mxu0 %v7248
    %v8288 = vpop.f32.mrf.mxu0
    %v8289 = vadd.f32 %v8276, %v8288
    %v8290 = vpop.f32.mrf.mxu0
    %8291 = vdwg.mxu0
    %8292 = vmatpush.bf16.msra.mxu0 %v8020
    %8293 = vmatpush.bf16.msra.mxu0 %v8019
    %8294 = vmatpush.bf16.msra.mxu0 %v8018
    %8295 = vmatpush.bf16.msra.mxu0 %v8017
    %8296 = vmatpush.bf16.msra.mxu0 %v8016
    %8297 = vmatpush.bf16.msra.mxu0 %v8015
    %8298 = vmatpush.bf16.msra.mxu0 %v8014
    %8299 = vmatpush.bf16.msra.mxu0 %v8013
    %8300 = vmatmul.bf16.gmra.mxu0 %v7249
    %v8301 = vpop.f32.mrf.mxu0
    %v8302 = vadd.f32 %v8289, %v8301
    %v8303 = vpop.f32.mrf.mxu0
    %8304 = vdwg.mxu0
    %8305 = vmatpush.bf16.msra.mxu0 %v8028
    %8306 = vmatpush.bf16.msra.mxu0 %v8027
    %8307 = vmatpush.bf16.msra.mxu0 %v8026
    %8308 = vmatpush.bf16.msra.mxu0 %v8025
    %8309 = vmatpush.bf16.msra.mxu0 %v8024
    %8310 = vmatpush.bf16.msra.mxu0 %v8023
    %8311 = vmatpush.bf16.msra.mxu0 %v8022
    %8312 = vmatpush.bf16.msra.mxu0 %v8021
    %8313 = vmatmul.bf16.gmra.mxu0 %v7250
    %v8314 = vpop.f32.mrf.mxu0
    %v8315 = vadd.f32 %v8302, %v8314
    %v8316 = vpop.f32.mrf.mxu0
    %8317 = vdwg.mxu0
    %8318 = vmatpush.bf16.msra.mxu0 %v8036
    %8319 = vmatpush.bf16.msra.mxu0 %v8035
    %8320 = vmatpush.bf16.msra.mxu0 %v8034
    %8321 = vmatpush.bf16.msra.mxu0 %v8033
    %8322 = vmatpush.bf16.msra.mxu0 %v8032
    %8323 = vmatpush.bf16.msra.mxu0 %v8031
    %8324 = vmatpush.bf16.msra.mxu0 %v8030
    %8325 = vmatpush.bf16.msra.mxu0 %v8029
    %8326 = vmatmul.bf16.gmra.mxu0 %v7251
    %v8327 = vpop.f32.mrf.mxu0
    %v8328 = vadd.f32 %v8315, %v8327
    %v8329 = vpop.f32.mrf.mxu0
    %8330 = vdwg.mxu0
    %v8331 = vadd.f32 %v7127, %v8328
    %v8332 = vshll.u32 %v7141, 16
    %v8334 = vrot.slane %v8332, 1
    %v8335 = vshll.u32 %v7142, 16
    %v8337 = vrot.slane %v8335, 1
    %v8338 = vrot.slane %v7141, 1
    %v8339 = vrot.slane %v7142, 1
    %v8341 = vunpack.c.l.b16 %v4629
    %v8342 = vunpack.c.h.b16 %v4629
    %v8343 = vpack.c.b16 %v8341, %v8341
    %v8344 = vpack.c.b16 %v8342, %v8342
    %v8346 = vshll.u32 %v8343, 16
    %v8348 = vrot.slane %v8346, 6
    %v8350 = vshll.u32 %v8344, 16
    %v8352 = vrot.slane %v8350, 6
    %v8353 = vrot.slane %v8343, 6
    %v8354 = vrot.slane %v8344, 6
    %v8355 = vrot.slane %v8346, 7
    %v8356 = vrot.slane %v8350, 7
    %v8357 = vrot.slane %v8343, 7
    %v8358 = vrot.slane %v8344, 7
    %v8359 = vshrl.u32 %v7166, 16
    %v8361 = vshrl.u32 %v7167, 16
    %v8364 = vunpack.c.l.b16 %v4637
    %v8365 = vunpack.c.h.b16 %v4637
    %v8366 = vpack.c.b16 %v8364, %v8364
    %v8367 = vpack.c.b16 %v8365, %v8365
    %v8368 = vrot.slane %v8366, 5
    %v8369 = vrot.slane %v8367, 5
    %v8371 = vshrl.u32 %v8366, 16
    %v8373 = vrot.slane %v8371, 5
    %v8375 = vshrl.u32 %v8367, 16
    %v8377 = vrot.slane %v8375, 5
    %v8378 = vrot.slane %v8366, 6
    %v8379 = vrot.slane %v8367, 6
    %v8380 = vrot.slane %v8371, 6
    %v8381 = vrot.slane %v8375, 6
    %v8382 = vrot.slane %v8366, 7
    %v8383 = vrot.slane %v8367, 7
    %v8384 = vrot.slane %v7146, 2
    %v8385 = vrot.slane %v7150, 2
    %v8387 = vshrl.u32 %v8334, 16
    %v8389 = vrot.slane %v8387, 2
    %v8391 = vshrl.u32 %v8337, 16
    %v8393 = vrot.slane %v8391, 2
    %v8395 = vshrl.u32 %v8338, 16
    %v8397 = vrot.slane %v8395, 2
    %v8399 = vshrl.u32 %v8339, 16
    %v8401 = vrot.slane %v8399, 2
    %v8403 = vshrl.u32 %v8348, 16
    %v8405 = vrot.slane %v8403, 2
    %v8407 = vshrl.u32 %v8352, 16
    %v8409 = vrot.slane %v8407, 2
    %v8411 = vshrl.u32 %v8353, 16
    %v8413 = vrot.slane %v8411, 2
    %v8415 = vshrl.u32 %v8354, 16
    %v8417 = vrot.slane %v8415, 2
    %v8419 = vshrl.u32 %v8355, 16
    %v8421 = vrot.slane %v8419, 2
    %v8423 = vshrl.u32 %v8356, 16
    %v8425 = vrot.slane %v8423, 2
    %v8427 = vshrl.u32 %v8357, 16
    %v8429 = vrot.slane %v8427, 2
    %v8431 = vshrl.u32 %v8358, 16
    %v8433 = vrot.slane %v8431, 2
    %v8448 = vrot.slane %v7169, 3
    %v8449 = vrot.slane %v7173, 3
    %v8451 = vshll.u32 %v8359, 16
    %v8453 = vrot.slane %v8451, 3
    %v8455 = vshll.u32 %v8361, 16
    %v8457 = vrot.slane %v8455, 3
    %v8459 = vshll.u32 %v8368, 16
    %v8461 = vrot.slane %v8459, 3
    %v8463 = vshll.u32 %v8369, 16
    %v8465 = vrot.slane %v8463, 3
    %v8467 = vshll.u32 %v8373, 16
    %v8469 = vrot.slane %v8467, 3
    %v8471 = vshll.u32 %v8377, 16
    %v8473 = vrot.slane %v8471, 3
    %v8475 = vshll.u32 %v8378, 16
    %v8477 = vrot.slane %v8475, 3
    %v8479 = vshll.u32 %v8379, 16
    %v8481 = vrot.slane %v8479, 3
    %v8483 = vshll.u32 %v8380, 16
    %v8485 = vrot.slane %v8483, 3
    %v8487 = vshll.u32 %v8381, 16
    %v8489 = vrot.slane %v8487, 3
    %v8491 = vshll.u32 %v8382, 16
    %v8493 = vrot.slane %v8491, 3
    %v8495 = vshll.u32 %v8383, 16
    %v8497 = vrot.slane %v8495, 3
    %v8512 = vsel %vm4758, %v8384, %v8448
    %v8513 = vsel %vm4758, %v8385, %v8449
    %v8514 = vsel %vm4758, %v8389, %v8453
    %v8515 = vsel %vm4758, %v8393, %v8457
    %v8516 = vsel %vm4758, %v8397, %v8461
    %v8517 = vsel %vm4758, %v8401, %v8465
    %v8518 = vsel %vm4758, %v8405, %v8469
    %v8519 = vsel %vm4758, %v8409, %v8473
    %v8520 = vsel %vm4758, %v8413, %v8477
    %v8521 = vsel %vm4758, %v8417, %v8481
    %v8522 = vsel %vm4758, %v8421, %v8485
    %v8523 = vsel %vm4758, %v8425, %v8489
    %v8524 = vsel %vm4758, %v8429, %v8493
    %v8525 = vsel %vm4758, %v8433, %v8497
    %s8526 = scalar_lea.vmem [#allocation4], 2688
    %v8527 = vld [vmem:[%s8526] sm:$0xf]
    %v8528 = vld [vmem:[%s8526 + $0x4] sm:$0xf]
    %v8529 = vld [vmem:[%s8526 + $0x8] sm:$0xf]
    %v8530 = vld [vmem:[%s8526 + $0xc] sm:$0xf]
    %v8531 = vld [vmem:[%s8526 + $0x10] sm:$0xf]
    %v8532 = vld [vmem:[%s8526 + $0x14] sm:$0xf]
    %v8533 = vld [vmem:[%s8526 + $0x18] sm:$0xf]
    %v8534 = vld [vmem:[%s8526 + $0x1c] sm:$0xf]
    %v8535 = vld [vmem:[%s8526 + $0x20] sm:$0xf]
    %v8536 = vld [vmem:[%s8526 + $0x24] sm:$0xf]
    %v8537 = vld [vmem:[%s8526 + $0x28] sm:$0xf]
    %v8538 = vld [vmem:[%s8526 + $0x2c] sm:$0xf]
    %v8539 = vld [vmem:[%s8526 + $0x30] sm:$0xf]
    %v8540 = vld [vmem:[%s8526 + $0x34] sm:$0xf]
    %v8541 = vld [vmem:[%s8526 + $0x38] sm:$0xf]
    %v8542 = vld [vmem:[%s8526 + $0x3c] sm:$0xf]
    %v8543 = vld [vmem:[%s8526 + $0x40] sm:$0xf]
    %v8544 = vld [vmem:[%s8526 + $0x44] sm:$0xf]
    %v8545 = vld [vmem:[%s8526 + $0x48] sm:$0xf]
    %v8546 = vld [vmem:[%s8526 + $0x4c] sm:$0xf]
    %v8547 = vld [vmem:[%s8526 + $0x50] sm:$0xf]
    %v8548 = vld [vmem:[%s8526 + $0x54] sm:$0xf]
    %v8549 = vld [vmem:[%s8526 + $0x58] sm:$0xf]
    %v8550 = vld [vmem:[%s8526 + $0x5c] sm:$0xf]
    %v8551 = vld [vmem:[%s8526 + $0x60] sm:$0xf]
    %v8552 = vld [vmem:[%s8526 + $0x64] sm:$0xf]
    %v8553 = vld [vmem:[%s8526 + $0x68] sm:$0xf]
    %v8554 = vld [vmem:[%s8526 + $0x6c] sm:$0xf]
    %v8555 = vld [vmem:[%s8526 + $0x70] sm:$0xf]
    %v8556 = vld [vmem:[%s8526 + $0x74] sm:$0xf]
    %v8557 = vld [vmem:[%s8526 + $0x78] sm:$0xf]
    %v8558 = vld [vmem:[%s8526 + $0x7c] sm:$0xf]
    %v8559 = vld [vmem:[%s8526 + $0x80] sm:$0xf]
    %v8560 = vld [vmem:[%s8526 + $0x84] sm:$0xf]
    %v8561 = vld [vmem:[%s8526 + $0x88] sm:$0xf]
    %v8562 = vld [vmem:[%s8526 + $0x8c] sm:$0xf]
    %v8563 = vld [vmem:[%s8526 + $0x90] sm:$0xf]
    %v8564 = vld [vmem:[%s8526 + $0x94] sm:$0xf]
    %v8565 = vld [vmem:[%s8526 + $0x98] sm:$0xf]
    %v8566 = vld [vmem:[%s8526 + $0x9c] sm:$0xf]
    %v8567 = vld [vmem:[%s8526 + $0xa0] sm:$0xf]
    %v8568 = vld [vmem:[%s8526 + $0xa4] sm:$0xf]
    %v8569 = vld [vmem:[%s8526 + $0xa8] sm:$0xf]
    %v8570 = vld [vmem:[%s8526 + $0xac] sm:$0xf]
    %v8571 = vld [vmem:[%s8526 + $0xb0] sm:$0xf]
    %v8572 = vld [vmem:[%s8526 + $0xb4] sm:$0xf]
    %v8573 = vld [vmem:[%s8526 + $0xb8] sm:$0xf]
    %v8574 = vld [vmem:[%s8526 + $0xbc] sm:$0xf]
    %v8575 = vld [vmem:[%s8526 + $0xc0] sm:$0xf]
    %v8576 = vld [vmem:[%s8526 + $0xc4] sm:$0xf]
    %v8577 = vld [vmem:[%s8526 + $0xc8] sm:$0xf]
    %v8578 = vld [vmem:[%s8526 + $0xcc] sm:$0xf]
    %v8579 = vld [vmem:[%s8526 + $0xd0] sm:$0xf]
    %v8580 = vld [vmem:[%s8526 + $0xd4] sm:$0xf]
    %v8581 = vld [vmem:[%s8526 + $0xd8] sm:$0xf]
    %v8582 = vld [vmem:[%s8526 + $0xdc] sm:$0xf]
    %v8583 = vld [vmem:[%s8526 + $0xe0] sm:$0xf]
    %v8584 = vld [vmem:[%s8526 + $0xe4] sm:$0xf]
    %v8585 = vld [vmem:[%s8526 + $0xe8] sm:$0xf]
    %v8586 = vld [vmem:[%s8526 + $0xec] sm:$0xf]
    %v8587 = vld [vmem:[%s8526 + $0xf0] sm:$0xf]
    %v8588 = vld [vmem:[%s8526 + $0xf4] sm:$0xf]
    %v8589 = vld [vmem:[%s8526 + $0xf8] sm:$0xf]
    %v8590 = vld [vmem:[%s8526 + $0xfc] sm:$0xf]
    %v8591 = vld [vmem:[%s8526 + $0x100] sm:$0xf]
    %v8592 = vld [vmem:[%s8526 + $0x104] sm:$0xf]
    %v8593 = vld [vmem:[%s8526 + $0x108] sm:$0xf]
    %v8594 = vld [vmem:[%s8526 + $0x10c] sm:$0xf]
    %v8595 = vld [vmem:[%s8526 + $0x110] sm:$0xf]
    %v8596 = vld [vmem:[%s8526 + $0x114] sm:$0xf]
    %v8597 = vld [vmem:[%s8526 + $0x118] sm:$0xf]
    %v8598 = vld [vmem:[%s8526 + $0x11c] sm:$0xf]
    %v8599 = vld [vmem:[%s8526 + $0x120] sm:$0xf]
    %v8600 = vld [vmem:[%s8526 + $0x124] sm:$0xf]
    %v8601 = vld [vmem:[%s8526 + $0x128] sm:$0xf]
    %v8602 = vld [vmem:[%s8526 + $0x12c] sm:$0xf]
    %v8603 = vld [vmem:[%s8526 + $0x130] sm:$0xf]
    %v8604 = vld [vmem:[%s8526 + $0x134] sm:$0xf]
    %v8605 = vld [vmem:[%s8526 + $0x138] sm:$0xf]
    %v8606 = vld [vmem:[%s8526 + $0x13c] sm:$0xf]
    %v8607 = vld [vmem:[%s8526 + $0x140] sm:$0xf]
    %v8608 = vld [vmem:[%s8526 + $0x144] sm:$0xf]
    %v8609 = vld [vmem:[%s8526 + $0x148] sm:$0xf]
    %v8610 = vld [vmem:[%s8526 + $0x14c] sm:$0xf]
    %v8611 = vld [vmem:[%s8526 + $0x150] sm:$0xf]
    %v8612 = vld [vmem:[%s8526 + $0x154] sm:$0xf]
    %v8613 = vld [vmem:[%s8526 + $0x158] sm:$0xf]
    %v8614 = vld [vmem:[%s8526 + $0x15c] sm:$0xf]
    %v8615 = vld [vmem:[%s8526 + $0x160] sm:$0xf]
    %v8616 = vld [vmem:[%s8526 + $0x164] sm:$0xf]
    %v8617 = vld [vmem:[%s8526 + $0x168] sm:$0xf]
    %v8618 = vld [vmem:[%s8526 + $0x16c] sm:$0xf]
    %v8619 = vld [vmem:[%s8526 + $0x170] sm:$0xf]
    %v8620 = vld [vmem:[%s8526 + $0x174] sm:$0xf]
    %v8621 = vld [vmem:[%s8526 + $0x178] sm:$0xf]
    %v8622 = vld [vmem:[%s8526 + $0x17c] sm:$0xf]
    %v8623 = vld [vmem:[%s8526 + $0x180] sm:$0xf]
    %v8624 = vld [vmem:[%s8526 + $0x184] sm:$0xf]
    %v8625 = vld [vmem:[%s8526 + $0x188] sm:$0xf]
    %v8626 = vld [vmem:[%s8526 + $0x18c] sm:$0xf]
    %v8627 = vld [vmem:[%s8526 + $0x190] sm:$0xf]
    %v8628 = vld [vmem:[%s8526 + $0x194] sm:$0xf]
    %v8629 = vld [vmem:[%s8526 + $0x198] sm:$0xf]
    %v8630 = vld [vmem:[%s8526 + $0x19c] sm:$0xf]
    %v8631 = vld [vmem:[%s8526 + $0x1a0] sm:$0xf]
    %v8632 = vld [vmem:[%s8526 + $0x1a4] sm:$0xf]
    %v8633 = vld [vmem:[%s8526 + $0x1a8] sm:$0xf]
    %v8634 = vld [vmem:[%s8526 + $0x1ac] sm:$0xf]
    %v8635 = vld [vmem:[%s8526 + $0x1b0] sm:$0xf]
    %v8636 = vld [vmem:[%s8526 + $0x1b4] sm:$0xf]
    %v8637 = vld [vmem:[%s8526 + $0x1b8] sm:$0xf]
    %v8638 = vld [vmem:[%s8526 + $0x1bc] sm:$0xf]
    %v8639 = vld [vmem:[%s8526 + $0x1c0] sm:$0xf]
    %v8640 = vld [vmem:[%s8526 + $0x1c4] sm:$0xf]
    %v8641 = vld [vmem:[%s8526 + $0x1c8] sm:$0xf]
    %v8642 = vld [vmem:[%s8526 + $0x1cc] sm:$0xf]
    %v8643 = vld [vmem:[%s8526 + $0x1d0] sm:$0xf]
    %v8644 = vld [vmem:[%s8526 + $0x1d4] sm:$0xf]
    %v8645 = vld [vmem:[%s8526 + $0x1d8] sm:$0xf]
    %v8646 = vld [vmem:[%s8526 + $0x1dc] sm:$0xf]
    %v8647 = vld [vmem:[%s8526 + $0x1e0] sm:$0xf]
    %v8648 = vld [vmem:[%s8526 + $0x1e4] sm:$0xf]
    %v8649 = vld [vmem:[%s8526 + $0x1e8] sm:$0xf]
    %v8650 = vld [vmem:[%s8526 + $0x1ec] sm:$0xf]
    %v8651 = vld [vmem:[%s8526 + $0x1f0] sm:$0xf]
    %v8652 = vld [vmem:[%s8526 + $0x1f4] sm:$0xf]
    %v8653 = vld [vmem:[%s8526 + $0x1f8] sm:$0xf]
    %v8654 = vld [vmem:[%s8526 + $0x1fc] sm:$0xf]
    %v8655 = vld [vmem:[%s8526 + $0x200] sm:$0xf]
    %v8656 = vld [vmem:[%s8526 + $0x204] sm:$0xf]
    %v8657 = vld [vmem:[%s8526 + $0x208] sm:$0xf]
    %v8658 = vld [vmem:[%s8526 + $0x20c] sm:$0xf]
    %v8659 = vld [vmem:[%s8526 + $0x210] sm:$0xf]
    %v8660 = vld [vmem:[%s8526 + $0x214] sm:$0xf]
    %v8661 = vld [vmem:[%s8526 + $0x218] sm:$0xf]
    %v8662 = vld [vmem:[%s8526 + $0x21c] sm:$0xf]
    %v8663 = vld [vmem:[%s8526 + $0x220] sm:$0xf]
    %v8664 = vld [vmem:[%s8526 + $0x224] sm:$0xf]
    %v8665 = vld [vmem:[%s8526 + $0x228] sm:$0xf]
    %v8666 = vld [vmem:[%s8526 + $0x22c] sm:$0xf]
    %v8667 = vld [vmem:[%s8526 + $0x230] sm:$0xf]
    %v8668 = vld [vmem:[%s8526 + $0x234] sm:$0xf]
    %v8669 = vld [vmem:[%s8526 + $0x238] sm:$0xf]
    %v8670 = vld [vmem:[%s8526 + $0x23c] sm:$0xf]
    %v8671 = vld [vmem:[%s8526 + $0x240] sm:$0xf]
    %v8672 = vld [vmem:[%s8526 + $0x244] sm:$0xf]
    %v8673 = vld [vmem:[%s8526 + $0x248] sm:$0xf]
    %v8674 = vld [vmem:[%s8526 + $0x24c] sm:$0xf]
    %v8675 = vld [vmem:[%s8526 + $0x250] sm:$0xf]
    %v8676 = vld [vmem:[%s8526 + $0x254] sm:$0xf]
    %v8677 = vld [vmem:[%s8526 + $0x258] sm:$0xf]
    %v8678 = vld [vmem:[%s8526 + $0x25c] sm:$0xf]
    %v8679 = vld [vmem:[%s8526 + $0x260] sm:$0xf]
    %v8680 = vld [vmem:[%s8526 + $0x264] sm:$0xf]
    %v8681 = vld [vmem:[%s8526 + $0x268] sm:$0xf]
    %v8682 = vld [vmem:[%s8526 + $0x26c] sm:$0xf]
    %v8683 = vld [vmem:[%s8526 + $0x270] sm:$0xf]
    %v8684 = vld [vmem:[%s8526 + $0x274] sm:$0xf]
    %v8685 = vld [vmem:[%s8526 + $0x278] sm:$0xf]
    %v8686 = vld [vmem:[%s8526 + $0x27c] sm:$0xf]
    %v8687 = vld [vmem:[%s8526 + $0x280] sm:$0xf]
    %v8688 = vld [vmem:[%s8526 + $0x284] sm:$0xf]
    %v8689 = vld [vmem:[%s8526 + $0x288] sm:$0xf]
    %v8690 = vld [vmem:[%s8526 + $0x28c] sm:$0xf]
    %v8691 = vld [vmem:[%s8526 + $0x290] sm:$0xf]
    %v8692 = vld [vmem:[%s8526 + $0x294] sm:$0xf]
    %v8693 = vld [vmem:[%s8526 + $0x298] sm:$0xf]
    %v8694 = vld [vmem:[%s8526 + $0x29c] sm:$0xf]
    %v8695 = vld [vmem:[%s8526 + $0x2a0] sm:$0xf]
    %v8696 = vld [vmem:[%s8526 + $0x2a4] sm:$0xf]
    %v8697 = vld [vmem:[%s8526 + $0x2a8] sm:$0xf]
    %v8698 = vld [vmem:[%s8526 + $0x2ac] sm:$0xf]
    %v8699 = vld [vmem:[%s8526 + $0x2b0] sm:$0xf]
    %v8700 = vld [vmem:[%s8526 + $0x2b4] sm:$0xf]
    %v8701 = vld [vmem:[%s8526 + $0x2b8] sm:$0xf]
    %v8702 = vld [vmem:[%s8526 + $0x2bc] sm:$0xf]
    %v8703 = vld [vmem:[%s8526 + $0x2c0] sm:$0xf]
    %v8704 = vld [vmem:[%s8526 + $0x2c4] sm:$0xf]
    %v8705 = vld [vmem:[%s8526 + $0x2c8] sm:$0xf]
    %v8706 = vld [vmem:[%s8526 + $0x2cc] sm:$0xf]
    %v8707 = vld [vmem:[%s8526 + $0x2d0] sm:$0xf]
    %v8708 = vld [vmem:[%s8526 + $0x2d4] sm:$0xf]
    %v8709 = vld [vmem:[%s8526 + $0x2d8] sm:$0xf]
    %v8710 = vld [vmem:[%s8526 + $0x2dc] sm:$0xf]
    %v8711 = vld [vmem:[%s8526 + $0x2e0] sm:$0xf]
    %v8712 = vld [vmem:[%s8526 + $0x2e4] sm:$0xf]
    %v8713 = vld [vmem:[%s8526 + $0x2e8] sm:$0xf]
    %v8714 = vld [vmem:[%s8526 + $0x2ec] sm:$0xf]
    %v8715 = vld [vmem:[%s8526 + $0x2f0] sm:$0xf]
    %v8716 = vld [vmem:[%s8526 + $0x2f4] sm:$0xf]
    %v8717 = vld [vmem:[%s8526 + $0x2f8] sm:$0xf]
    %v8718 = vld [vmem:[%s8526 + $0x2fc] sm:$0xf]
    %v8719 = vld [vmem:[%s8526 + $0x300] sm:$0xf]
    %v8720 = vld [vmem:[%s8526 + $0x304] sm:$0xf]
    %v8721 = vld [vmem:[%s8526 + $0x308] sm:$0xf]
    %v8722 = vld [vmem:[%s8526 + $0x30c] sm:$0xf]
    %v8723 = vld [vmem:[%s8526 + $0x310] sm:$0xf]
    %v8724 = vld [vmem:[%s8526 + $0x314] sm:$0xf]
    %v8725 = vld [vmem:[%s8526 + $0x318] sm:$0xf]
    %v8726 = vld [vmem:[%s8526 + $0x31c] sm:$0xf]
    %v8727 = vld [vmem:[%s8526 + $0x320] sm:$0xf]
    %v8728 = vld [vmem:[%s8526 + $0x324] sm:$0xf]
    %v8729 = vld [vmem:[%s8526 + $0x328] sm:$0xf]
    %v8730 = vld [vmem:[%s8526 + $0x32c] sm:$0xf]
    %v8731 = vld [vmem:[%s8526 + $0x330] sm:$0xf]
    %v8732 = vld [vmem:[%s8526 + $0x334] sm:$0xf]
    %v8733 = vld [vmem:[%s8526 + $0x338] sm:$0xf]
    %v8734 = vld [vmem:[%s8526 + $0x33c] sm:$0xf]
    %v8735 = vld [vmem:[%s8526 + $0x340] sm:$0xf]
    %v8736 = vld [vmem:[%s8526 + $0x344] sm:$0xf]
    %v8737 = vld [vmem:[%s8526 + $0x348] sm:$0xf]
    %v8738 = vld [vmem:[%s8526 + $0x34c] sm:$0xf]
    %v8739 = vld [vmem:[%s8526 + $0x350] sm:$0xf]
    %v8740 = vld [vmem:[%s8526 + $0x354] sm:$0xf]
    %v8741 = vld [vmem:[%s8526 + $0x358] sm:$0xf]
    %v8742 = vld [vmem:[%s8526 + $0x35c] sm:$0xf]
    %v8743 = vld [vmem:[%s8526 + $0x360] sm:$0xf]
    %v8744 = vld [vmem:[%s8526 + $0x364] sm:$0xf]
    %v8745 = vld [vmem:[%s8526 + $0x368] sm:$0xf]
    %v8746 = vld [vmem:[%s8526 + $0x36c] sm:$0xf]
    %v8747 = vld [vmem:[%s8526 + $0x370] sm:$0xf]
    %v8748 = vld [vmem:[%s8526 + $0x374] sm:$0xf]
    %v8749 = vld [vmem:[%s8526 + $0x378] sm:$0xf]
    %v8750 = vld [vmem:[%s8526 + $0x37c] sm:$0xf]
    %v8975 = vunpack.c.l.b16 %v8527
    %v8976 = vunpack.c.l.b16 %v8528
    %v8977 = vunpack.c.l.b16 %v8529
    %v8978 = vunpack.c.l.b16 %v8530
    %v8979 = vunpack.c.l.b16 %v8531
    %v8980 = vunpack.c.l.b16 %v8532
    %v8981 = vunpack.c.l.b16 %v8533
    %v8982 = vunpack.c.l.b16 %v8534
    %v8983 = vunpack.c.l.b16 %v8535
    %v8984 = vunpack.c.l.b16 %v8536
    %v8985 = vunpack.c.l.b16 %v8537
    %v8986 = vunpack.c.l.b16 %v8538
    %v8987 = vunpack.c.l.b16 %v8539
    %v8988 = vunpack.c.l.b16 %v8540
    %v8989 = vunpack.c.l.b16 %v8541
    %v8990 = vunpack.c.l.b16 %v8542
    %v8991 = vunpack.c.l.b16 %v8543
    %v8992 = vunpack.c.l.b16 %v8544
    %v8993 = vunpack.c.l.b16 %v8545
    %v8994 = vunpack.c.l.b16 %v8546
    %v8995 = vunpack.c.l.b16 %v8547
    %v8996 = vunpack.c.l.b16 %v8548
    %v8997 = vunpack.c.l.b16 %v8549
    %v8998 = vunpack.c.l.b16 %v8550
    %v8999 = vunpack.c.l.b16 %v8551
    %v9000 = vunpack.c.l.b16 %v8552
    %v9001 = vunpack.c.l.b16 %v8553
    %v9002 = vunpack.c.l.b16 %v8554
    %v9003 = vunpack.c.l.b16 %v8555
    %v9004 = vunpack.c.l.b16 %v8556
    %v9005 = vunpack.c.l.b16 %v8557
    %v9006 = vunpack.c.l.b16 %v8558
    %v9007 = vunpack.c.l.b16 %v8559
    %v9008 = vunpack.c.l.b16 %v8560
    %v9009 = vunpack.c.l.b16 %v8561
    %v9010 = vunpack.c.l.b16 %v8562
    %v9011 = vunpack.c.l.b16 %v8563
    %v9012 = vunpack.c.l.b16 %v8564
    %v9013 = vunpack.c.l.b16 %v8565
    %v9014 = vunpack.c.l.b16 %v8566
    %v9015 = vunpack.c.l.b16 %v8567
    %v9016 = vunpack.c.l.b16 %v8568
    %v9017 = vunpack.c.l.b16 %v8569
    %v9018 = vunpack.c.l.b16 %v8570
    %v9019 = vunpack.c.l.b16 %v8571
    %v9020 = vunpack.c.l.b16 %v8572
    %v9021 = vunpack.c.l.b16 %v8573
    %v9022 = vunpack.c.l.b16 %v8574
    %v9023 = vunpack.c.l.b16 %v8575
    %v9024 = vunpack.c.l.b16 %v8576
    %v9025 = vunpack.c.l.b16 %v8577
    %v9026 = vunpack.c.l.b16 %v8578
    %v9027 = vunpack.c.l.b16 %v8579
    %v9028 = vunpack.c.l.b16 %v8580
    %v9029 = vunpack.c.l.b16 %v8581
    %v9030 = vunpack.c.l.b16 %v8582
    %v9031 = vunpack.c.l.b16 %v8583
    %v9032 = vunpack.c.l.b16 %v8584
    %v9033 = vunpack.c.l.b16 %v8585
    %v9034 = vunpack.c.l.b16 %v8586
    %v9035 = vunpack.c.l.b16 %v8587
    %v9036 = vunpack.c.l.b16 %v8588
    %v9037 = vunpack.c.l.b16 %v8589
    %v9038 = vunpack.c.l.b16 %v8590
    %v9039 = vunpack.c.l.b16 %v8591
    %v9040 = vunpack.c.l.b16 %v8592
    %v9041 = vunpack.c.l.b16 %v8593
    %v9042 = vunpack.c.l.b16 %v8594
    %v9043 = vunpack.c.l.b16 %v8595
    %v9044 = vunpack.c.l.b16 %v8596
    %v9045 = vunpack.c.l.b16 %v8597
    %v9046 = vunpack.c.l.b16 %v8598
    %v9047 = vunpack.c.l.b16 %v8599
    %v9048 = vunpack.c.l.b16 %v8600
    %v9049 = vunpack.c.l.b16 %v8601
    %v9050 = vunpack.c.l.b16 %v8602
    %v9051 = vunpack.c.l.b16 %v8603
    %v9052 = vunpack.c.l.b16 %v8604
    %v9053 = vunpack.c.l.b16 %v8605
    %v9054 = vunpack.c.l.b16 %v8606
    %v9055 = vunpack.c.l.b16 %v8607
    %v9056 = vunpack.c.l.b16 %v8608
    %v9057 = vunpack.c.l.b16 %v8609
    %v9058 = vunpack.c.l.b16 %v8610
    %v9059 = vunpack.c.l.b16 %v8611
    %v9060 = vunpack.c.l.b16 %v8612
    %v9061 = vunpack.c.l.b16 %v8613
    %v9062 = vunpack.c.l.b16 %v8614
    %v9063 = vunpack.c.l.b16 %v8615
    %v9064 = vunpack.c.l.b16 %v8616
    %v9065 = vunpack.c.l.b16 %v8617
    %v9066 = vunpack.c.l.b16 %v8618
    %v9067 = vunpack.c.l.b16 %v8619
    %v9068 = vunpack.c.l.b16 %v8620
    %v9069 = vunpack.c.l.b16 %v8621
    %v9070 = vunpack.c.l.b16 %v8622
    %v9071 = vunpack.c.l.b16 %v8623
    %v9072 = vunpack.c.l.b16 %v8624
    %v9073 = vunpack.c.l.b16 %v8625
    %v9074 = vunpack.c.l.b16 %v8626
    %v9075 = vunpack.c.l.b16 %v8627
    %v9076 = vunpack.c.l.b16 %v8628
    %v9077 = vunpack.c.l.b16 %v8629
    %v9078 = vunpack.c.l.b16 %v8630
    %v9079 = vunpack.c.l.b16 %v8631
    %v9080 = vunpack.c.l.b16 %v8632
    %v9081 = vunpack.c.l.b16 %v8633
    %v9082 = vunpack.c.l.b16 %v8634
    %v9083 = vunpack.c.l.b16 %v8635
    %v9084 = vunpack.c.l.b16 %v8636
    %v9085 = vunpack.c.l.b16 %v8637
    %v9086 = vunpack.c.l.b16 %v8638
    %v9087 = vunpack.c.l.b16 %v8639
    %v9088 = vunpack.c.l.b16 %v8640
    %v9089 = vunpack.c.l.b16 %v8641
    %v9090 = vunpack.c.l.b16 %v8642
    %v9091 = vunpack.c.l.b16 %v8643
    %v9092 = vunpack.c.l.b16 %v8644
    %v9093 = vunpack.c.l.b16 %v8645
    %v9094 = vunpack.c.l.b16 %v8646
    %v9095 = vunpack.c.l.b16 %v8647
    %v9096 = vunpack.c.l.b16 %v8648
    %v9097 = vunpack.c.l.b16 %v8649
    %v9098 = vunpack.c.l.b16 %v8650
    %v9099 = vunpack.c.l.b16 %v8651
    %v9100 = vunpack.c.l.b16 %v8652
    %v9101 = vunpack.c.l.b16 %v8653
    %v9102 = vunpack.c.l.b16 %v8654
    %v9103 = vunpack.c.l.b16 %v8655
    %v9104 = vunpack.c.l.b16 %v8656
    %v9105 = vunpack.c.l.b16 %v8657
    %v9106 = vunpack.c.l.b16 %v8658
    %v9107 = vunpack.c.l.b16 %v8659
    %v9108 = vunpack.c.l.b16 %v8660
    %v9109 = vunpack.c.l.b16 %v8661
    %v9110 = vunpack.c.l.b16 %v8662
    %v9111 = vunpack.c.l.b16 %v8663
    %v9112 = vunpack.c.l.b16 %v8664
    %v9113 = vunpack.c.l.b16 %v8665
    %v9114 = vunpack.c.l.b16 %v8666
    %v9115 = vunpack.c.l.b16 %v8667
    %v9116 = vunpack.c.l.b16 %v8668
    %v9117 = vunpack.c.l.b16 %v8669
    %v9118 = vunpack.c.l.b16 %v8670
    %v9119 = vunpack.c.l.b16 %v8671
    %v9120 = vunpack.c.l.b16 %v8672
    %v9121 = vunpack.c.l.b16 %v8673
    %v9122 = vunpack.c.l.b16 %v8674
    %v9123 = vunpack.c.l.b16 %v8675
    %v9124 = vunpack.c.l.b16 %v8676
    %v9125 = vunpack.c.l.b16 %v8677
    %v9126 = vunpack.c.l.b16 %v8678
    %v9127 = vunpack.c.l.b16 %v8679
    %v9128 = vunpack.c.l.b16 %v8680
    %v9129 = vunpack.c.l.b16 %v8681
    %v9130 = vunpack.c.l.b16 %v8682
    %v9131 = vunpack.c.l.b16 %v8683
    %v9132 = vunpack.c.l.b16 %v8684
    %v9133 = vunpack.c.l.b16 %v8685
    %v9134 = vunpack.c.l.b16 %v8686
    %v9135 = vunpack.c.l.b16 %v8687
    %v9136 = vunpack.c.l.b16 %v8688
    %v9137 = vunpack.c.l.b16 %v8689
    %v9138 = vunpack.c.l.b16 %v8690
    %v9139 = vunpack.c.l.b16 %v8691
    %v9140 = vunpack.c.l.b16 %v8692
    %v9141 = vunpack.c.l.b16 %v8693
    %v9142 = vunpack.c.l.b16 %v8694
    %v9143 = vunpack.c.l.b16 %v8695
    %v9144 = vunpack.c.l.b16 %v8696
    %v9145 = vunpack.c.l.b16 %v8697
    %v9146 = vunpack.c.l.b16 %v8698
    %v9147 = vunpack.c.l.b16 %v8699
    %v9148 = vunpack.c.l.b16 %v8700
    %v9149 = vunpack.c.l.b16 %v8701
    %v9150 = vunpack.c.l.b16 %v8702
    %v9151 = vunpack.c.l.b16 %v8703
    %v9152 = vunpack.c.l.b16 %v8704
    %v9153 = vunpack.c.l.b16 %v8705
    %v9154 = vunpack.c.l.b16 %v8706
    %v9155 = vunpack.c.l.b16 %v8707
    %v9156 = vunpack.c.l.b16 %v8708
    %v9157 = vunpack.c.l.b16 %v8709
    %v9158 = vunpack.c.l.b16 %v8710
    %v9159 = vunpack.c.l.b16 %v8711
    %v9160 = vunpack.c.l.b16 %v8712
    %v9161 = vunpack.c.l.b16 %v8713
    %v9162 = vunpack.c.l.b16 %v8714
    %v9163 = vunpack.c.l.b16 %v8715
    %v9164 = vunpack.c.l.b16 %v8716
    %v9165 = vunpack.c.l.b16 %v8717
    %v9166 = vunpack.c.l.b16 %v8718
    %v9167 = vunpack.c.l.b16 %v8719
    %v9168 = vunpack.c.l.b16 %v8720
    %v9169 = vunpack.c.l.b16 %v8721
    %v9170 = vunpack.c.l.b16 %v8722
    %v9171 = vunpack.c.l.b16 %v8723
    %v9172 = vunpack.c.l.b16 %v8724
    %v9173 = vunpack.c.l.b16 %v8725
    %v9174 = vunpack.c.l.b16 %v8726
    %v9175 = vunpack.c.l.b16 %v8727
    %v9176 = vunpack.c.l.b16 %v8728
    %v9177 = vunpack.c.l.b16 %v8729
    %v9178 = vunpack.c.l.b16 %v8730
    %v9179 = vunpack.c.l.b16 %v8731
    %v9180 = vunpack.c.l.b16 %v8732
    %v9181 = vunpack.c.l.b16 %v8733
    %v9182 = vunpack.c.l.b16 %v8734
    %v9183 = vunpack.c.l.b16 %v8735
    %v9184 = vunpack.c.l.b16 %v8736
    %v9185 = vunpack.c.l.b16 %v8737
    %v9186 = vunpack.c.l.b16 %v8738
    %v9187 = vunpack.c.l.b16 %v8739
    %v9188 = vunpack.c.l.b16 %v8740
    %v9189 = vunpack.c.l.b16 %v8741
    %v9190 = vunpack.c.l.b16 %v8742
    %v9191 = vunpack.c.l.b16 %v8743
    %v9192 = vunpack.c.l.b16 %v8744
    %v9193 = vunpack.c.l.b16 %v8745
    %v9194 = vunpack.c.l.b16 %v8746
    %v9195 = vunpack.c.l.b16 %v8747
    %v9196 = vunpack.c.l.b16 %v8748
    %v9197 = vunpack.c.l.b16 %v8749
    %v9198 = vunpack.c.l.b16 %v8750
    %v9199 = vpack.c.b16 %v8976, %v8975
    %v9200 = vpack.c.b16 %v8978, %v8977
    %v9201 = vpack.c.b16 %v8980, %v8979
    %v9202 = vpack.c.b16 %v8982, %v8981
    %v9203 = vpack.c.b16 %v8984, %v8983
    %v9204 = vpack.c.b16 %v8986, %v8985
    %v9205 = vpack.c.b16 %v8988, %v8987
    %v9206 = vpack.c.b16 %v8990, %v8989
    %v9207 = vpack.c.b16 %v8992, %v8991
    %v9208 = vpack.c.b16 %v8994, %v8993
    %v9209 = vpack.c.b16 %v8996, %v8995
    %v9210 = vpack.c.b16 %v8998, %v8997
    %v9211 = vpack.c.b16 %v9000, %v8999
    %v9212 = vpack.c.b16 %v9002, %v9001
    %v9213 = vpack.c.b16 %v9004, %v9003
    %v9214 = vpack.c.b16 %v9006, %v9005
    %v9215 = vpack.c.b16 %v9008, %v9007
    %v9216 = vpack.c.b16 %v9010, %v9009
    %v9217 = vpack.c.b16 %v9012, %v9011
    %v9218 = vpack.c.b16 %v9014, %v9013
    %v9219 = vpack.c.b16 %v9016, %v9015
    %v9220 = vpack.c.b16 %v9018, %v9017
    %v9221 = vpack.c.b16 %v9020, %v9019
    %v9222 = vpack.c.b16 %v9022, %v9021
    %v9223 = vpack.c.b16 %v9024, %v9023
    %v9224 = vpack.c.b16 %v9026, %v9025
    %v9225 = vpack.c.b16 %v9028, %v9027
    %v9226 = vpack.c.b16 %v9030, %v9029
    %v9227 = vpack.c.b16 %v9032, %v9031
    %v9228 = vpack.c.b16 %v9034, %v9033
    %v9229 = vpack.c.b16 %v9036, %v9035
    %v9230 = vpack.c.b16 %v9038, %v9037
    %v9231 = vpack.c.b16 %v9040, %v9039
    %v9232 = vpack.c.b16 %v9042, %v9041
    %v9233 = vpack.c.b16 %v9044, %v9043
    %v9234 = vpack.c.b16 %v9046, %v9045
    %v9235 = vpack.c.b16 %v9048, %v9047
    %v9236 = vpack.c.b16 %v9050, %v9049
    %v9237 = vpack.c.b16 %v9052, %v9051
    %v9238 = vpack.c.b16 %v9054, %v9053
    %v9239 = vpack.c.b16 %v9056, %v9055
    %v9240 = vpack.c.b16 %v9058, %v9057
    %v9241 = vpack.c.b16 %v9060, %v9059
    %v9242 = vpack.c.b16 %v9062, %v9061
    %v9243 = vpack.c.b16 %v9064, %v9063
    %v9244 = vpack.c.b16 %v9066, %v9065
    %v9245 = vpack.c.b16 %v9068, %v9067
    %v9246 = vpack.c.b16 %v9070, %v9069
    %v9247 = vpack.c.b16 %v9072, %v9071
    %v9248 = vpack.c.b16 %v9074, %v9073
    %v9249 = vpack.c.b16 %v9076, %v9075
    %v9250 = vpack.c.b16 %v9078, %v9077
    %v9251 = vpack.c.b16 %v9080, %v9079
    %v9252 = vpack.c.b16 %v9082, %v9081
    %v9253 = vpack.c.b16 %v9084, %v9083
    %v9254 = vpack.c.b16 %v9086, %v9085
    %v9255 = vpack.c.b16 %v9088, %v9087
    %v9256 = vpack.c.b16 %v9090, %v9089
    %v9257 = vpack.c.b16 %v9092, %v9091
    %v9258 = vpack.c.b16 %v9094, %v9093
    %v9259 = vpack.c.b16 %v9096, %v9095
    %v9260 = vpack.c.b16 %v9098, %v9097
    %v9261 = vpack.c.b16 %v9100, %v9099
    %v9262 = vpack.c.b16 %v9102, %v9101
    %v9263 = vpack.c.b16 %v9104, %v9103
    %v9264 = vpack.c.b16 %v9106, %v9105
    %v9265 = vpack.c.b16 %v9108, %v9107
    %v9266 = vpack.c.b16 %v9110, %v9109
    %v9267 = vpack.c.b16 %v9112, %v9111
    %v9268 = vpack.c.b16 %v9114, %v9113
    %v9269 = vpack.c.b16 %v9116, %v9115
    %v9270 = vpack.c.b16 %v9118, %v9117
    %v9271 = vpack.c.b16 %v9120, %v9119
    %v9272 = vpack.c.b16 %v9122, %v9121
    %v9273 = vpack.c.b16 %v9124, %v9123
    %v9274 = vpack.c.b16 %v9126, %v9125
    %v9275 = vpack.c.b16 %v9128, %v9127
    %v9276 = vpack.c.b16 %v9130, %v9129
    %v9277 = vpack.c.b16 %v9132, %v9131
    %v9278 = vpack.c.b16 %v9134, %v9133
    %v9279 = vpack.c.b16 %v9136, %v9135
    %v9280 = vpack.c.b16 %v9138, %v9137
    %v9281 = vpack.c.b16 %v9140, %v9139
    %v9282 = vpack.c.b16 %v9142, %v9141
    %v9283 = vpack.c.b16 %v9144, %v9143
    %v9284 = vpack.c.b16 %v9146, %v9145
    %v9285 = vpack.c.b16 %v9148, %v9147
    %v9286 = vpack.c.b16 %v9150, %v9149
    %v9287 = vpack.c.b16 %v9152, %v9151
    %v9288 = vpack.c.b16 %v9154, %v9153
    %v9289 = vpack.c.b16 %v9156, %v9155
    %v9290 = vpack.c.b16 %v9158, %v9157
    %v9291 = vpack.c.b16 %v9160, %v9159
    %v9292 = vpack.c.b16 %v9162, %v9161
    %v9293 = vpack.c.b16 %v9164, %v9163
    %v9294 = vpack.c.b16 %v9166, %v9165
    %v9295 = vpack.c.b16 %v9168, %v9167
    %v9296 = vpack.c.b16 %v9170, %v9169
    %v9297 = vpack.c.b16 %v9172, %v9171
    %v9298 = vpack.c.b16 %v9174, %v9173
    %v9299 = vpack.c.b16 %v9176, %v9175
    %v9300 = vpack.c.b16 %v9178, %v9177
    %v9301 = vpack.c.b16 %v9180, %v9179
    %v9302 = vpack.c.b16 %v9182, %v9181
    %v9303 = vpack.c.b16 %v9184, %v9183
    %v9304 = vpack.c.b16 %v9186, %v9185
    %v9305 = vpack.c.b16 %v9188, %v9187
    %v9306 = vpack.c.b16 %v9190, %v9189
    %v9307 = vpack.c.b16 %v9192, %v9191
    %v9308 = vpack.c.b16 %v9194, %v9193
    %v9309 = vpack.c.b16 %v9196, %v9195
    %v9310 = vpack.c.b16 %v9198, %v9197
    %9423 = vmatpush.bf16.msra.mxu0 %v9206
    %9424 = vmatpush.bf16.msra.mxu0 %v9205
    %9425 = vmatpush.bf16.msra.mxu0 %v9204
    %9426 = vmatpush.bf16.msra.mxu0 %v9203
    %9427 = vmatpush.bf16.msra.mxu0 %v9202
    %9428 = vmatpush.bf16.msra.mxu0 %v9201
    %9429 = vmatpush.bf16.msra.mxu0 %v9200
    %9430 = vmatpush.bf16.msra.mxu0 %v9199
    %9431 = vmatmul.bf16.gmra.mxu0 %v8512
    %v9432 = vpop.f32.mrf.mxu0
    %v9433 = vadd.f32 0.0, %v9432
    %v9434 = vpop.f32.mrf.mxu0
    %9435 = vdwg.mxu0
    %9436 = vmatpush.bf16.msra.mxu0 %v9214
    %9437 = vmatpush.bf16.msra.mxu0 %v9213
    %9438 = vmatpush.bf16.msra.mxu0 %v9212
    %9439 = vmatpush.bf16.msra.mxu0 %v9211
    %9440 = vmatpush.bf16.msra.mxu0 %v9210
    %9441 = vmatpush.bf16.msra.mxu0 %v9209
    %9442 = vmatpush.bf16.msra.mxu0 %v9208
    %9443 = vmatpush.bf16.msra.mxu0 %v9207
    %9444 = vmatmul.bf16.gmra.mxu0 %v8513
    %v9445 = vpop.f32.mrf.mxu0
    %v9446 = vadd.f32 %v9433, %v9445
    %v9447 = vpop.f32.mrf.mxu0
    %9448 = vdwg.mxu0
    %9449 = vmatpush.bf16.msra.mxu0 %v9222
    %9450 = vmatpush.bf16.msra.mxu0 %v9221
    %9451 = vmatpush.bf16.msra.mxu0 %v9220
    %9452 = vmatpush.bf16.msra.mxu0 %v9219
    %9453 = vmatpush.bf16.msra.mxu0 %v9218
    %9454 = vmatpush.bf16.msra.mxu0 %v9217
    %9455 = vmatpush.bf16.msra.mxu0 %v9216
    %9456 = vmatpush.bf16.msra.mxu0 %v9215
    %9457 = vmatmul.bf16.gmra.mxu0 %v8514
    %v9458 = vpop.f32.mrf.mxu0
    %v9459 = vadd.f32 %v9446, %v9458
    %v9460 = vpop.f32.mrf.mxu0
    %9461 = vdwg.mxu0
    %9462 = vmatpush.bf16.msra.mxu0 %v9230
    %9463 = vmatpush.bf16.msra.mxu0 %v9229
    %9464 = vmatpush.bf16.msra.mxu0 %v9228
    %9465 = vmatpush.bf16.msra.mxu0 %v9227
    %9466 = vmatpush.bf16.msra.mxu0 %v9226
    %9467 = vmatpush.bf16.msra.mxu0 %v9225
    %9468 = vmatpush.bf16.msra.mxu0 %v9224
    %9469 = vmatpush.bf16.msra.mxu0 %v9223
    %9470 = vmatmul.bf16.gmra.mxu0 %v8515
    %v9471 = vpop.f32.mrf.mxu0
    %v9472 = vadd.f32 %v9459, %v9471
    %v9473 = vpop.f32.mrf.mxu0
    %9474 = vdwg.mxu0
    %9475 = vmatpush.bf16.msra.mxu0 %v9238
    %9476 = vmatpush.bf16.msra.mxu0 %v9237
    %9477 = vmatpush.bf16.msra.mxu0 %v9236
    %9478 = vmatpush.bf16.msra.mxu0 %v9235
    %9479 = vmatpush.bf16.msra.mxu0 %v9234
    %9480 = vmatpush.bf16.msra.mxu0 %v9233
    %9481 = vmatpush.bf16.msra.mxu0 %v9232
    %9482 = vmatpush.bf16.msra.mxu0 %v9231
    %9483 = vmatmul.bf16.gmra.mxu0 %v8516
    %v9484 = vpop.f32.mrf.mxu0
    %v9485 = vadd.f32 %v9472, %v9484
    %v9486 = vpop.f32.mrf.mxu0
    %9487 = vdwg.mxu0
    %9488 = vmatpush.bf16.msra.mxu0 %v9246
    %9489 = vmatpush.bf16.msra.mxu0 %v9245
    %9490 = vmatpush.bf16.msra.mxu0 %v9244
    %9491 = vmatpush.bf16.msra.mxu0 %v9243
    %9492 = vmatpush.bf16.msra.mxu0 %v9242
    %9493 = vmatpush.bf16.msra.mxu0 %v9241
    %9494 = vmatpush.bf16.msra.mxu0 %v9240
    %9495 = vmatpush.bf16.msra.mxu0 %v9239
    %9496 = vmatmul.bf16.gmra.mxu0 %v8517
    %v9497 = vpop.f32.mrf.mxu0
    %v9498 = vadd.f32 %v9485, %v9497
    %v9499 = vpop.f32.mrf.mxu0
    %9500 = vdwg.mxu0
    %9501 = vmatpush.bf16.msra.mxu0 %v9254
    %9502 = vmatpush.bf16.msra.mxu0 %v9253
    %9503 = vmatpush.bf16.msra.mxu0 %v9252
    %9504 = vmatpush.bf16.msra.mxu0 %v9251
    %9505 = vmatpush.bf16.msra.mxu0 %v9250
    %9506 = vmatpush.bf16.msra.mxu0 %v9249
    %9507 = vmatpush.bf16.msra.mxu0 %v9248
    %9508 = vmatpush.bf16.msra.mxu0 %v9247
    %9509 = vmatmul.bf16.gmra.mxu0 %v8518
    %v9510 = vpop.f32.mrf.mxu0
    %v9511 = vadd.f32 %v9498, %v9510
    %v9512 = vpop.f32.mrf.mxu0
    %9513 = vdwg.mxu0
    %9514 = vmatpush.bf16.msra.mxu0 %v9262
    %9515 = vmatpush.bf16.msra.mxu0 %v9261
    %9516 = vmatpush.bf16.msra.mxu0 %v9260
    %9517 = vmatpush.bf16.msra.mxu0 %v9259
    %9518 = vmatpush.bf16.msra.mxu0 %v9258
    %9519 = vmatpush.bf16.msra.mxu0 %v9257
    %9520 = vmatpush.bf16.msra.mxu0 %v9256
    %9521 = vmatpush.bf16.msra.mxu0 %v9255
    %9522 = vmatmul.bf16.gmra.mxu0 %v8519
    %v9523 = vpop.f32.mrf.mxu0
    %v9524 = vadd.f32 %v9511, %v9523
    %v9525 = vpop.f32.mrf.mxu0
    %9526 = vdwg.mxu0
    %9527 = vmatpush.bf16.msra.mxu0 %v9270
    %9528 = vmatpush.bf16.msra.mxu0 %v9269
    %9529 = vmatpush.bf16.msra.mxu0 %v9268
    %9530 = vmatpush.bf16.msra.mxu0 %v9267
    %9531 = vmatpush.bf16.msra.mxu0 %v9266
    %9532 = vmatpush.bf16.msra.mxu0 %v9265
    %9533 = vmatpush.bf16.msra.mxu0 %v9264
    %9534 = vmatpush.bf16.msra.mxu0 %v9263
    %9535 = vmatmul.bf16.gmra.mxu0 %v8520
    %v9536 = vpop.f32.mrf.mxu0
    %v9537 = vadd.f32 %v9524, %v9536
    %v9538 = vpop.f32.mrf.mxu0
    %9539 = vdwg.mxu0
    %9540 = vmatpush.bf16.msra.mxu0 %v9278
    %9541 = vmatpush.bf16.msra.mxu0 %v9277
    %9542 = vmatpush.bf16.msra.mxu0 %v9276
    %9543 = vmatpush.bf16.msra.mxu0 %v9275
    %9544 = vmatpush.bf16.msra.mxu0 %v9274
    %9545 = vmatpush.bf16.msra.mxu0 %v9273
    %9546 = vmatpush.bf16.msra.mxu0 %v9272
    %9547 = vmatpush.bf16.msra.mxu0 %v9271
    %9548 = vmatmul.bf16.gmra.mxu0 %v8521
    %v9549 = vpop.f32.mrf.mxu0
    %v9550 = vadd.f32 %v9537, %v9549
    %v9551 = vpop.f32.mrf.mxu0
    %9552 = vdwg.mxu0
    %9553 = vmatpush.bf16.msra.mxu0 %v9286
    %9554 = vmatpush.bf16.msra.mxu0 %v9285
    %9555 = vmatpush.bf16.msra.mxu0 %v9284
    %9556 = vmatpush.bf16.msra.mxu0 %v9283
    %9557 = vmatpush.bf16.msra.mxu0 %v9282
    %9558 = vmatpush.bf16.msra.mxu0 %v9281
    %9559 = vmatpush.bf16.msra.mxu0 %v9280
    %9560 = vmatpush.bf16.msra.mxu0 %v9279
    %9561 = vmatmul.bf16.gmra.mxu0 %v8522
    %v9562 = vpop.f32.mrf.mxu0
    %v9563 = vadd.f32 %v9550, %v9562
    %v9564 = vpop.f32.mrf.mxu0
    %9565 = vdwg.mxu0
    %9566 = vmatpush.bf16.msra.mxu0 %v9294
    %9567 = vmatpush.bf16.msra.mxu0 %v9293
    %9568 = vmatpush.bf16.msra.mxu0 %v9292
    %9569 = vmatpush.bf16.msra.mxu0 %v9291
    %9570 = vmatpush.bf16.msra.mxu0 %v9290
    %9571 = vmatpush.bf16.msra.mxu0 %v9289
    %9572 = vmatpush.bf16.msra.mxu0 %v9288
    %9573 = vmatpush.bf16.msra.mxu0 %v9287
    %9574 = vmatmul.bf16.gmra.mxu0 %v8523
    %v9575 = vpop.f32.mrf.mxu0
    %v9576 = vadd.f32 %v9563, %v9575
    %v9577 = vpop.f32.mrf.mxu0
    %9578 = vdwg.mxu0
    %9579 = vmatpush.bf16.msra.mxu0 %v9302
    %9580 = vmatpush.bf16.msra.mxu0 %v9301
    %9581 = vmatpush.bf16.msra.mxu0 %v9300
    %9582 = vmatpush.bf16.msra.mxu0 %v9299
    %9583 = vmatpush.bf16.msra.mxu0 %v9298
    %9584 = vmatpush.bf16.msra.mxu0 %v9297
    %9585 = vmatpush.bf16.msra.mxu0 %v9296
    %9586 = vmatpush.bf16.msra.mxu0 %v9295
    %9587 = vmatmul.bf16.gmra.mxu0 %v8524
    %v9588 = vpop.f32.mrf.mxu0
    %v9589 = vadd.f32 %v9576, %v9588
    %v9590 = vpop.f32.mrf.mxu0
    %9591 = vdwg.mxu0
    %9592 = vmatpush.bf16.msra.mxu0 %v9310
    %9593 = vmatpush.bf16.msra.mxu0 %v9309
    %9594 = vmatpush.bf16.msra.mxu0 %v9308
    %9595 = vmatpush.bf16.msra.mxu0 %v9307
    %9596 = vmatpush.bf16.msra.mxu0 %v9306
    %9597 = vmatpush.bf16.msra.mxu0 %v9305
    %9598 = vmatpush.bf16.msra.mxu0 %v9304
    %9599 = vmatpush.bf16.msra.mxu0 %v9303
    %9600 = vmatmul.bf16.gmra.mxu0 %v8525
    %v9601 = vpop.f32.mrf.mxu0
    %v9602 = vadd.f32 %v9589, %v9601
    %v9603 = vpop.f32.mrf.mxu0
    %9604 = vdwg.mxu0
    %v9605 = vadd.f32 %v8331, %v9602
    %v9606 = vshrl.u32 %v8343, 16
    %v9608 = vshrl.u32 %v8344, 16
    %v9611 = vunpack.c.l.b16 %v4630
    %v9612 = vunpack.c.h.b16 %v4630
    %v9613 = vpack.c.b16 %v9611, %v9611
    %v9614 = vpack.c.b16 %v9612, %v9612
    %v9615 = vrot.slane %v9613, 5
    %v9616 = vrot.slane %v9614, 5
    %v9618 = vshrl.u32 %v9613, 16
    %v9620 = vrot.slane %v9618, 5
    %v9622 = vshrl.u32 %v9614, 16
    %v9624 = vrot.slane %v9622, 5
    %v9625 = vrot.slane %v9613, 6
    %v9626 = vrot.slane %v9614, 6
    %v9627 = vrot.slane %v9618, 6
    %v9628 = vrot.slane %v9622, 6
    %v9629 = vrot.slane %v9613, 7
    %v9630 = vrot.slane %v9614, 7
    %v9632 = vunpack.c.l.b16 %v4638
    %v9633 = vunpack.c.h.b16 %v4638
    %v9634 = vpack.c.b16 %v9632, %v9632
    %v9635 = vpack.c.b16 %v9633, %v9633
    %v9637 = vshll.u32 %v9634, 16
    %v9639 = vrot.slane %v9637, 5
    %v9641 = vshll.u32 %v9635, 16
    %v9643 = vrot.slane %v9641, 5
    %v9644 = vrot.slane %v9634, 5
    %v9645 = vrot.slane %v9635, 5
    %v9646 = vrot.slane %v9637, 6
    %v9647 = vrot.slane %v9641, 6
    %v9648 = vrot.slane %v9634, 6
    %v9649 = vrot.slane %v9635, 6
    %v9650 = vrot.slane %v9637, 7
    %v9651 = vrot.slane %v9641, 7
    %v9652 = vrot.slane %v9634, 7
    %v9653 = vrot.slane %v9635, 7
    %v9654 = vrot.slane %v8343, 3
    %v9655 = vrot.slane %v8344, 3
    %v9656 = vrot.slane %v9606, 3
    %v9657 = vrot.slane %v9608, 3
    %v9658 = vrot.slane %v9615, 3
    %v9659 = vrot.slane %v9616, 3
    %v9660 = vrot.slane %v9620, 3
    %v9661 = vrot.slane %v9624, 3
    %v9662 = vrot.slane %v9625, 3
    %v9663 = vrot.slane %v9626, 3
    %v9664 = vrot.slane %v9627, 3
    %v9665 = vrot.slane %v9628, 3
    %v9666 = vrot.slane %v9629, 3
    %v9667 = vrot.slane %v9630, 3
    %v9682 = vrot.slane %v8366, 3
    %v9683 = vrot.slane %v8367, 3
    %v9684 = vrot.slane %v9639, 3
    %v9685 = vrot.slane %v9643, 3
    %v9686 = vrot.slane %v9644, 3
    %v9687 = vrot.slane %v9645, 3
    %v9688 = vrot.slane %v9646, 3
    %v9689 = vrot.slane %v9647, 3
    %v9690 = vrot.slane %v9648, 3
    %v9691 = vrot.slane %v9649, 3
    %v9692 = vrot.slane %v9650, 3
    %v9693 = vrot.slane %v9651, 3
    %v9694 = vrot.slane %v9652, 3
    %v9695 = vrot.slane %v9653, 3
    %v9710 = vsel %vm4758, %v9654, %v9682
    %v9711 = vsel %vm4758, %v9655, %v9683
    %v9712 = vsel %vm4758, %v9656, %v9684
    %v9713 = vsel %vm4758, %v9657, %v9685
    %v9714 = vsel %vm4758, %v9658, %v9686
    %v9715 = vsel %vm4758, %v9659, %v9687
    %v9716 = vsel %vm4758, %v9660, %v9688
    %v9717 = vsel %vm4758, %v9661, %v9689
    %v9718 = vsel %vm4758, %v9662, %v9690
    %v9719 = vsel %vm4758, %v9663, %v9691
    %v9720 = vsel %vm4758, %v9664, %v9692
    %v9721 = vsel %vm4758, %v9665, %v9693
    %v9722 = vsel %vm4758, %v9666, %v9694
    %v9723 = vsel %vm4758, %v9667, %v9695
    %s9724 = scalar_lea.vmem [#allocation4], 3584
    %v9725 = vld [vmem:[%s9724] sm:$0xf]
    %v9726 = vld [vmem:[%s9724 + $0x4] sm:$0xf]
    %v9727 = vld [vmem:[%s9724 + $0x8] sm:$0xf]
    %v9728 = vld [vmem:[%s9724 + $0xc] sm:$0xf]
    %v9729 = vld [vmem:[%s9724 + $0x10] sm:$0xf]
    %v9730 = vld [vmem:[%s9724 + $0x14] sm:$0xf]
    %v9731 = vld [vmem:[%s9724 + $0x18] sm:$0xf]
    %v9732 = vld [vmem:[%s9724 + $0x1c] sm:$0xf]
    %v9733 = vld [vmem:[%s9724 + $0x20] sm:$0xf]
    %v9734 = vld [vmem:[%s9724 + $0x24] sm:$0xf]
    %v9735 = vld [vmem:[%s9724 + $0x28] sm:$0xf]
    %v9736 = vld [vmem:[%s9724 + $0x2c] sm:$0xf]
    %v9737 = vld [vmem:[%s9724 + $0x30] sm:$0xf]
    %v9738 = vld [vmem:[%s9724 + $0x34] sm:$0xf]
    %v9739 = vld [vmem:[%s9724 + $0x38] sm:$0xf]
    %v9740 = vld [vmem:[%s9724 + $0x3c] sm:$0xf]
    %v9741 = vld [vmem:[%s9724 + $0x40] sm:$0xf]
    %v9742 = vld [vmem:[%s9724 + $0x44] sm:$0xf]
    %v9743 = vld [vmem:[%s9724 + $0x48] sm:$0xf]
    %v9744 = vld [vmem:[%s9724 + $0x4c] sm:$0xf]
    %v9745 = vld [vmem:[%s9724 + $0x50] sm:$0xf]
    %v9746 = vld [vmem:[%s9724 + $0x54] sm:$0xf]
    %v9747 = vld [vmem:[%s9724 + $0x58] sm:$0xf]
    %v9748 = vld [vmem:[%s9724 + $0x5c] sm:$0xf]
    %v9749 = vld [vmem:[%s9724 + $0x60] sm:$0xf]
    %v9750 = vld [vmem:[%s9724 + $0x64] sm:$0xf]
    %v9751 = vld [vmem:[%s9724 + $0x68] sm:$0xf]
    %v9752 = vld [vmem:[%s9724 + $0x6c] sm:$0xf]
    %v9753 = vld [vmem:[%s9724 + $0x70] sm:$0xf]
    %v9754 = vld [vmem:[%s9724 + $0x74] sm:$0xf]
    %v9755 = vld [vmem:[%s9724 + $0x78] sm:$0xf]
    %v9756 = vld [vmem:[%s9724 + $0x7c] sm:$0xf]
    %v9757 = vld [vmem:[%s9724 + $0x80] sm:$0xf]
    %v9758 = vld [vmem:[%s9724 + $0x84] sm:$0xf]
    %v9759 = vld [vmem:[%s9724 + $0x88] sm:$0xf]
    %v9760 = vld [vmem:[%s9724 + $0x8c] sm:$0xf]
    %v9761 = vld [vmem:[%s9724 + $0x90] sm:$0xf]
    %v9762 = vld [vmem:[%s9724 + $0x94] sm:$0xf]
    %v9763 = vld [vmem:[%s9724 + $0x98] sm:$0xf]
    %v9764 = vld [vmem:[%s9724 + $0x9c] sm:$0xf]
    %v9765 = vld [vmem:[%s9724 + $0xa0] sm:$0xf]
    %v9766 = vld [vmem:[%s9724 + $0xa4] sm:$0xf]
    %v9767 = vld [vmem:[%s9724 + $0xa8] sm:$0xf]
    %v9768 = vld [vmem:[%s9724 + $0xac] sm:$0xf]
    %v9769 = vld [vmem:[%s9724 + $0xb0] sm:$0xf]
    %v9770 = vld [vmem:[%s9724 + $0xb4] sm:$0xf]
    %v9771 = vld [vmem:[%s9724 + $0xb8] sm:$0xf]
    %v9772 = vld [vmem:[%s9724 + $0xbc] sm:$0xf]
    %v9773 = vld [vmem:[%s9724 + $0xc0] sm:$0xf]
    %v9774 = vld [vmem:[%s9724 + $0xc4] sm:$0xf]
    %v9775 = vld [vmem:[%s9724 + $0xc8] sm:$0xf]
    %v9776 = vld [vmem:[%s9724 + $0xcc] sm:$0xf]
    %v9777 = vld [vmem:[%s9724 + $0xd0] sm:$0xf]
    %v9778 = vld [vmem:[%s9724 + $0xd4] sm:$0xf]
    %v9779 = vld [vmem:[%s9724 + $0xd8] sm:$0xf]
    %v9780 = vld [vmem:[%s9724 + $0xdc] sm:$0xf]
    %v9781 = vld [vmem:[%s9724 + $0xe0] sm:$0xf]
    %v9782 = vld [vmem:[%s9724 + $0xe4] sm:$0xf]
    %v9783 = vld [vmem:[%s9724 + $0xe8] sm:$0xf]
    %v9784 = vld [vmem:[%s9724 + $0xec] sm:$0xf]
    %v9785 = vld [vmem:[%s9724 + $0xf0] sm:$0xf]
    %v9786 = vld [vmem:[%s9724 + $0xf4] sm:$0xf]
    %v9787 = vld [vmem:[%s9724 + $0xf8] sm:$0xf]
    %v9788 = vld [vmem:[%s9724 + $0xfc] sm:$0xf]
    %v9789 = vld [vmem:[%s9724 + $0x100] sm:$0xf]
    %v9790 = vld [vmem:[%s9724 + $0x104] sm:$0xf]
    %v9791 = vld [vmem:[%s9724 + $0x108] sm:$0xf]
    %v9792 = vld [vmem:[%s9724 + $0x10c] sm:$0xf]
    %v9793 = vld [vmem:[%s9724 + $0x110] sm:$0xf]
    %v9794 = vld [vmem:[%s9724 + $0x114] sm:$0xf]
    %v9795 = vld [vmem:[%s9724 + $0x118] sm:$0xf]
    %v9796 = vld [vmem:[%s9724 + $0x11c] sm:$0xf]
    %v9797 = vld [vmem:[%s9724 + $0x120] sm:$0xf]
    %v9798 = vld [vmem:[%s9724 + $0x124] sm:$0xf]
    %v9799 = vld [vmem:[%s9724 + $0x128] sm:$0xf]
    %v9800 = vld [vmem:[%s9724 + $0x12c] sm:$0xf]
    %v9801 = vld [vmem:[%s9724 + $0x130] sm:$0xf]
    %v9802 = vld [vmem:[%s9724 + $0x134] sm:$0xf]
    %v9803 = vld [vmem:[%s9724 + $0x138] sm:$0xf]
    %v9804 = vld [vmem:[%s9724 + $0x13c] sm:$0xf]
    %v9805 = vld [vmem:[%s9724 + $0x140] sm:$0xf]
    %v9806 = vld [vmem:[%s9724 + $0x144] sm:$0xf]
    %v9807 = vld [vmem:[%s9724 + $0x148] sm:$0xf]
    %v9808 = vld [vmem:[%s9724 + $0x14c] sm:$0xf]
    %v9809 = vld [vmem:[%s9724 + $0x150] sm:$0xf]
    %v9810 = vld [vmem:[%s9724 + $0x154] sm:$0xf]
    %v9811 = vld [vmem:[%s9724 + $0x158] sm:$0xf]
    %v9812 = vld [vmem:[%s9724 + $0x15c] sm:$0xf]
    %v9813 = vld [vmem:[%s9724 + $0x160] sm:$0xf]
    %v9814 = vld [vmem:[%s9724 + $0x164] sm:$0xf]
    %v9815 = vld [vmem:[%s9724 + $0x168] sm:$0xf]
    %v9816 = vld [vmem:[%s9724 + $0x16c] sm:$0xf]
    %v9817 = vld [vmem:[%s9724 + $0x170] sm:$0xf]
    %v9818 = vld [vmem:[%s9724 + $0x174] sm:$0xf]
    %v9819 = vld [vmem:[%s9724 + $0x178] sm:$0xf]
    %v9820 = vld [vmem:[%s9724 + $0x17c] sm:$0xf]
    %v9821 = vld [vmem:[%s9724 + $0x180] sm:$0xf]
    %v9822 = vld [vmem:[%s9724 + $0x184] sm:$0xf]
    %v9823 = vld [vmem:[%s9724 + $0x188] sm:$0xf]
    %v9824 = vld [vmem:[%s9724 + $0x18c] sm:$0xf]
    %v9825 = vld [vmem:[%s9724 + $0x190] sm:$0xf]
    %v9826 = vld [vmem:[%s9724 + $0x194] sm:$0xf]
    %v9827 = vld [vmem:[%s9724 + $0x198] sm:$0xf]
    %v9828 = vld [vmem:[%s9724 + $0x19c] sm:$0xf]
    %v9829 = vld [vmem:[%s9724 + $0x1a0] sm:$0xf]
    %v9830 = vld [vmem:[%s9724 + $0x1a4] sm:$0xf]
    %v9831 = vld [vmem:[%s9724 + $0x1a8] sm:$0xf]
    %v9832 = vld [vmem:[%s9724 + $0x1ac] sm:$0xf]
    %v9833 = vld [vmem:[%s9724 + $0x1b0] sm:$0xf]
    %v9834 = vld [vmem:[%s9724 + $0x1b4] sm:$0xf]
    %v9835 = vld [vmem:[%s9724 + $0x1b8] sm:$0xf]
    %v9836 = vld [vmem:[%s9724 + $0x1bc] sm:$0xf]
    %v9837 = vld [vmem:[%s9724 + $0x1c0] sm:$0xf]
    %v9838 = vld [vmem:[%s9724 + $0x1c4] sm:$0xf]
    %v9839 = vld [vmem:[%s9724 + $0x1c8] sm:$0xf]
    %v9840 = vld [vmem:[%s9724 + $0x1cc] sm:$0xf]
    %v9841 = vld [vmem:[%s9724 + $0x1d0] sm:$0xf]
    %v9842 = vld [vmem:[%s9724 + $0x1d4] sm:$0xf]
    %v9843 = vld [vmem:[%s9724 + $0x1d8] sm:$0xf]
    %v9844 = vld [vmem:[%s9724 + $0x1dc] sm:$0xf]
    %v9845 = vld [vmem:[%s9724 + $0x1e0] sm:$0xf]
    %v9846 = vld [vmem:[%s9724 + $0x1e4] sm:$0xf]
    %v9847 = vld [vmem:[%s9724 + $0x1e8] sm:$0xf]
    %v9848 = vld [vmem:[%s9724 + $0x1ec] sm:$0xf]
    %v9849 = vld [vmem:[%s9724 + $0x1f0] sm:$0xf]
    %v9850 = vld [vmem:[%s9724 + $0x1f4] sm:$0xf]
    %v9851 = vld [vmem:[%s9724 + $0x1f8] sm:$0xf]
    %v9852 = vld [vmem:[%s9724 + $0x1fc] sm:$0xf]
    %v9853 = vld [vmem:[%s9724 + $0x200] sm:$0xf]
    %v9854 = vld [vmem:[%s9724 + $0x204] sm:$0xf]
    %v9855 = vld [vmem:[%s9724 + $0x208] sm:$0xf]
    %v9856 = vld [vmem:[%s9724 + $0x20c] sm:$0xf]
    %v9857 = vld [vmem:[%s9724 + $0x210] sm:$0xf]
    %v9858 = vld [vmem:[%s9724 + $0x214] sm:$0xf]
    %v9859 = vld [vmem:[%s9724 + $0x218] sm:$0xf]
    %v9860 = vld [vmem:[%s9724 + $0x21c] sm:$0xf]
    %v9861 = vld [vmem:[%s9724 + $0x220] sm:$0xf]
    %v9862 = vld [vmem:[%s9724 + $0x224] sm:$0xf]
    %v9863 = vld [vmem:[%s9724 + $0x228] sm:$0xf]
    %v9864 = vld [vmem:[%s9724 + $0x22c] sm:$0xf]
    %v9865 = vld [vmem:[%s9724 + $0x230] sm:$0xf]
    %v9866 = vld [vmem:[%s9724 + $0x234] sm:$0xf]
    %v9867 = vld [vmem:[%s9724 + $0x238] sm:$0xf]
    %v9868 = vld [vmem:[%s9724 + $0x23c] sm:$0xf]
    %v9869 = vld [vmem:[%s9724 + $0x240] sm:$0xf]
    %v9870 = vld [vmem:[%s9724 + $0x244] sm:$0xf]
    %v9871 = vld [vmem:[%s9724 + $0x248] sm:$0xf]
    %v9872 = vld [vmem:[%s9724 + $0x24c] sm:$0xf]
    %v9873 = vld [vmem:[%s9724 + $0x250] sm:$0xf]
    %v9874 = vld [vmem:[%s9724 + $0x254] sm:$0xf]
    %v9875 = vld [vmem:[%s9724 + $0x258] sm:$0xf]
    %v9876 = vld [vmem:[%s9724 + $0x25c] sm:$0xf]
    %v9877 = vld [vmem:[%s9724 + $0x260] sm:$0xf]
    %v9878 = vld [vmem:[%s9724 + $0x264] sm:$0xf]
    %v9879 = vld [vmem:[%s9724 + $0x268] sm:$0xf]
    %v9880 = vld [vmem:[%s9724 + $0x26c] sm:$0xf]
    %v9881 = vld [vmem:[%s9724 + $0x270] sm:$0xf]
    %v9882 = vld [vmem:[%s9724 + $0x274] sm:$0xf]
    %v9883 = vld [vmem:[%s9724 + $0x278] sm:$0xf]
    %v9884 = vld [vmem:[%s9724 + $0x27c] sm:$0xf]
    %v9885 = vld [vmem:[%s9724 + $0x280] sm:$0xf]
    %v9886 = vld [vmem:[%s9724 + $0x284] sm:$0xf]
    %v9887 = vld [vmem:[%s9724 + $0x288] sm:$0xf]
    %v9888 = vld [vmem:[%s9724 + $0x28c] sm:$0xf]
    %v9889 = vld [vmem:[%s9724 + $0x290] sm:$0xf]
    %v9890 = vld [vmem:[%s9724 + $0x294] sm:$0xf]
    %v9891 = vld [vmem:[%s9724 + $0x298] sm:$0xf]
    %v9892 = vld [vmem:[%s9724 + $0x29c] sm:$0xf]
    %v9893 = vld [vmem:[%s9724 + $0x2a0] sm:$0xf]
    %v9894 = vld [vmem:[%s9724 + $0x2a4] sm:$0xf]
    %v9895 = vld [vmem:[%s9724 + $0x2a8] sm:$0xf]
    %v9896 = vld [vmem:[%s9724 + $0x2ac] sm:$0xf]
    %v9897 = vld [vmem:[%s9724 + $0x2b0] sm:$0xf]
    %v9898 = vld [vmem:[%s9724 + $0x2b4] sm:$0xf]
    %v9899 = vld [vmem:[%s9724 + $0x2b8] sm:$0xf]
    %v9900 = vld [vmem:[%s9724 + $0x2bc] sm:$0xf]
    %v9901 = vld [vmem:[%s9724 + $0x2c0] sm:$0xf]
    %v9902 = vld [vmem:[%s9724 + $0x2c4] sm:$0xf]
    %v9903 = vld [vmem:[%s9724 + $0x2c8] sm:$0xf]
    %v9904 = vld [vmem:[%s9724 + $0x2cc] sm:$0xf]
    %v9905 = vld [vmem:[%s9724 + $0x2d0] sm:$0xf]
    %v9906 = vld [vmem:[%s9724 + $0x2d4] sm:$0xf]
    %v9907 = vld [vmem:[%s9724 + $0x2d8] sm:$0xf]
    %v9908 = vld [vmem:[%s9724 + $0x2dc] sm:$0xf]
    %v9909 = vld [vmem:[%s9724 + $0x2e0] sm:$0xf]
    %v9910 = vld [vmem:[%s9724 + $0x2e4] sm:$0xf]
    %v9911 = vld [vmem:[%s9724 + $0x2e8] sm:$0xf]
    %v9912 = vld [vmem:[%s9724 + $0x2ec] sm:$0xf]
    %v9913 = vld [vmem:[%s9724 + $0x2f0] sm:$0xf]
    %v9914 = vld [vmem:[%s9724 + $0x2f4] sm:$0xf]
    %v9915 = vld [vmem:[%s9724 + $0x2f8] sm:$0xf]
    %v9916 = vld [vmem:[%s9724 + $0x2fc] sm:$0xf]
    %v9917 = vld [vmem:[%s9724 + $0x300] sm:$0xf]
    %v9918 = vld [vmem:[%s9724 + $0x304] sm:$0xf]
    %v9919 = vld [vmem:[%s9724 + $0x308] sm:$0xf]
    %v9920 = vld [vmem:[%s9724 + $0x30c] sm:$0xf]
    %v9921 = vld [vmem:[%s9724 + $0x310] sm:$0xf]
    %v9922 = vld [vmem:[%s9724 + $0x314] sm:$0xf]
    %v9923 = vld [vmem:[%s9724 + $0x318] sm:$0xf]
    %v9924 = vld [vmem:[%s9724 + $0x31c] sm:$0xf]
    %v9925 = vld [vmem:[%s9724 + $0x320] sm:$0xf]
    %v9926 = vld [vmem:[%s9724 + $0x324] sm:$0xf]
    %v9927 = vld [vmem:[%s9724 + $0x328] sm:$0xf]
    %v9928 = vld [vmem:[%s9724 + $0x32c] sm:$0xf]
    %v9929 = vld [vmem:[%s9724 + $0x330] sm:$0xf]
    %v9930 = vld [vmem:[%s9724 + $0x334] sm:$0xf]
    %v9931 = vld [vmem:[%s9724 + $0x338] sm:$0xf]
    %v9932 = vld [vmem:[%s9724 + $0x33c] sm:$0xf]
    %v9933 = vld [vmem:[%s9724 + $0x340] sm:$0xf]
    %v9934 = vld [vmem:[%s9724 + $0x344] sm:$0xf]
    %v9935 = vld [vmem:[%s9724 + $0x348] sm:$0xf]
    %v9936 = vld [vmem:[%s9724 + $0x34c] sm:$0xf]
    %v9937 = vld [vmem:[%s9724 + $0x350] sm:$0xf]
    %v9938 = vld [vmem:[%s9724 + $0x354] sm:$0xf]
    %v9939 = vld [vmem:[%s9724 + $0x358] sm:$0xf]
    %v9940 = vld [vmem:[%s9724 + $0x35c] sm:$0xf]
    %v9941 = vld [vmem:[%s9724 + $0x360] sm:$0xf]
    %v9942 = vld [vmem:[%s9724 + $0x364] sm:$0xf]
    %v9943 = vld [vmem:[%s9724 + $0x368] sm:$0xf]
    %v9944 = vld [vmem:[%s9724 + $0x36c] sm:$0xf]
    %v9945 = vld [vmem:[%s9724 + $0x370] sm:$0xf]
    %v9946 = vld [vmem:[%s9724 + $0x374] sm:$0xf]
    %v9947 = vld [vmem:[%s9724 + $0x378] sm:$0xf]
    %v9948 = vld [vmem:[%s9724 + $0x37c] sm:$0xf]
    %v10173 = vunpack.c.l.b16 %v9725
    %v10174 = vunpack.c.l.b16 %v9726
    %v10175 = vunpack.c.l.b16 %v9727
    %v10176 = vunpack.c.l.b16 %v9728
    %v10177 = vunpack.c.l.b16 %v9729
    %v10178 = vunpack.c.l.b16 %v9730
    %v10179 = vunpack.c.l.b16 %v9731
    %v10180 = vunpack.c.l.b16 %v9732
    %v10181 = vunpack.c.l.b16 %v9733
    %v10182 = vunpack.c.l.b16 %v9734
    %v10183 = vunpack.c.l.b16 %v9735
    %v10184 = vunpack.c.l.b16 %v9736
    %v10185 = vunpack.c.l.b16 %v9737
    %v10186 = vunpack.c.l.b16 %v9738
    %v10187 = vunpack.c.l.b16 %v9739
    %v10188 = vunpack.c.l.b16 %v9740
    %v10189 = vunpack.c.l.b16 %v9741
    %v10190 = vunpack.c.l.b16 %v9742
    %v10191 = vunpack.c.l.b16 %v9743
    %v10192 = vunpack.c.l.b16 %v9744
    %v10193 = vunpack.c.l.b16 %v9745
    %v10194 = vunpack.c.l.b16 %v9746
    %v10195 = vunpack.c.l.b16 %v9747
    %v10196 = vunpack.c.l.b16 %v9748
    %v10197 = vunpack.c.l.b16 %v9749
    %v10198 = vunpack.c.l.b16 %v9750
    %v10199 = vunpack.c.l.b16 %v9751
    %v10200 = vunpack.c.l.b16 %v9752
    %v10201 = vunpack.c.l.b16 %v9753
    %v10202 = vunpack.c.l.b16 %v9754
    %v10203 = vunpack.c.l.b16 %v9755
    %v10204 = vunpack.c.l.b16 %v9756
    %v10205 = vunpack.c.l.b16 %v9757
    %v10206 = vunpack.c.l.b16 %v9758
    %v10207 = vunpack.c.l.b16 %v9759
    %v10208 = vunpack.c.l.b16 %v9760
    %v10209 = vunpack.c.l.b16 %v9761
    %v10210 = vunpack.c.l.b16 %v9762
    %v10211 = vunpack.c.l.b16 %v9763
    %v10212 = vunpack.c.l.b16 %v9764
    %v10213 = vunpack.c.l.b16 %v9765
    %v10214 = vunpack.c.l.b16 %v9766
    %v10215 = vunpack.c.l.b16 %v9767
    %v10216 = vunpack.c.l.b16 %v9768
    %v10217 = vunpack.c.l.b16 %v9769
    %v10218 = vunpack.c.l.b16 %v9770
    %v10219 = vunpack.c.l.b16 %v9771
    %v10220 = vunpack.c.l.b16 %v9772
    %v10221 = vunpack.c.l.b16 %v9773
    %v10222 = vunpack.c.l.b16 %v9774
    %v10223 = vunpack.c.l.b16 %v9775
    %v10224 = vunpack.c.l.b16 %v9776
    %v10225 = vunpack.c.l.b16 %v9777
    %v10226 = vunpack.c.l.b16 %v9778
    %v10227 = vunpack.c.l.b16 %v9779
    %v10228 = vunpack.c.l.b16 %v9780
    %v10229 = vunpack.c.l.b16 %v9781
    %v10230 = vunpack.c.l.b16 %v9782
    %v10231 = vunpack.c.l.b16 %v9783
    %v10232 = vunpack.c.l.b16 %v9784
    %v10233 = vunpack.c.l.b16 %v9785
    %v10234 = vunpack.c.l.b16 %v9786
    %v10235 = vunpack.c.l.b16 %v9787
    %v10236 = vunpack.c.l.b16 %v9788
    %v10237 = vunpack.c.l.b16 %v9789
    %v10238 = vunpack.c.l.b16 %v9790
    %v10239 = vunpack.c.l.b16 %v9791
    %v10240 = vunpack.c.l.b16 %v9792
    %v10241 = vunpack.c.l.b16 %v9793
    %v10242 = vunpack.c.l.b16 %v9794
    %v10243 = vunpack.c.l.b16 %v9795
    %v10244 = vunpack.c.l.b16 %v9796
    %v10245 = vunpack.c.l.b16 %v9797
    %v10246 = vunpack.c.l.b16 %v9798
    %v10247 = vunpack.c.l.b16 %v9799
    %v10248 = vunpack.c.l.b16 %v9800
    %v10249 = vunpack.c.l.b16 %v9801
    %v10250 = vunpack.c.l.b16 %v9802
    %v10251 = vunpack.c.l.b16 %v9803
    %v10252 = vunpack.c.l.b16 %v9804
    %v10253 = vunpack.c.l.b16 %v9805
    %v10254 = vunpack.c.l.b16 %v9806
    %v10255 = vunpack.c.l.b16 %v9807
    %v10256 = vunpack.c.l.b16 %v9808
    %v10257 = vunpack.c.l.b16 %v9809
    %v10258 = vunpack.c.l.b16 %v9810
    %v10259 = vunpack.c.l.b16 %v9811
    %v10260 = vunpack.c.l.b16 %v9812
    %v10261 = vunpack.c.l.b16 %v9813
    %v10262 = vunpack.c.l.b16 %v9814
    %v10263 = vunpack.c.l.b16 %v9815
    %v10264 = vunpack.c.l.b16 %v9816
    %v10265 = vunpack.c.l.b16 %v9817
    %v10266 = vunpack.c.l.b16 %v9818
    %v10267 = vunpack.c.l.b16 %v9819
    %v10268 = vunpack.c.l.b16 %v9820
    %v10269 = vunpack.c.l.b16 %v9821
    %v10270 = vunpack.c.l.b16 %v9822
    %v10271 = vunpack.c.l.b16 %v9823
    %v10272 = vunpack.c.l.b16 %v9824
    %v10273 = vunpack.c.l.b16 %v9825
    %v10274 = vunpack.c.l.b16 %v9826
    %v10275 = vunpack.c.l.b16 %v9827
    %v10276 = vunpack.c.l.b16 %v9828
    %v10277 = vunpack.c.l.b16 %v9829
    %v10278 = vunpack.c.l.b16 %v9830
    %v10279 = vunpack.c.l.b16 %v9831
    %v10280 = vunpack.c.l.b16 %v9832
    %v10281 = vunpack.c.l.b16 %v9833
    %v10282 = vunpack.c.l.b16 %v9834
    %v10283 = vunpack.c.l.b16 %v9835
    %v10284 = vunpack.c.l.b16 %v9836
    %v10285 = vunpack.c.l.b16 %v9837
    %v10286 = vunpack.c.l.b16 %v9838
    %v10287 = vunpack.c.l.b16 %v9839
    %v10288 = vunpack.c.l.b16 %v9840
    %v10289 = vunpack.c.l.b16 %v9841
    %v10290 = vunpack.c.l.b16 %v9842
    %v10291 = vunpack.c.l.b16 %v9843
    %v10292 = vunpack.c.l.b16 %v9844
    %v10293 = vunpack.c.l.b16 %v9845
    %v10294 = vunpack.c.l.b16 %v9846
    %v10295 = vunpack.c.l.b16 %v9847
    %v10296 = vunpack.c.l.b16 %v9848
    %v10297 = vunpack.c.l.b16 %v9849
    %v10298 = vunpack.c.l.b16 %v9850
    %v10299 = vunpack.c.l.b16 %v9851
    %v10300 = vunpack.c.l.b16 %v9852
    %v10301 = vunpack.c.l.b16 %v9853
    %v10302 = vunpack.c.l.b16 %v9854
    %v10303 = vunpack.c.l.b16 %v9855
    %v10304 = vunpack.c.l.b16 %v9856
    %v10305 = vunpack.c.l.b16 %v9857
    %v10306 = vunpack.c.l.b16 %v9858
    %v10307 = vunpack.c.l.b16 %v9859
    %v10308 = vunpack.c.l.b16 %v9860
    %v10309 = vunpack.c.l.b16 %v9861
    %v10310 = vunpack.c.l.b16 %v9862
    %v10311 = vunpack.c.l.b16 %v9863
    %v10312 = vunpack.c.l.b16 %v9864
    %v10313 = vunpack.c.l.b16 %v9865
    %v10314 = vunpack.c.l.b16 %v9866
    %v10315 = vunpack.c.l.b16 %v9867
    %v10316 = vunpack.c.l.b16 %v9868
    %v10317 = vunpack.c.l.b16 %v9869
    %v10318 = vunpack.c.l.b16 %v9870
    %v10319 = vunpack.c.l.b16 %v9871
    %v10320 = vunpack.c.l.b16 %v9872
    %v10321 = vunpack.c.l.b16 %v9873
    %v10322 = vunpack.c.l.b16 %v9874
    %v10323 = vunpack.c.l.b16 %v9875
    %v10324 = vunpack.c.l.b16 %v9876
    %v10325 = vunpack.c.l.b16 %v9877
    %v10326 = vunpack.c.l.b16 %v9878
    %v10327 = vunpack.c.l.b16 %v9879
    %v10328 = vunpack.c.l.b16 %v9880
    %v10329 = vunpack.c.l.b16 %v9881
    %v10330 = vunpack.c.l.b16 %v9882
    %v10331 = vunpack.c.l.b16 %v9883
    %v10332 = vunpack.c.l.b16 %v9884
    %v10333 = vunpack.c.l.b16 %v9885
    %v10334 = vunpack.c.l.b16 %v9886
    %v10335 = vunpack.c.l.b16 %v9887
    %v10336 = vunpack.c.l.b16 %v9888
    %v10337 = vunpack.c.l.b16 %v9889
    %v10338 = vunpack.c.l.b16 %v9890
    %v10339 = vunpack.c.l.b16 %v9891
    %v10340 = vunpack.c.l.b16 %v9892
    %v10341 = vunpack.c.l.b16 %v9893
    %v10342 = vunpack.c.l.b16 %v9894
    %v10343 = vunpack.c.l.b16 %v9895
    %v10344 = vunpack.c.l.b16 %v9896
    %v10345 = vunpack.c.l.b16 %v9897
    %v10346 = vunpack.c.l.b16 %v9898
    %v10347 = vunpack.c.l.b16 %v9899
    %v10348 = vunpack.c.l.b16 %v9900
    %v10349 = vunpack.c.l.b16 %v9901
    %v10350 = vunpack.c.l.b16 %v9902
    %v10351 = vunpack.c.l.b16 %v9903
    %v10352 = vunpack.c.l.b16 %v9904
    %v10353 = vunpack.c.l.b16 %v9905
    %v10354 = vunpack.c.l.b16 %v9906
    %v10355 = vunpack.c.l.b16 %v9907
    %v10356 = vunpack.c.l.b16 %v9908
    %v10357 = vunpack.c.l.b16 %v9909
    %v10358 = vunpack.c.l.b16 %v9910
    %v10359 = vunpack.c.l.b16 %v9911
    %v10360 = vunpack.c.l.b16 %v9912
    %v10361 = vunpack.c.l.b16 %v9913
    %v10362 = vunpack.c.l.b16 %v9914
    %v10363 = vunpack.c.l.b16 %v9915
    %v10364 = vunpack.c.l.b16 %v9916
    %v10365 = vunpack.c.l.b16 %v9917
    %v10366 = vunpack.c.l.b16 %v9918
    %v10367 = vunpack.c.l.b16 %v9919
    %v10368 = vunpack.c.l.b16 %v9920
    %v10369 = vunpack.c.l.b16 %v9921
    %v10370 = vunpack.c.l.b16 %v9922
    %v10371 = vunpack.c.l.b16 %v9923
    %v10372 = vunpack.c.l.b16 %v9924
    %v10373 = vunpack.c.l.b16 %v9925
    %v10374 = vunpack.c.l.b16 %v9926
    %v10375 = vunpack.c.l.b16 %v9927
    %v10376 = vunpack.c.l.b16 %v9928
    %v10377 = vunpack.c.l.b16 %v9929
    %v10378 = vunpack.c.l.b16 %v9930
    %v10379 = vunpack.c.l.b16 %v9931
    %v10380 = vunpack.c.l.b16 %v9932
    %v10381 = vunpack.c.l.b16 %v9933
    %v10382 = vunpack.c.l.b16 %v9934
    %v10383 = vunpack.c.l.b16 %v9935
    %v10384 = vunpack.c.l.b16 %v9936
    %v10385 = vunpack.c.l.b16 %v9937
    %v10386 = vunpack.c.l.b16 %v9938
    %v10387 = vunpack.c.l.b16 %v9939
    %v10388 = vunpack.c.l.b16 %v9940
    %v10389 = vunpack.c.l.b16 %v9941
    %v10390 = vunpack.c.l.b16 %v9942
    %v10391 = vunpack.c.l.b16 %v9943
    %v10392 = vunpack.c.l.b16 %v9944
    %v10393 = vunpack.c.l.b16 %v9945
    %v10394 = vunpack.c.l.b16 %v9946
    %v10395 = vunpack.c.l.b16 %v9947
    %v10396 = vunpack.c.l.b16 %v9948
    %v10397 = vpack.c.b16 %v10174, %v10173
    %v10398 = vpack.c.b16 %v10176, %v10175
    %v10399 = vpack.c.b16 %v10178, %v10177
    %v10400 = vpack.c.b16 %v10180, %v10179
    %v10401 = vpack.c.b16 %v10182, %v10181
    %v10402 = vpack.c.b16 %v10184, %v10183
    %v10403 = vpack.c.b16 %v10186, %v10185
    %v10404 = vpack.c.b16 %v10188, %v10187
    %v10405 = vpack.c.b16 %v10190, %v10189
    %v10406 = vpack.c.b16 %v10192, %v10191
    %v10407 = vpack.c.b16 %v10194, %v10193
    %v10408 = vpack.c.b16 %v10196, %v10195
    %v10409 = vpack.c.b16 %v10198, %v10197
    %v10410 = vpack.c.b16 %v10200, %v10199
    %v10411 = vpack.c.b16 %v10202, %v10201
    %v10412 = vpack.c.b16 %v10204, %v10203
    %v10413 = vpack.c.b16 %v10206, %v10205
    %v10414 = vpack.c.b16 %v10208, %v10207
    %v10415 = vpack.c.b16 %v10210, %v10209
    %v10416 = vpack.c.b16 %v10212, %v10211
    %v10417 = vpack.c.b16 %v10214, %v10213
    %v10418 = vpack.c.b16 %v10216, %v10215
    %v10419 = vpack.c.b16 %v10218, %v10217
    %v10420 = vpack.c.b16 %v10220, %v10219
    %v10421 = vpack.c.b16 %v10222, %v10221
    %v10422 = vpack.c.b16 %v10224, %v10223
    %v10423 = vpack.c.b16 %v10226, %v10225
    %v10424 = vpack.c.b16 %v10228, %v10227
    %v10425 = vpack.c.b16 %v10230, %v10229
    %v10426 = vpack.c.b16 %v10232, %v10231
    %v10427 = vpack.c.b16 %v10234, %v10233
    %v10428 = vpack.c.b16 %v10236, %v10235
    %v10429 = vpack.c.b16 %v10238, %v10237
    %v10430 = vpack.c.b16 %v10240, %v10239
    %v10431 = vpack.c.b16 %v10242, %v10241
    %v10432 = vpack.c.b16 %v10244, %v10243
    %v10433 = vpack.c.b16 %v10246, %v10245
    %v10434 = vpack.c.b16 %v10248, %v10247
    %v10435 = vpack.c.b16 %v10250, %v10249
    %v10436 = vpack.c.b16 %v10252, %v10251
    %v10437 = vpack.c.b16 %v10254, %v10253
    %v10438 = vpack.c.b16 %v10256, %v10255
    %v10439 = vpack.c.b16 %v10258, %v10257
    %v10440 = vpack.c.b16 %v10260, %v10259
    %v10441 = vpack.c.b16 %v10262, %v10261
    %v10442 = vpack.c.b16 %v10264, %v10263
    %v10443 = vpack.c.b16 %v10266, %v10265
    %v10444 = vpack.c.b16 %v10268, %v10267
    %v10445 = vpack.c.b16 %v10270, %v10269
    %v10446 = vpack.c.b16 %v10272, %v10271
    %v10447 = vpack.c.b16 %v10274, %v10273
    %v10448 = vpack.c.b16 %v10276, %v10275
    %v10449 = vpack.c.b16 %v10278, %v10277
    %v10450 = vpack.c.b16 %v10280, %v10279
    %v10451 = vpack.c.b16 %v10282, %v10281
    %v10452 = vpack.c.b16 %v10284, %v10283
    %v10453 = vpack.c.b16 %v10286, %v10285
    %v10454 = vpack.c.b16 %v10288, %v10287
    %v10455 = vpack.c.b16 %v10290, %v10289
    %v10456 = vpack.c.b16 %v10292, %v10291
    %v10457 = vpack.c.b16 %v10294, %v10293
    %v10458 = vpack.c.b16 %v10296, %v10295
    %v10459 = vpack.c.b16 %v10298, %v10297
    %v10460 = vpack.c.b16 %v10300, %v10299
    %v10461 = vpack.c.b16 %v10302, %v10301
    %v10462 = vpack.c.b16 %v10304, %v10303
    %v10463 = vpack.c.b16 %v10306, %v10305
    %v10464 = vpack.c.b16 %v10308, %v10307
    %v10465 = vpack.c.b16 %v10310, %v10309
    %v10466 = vpack.c.b16 %v10312, %v10311
    %v10467 = vpack.c.b16 %v10314, %v10313
    %v10468 = vpack.c.b16 %v10316, %v10315
    %v10469 = vpack.c.b16 %v10318, %v10317
    %v10470 = vpack.c.b16 %v10320, %v10319
    %v10471 = vpack.c.b16 %v10322, %v10321
    %v10472 = vpack.c.b16 %v10324, %v10323
    %v10473 = vpack.c.b16 %v10326, %v10325
    %v10474 = vpack.c.b16 %v10328, %v10327
    %v10475 = vpack.c.b16 %v10330, %v10329
    %v10476 = vpack.c.b16 %v10332, %v10331
    %v10477 = vpack.c.b16 %v10334, %v10333
    %v10478 = vpack.c.b16 %v10336, %v10335
    %v10479 = vpack.c.b16 %v10338, %v10337
    %v10480 = vpack.c.b16 %v10340, %v10339
    %v10481 = vpack.c.b16 %v10342, %v10341
    %v10482 = vpack.c.b16 %v10344, %v10343
    %v10483 = vpack.c.b16 %v10346, %v10345
    %v10484 = vpack.c.b16 %v10348, %v10347
    %v10485 = vpack.c.b16 %v10350, %v10349
    %v10486 = vpack.c.b16 %v10352, %v10351
    %v10487 = vpack.c.b16 %v10354, %v10353
    %v10488 = vpack.c.b16 %v10356, %v10355
    %v10489 = vpack.c.b16 %v10358, %v10357
    %v10490 = vpack.c.b16 %v10360, %v10359
    %v10491 = vpack.c.b16 %v10362, %v10361
    %v10492 = vpack.c.b16 %v10364, %v10363
    %v10493 = vpack.c.b16 %v10366, %v10365
    %v10494 = vpack.c.b16 %v10368, %v10367
    %v10495 = vpack.c.b16 %v10370, %v10369
    %v10496 = vpack.c.b16 %v10372, %v10371
    %v10497 = vpack.c.b16 %v10374, %v10373
    %v10498 = vpack.c.b16 %v10376, %v10375
    %v10499 = vpack.c.b16 %v10378, %v10377
    %v10500 = vpack.c.b16 %v10380, %v10379
    %v10501 = vpack.c.b16 %v10382, %v10381
    %v10502 = vpack.c.b16 %v10384, %v10383
    %v10503 = vpack.c.b16 %v10386, %v10385
    %v10504 = vpack.c.b16 %v10388, %v10387
    %v10505 = vpack.c.b16 %v10390, %v10389
    %v10506 = vpack.c.b16 %v10392, %v10391
    %v10507 = vpack.c.b16 %v10394, %v10393
    %v10508 = vpack.c.b16 %v10396, %v10395
    %10621 = vmatpush.bf16.msra.mxu0 %v10404
    %10622 = vmatpush.bf16.msra.mxu0 %v10403
    %10623 = vmatpush.bf16.msra.mxu0 %v10402
    %10624 = vmatpush.bf16.msra.mxu0 %v10401
    %10625 = vmatpush.bf16.msra.mxu0 %v10400
    %10626 = vmatpush.bf16.msra.mxu0 %v10399
    %10627 = vmatpush.bf16.msra.mxu0 %v10398
    %10628 = vmatpush.bf16.msra.mxu0 %v10397
    %10629 = vmatmul.bf16.gmra.mxu0 %v9710
    %v10630 = vpop.f32.mrf.mxu0
    %v10631 = vadd.f32 0.0, %v10630
    %v10632 = vpop.f32.mrf.mxu0
    %10633 = vdwg.mxu0
    %10634 = vmatpush.bf16.msra.mxu0 %v10412
    %10635 = vmatpush.bf16.msra.mxu0 %v10411
    %10636 = vmatpush.bf16.msra.mxu0 %v10410
    %10637 = vmatpush.bf16.msra.mxu0 %v10409
    %10638 = vmatpush.bf16.msra.mxu0 %v10408
    %10639 = vmatpush.bf16.msra.mxu0 %v10407
    %10640 = vmatpush.bf16.msra.mxu0 %v10406
    %10641 = vmatpush.bf16.msra.mxu0 %v10405
    %10642 = vmatmul.bf16.gmra.mxu0 %v9711
    %v10643 = vpop.f32.mrf.mxu0
    %v10644 = vadd.f32 %v10631, %v10643
    %v10645 = vpop.f32.mrf.mxu0
    %10646 = vdwg.mxu0
    %10647 = vmatpush.bf16.msra.mxu0 %v10420
    %10648 = vmatpush.bf16.msra.mxu0 %v10419
    %10649 = vmatpush.bf16.msra.mxu0 %v10418
    %10650 = vmatpush.bf16.msra.mxu0 %v10417
    %10651 = vmatpush.bf16.msra.mxu0 %v10416
    %10652 = vmatpush.bf16.msra.mxu0 %v10415
    %10653 = vmatpush.bf16.msra.mxu0 %v10414
    %10654 = vmatpush.bf16.msra.mxu0 %v10413
    %10655 = vmatmul.bf16.gmra.mxu0 %v9712
    %v10656 = vpop.f32.mrf.mxu0
    %v10657 = vadd.f32 %v10644, %v10656
    %v10658 = vpop.f32.mrf.mxu0
    %10659 = vdwg.mxu0
    %10660 = vmatpush.bf16.msra.mxu0 %v10428
    %10661 = vmatpush.bf16.msra.mxu0 %v10427
    %10662 = vmatpush.bf16.msra.mxu0 %v10426
    %10663 = vmatpush.bf16.msra.mxu0 %v10425
    %10664 = vmatpush.bf16.msra.mxu0 %v10424
    %10665 = vmatpush.bf16.msra.mxu0 %v10423
    %10666 = vmatpush.bf16.msra.mxu0 %v10422
    %10667 = vmatpush.bf16.msra.mxu0 %v10421
    %10668 = vmatmul.bf16.gmra.mxu0 %v9713
    %v10669 = vpop.f32.mrf.mxu0
    %v10670 = vadd.f32 %v10657, %v10669
    %v10671 = vpop.f32.mrf.mxu0
    %10672 = vdwg.mxu0
    %10673 = vmatpush.bf16.msra.mxu0 %v10436
    %10674 = vmatpush.bf16.msra.mxu0 %v10435
    %10675 = vmatpush.bf16.msra.mxu0 %v10434
    %10676 = vmatpush.bf16.msra.mxu0 %v10433
    %10677 = vmatpush.bf16.msra.mxu0 %v10432
    %10678 = vmatpush.bf16.msra.mxu0 %v10431
    %10679 = vmatpush.bf16.msra.mxu0 %v10430
    %10680 = vmatpush.bf16.msra.mxu0 %v10429
    %10681 = vmatmul.bf16.gmra.mxu0 %v9714
    %v10682 = vpop.f32.mrf.mxu0
    %v10683 = vadd.f32 %v10670, %v10682
    %v10684 = vpop.f32.mrf.mxu0
    %10685 = vdwg.mxu0
    %10686 = vmatpush.bf16.msra.mxu0 %v10444
    %10687 = vmatpush.bf16.msra.mxu0 %v10443
    %10688 = vmatpush.bf16.msra.mxu0 %v10442
    %10689 = vmatpush.bf16.msra.mxu0 %v10441
    %10690 = vmatpush.bf16.msra.mxu0 %v10440
    %10691 = vmatpush.bf16.msra.mxu0 %v10439
    %10692 = vmatpush.bf16.msra.mxu0 %v10438
    %10693 = vmatpush.bf16.msra.mxu0 %v10437
    %10694 = vmatmul.bf16.gmra.mxu0 %v9715
    %v10695 = vpop.f32.mrf.mxu0
    %v10696 = vadd.f32 %v10683, %v10695
    %v10697 = vpop.f32.mrf.mxu0
    %10698 = vdwg.mxu0
    %10699 = vmatpush.bf16.msra.mxu0 %v10452
    %10700 = vmatpush.bf16.msra.mxu0 %v10451
    %10701 = vmatpush.bf16.msra.mxu0 %v10450
    %10702 = vmatpush.bf16.msra.mxu0 %v10449
    %10703 = vmatpush.bf16.msra.mxu0 %v10448
    %10704 = vmatpush.bf16.msra.mxu0 %v10447
    %10705 = vmatpush.bf16.msra.mxu0 %v10446
    %10706 = vmatpush.bf16.msra.mxu0 %v10445
    %10707 = vmatmul.bf16.gmra.mxu0 %v9716
    %v10708 = vpop.f32.mrf.mxu0
    %v10709 = vadd.f32 %v10696, %v10708
    %v10710 = vpop.f32.mrf.mxu0
    %10711 = vdwg.mxu0
    %10712 = vmatpush.bf16.msra.mxu0 %v10460
    %10713 = vmatpush.bf16.msra.mxu0 %v10459
    %10714 = vmatpush.bf16.msra.mxu0 %v10458
    %10715 = vmatpush.bf16.msra.mxu0 %v10457
    %10716 = vmatpush.bf16.msra.mxu0 %v10456
    %10717 = vmatpush.bf16.msra.mxu0 %v10455
    %10718 = vmatpush.bf16.msra.mxu0 %v10454
    %10719 = vmatpush.bf16.msra.mxu0 %v10453
    %10720 = vmatmul.bf16.gmra.mxu0 %v9717
    %v10721 = vpop.f32.mrf.mxu0
    %v10722 = vadd.f32 %v10709, %v10721
    %v10723 = vpop.f32.mrf.mxu0
    %10724 = vdwg.mxu0
    %10725 = vmatpush.bf16.msra.mxu0 %v10468
    %10726 = vmatpush.bf16.msra.mxu0 %v10467
    %10727 = vmatpush.bf16.msra.mxu0 %v10466
    %10728 = vmatpush.bf16.msra.mxu0 %v10465
    %10729 = vmatpush.bf16.msra.mxu0 %v10464
    %10730 = vmatpush.bf16.msra.mxu0 %v10463
    %10731 = vmatpush.bf16.msra.mxu0 %v10462
    %10732 = vmatpush.bf16.msra.mxu0 %v10461
    %10733 = vmatmul.bf16.gmra.mxu0 %v9718
    %v10734 = vpop.f32.mrf.mxu0
    %v10735 = vadd.f32 %v10722, %v10734
    %v10736 = vpop.f32.mrf.mxu0
    %10737 = vdwg.mxu0
    %10738 = vmatpush.bf16.msra.mxu0 %v10476
    %10739 = vmatpush.bf16.msra.mxu0 %v10475
    %10740 = vmatpush.bf16.msra.mxu0 %v10474
    %10741 = vmatpush.bf16.msra.mxu0 %v10473
    %10742 = vmatpush.bf16.msra.mxu0 %v10472
    %10743 = vmatpush.bf16.msra.mxu0 %v10471
    %10744 = vmatpush.bf16.msra.mxu0 %v10470
    %10745 = vmatpush.bf16.msra.mxu0 %v10469
    %10746 = vmatmul.bf16.gmra.mxu0 %v9719
    %v10747 = vpop.f32.mrf.mxu0
    %v10748 = vadd.f32 %v10735, %v10747
    %v10749 = vpop.f32.mrf.mxu0
    %10750 = vdwg.mxu0
    %10751 = vmatpush.bf16.msra.mxu0 %v10484
    %10752 = vmatpush.bf16.msra.mxu0 %v10483
    %10753 = vmatpush.bf16.msra.mxu0 %v10482
    %10754 = vmatpush.bf16.msra.mxu0 %v10481
    %10755 = vmatpush.bf16.msra.mxu0 %v10480
    %10756 = vmatpush.bf16.msra.mxu0 %v10479
    %10757 = vmatpush.bf16.msra.mxu0 %v10478
    %10758 = vmatpush.bf16.msra.mxu0 %v10477
    %10759 = vmatmul.bf16.gmra.mxu0 %v9720
    %v10760 = vpop.f32.mrf.mxu0
    %v10761 = vadd.f32 %v10748, %v10760
    %v10762 = vpop.f32.mrf.mxu0
    %10763 = vdwg.mxu0
    %10764 = vmatpush.bf16.msra.mxu0 %v10492
    %10765 = vmatpush.bf16.msra.mxu0 %v10491
    %10766 = vmatpush.bf16.msra.mxu0 %v10490
    %10767 = vmatpush.bf16.msra.mxu0 %v10489
    %10768 = vmatpush.bf16.msra.mxu0 %v10488
    %10769 = vmatpush.bf16.msra.mxu0 %v10487
    %10770 = vmatpush.bf16.msra.mxu0 %v10486
    %10771 = vmatpush.bf16.msra.mxu0 %v10485
    %10772 = vmatmul.bf16.gmra.mxu0 %v9721
    %v10773 = vpop.f32.mrf.mxu0
    %v10774 = vadd.f32 %v10761, %v10773
    %v10775 = vpop.f32.mrf.mxu0
    %10776 = vdwg.mxu0
    %10777 = vmatpush.bf16.msra.mxu0 %v10500
    %10778 = vmatpush.bf16.msra.mxu0 %v10499
    %10779 = vmatpush.bf16.msra.mxu0 %v10498
    %10780 = vmatpush.bf16.msra.mxu0 %v10497
    %10781 = vmatpush.bf16.msra.mxu0 %v10496
    %10782 = vmatpush.bf16.msra.mxu0 %v10495
    %10783 = vmatpush.bf16.msra.mxu0 %v10494
    %10784 = vmatpush.bf16.msra.mxu0 %v10493
    %10785 = vmatmul.bf16.gmra.mxu0 %v9722
    %v10786 = vpop.f32.mrf.mxu0
    %v10787 = vadd.f32 %v10774, %v10786
    %v10788 = vpop.f32.mrf.mxu0
    %10789 = vdwg.mxu0
    %10790 = vmatpush.bf16.msra.mxu0 %v10508
    %10791 = vmatpush.bf16.msra.mxu0 %v10507
    %10792 = vmatpush.bf16.msra.mxu0 %v10506
    %10793 = vmatpush.bf16.msra.mxu0 %v10505
    %10794 = vmatpush.bf16.msra.mxu0 %v10504
    %10795 = vmatpush.bf16.msra.mxu0 %v10503
    %10796 = vmatpush.bf16.msra.mxu0 %v10502
    %10797 = vmatpush.bf16.msra.mxu0 %v10501
    %10798 = vmatmul.bf16.gmra.mxu0 %v9723
    %v10799 = vpop.f32.mrf.mxu0
    %v10800 = vadd.f32 %v10787, %v10799
    %v10801 = vpop.f32.mrf.mxu0
    %10802 = vdwg.mxu0
    %v10803 = vadd.f32 %v9605, %v10800
    %v10805 = vunpack.c.l.b16 %v4631
    %v10806 = vunpack.c.h.b16 %v4631
    %v10807 = vpack.c.b16 %v10805, %v10805
    %v10808 = vpack.c.b16 %v10806, %v10806
    %v10810 = vshll.u32 %v10807, 16
    %v10812 = vrot.slane %v10810, 5
    %v10814 = vshll.u32 %v10808, 16
    %v10816 = vrot.slane %v10814, 5
    %v10817 = vrot.slane %v10807, 5
    %v10818 = vrot.slane %v10808, 5
    %v10819 = vrot.slane %v10810, 6
    %v10820 = vrot.slane %v10814, 6
    %v10821 = vrot.slane %v10807, 6
    %v10822 = vrot.slane %v10808, 6
    %v10823 = vrot.slane %v10810, 7
    %v10824 = vrot.slane %v10814, 7
    %v10825 = vrot.slane %v10807, 7
    %v10826 = vrot.slane %v10808, 7
    %v10828 = vunpack.c.l.b16 %v4639
    %v10829 = vunpack.c.h.b16 %v4639
    %v10830 = vpack.c.b16 %v10828, %v10828
    %v10831 = vpack.c.b16 %v10829, %v10829
    %v10833 = vshrl.u32 %v10830, 16
    %v10836 = vshrl.u32 %v10831, 16
    %v10838 = vrot.slane %v10830, 1
    %v10839 = vrot.slane %v10831, 1
    %v10840 = vrot.slane %v10833, 1
    %v10841 = vrot.slane %v10836, 1
    %v10842 = vrot.slane %v10830, 2
    %v10843 = vrot.slane %v10831, 2
    %v10844 = vrot.slane %v10833, 2
    %v10845 = vrot.slane %v10836, 2
    %v10846 = vrot.slane %v10830, 3
    %v10847 = vrot.slane %v10831, 3
    %v10848 = vrot.slane %v9618, 3
    %v10849 = vrot.slane %v9622, 3
    %v10851 = vshrl.u32 %v10812, 16
    %v10853 = vrot.slane %v10851, 3
    %v10855 = vshrl.u32 %v10816, 16
    %v10857 = vrot.slane %v10855, 3
    %v10859 = vshrl.u32 %v10817, 16
    %v10861 = vrot.slane %v10859, 3
    %v10863 = vshrl.u32 %v10818, 16
    %v10865 = vrot.slane %v10863, 3
    %v10867 = vshrl.u32 %v10819, 16
    %v10869 = vrot.slane %v10867, 3
    %v10871 = vshrl.u32 %v10820, 16
    %v10873 = vrot.slane %v10871, 3
    %v10875 = vshrl.u32 %v10821, 16
    %v10877 = vrot.slane %v10875, 3
    %v10879 = vshrl.u32 %v10822, 16
    %v10881 = vrot.slane %v10879, 3
    %v10883 = vshrl.u32 %v10823, 16
    %v10885 = vrot.slane %v10883, 3
    %v10887 = vshrl.u32 %v10824, 16
    %v10889 = vrot.slane %v10887, 3
    %v10891 = vshrl.u32 %v10825, 16
    %v10893 = vrot.slane %v10891, 3
    %v10895 = vshrl.u32 %v10826, 16
    %v10897 = vrot.slane %v10895, 3
    %v10912 = vshll.u32 %v10830, 16
    %v10914 = vshll.u32 %v10831, 16
    %v10917 = vshll.u32 %v10833, 16
    %v10920 = vshll.u32 %v10836, 16
    %v10923 = vshll.u32 %v10838, 16
    %v10926 = vshll.u32 %v10839, 16
    %v10929 = vshll.u32 %v10840, 16
    %v10932 = vshll.u32 %v10841, 16
    %v10935 = vshll.u32 %v10842, 16
    %v10938 = vshll.u32 %v10843, 16
    %v10941 = vshll.u32 %v10844, 16
    %v10944 = vshll.u32 %v10845, 16
    %v10947 = vshll.u32 %v10846, 16
    %v10950 = vshll.u32 %v10847, 16
    %v10966 = vsel %vm4758, %v10848, %v10912
    %v10967 = vsel %vm4758, %v10849, %v10914
    %v10968 = vsel %vm4758, %v10853, %v10917
    %v10969 = vsel %vm4758, %v10857, %v10920
    %v10970 = vsel %vm4758, %v10861, %v10923
    %v10971 = vsel %vm4758, %v10865, %v10926
    %v10972 = vsel %vm4758, %v10869, %v10929
    %v10973 = vsel %vm4758, %v10873, %v10932
    %v10974 = vsel %vm4758, %v10877, %v10935
    %v10975 = vsel %vm4758, %v10881, %v10938
    %v10976 = vsel %vm4758, %v10885, %v10941
    %v10977 = vsel %vm4758, %v10889, %v10944
    %v10978 = vsel %vm4758, %v10893, %v10947
    %v10979 = vsel %vm4758, %v10897, %v10950
    %s10980 = scalar_lea.vmem [#allocation4], 4480
    %v10981 = vld [vmem:[%s10980] sm:$0xf]
    %v10982 = vld [vmem:[%s10980 + $0x4] sm:$0xf]
    %v10983 = vld [vmem:[%s10980 + $0x8] sm:$0xf]
    %v10984 = vld [vmem:[%s10980 + $0xc] sm:$0xf]
    %v10985 = vld [vmem:[%s10980 + $0x10] sm:$0xf]
    %v10986 = vld [vmem:[%s10980 + $0x14] sm:$0xf]
    %v10987 = vld [vmem:[%s10980 + $0x18] sm:$0xf]
    %v10988 = vld [vmem:[%s10980 + $0x1c] sm:$0xf]
    %v10989 = vld [vmem:[%s10980 + $0x20] sm:$0xf]
    %v10990 = vld [vmem:[%s10980 + $0x24] sm:$0xf]
    %v10991 = vld [vmem:[%s10980 + $0x28] sm:$0xf]
    %v10992 = vld [vmem:[%s10980 + $0x2c] sm:$0xf]
    %v10993 = vld [vmem:[%s10980 + $0x30] sm:$0xf]
    %v10994 = vld [vmem:[%s10980 + $0x34] sm:$0xf]
    %v10995 = vld [vmem:[%s10980 + $0x38] sm:$0xf]
    %v10996 = vld [vmem:[%s10980 + $0x3c] sm:$0xf]
    %v10997 = vld [vmem:[%s10980 + $0x40] sm:$0xf]
    %v10998 = vld [vmem:[%s10980 + $0x44] sm:$0xf]
    %v10999 = vld [vmem:[%s10980 + $0x48] sm:$0xf]
    %v11000 = vld [vmem:[%s10980 + $0x4c] sm:$0xf]
    %v11001 = vld [vmem:[%s10980 + $0x50] sm:$0xf]
    %v11002 = vld [vmem:[%s10980 + $0x54] sm:$0xf]
    %v11003 = vld [vmem:[%s10980 + $0x58] sm:$0xf]
    %v11004 = vld [vmem:[%s10980 + $0x5c] sm:$0xf]
    %v11005 = vld [vmem:[%s10980 + $0x60] sm:$0xf]
    %v11006 = vld [vmem:[%s10980 + $0x64] sm:$0xf]
    %v11007 = vld [vmem:[%s10980 + $0x68] sm:$0xf]
    %v11008 = vld [vmem:[%s10980 + $0x6c] sm:$0xf]
    %v11009 = vld [vmem:[%s10980 + $0x70] sm:$0xf]
    %v11010 = vld [vmem:[%s10980 + $0x74] sm:$0xf]
    %v11011 = vld [vmem:[%s10980 + $0x78] sm:$0xf]
    %v11012 = vld [vmem:[%s10980 + $0x7c] sm:$0xf]
    %v11013 = vld [vmem:[%s10980 + $0x80] sm:$0xf]
    %v11014 = vld [vmem:[%s10980 + $0x84] sm:$0xf]
    %v11015 = vld [vmem:[%s10980 + $0x88] sm:$0xf]
    %v11016 = vld [vmem:[%s10980 + $0x8c] sm:$0xf]
    %v11017 = vld [vmem:[%s10980 + $0x90] sm:$0xf]
    %v11018 = vld [vmem:[%s10980 + $0x94] sm:$0xf]
    %v11019 = vld [vmem:[%s10980 + $0x98] sm:$0xf]
    %v11020 = vld [vmem:[%s10980 + $0x9c] sm:$0xf]
    %v11021 = vld [vmem:[%s10980 + $0xa0] sm:$0xf]
    %v11022 = vld [vmem:[%s10980 + $0xa4] sm:$0xf]
    %v11023 = vld [vmem:[%s10980 + $0xa8] sm:$0xf]
    %v11024 = vld [vmem:[%s10980 + $0xac] sm:$0xf]
    %v11025 = vld [vmem:[%s10980 + $0xb0] sm:$0xf]
    %v11026 = vld [vmem:[%s10980 + $0xb4] sm:$0xf]
    %v11027 = vld [vmem:[%s10980 + $0xb8] sm:$0xf]
    %v11028 = vld [vmem:[%s10980 + $0xbc] sm:$0xf]
    %v11029 = vld [vmem:[%s10980 + $0xc0] sm:$0xf]
    %v11030 = vld [vmem:[%s10980 + $0xc4] sm:$0xf]
    %v11031 = vld [vmem:[%s10980 + $0xc8] sm:$0xf]
    %v11032 = vld [vmem:[%s10980 + $0xcc] sm:$0xf]
    %v11033 = vld [vmem:[%s10980 + $0xd0] sm:$0xf]
    %v11034 = vld [vmem:[%s10980 + $0xd4] sm:$0xf]
    %v11035 = vld [vmem:[%s10980 + $0xd8] sm:$0xf]
    %v11036 = vld [vmem:[%s10980 + $0xdc] sm:$0xf]
    %v11037 = vld [vmem:[%s10980 + $0xe0] sm:$0xf]
    %v11038 = vld [vmem:[%s10980 + $0xe4] sm:$0xf]
    %v11039 = vld [vmem:[%s10980 + $0xe8] sm:$0xf]
    %v11040 = vld [vmem:[%s10980 + $0xec] sm:$0xf]
    %v11041 = vld [vmem:[%s10980 + $0xf0] sm:$0xf]
    %v11042 = vld [vmem:[%s10980 + $0xf4] sm:$0xf]
    %v11043 = vld [vmem:[%s10980 + $0xf8] sm:$0xf]
    %v11044 = vld [vmem:[%s10980 + $0xfc] sm:$0xf]
    %v11045 = vld [vmem:[%s10980 + $0x100] sm:$0xf]
    %v11046 = vld [vmem:[%s10980 + $0x104] sm:$0xf]
    %v11047 = vld [vmem:[%s10980 + $0x108] sm:$0xf]
    %v11048 = vld [vmem:[%s10980 + $0x10c] sm:$0xf]
    %v11049 = vld [vmem:[%s10980 + $0x110] sm:$0xf]
    %v11050 = vld [vmem:[%s10980 + $0x114] sm:$0xf]
    %v11051 = vld [vmem:[%s10980 + $0x118] sm:$0xf]
    %v11052 = vld [vmem:[%s10980 + $0x11c] sm:$0xf]
    %v11053 = vld [vmem:[%s10980 + $0x120] sm:$0xf]
    %v11054 = vld [vmem:[%s10980 + $0x124] sm:$0xf]
    %v11055 = vld [vmem:[%s10980 + $0x128] sm:$0xf]
    %v11056 = vld [vmem:[%s10980 + $0x12c] sm:$0xf]
    %v11057 = vld [vmem:[%s10980 + $0x130] sm:$0xf]
    %v11058 = vld [vmem:[%s10980 + $0x134] sm:$0xf]
    %v11059 = vld [vmem:[%s10980 + $0x138] sm:$0xf]
    %v11060 = vld [vmem:[%s10980 + $0x13c] sm:$0xf]
    %v11061 = vld [vmem:[%s10980 + $0x140] sm:$0xf]
    %v11062 = vld [vmem:[%s10980 + $0x144] sm:$0xf]
    %v11063 = vld [vmem:[%s10980 + $0x148] sm:$0xf]
    %v11064 = vld [vmem:[%s10980 + $0x14c] sm:$0xf]
    %v11065 = vld [vmem:[%s10980 + $0x150] sm:$0xf]
    %v11066 = vld [vmem:[%s10980 + $0x154] sm:$0xf]
    %v11067 = vld [vmem:[%s10980 + $0x158] sm:$0xf]
    %v11068 = vld [vmem:[%s10980 + $0x15c] sm:$0xf]
    %v11069 = vld [vmem:[%s10980 + $0x160] sm:$0xf]
    %v11070 = vld [vmem:[%s10980 + $0x164] sm:$0xf]
    %v11071 = vld [vmem:[%s10980 + $0x168] sm:$0xf]
    %v11072 = vld [vmem:[%s10980 + $0x16c] sm:$0xf]
    %v11073 = vld [vmem:[%s10980 + $0x170] sm:$0xf]
    %v11074 = vld [vmem:[%s10980 + $0x174] sm:$0xf]
    %v11075 = vld [vmem:[%s10980 + $0x178] sm:$0xf]
    %v11076 = vld [vmem:[%s10980 + $0x17c] sm:$0xf]
    %v11077 = vld [vmem:[%s10980 + $0x180] sm:$0xf]
    %v11078 = vld [vmem:[%s10980 + $0x184] sm:$0xf]
    %v11079 = vld [vmem:[%s10980 + $0x188] sm:$0xf]
    %v11080 = vld [vmem:[%s10980 + $0x18c] sm:$0xf]
    %v11081 = vld [vmem:[%s10980 + $0x190] sm:$0xf]
    %v11082 = vld [vmem:[%s10980 + $0x194] sm:$0xf]
    %v11083 = vld [vmem:[%s10980 + $0x198] sm:$0xf]
    %v11084 = vld [vmem:[%s10980 + $0x19c] sm:$0xf]
    %v11085 = vld [vmem:[%s10980 + $0x1a0] sm:$0xf]
    %v11086 = vld [vmem:[%s10980 + $0x1a4] sm:$0xf]
    %v11087 = vld [vmem:[%s10980 + $0x1a8] sm:$0xf]
    %v11088 = vld [vmem:[%s10980 + $0x1ac] sm:$0xf]
    %v11089 = vld [vmem:[%s10980 + $0x1b0] sm:$0xf]
    %v11090 = vld [vmem:[%s10980 + $0x1b4] sm:$0xf]
    %v11091 = vld [vmem:[%s10980 + $0x1b8] sm:$0xf]
    %v11092 = vld [vmem:[%s10980 + $0x1bc] sm:$0xf]
    %v11093 = vld [vmem:[%s10980 + $0x1c0] sm:$0xf]
    %v11094 = vld [vmem:[%s10980 + $0x1c4] sm:$0xf]
    %v11095 = vld [vmem:[%s10980 + $0x1c8] sm:$0xf]
    %v11096 = vld [vmem:[%s10980 + $0x1cc] sm:$0xf]
    %v11097 = vld [vmem:[%s10980 + $0x1d0] sm:$0xf]
    %v11098 = vld [vmem:[%s10980 + $0x1d4] sm:$0xf]
    %v11099 = vld [vmem:[%s10980 + $0x1d8] sm:$0xf]
    %v11100 = vld [vmem:[%s10980 + $0x1dc] sm:$0xf]
    %v11101 = vld [vmem:[%s10980 + $0x1e0] sm:$0xf]
    %v11102 = vld [vmem:[%s10980 + $0x1e4] sm:$0xf]
    %v11103 = vld [vmem:[%s10980 + $0x1e8] sm:$0xf]
    %v11104 = vld [vmem:[%s10980 + $0x1ec] sm:$0xf]
    %v11105 = vld [vmem:[%s10980 + $0x1f0] sm:$0xf]
    %v11106 = vld [vmem:[%s10980 + $0x1f4] sm:$0xf]
    %v11107 = vld [vmem:[%s10980 + $0x1f8] sm:$0xf]
    %v11108 = vld [vmem:[%s10980 + $0x1fc] sm:$0xf]
    %v11109 = vld [vmem:[%s10980 + $0x200] sm:$0xf]
    %v11110 = vld [vmem:[%s10980 + $0x204] sm:$0xf]
    %v11111 = vld [vmem:[%s10980 + $0x208] sm:$0xf]
    %v11112 = vld [vmem:[%s10980 + $0x20c] sm:$0xf]
    %v11113 = vld [vmem:[%s10980 + $0x210] sm:$0xf]
    %v11114 = vld [vmem:[%s10980 + $0x214] sm:$0xf]
    %v11115 = vld [vmem:[%s10980 + $0x218] sm:$0xf]
    %v11116 = vld [vmem:[%s10980 + $0x21c] sm:$0xf]
    %v11117 = vld [vmem:[%s10980 + $0x220] sm:$0xf]
    %v11118 = vld [vmem:[%s10980 + $0x224] sm:$0xf]
    %v11119 = vld [vmem:[%s10980 + $0x228] sm:$0xf]
    %v11120 = vld [vmem:[%s10980 + $0x22c] sm:$0xf]
    %v11121 = vld [vmem:[%s10980 + $0x230] sm:$0xf]
    %v11122 = vld [vmem:[%s10980 + $0x234] sm:$0xf]
    %v11123 = vld [vmem:[%s10980 + $0x238] sm:$0xf]
    %v11124 = vld [vmem:[%s10980 + $0x23c] sm:$0xf]
    %v11125 = vld [vmem:[%s10980 + $0x240] sm:$0xf]
    %v11126 = vld [vmem:[%s10980 + $0x244] sm:$0xf]
    %v11127 = vld [vmem:[%s10980 + $0x248] sm:$0xf]
    %v11128 = vld [vmem:[%s10980 + $0x24c] sm:$0xf]
    %v11129 = vld [vmem:[%s10980 + $0x250] sm:$0xf]
    %v11130 = vld [vmem:[%s10980 + $0x254] sm:$0xf]
    %v11131 = vld [vmem:[%s10980 + $0x258] sm:$0xf]
    %v11132 = vld [vmem:[%s10980 + $0x25c] sm:$0xf]
    %v11133 = vld [vmem:[%s10980 + $0x260] sm:$0xf]
    %v11134 = vld [vmem:[%s10980 + $0x264] sm:$0xf]
    %v11135 = vld [vmem:[%s10980 + $0x268] sm:$0xf]
    %v11136 = vld [vmem:[%s10980 + $0x26c] sm:$0xf]
    %v11137 = vld [vmem:[%s10980 + $0x270] sm:$0xf]
    %v11138 = vld [vmem:[%s10980 + $0x274] sm:$0xf]
    %v11139 = vld [vmem:[%s10980 + $0x278] sm:$0xf]
    %v11140 = vld [vmem:[%s10980 + $0x27c] sm:$0xf]
    %v11141 = vld [vmem:[%s10980 + $0x280] sm:$0xf]
    %v11142 = vld [vmem:[%s10980 + $0x284] sm:$0xf]
    %v11143 = vld [vmem:[%s10980 + $0x288] sm:$0xf]
    %v11144 = vld [vmem:[%s10980 + $0x28c] sm:$0xf]
    %v11145 = vld [vmem:[%s10980 + $0x290] sm:$0xf]
    %v11146 = vld [vmem:[%s10980 + $0x294] sm:$0xf]
    %v11147 = vld [vmem:[%s10980 + $0x298] sm:$0xf]
    %v11148 = vld [vmem:[%s10980 + $0x29c] sm:$0xf]
    %v11149 = vld [vmem:[%s10980 + $0x2a0] sm:$0xf]
    %v11150 = vld [vmem:[%s10980 + $0x2a4] sm:$0xf]
    %v11151 = vld [vmem:[%s10980 + $0x2a8] sm:$0xf]
    %v11152 = vld [vmem:[%s10980 + $0x2ac] sm:$0xf]
    %v11153 = vld [vmem:[%s10980 + $0x2b0] sm:$0xf]
    %v11154 = vld [vmem:[%s10980 + $0x2b4] sm:$0xf]
    %v11155 = vld [vmem:[%s10980 + $0x2b8] sm:$0xf]
    %v11156 = vld [vmem:[%s10980 + $0x2bc] sm:$0xf]
    %v11157 = vld [vmem:[%s10980 + $0x2c0] sm:$0xf]
    %v11158 = vld [vmem:[%s10980 + $0x2c4] sm:$0xf]
    %v11159 = vld [vmem:[%s10980 + $0x2c8] sm:$0xf]
    %v11160 = vld [vmem:[%s10980 + $0x2cc] sm:$0xf]
    %v11161 = vld [vmem:[%s10980 + $0x2d0] sm:$0xf]
    %v11162 = vld [vmem:[%s10980 + $0x2d4] sm:$0xf]
    %v11163 = vld [vmem:[%s10980 + $0x2d8] sm:$0xf]
    %v11164 = vld [vmem:[%s10980 + $0x2dc] sm:$0xf]
    %v11165 = vld [vmem:[%s10980 + $0x2e0] sm:$0xf]
    %v11166 = vld [vmem:[%s10980 + $0x2e4] sm:$0xf]
    %v11167 = vld [vmem:[%s10980 + $0x2e8] sm:$0xf]
    %v11168 = vld [vmem:[%s10980 + $0x2ec] sm:$0xf]
    %v11169 = vld [vmem:[%s10980 + $0x2f0] sm:$0xf]
    %v11170 = vld [vmem:[%s10980 + $0x2f4] sm:$0xf]
    %v11171 = vld [vmem:[%s10980 + $0x2f8] sm:$0xf]
    %v11172 = vld [vmem:[%s10980 + $0x2fc] sm:$0xf]
    %v11173 = vld [vmem:[%s10980 + $0x300] sm:$0xf]
    %v11174 = vld [vmem:[%s10980 + $0x304] sm:$0xf]
    %v11175 = vld [vmem:[%s10980 + $0x308] sm:$0xf]
    %v11176 = vld [vmem:[%s10980 + $0x30c] sm:$0xf]
    %v11177 = vld [vmem:[%s10980 + $0x310] sm:$0xf]
    %v11178 = vld [vmem:[%s10980 + $0x314] sm:$0xf]
    %v11179 = vld [vmem:[%s10980 + $0x318] sm:$0xf]
    %v11180 = vld [vmem:[%s10980 + $0x31c] sm:$0xf]
    %v11181 = vld [vmem:[%s10980 + $0x320] sm:$0xf]
    %v11182 = vld [vmem:[%s10980 + $0x324] sm:$0xf]
    %v11183 = vld [vmem:[%s10980 + $0x328] sm:$0xf]
    %v11184 = vld [vmem:[%s10980 + $0x32c] sm:$0xf]
    %v11185 = vld [vmem:[%s10980 + $0x330] sm:$0xf]
    %v11186 = vld [vmem:[%s10980 + $0x334] sm:$0xf]
    %v11187 = vld [vmem:[%s10980 + $0x338] sm:$0xf]
    %v11188 = vld [vmem:[%s10980 + $0x33c] sm:$0xf]
    %v11189 = vld [vmem:[%s10980 + $0x340] sm:$0xf]
    %v11190 = vld [vmem:[%s10980 + $0x344] sm:$0xf]
    %v11191 = vld [vmem:[%s10980 + $0x348] sm:$0xf]
    %v11192 = vld [vmem:[%s10980 + $0x34c] sm:$0xf]
    %v11193 = vld [vmem:[%s10980 + $0x350] sm:$0xf]
    %v11194 = vld [vmem:[%s10980 + $0x354] sm:$0xf]
    %v11195 = vld [vmem:[%s10980 + $0x358] sm:$0xf]
    %v11196 = vld [vmem:[%s10980 + $0x35c] sm:$0xf]
    %v11197 = vld [vmem:[%s10980 + $0x360] sm:$0xf]
    %v11198 = vld [vmem:[%s10980 + $0x364] sm:$0xf]
    %v11199 = vld [vmem:[%s10980 + $0x368] sm:$0xf]
    %v11200 = vld [vmem:[%s10980 + $0x36c] sm:$0xf]
    %v11201 = vld [vmem:[%s10980 + $0x370] sm:$0xf]
    %v11202 = vld [vmem:[%s10980 + $0x374] sm:$0xf]
    %v11203 = vld [vmem:[%s10980 + $0x378] sm:$0xf]
    %v11204 = vld [vmem:[%s10980 + $0x37c] sm:$0xf]
    %v11429 = vunpack.c.l.b16 %v10981
    %v11430 = vunpack.c.l.b16 %v10982
    %v11431 = vunpack.c.l.b16 %v10983
    %v11432 = vunpack.c.l.b16 %v10984
    %v11433 = vunpack.c.l.b16 %v10985
    %v11434 = vunpack.c.l.b16 %v10986
    %v11435 = vunpack.c.l.b16 %v10987
    %v11436 = vunpack.c.l.b16 %v10988
    %v11437 = vunpack.c.l.b16 %v10989
    %v11438 = vunpack.c.l.b16 %v10990
    %v11439 = vunpack.c.l.b16 %v10991
    %v11440 = vunpack.c.l.b16 %v10992
    %v11441 = vunpack.c.l.b16 %v10993
    %v11442 = vunpack.c.l.b16 %v10994
    %v11443 = vunpack.c.l.b16 %v10995
    %v11444 = vunpack.c.l.b16 %v10996
    %v11445 = vunpack.c.l.b16 %v10997
    %v11446 = vunpack.c.l.b16 %v10998
    %v11447 = vunpack.c.l.b16 %v10999
    %v11448 = vunpack.c.l.b16 %v11000
    %v11449 = vunpack.c.l.b16 %v11001
    %v11450 = vunpack.c.l.b16 %v11002
    %v11451 = vunpack.c.l.b16 %v11003
    %v11452 = vunpack.c.l.b16 %v11004
    %v11453 = vunpack.c.l.b16 %v11005
    %v11454 = vunpack.c.l.b16 %v11006
    %v11455 = vunpack.c.l.b16 %v11007
    %v11456 = vunpack.c.l.b16 %v11008
    %v11457 = vunpack.c.l.b16 %v11009
    %v11458 = vunpack.c.l.b16 %v11010
    %v11459 = vunpack.c.l.b16 %v11011
    %v11460 = vunpack.c.l.b16 %v11012
    %v11461 = vunpack.c.l.b16 %v11013
    %v11462 = vunpack.c.l.b16 %v11014
    %v11463 = vunpack.c.l.b16 %v11015
    %v11464 = vunpack.c.l.b16 %v11016
    %v11465 = vunpack.c.l.b16 %v11017
    %v11466 = vunpack.c.l.b16 %v11018
    %v11467 = vunpack.c.l.b16 %v11019
    %v11468 = vunpack.c.l.b16 %v11020
    %v11469 = vunpack.c.l.b16 %v11021
    %v11470 = vunpack.c.l.b16 %v11022
    %v11471 = vunpack.c.l.b16 %v11023
    %v11472 = vunpack.c.l.b16 %v11024
    %v11473 = vunpack.c.l.b16 %v11025
    %v11474 = vunpack.c.l.b16 %v11026
    %v11475 = vunpack.c.l.b16 %v11027
    %v11476 = vunpack.c.l.b16 %v11028
    %v11477 = vunpack.c.l.b16 %v11029
    %v11478 = vunpack.c.l.b16 %v11030
    %v11479 = vunpack.c.l.b16 %v11031
    %v11480 = vunpack.c.l.b16 %v11032
    %v11481 = vunpack.c.l.b16 %v11033
    %v11482 = vunpack.c.l.b16 %v11034
    %v11483 = vunpack.c.l.b16 %v11035
    %v11484 = vunpack.c.l.b16 %v11036
    %v11485 = vunpack.c.l.b16 %v11037
    %v11486 = vunpack.c.l.b16 %v11038
    %v11487 = vunpack.c.l.b16 %v11039
    %v11488 = vunpack.c.l.b16 %v11040
    %v11489 = vunpack.c.l.b16 %v11041
    %v11490 = vunpack.c.l.b16 %v11042
    %v11491 = vunpack.c.l.b16 %v11043
    %v11492 = vunpack.c.l.b16 %v11044
    %v11493 = vunpack.c.l.b16 %v11045
    %v11494 = vunpack.c.l.b16 %v11046
    %v11495 = vunpack.c.l.b16 %v11047
    %v11496 = vunpack.c.l.b16 %v11048
    %v11497 = vunpack.c.l.b16 %v11049
    %v11498 = vunpack.c.l.b16 %v11050
    %v11499 = vunpack.c.l.b16 %v11051
    %v11500 = vunpack.c.l.b16 %v11052
    %v11501 = vunpack.c.l.b16 %v11053
    %v11502 = vunpack.c.l.b16 %v11054
    %v11503 = vunpack.c.l.b16 %v11055
    %v11504 = vunpack.c.l.b16 %v11056
    %v11505 = vunpack.c.l.b16 %v11057
    %v11506 = vunpack.c.l.b16 %v11058
    %v11507 = vunpack.c.l.b16 %v11059
    %v11508 = vunpack.c.l.b16 %v11060
    %v11509 = vunpack.c.l.b16 %v11061
    %v11510 = vunpack.c.l.b16 %v11062
    %v11511 = vunpack.c.l.b16 %v11063
    %v11512 = vunpack.c.l.b16 %v11064
    %v11513 = vunpack.c.l.b16 %v11065
    %v11514 = vunpack.c.l.b16 %v11066
    %v11515 = vunpack.c.l.b16 %v11067
    %v11516 = vunpack.c.l.b16 %v11068
    %v11517 = vunpack.c.l.b16 %v11069
    %v11518 = vunpack.c.l.b16 %v11070
    %v11519 = vunpack.c.l.b16 %v11071
    %v11520 = vunpack.c.l.b16 %v11072
    %v11521 = vunpack.c.l.b16 %v11073
    %v11522 = vunpack.c.l.b16 %v11074
    %v11523 = vunpack.c.l.b16 %v11075
    %v11524 = vunpack.c.l.b16 %v11076
    %v11525 = vunpack.c.l.b16 %v11077
    %v11526 = vunpack.c.l.b16 %v11078
    %v11527 = vunpack.c.l.b16 %v11079
    %v11528 = vunpack.c.l.b16 %v11080
    %v11529 = vunpack.c.l.b16 %v11081
    %v11530 = vunpack.c.l.b16 %v11082
    %v11531 = vunpack.c.l.b16 %v11083
    %v11532 = vunpack.c.l.b16 %v11084
    %v11533 = vunpack.c.l.b16 %v11085
    %v11534 = vunpack.c.l.b16 %v11086
    %v11535 = vunpack.c.l.b16 %v11087
    %v11536 = vunpack.c.l.b16 %v11088
    %v11537 = vunpack.c.l.b16 %v11089
    %v11538 = vunpack.c.l.b16 %v11090
    %v11539 = vunpack.c.l.b16 %v11091
    %v11540 = vunpack.c.l.b16 %v11092
    %v11541 = vunpack.c.l.b16 %v11093
    %v11542 = vunpack.c.l.b16 %v11094
    %v11543 = vunpack.c.l.b16 %v11095
    %v11544 = vunpack.c.l.b16 %v11096
    %v11545 = vunpack.c.l.b16 %v11097
    %v11546 = vunpack.c.l.b16 %v11098
    %v11547 = vunpack.c.l.b16 %v11099
    %v11548 = vunpack.c.l.b16 %v11100
    %v11549 = vunpack.c.l.b16 %v11101
    %v11550 = vunpack.c.l.b16 %v11102
    %v11551 = vunpack.c.l.b16 %v11103
    %v11552 = vunpack.c.l.b16 %v11104
    %v11553 = vunpack.c.l.b16 %v11105
    %v11554 = vunpack.c.l.b16 %v11106
    %v11555 = vunpack.c.l.b16 %v11107
    %v11556 = vunpack.c.l.b16 %v11108
    %v11557 = vunpack.c.l.b16 %v11109
    %v11558 = vunpack.c.l.b16 %v11110
    %v11559 = vunpack.c.l.b16 %v11111
    %v11560 = vunpack.c.l.b16 %v11112
    %v11561 = vunpack.c.l.b16 %v11113
    %v11562 = vunpack.c.l.b16 %v11114
    %v11563 = vunpack.c.l.b16 %v11115
    %v11564 = vunpack.c.l.b16 %v11116
    %v11565 = vunpack.c.l.b16 %v11117
    %v11566 = vunpack.c.l.b16 %v11118
    %v11567 = vunpack.c.l.b16 %v11119
    %v11568 = vunpack.c.l.b16 %v11120
    %v11569 = vunpack.c.l.b16 %v11121
    %v11570 = vunpack.c.l.b16 %v11122
    %v11571 = vunpack.c.l.b16 %v11123
    %v11572 = vunpack.c.l.b16 %v11124
    %v11573 = vunpack.c.l.b16 %v11125
    %v11574 = vunpack.c.l.b16 %v11126
    %v11575 = vunpack.c.l.b16 %v11127
    %v11576 = vunpack.c.l.b16 %v11128
    %v11577 = vunpack.c.l.b16 %v11129
    %v11578 = vunpack.c.l.b16 %v11130
    %v11579 = vunpack.c.l.b16 %v11131
    %v11580 = vunpack.c.l.b16 %v11132
    %v11581 = vunpack.c.l.b16 %v11133
    %v11582 = vunpack.c.l.b16 %v11134
    %v11583 = vunpack.c.l.b16 %v11135
    %v11584 = vunpack.c.l.b16 %v11136
    %v11585 = vunpack.c.l.b16 %v11137
    %v11586 = vunpack.c.l.b16 %v11138
    %v11587 = vunpack.c.l.b16 %v11139
    %v11588 = vunpack.c.l.b16 %v11140
    %v11589 = vunpack.c.l.b16 %v11141
    %v11590 = vunpack.c.l.b16 %v11142
    %v11591 = vunpack.c.l.b16 %v11143
    %v11592 = vunpack.c.l.b16 %v11144
    %v11593 = vunpack.c.l.b16 %v11145
    %v11594 = vunpack.c.l.b16 %v11146
    %v11595 = vunpack.c.l.b16 %v11147
    %v11596 = vunpack.c.l.b16 %v11148
    %v11597 = vunpack.c.l.b16 %v11149
    %v11598 = vunpack.c.l.b16 %v11150
    %v11599 = vunpack.c.l.b16 %v11151
    %v11600 = vunpack.c.l.b16 %v11152
    %v11601 = vunpack.c.l.b16 %v11153
    %v11602 = vunpack.c.l.b16 %v11154
    %v11603 = vunpack.c.l.b16 %v11155
    %v11604 = vunpack.c.l.b16 %v11156
    %v11605 = vunpack.c.l.b16 %v11157
    %v11606 = vunpack.c.l.b16 %v11158
    %v11607 = vunpack.c.l.b16 %v11159
    %v11608 = vunpack.c.l.b16 %v11160
    %v11609 = vunpack.c.l.b16 %v11161
    %v11610 = vunpack.c.l.b16 %v11162
    %v11611 = vunpack.c.l.b16 %v11163
    %v11612 = vunpack.c.l.b16 %v11164
    %v11613 = vunpack.c.l.b16 %v11165
    %v11614 = vunpack.c.l.b16 %v11166
    %v11615 = vunpack.c.l.b16 %v11167
    %v11616 = vunpack.c.l.b16 %v11168
    %v11617 = vunpack.c.l.b16 %v11169
    %v11618 = vunpack.c.l.b16 %v11170
    %v11619 = vunpack.c.l.b16 %v11171
    %v11620 = vunpack.c.l.b16 %v11172
    %v11621 = vunpack.c.l.b16 %v11173
    %v11622 = vunpack.c.l.b16 %v11174
    %v11623 = vunpack.c.l.b16 %v11175
    %v11624 = vunpack.c.l.b16 %v11176
    %v11625 = vunpack.c.l.b16 %v11177
    %v11626 = vunpack.c.l.b16 %v11178
    %v11627 = vunpack.c.l.b16 %v11179
    %v11628 = vunpack.c.l.b16 %v11180
    %v11629 = vunpack.c.l.b16 %v11181
    %v11630 = vunpack.c.l.b16 %v11182
    %v11631 = vunpack.c.l.b16 %v11183
    %v11632 = vunpack.c.l.b16 %v11184
    %v11633 = vunpack.c.l.b16 %v11185
    %v11634 = vunpack.c.l.b16 %v11186
    %v11635 = vunpack.c.l.b16 %v11187
    %v11636 = vunpack.c.l.b16 %v11188
    %v11637 = vunpack.c.l.b16 %v11189
    %v11638 = vunpack.c.l.b16 %v11190
    %v11639 = vunpack.c.l.b16 %v11191
    %v11640 = vunpack.c.l.b16 %v11192
    %v11641 = vunpack.c.l.b16 %v11193
    %v11642 = vunpack.c.l.b16 %v11194
    %v11643 = vunpack.c.l.b16 %v11195
    %v11644 = vunpack.c.l.b16 %v11196
    %v11645 = vunpack.c.l.b16 %v11197
    %v11646 = vunpack.c.l.b16 %v11198
    %v11647 = vunpack.c.l.b16 %v11199
    %v11648 = vunpack.c.l.b16 %v11200
    %v11649 = vunpack.c.l.b16 %v11201
    %v11650 = vunpack.c.l.b16 %v11202
    %v11651 = vunpack.c.l.b16 %v11203
    %v11652 = vunpack.c.l.b16 %v11204
    %v11653 = vpack.c.b16 %v11430, %v11429
    %v11654 = vpack.c.b16 %v11432, %v11431
    %v11655 = vpack.c.b16 %v11434, %v11433
    %v11656 = vpack.c.b16 %v11436, %v11435
    %v11657 = vpack.c.b16 %v11438, %v11437
    %v11658 = vpack.c.b16 %v11440, %v11439
    %v11659 = vpack.c.b16 %v11442, %v11441
    %v11660 = vpack.c.b16 %v11444, %v11443
    %v11661 = vpack.c.b16 %v11446, %v11445
    %v11662 = vpack.c.b16 %v11448, %v11447
    %v11663 = vpack.c.b16 %v11450, %v11449
    %v11664 = vpack.c.b16 %v11452, %v11451
    %v11665 = vpack.c.b16 %v11454, %v11453
    %v11666 = vpack.c.b16 %v11456, %v11455
    %v11667 = vpack.c.b16 %v11458, %v11457
    %v11668 = vpack.c.b16 %v11460, %v11459
    %v11669 = vpack.c.b16 %v11462, %v11461
    %v11670 = vpack.c.b16 %v11464, %v11463
    %v11671 = vpack.c.b16 %v11466, %v11465
    %v11672 = vpack.c.b16 %v11468, %v11467
    %v11673 = vpack.c.b16 %v11470, %v11469
    %v11674 = vpack.c.b16 %v11472, %v11471
    %v11675 = vpack.c.b16 %v11474, %v11473
    %v11676 = vpack.c.b16 %v11476, %v11475
    %v11677 = vpack.c.b16 %v11478, %v11477
    %v11678 = vpack.c.b16 %v11480, %v11479
    %v11679 = vpack.c.b16 %v11482, %v11481
    %v11680 = vpack.c.b16 %v11484, %v11483
    %v11681 = vpack.c.b16 %v11486, %v11485
    %v11682 = vpack.c.b16 %v11488, %v11487
    %v11683 = vpack.c.b16 %v11490, %v11489
    %v11684 = vpack.c.b16 %v11492, %v11491
    %v11685 = vpack.c.b16 %v11494, %v11493
    %v11686 = vpack.c.b16 %v11496, %v11495
    %v11687 = vpack.c.b16 %v11498, %v11497
    %v11688 = vpack.c.b16 %v11500, %v11499
    %v11689 = vpack.c.b16 %v11502, %v11501
    %v11690 = vpack.c.b16 %v11504, %v11503
    %v11691 = vpack.c.b16 %v11506, %v11505
    %v11692 = vpack.c.b16 %v11508, %v11507
    %v11693 = vpack.c.b16 %v11510, %v11509
    %v11694 = vpack.c.b16 %v11512, %v11511
    %v11695 = vpack.c.b16 %v11514, %v11513
    %v11696 = vpack.c.b16 %v11516, %v11515
    %v11697 = vpack.c.b16 %v11518, %v11517
    %v11698 = vpack.c.b16 %v11520, %v11519
    %v11699 = vpack.c.b16 %v11522, %v11521
    %v11700 = vpack.c.b16 %v11524, %v11523
    %v11701 = vpack.c.b16 %v11526, %v11525
    %v11702 = vpack.c.b16 %v11528, %v11527
    %v11703 = vpack.c.b16 %v11530, %v11529
    %v11704 = vpack.c.b16 %v11532, %v11531
    %v11705 = vpack.c.b16 %v11534, %v11533
    %v11706 = vpack.c.b16 %v11536, %v11535
    %v11707 = vpack.c.b16 %v11538, %v11537
    %v11708 = vpack.c.b16 %v11540, %v11539
    %v11709 = vpack.c.b16 %v11542, %v11541
    %v11710 = vpack.c.b16 %v11544, %v11543
    %v11711 = vpack.c.b16 %v11546, %v11545
    %v11712 = vpack.c.b16 %v11548, %v11547
    %v11713 = vpack.c.b16 %v11550, %v11549
    %v11714 = vpack.c.b16 %v11552, %v11551
    %v11715 = vpack.c.b16 %v11554, %v11553
    %v11716 = vpack.c.b16 %v11556, %v11555
    %v11717 = vpack.c.b16 %v11558, %v11557
    %v11718 = vpack.c.b16 %v11560, %v11559
    %v11719 = vpack.c.b16 %v11562, %v11561
    %v11720 = vpack.c.b16 %v11564, %v11563
    %v11721 = vpack.c.b16 %v11566, %v11565
    %v11722 = vpack.c.b16 %v11568, %v11567
    %v11723 = vpack.c.b16 %v11570, %v11569
    %v11724 = vpack.c.b16 %v11572, %v11571
    %v11725 = vpack.c.b16 %v11574, %v11573
    %v11726 = vpack.c.b16 %v11576, %v11575
    %v11727 = vpack.c.b16 %v11578, %v11577
    %v11728 = vpack.c.b16 %v11580, %v11579
    %v11729 = vpack.c.b16 %v11582, %v11581
    %v11730 = vpack.c.b16 %v11584, %v11583
    %v11731 = vpack.c.b16 %v11586, %v11585
    %v11732 = vpack.c.b16 %v11588, %v11587
    %v11733 = vpack.c.b16 %v11590, %v11589
    %v11734 = vpack.c.b16 %v11592, %v11591
    %v11735 = vpack.c.b16 %v11594, %v11593
    %v11736 = vpack.c.b16 %v11596, %v11595
    %v11737 = vpack.c.b16 %v11598, %v11597
    %v11738 = vpack.c.b16 %v11600, %v11599
    %v11739 = vpack.c.b16 %v11602, %v11601
    %v11740 = vpack.c.b16 %v11604, %v11603
    %v11741 = vpack.c.b16 %v11606, %v11605
    %v11742 = vpack.c.b16 %v11608, %v11607
    %v11743 = vpack.c.b16 %v11610, %v11609
    %v11744 = vpack.c.b16 %v11612, %v11611
    %v11745 = vpack.c.b16 %v11614, %v11613
    %v11746 = vpack.c.b16 %v11616, %v11615
    %v11747 = vpack.c.b16 %v11618, %v11617
    %v11748 = vpack.c.b16 %v11620, %v11619
    %v11749 = vpack.c.b16 %v11622, %v11621
    %v11750 = vpack.c.b16 %v11624, %v11623
    %v11751 = vpack.c.b16 %v11626, %v11625
    %v11752 = vpack.c.b16 %v11628, %v11627
    %v11753 = vpack.c.b16 %v11630, %v11629
    %v11754 = vpack.c.b16 %v11632, %v11631
    %v11755 = vpack.c.b16 %v11634, %v11633
    %v11756 = vpack.c.b16 %v11636, %v11635
    %v11757 = vpack.c.b16 %v11638, %v11637
    %v11758 = vpack.c.b16 %v11640, %v11639
    %v11759 = vpack.c.b16 %v11642, %v11641
    %v11760 = vpack.c.b16 %v11644, %v11643
    %v11761 = vpack.c.b16 %v11646, %v11645
    %v11762 = vpack.c.b16 %v11648, %v11647
    %v11763 = vpack.c.b16 %v11650, %v11649
    %v11764 = vpack.c.b16 %v11652, %v11651
    %11877 = vmatpush.bf16.msra.mxu0 %v11660
    %11878 = vmatpush.bf16.msra.mxu0 %v11659
    %11879 = vmatpush.bf16.msra.mxu0 %v11658
    %11880 = vmatpush.bf16.msra.mxu0 %v11657
    %11881 = vmatpush.bf16.msra.mxu0 %v11656
    %11882 = vmatpush.bf16.msra.mxu0 %v11655
    %11883 = vmatpush.bf16.msra.mxu0 %v11654
    %11884 = vmatpush.bf16.msra.mxu0 %v11653
    %11885 = vmatmul.bf16.gmra.mxu0 %v10966
    %v11886 = vpop.f32.mrf.mxu0
    %v11887 = vadd.f32 0.0, %v11886
    %v11888 = vpop.f32.mrf.mxu0
    %11889 = vdwg.mxu0
    %11890 = vmatpush.bf16.msra.mxu0 %v11668
    %11891 = vmatpush.bf16.msra.mxu0 %v11667
    %11892 = vmatpush.bf16.msra.mxu0 %v11666
    %11893 = vmatpush.bf16.msra.mxu0 %v11665
    %11894 = vmatpush.bf16.msra.mxu0 %v11664
    %11895 = vmatpush.bf16.msra.mxu0 %v11663
    %11896 = vmatpush.bf16.msra.mxu0 %v11662
    %11897 = vmatpush.bf16.msra.mxu0 %v11661
    %11898 = vmatmul.bf16.gmra.mxu0 %v10967
    %v11899 = vpop.f32.mrf.mxu0
    %v11900 = vadd.f32 %v11887, %v11899
    %v11901 = vpop.f32.mrf.mxu0
    %11902 = vdwg.mxu0
    %11903 = vmatpush.bf16.msra.mxu0 %v11676
    %11904 = vmatpush.bf16.msra.mxu0 %v11675
    %11905 = vmatpush.bf16.msra.mxu0 %v11674
    %11906 = vmatpush.bf16.msra.mxu0 %v11673
    %11907 = vmatpush.bf16.msra.mxu0 %v11672
    %11908 = vmatpush.bf16.msra.mxu0 %v11671
    %11909 = vmatpush.bf16.msra.mxu0 %v11670
    %11910 = vmatpush.bf16.msra.mxu0 %v11669
    %11911 = vmatmul.bf16.gmra.mxu0 %v10968
    %v11912 = vpop.f32.mrf.mxu0
    %v11913 = vadd.f32 %v11900, %v11912
    %v11914 = vpop.f32.mrf.mxu0
    %11915 = vdwg.mxu0
    %11916 = vmatpush.bf16.msra.mxu0 %v11684
    %11917 = vmatpush.bf16.msra.mxu0 %v11683
    %11918 = vmatpush.bf16.msra.mxu0 %v11682
    %11919 = vmatpush.bf16.msra.mxu0 %v11681
    %11920 = vmatpush.bf16.msra.mxu0 %v11680
    %11921 = vmatpush.bf16.msra.mxu0 %v11679
    %11922 = vmatpush.bf16.msra.mxu0 %v11678
    %11923 = vmatpush.bf16.msra.mxu0 %v11677
    %11924 = vmatmul.bf16.gmra.mxu0 %v10969
    %v11925 = vpop.f32.mrf.mxu0
    %v11926 = vadd.f32 %v11913, %v11925
    %v11927 = vpop.f32.mrf.mxu0
    %11928 = vdwg.mxu0
    %11929 = vmatpush.bf16.msra.mxu0 %v11692
    %11930 = vmatpush.bf16.msra.mxu0 %v11691
    %11931 = vmatpush.bf16.msra.mxu0 %v11690
    %11932 = vmatpush.bf16.msra.mxu0 %v11689
    %11933 = vmatpush.bf16.msra.mxu0 %v11688
    %11934 = vmatpush.bf16.msra.mxu0 %v11687
    %11935 = vmatpush.bf16.msra.mxu0 %v11686
    %11936 = vmatpush.bf16.msra.mxu0 %v11685
    %11937 = vmatmul.bf16.gmra.mxu0 %v10970
    %v11938 = vpop.f32.mrf.mxu0
    %v11939 = vadd.f32 %v11926, %v11938
    %v11940 = vpop.f32.mrf.mxu0
    %11941 = vdwg.mxu0
    %11942 = vmatpush.bf16.msra.mxu0 %v11700
    %11943 = vmatpush.bf16.msra.mxu0 %v11699
    %11944 = vmatpush.bf16.msra.mxu0 %v11698
    %11945 = vmatpush.bf16.msra.mxu0 %v11697
    %11946 = vmatpush.bf16.msra.mxu0 %v11696
    %11947 = vmatpush.bf16.msra.mxu0 %v11695
    %11948 = vmatpush.bf16.msra.mxu0 %v11694
    %11949 = vmatpush.bf16.msra.mxu0 %v11693
    %11950 = vmatmul.bf16.gmra.mxu0 %v10971
    %v11951 = vpop.f32.mrf.mxu0
    %v11952 = vadd.f32 %v11939, %v11951
    %v11953 = vpop.f32.mrf.mxu0
    %11954 = vdwg.mxu0
    %11955 = vmatpush.bf16.msra.mxu0 %v11708
    %11956 = vmatpush.bf16.msra.mxu0 %v11707
    %11957 = vmatpush.bf16.msra.mxu0 %v11706
    %11958 = vmatpush.bf16.msra.mxu0 %v11705
    %11959 = vmatpush.bf16.msra.mxu0 %v11704
    %11960 = vmatpush.bf16.msra.mxu0 %v11703
    %11961 = vmatpush.bf16.msra.mxu0 %v11702
    %11962 = vmatpush.bf16.msra.mxu0 %v11701
    %11963 = vmatmul.bf16.gmra.mxu0 %v10972
    %v11964 = vpop.f32.mrf.mxu0
    %v11965 = vadd.f32 %v11952, %v11964
    %v11966 = vpop.f32.mrf.mxu0
    %11967 = vdwg.mxu0
    %11968 = vmatpush.bf16.msra.mxu0 %v11716
    %11969 = vmatpush.bf16.msra.mxu0 %v11715
    %11970 = vmatpush.bf16.msra.mxu0 %v11714
    %11971 = vmatpush.bf16.msra.mxu0 %v11713
    %11972 = vmatpush.bf16.msra.mxu0 %v11712
    %11973 = vmatpush.bf16.msra.mxu0 %v11711
    %11974 = vmatpush.bf16.msra.mxu0 %v11710
    %11975 = vmatpush.bf16.msra.mxu0 %v11709
    %11976 = vmatmul.bf16.gmra.mxu0 %v10973
    %v11977 = vpop.f32.mrf.mxu0
    %v11978 = vadd.f32 %v11965, %v11977
    %v11979 = vpop.f32.mrf.mxu0
    %11980 = vdwg.mxu0
    %11981 = vmatpush.bf16.msra.mxu0 %v11724
    %11982 = vmatpush.bf16.msra.mxu0 %v11723
    %11983 = vmatpush.bf16.msra.mxu0 %v11722
    %11984 = vmatpush.bf16.msra.mxu0 %v11721
    %11985 = vmatpush.bf16.msra.mxu0 %v11720
    %11986 = vmatpush.bf16.msra.mxu0 %v11719
    %11987 = vmatpush.bf16.msra.mxu0 %v11718
    %11988 = vmatpush.bf16.msra.mxu0 %v11717
    %11989 = vmatmul.bf16.gmra.mxu0 %v10974
    %v11990 = vpop.f32.mrf.mxu0
    %v11991 = vadd.f32 %v11978, %v11990
    %v11992 = vpop.f32.mrf.mxu0
    %11993 = vdwg.mxu0
    %11994 = vmatpush.bf16.msra.mxu0 %v11732
    %11995 = vmatpush.bf16.msra.mxu0 %v11731
    %11996 = vmatpush.bf16.msra.mxu0 %v11730
    %11997 = vmatpush.bf16.msra.mxu0 %v11729
    %11998 = vmatpush.bf16.msra.mxu0 %v11728
    %11999 = vmatpush.bf16.msra.mxu0 %v11727
    %12000 = vmatpush.bf16.msra.mxu0 %v11726
    %12001 = vmatpush.bf16.msra.mxu0 %v11725
    %12002 = vmatmul.bf16.gmra.mxu0 %v10975
    %v12003 = vpop.f32.mrf.mxu0
    %v12004 = vadd.f32 %v11991, %v12003
    %v12005 = vpop.f32.mrf.mxu0
    %12006 = vdwg.mxu0
    %12007 = vmatpush.bf16.msra.mxu0 %v11740
    %12008 = vmatpush.bf16.msra.mxu0 %v11739
    %12009 = vmatpush.bf16.msra.mxu0 %v11738
    %12010 = vmatpush.bf16.msra.mxu0 %v11737
    %12011 = vmatpush.bf16.msra.mxu0 %v11736
    %12012 = vmatpush.bf16.msra.mxu0 %v11735
    %12013 = vmatpush.bf16.msra.mxu0 %v11734
    %12014 = vmatpush.bf16.msra.mxu0 %v11733
    %12015 = vmatmul.bf16.gmra.mxu0 %v10976
    %v12016 = vpop.f32.mrf.mxu0
    %v12017 = vadd.f32 %v12004, %v12016
    %v12018 = vpop.f32.mrf.mxu0
    %12019 = vdwg.mxu0
    %12020 = vmatpush.bf16.msra.mxu0 %v11748
    %12021 = vmatpush.bf16.msra.mxu0 %v11747
    %12022 = vmatpush.bf16.msra.mxu0 %v11746
    %12023 = vmatpush.bf16.msra.mxu0 %v11745
    %12024 = vmatpush.bf16.msra.mxu0 %v11744
    %12025 = vmatpush.bf16.msra.mxu0 %v11743
    %12026 = vmatpush.bf16.msra.mxu0 %v11742
    %12027 = vmatpush.bf16.msra.mxu0 %v11741
    %12028 = vmatmul.bf16.gmra.mxu0 %v10977
    %v12029 = vpop.f32.mrf.mxu0
    %v12030 = vadd.f32 %v12017, %v12029
    %v12031 = vpop.f32.mrf.mxu0
    %12032 = vdwg.mxu0
    %12033 = vmatpush.bf16.msra.mxu0 %v11756
    %12034 = vmatpush.bf16.msra.mxu0 %v11755
    %12035 = vmatpush.bf16.msra.mxu0 %v11754
    %12036 = vmatpush.bf16.msra.mxu0 %v11753
    %12037 = vmatpush.bf16.msra.mxu0 %v11752
    %12038 = vmatpush.bf16.msra.mxu0 %v11751
    %12039 = vmatpush.bf16.msra.mxu0 %v11750
    %12040 = vmatpush.bf16.msra.mxu0 %v11749
    %12041 = vmatmul.bf16.gmra.mxu0 %v10978
    %v12042 = vpop.f32.mrf.mxu0
    %v12043 = vadd.f32 %v12030, %v12042
    %v12044 = vpop.f32.mrf.mxu0
    %12045 = vdwg.mxu0
    %12046 = vmatpush.bf16.msra.mxu0 %v11764
    %12047 = vmatpush.bf16.msra.mxu0 %v11763
    %12048 = vmatpush.bf16.msra.mxu0 %v11762
    %12049 = vmatpush.bf16.msra.mxu0 %v11761
    %12050 = vmatpush.bf16.msra.mxu0 %v11760
    %12051 = vmatpush.bf16.msra.mxu0 %v11759
    %12052 = vmatpush.bf16.msra.mxu0 %v11758
    %12053 = vmatpush.bf16.msra.mxu0 %v11757
    %12054 = vmatmul.bf16.gmra.mxu0 %v10979
    %v12055 = vpop.f32.mrf.mxu0
    %v12056 = vadd.f32 %v12043, %v12055
    %v12057 = vpop.f32.mrf.mxu0
    %12058 = vdwg.mxu0
    %v12059 = vadd.f32 %v10803, %v12056
    %v12061 = vunpack.c.l.b16 %v4632
    %v12062 = vunpack.c.h.b16 %v4632
    %v12063 = vpack.c.b16 %v12061, %v12061
    %v12064 = vpack.c.b16 %v12062, %v12062
    %v12068 = vshrl.u32 %v12063, 16
    %v12071 = vshrl.u32 %v12064, 16
    %v12075 = vrot.slane %v12063, 1
    %v12076 = vrot.slane %v12064, 1
    %v12079 = vrot.slane %v12068, 1
    %v12080 = vrot.slane %v12071, 1
    %v12083 = vrot.slane %v12063, 2
    %v12084 = vrot.slane %v12064, 2
    %v12087 = vrot.slane %v12068, 2
    %v12088 = vrot.slane %v12071, 2
    %v12091 = vrot.slane %v12063, 3
    %v12092 = vrot.slane %v12064, 3
    %v12096 = vunpack.c.l.b16 %v4640
    %v12097 = vunpack.c.h.b16 %v4640
    %v12098 = vpack.c.b16 %v12096, %v12096
    %v12099 = vpack.c.b16 %v12097, %v12097
    %v12103 = vshll.u32 %v12098, 16
    %v12105 = vrot.slane %v12103, 1
    %v12107 = vshll.u32 %v12099, 16
    %v12109 = vrot.slane %v12107, 1
    %v12112 = vrot.slane %v12098, 1
    %v12113 = vrot.slane %v12099, 1
    %v12116 = vrot.slane %v12103, 2
    %v12117 = vrot.slane %v12107, 2
    %v12120 = vrot.slane %v12098, 2
    %v12121 = vrot.slane %v12099, 2
    %v12124 = vrot.slane %v12103, 3
    %v12125 = vrot.slane %v12107, 3
    %v12128 = vrot.slane %v12098, 3
    %v12129 = vrot.slane %v12099, 3
    %v12132 = vsel %vm4758, %v12063, %v12098
    %v12133 = vsel %vm4758, %v12064, %v12099
    %v12134 = vsel %vm4758, %v12068, %v12105
    %v12135 = vsel %vm4758, %v12071, %v12109
    %v12136 = vsel %vm4758, %v12075, %v12112
    %v12137 = vsel %vm4758, %v12076, %v12113
    %v12138 = vsel %vm4758, %v12079, %v12116
    %v12139 = vsel %vm4758, %v12080, %v12117
    %v12140 = vsel %vm4758, %v12083, %v12120
    %v12141 = vsel %vm4758, %v12084, %v12121
    %v12142 = vsel %vm4758, %v12087, %v12124
    %v12143 = vsel %vm4758, %v12088, %v12125
    %v12144 = vsel %vm4758, %v12091, %v12128
    %v12145 = vsel %vm4758, %v12092, %v12129
    %s12146 = scalar_lea.vmem [#allocation4], 5376
    %v12147 = vld [vmem:[%s12146] sm:$0xf]
    %v12148 = vld [vmem:[%s12146 + $0x4] sm:$0xf]
    %v12149 = vld [vmem:[%s12146 + $0x8] sm:$0xf]
    %v12150 = vld [vmem:[%s12146 + $0xc] sm:$0xf]
    %v12151 = vld [vmem:[%s12146 + $0x10] sm:$0xf]
    %v12152 = vld [vmem:[%s12146 + $0x14] sm:$0xf]
    %v12153 = vld [vmem:[%s12146 + $0x18] sm:$0xf]
    %v12154 = vld [vmem:[%s12146 + $0x1c] sm:$0xf]
    %v12155 = vld [vmem:[%s12146 + $0x20] sm:$0xf]
    %v12156 = vld [vmem:[%s12146 + $0x24] sm:$0xf]
    %v12157 = vld [vmem:[%s12146 + $0x28] sm:$0xf]
    %v12158 = vld [vmem:[%s12146 + $0x2c] sm:$0xf]
    %v12159 = vld [vmem:[%s12146 + $0x30] sm:$0xf]
    %v12160 = vld [vmem:[%s12146 + $0x34] sm:$0xf]
    %v12161 = vld [vmem:[%s12146 + $0x38] sm:$0xf]
    %v12162 = vld [vmem:[%s12146 + $0x3c] sm:$0xf]
    %v12163 = vld [vmem:[%s12146 + $0x40] sm:$0xf]
    %v12164 = vld [vmem:[%s12146 + $0x44] sm:$0xf]
    %v12165 = vld [vmem:[%s12146 + $0x48] sm:$0xf]
    %v12166 = vld [vmem:[%s12146 + $0x4c] sm:$0xf]
    %v12167 = vld [vmem:[%s12146 + $0x50] sm:$0xf]
    %v12168 = vld [vmem:[%s12146 + $0x54] sm:$0xf]
    %v12169 = vld [vmem:[%s12146 + $0x58] sm:$0xf]
    %v12170 = vld [vmem:[%s12146 + $0x5c] sm:$0xf]
    %v12171 = vld [vmem:[%s12146 + $0x60] sm:$0xf]
    %v12172 = vld [vmem:[%s12146 + $0x64] sm:$0xf]
    %v12173 = vld [vmem:[%s12146 + $0x68] sm:$0xf]
    %v12174 = vld [vmem:[%s12146 + $0x6c] sm:$0xf]
    %v12175 = vld [vmem:[%s12146 + $0x70] sm:$0xf]
    %v12176 = vld [vmem:[%s12146 + $0x74] sm:$0xf]
    %v12177 = vld [vmem:[%s12146 + $0x78] sm:$0xf]
    %v12178 = vld [vmem:[%s12146 + $0x7c] sm:$0xf]
    %v12179 = vld [vmem:[%s12146 + $0x80] sm:$0xf]
    %v12180 = vld [vmem:[%s12146 + $0x84] sm:$0xf]
    %v12181 = vld [vmem:[%s12146 + $0x88] sm:$0xf]
    %v12182 = vld [vmem:[%s12146 + $0x8c] sm:$0xf]
    %v12183 = vld [vmem:[%s12146 + $0x90] sm:$0xf]
    %v12184 = vld [vmem:[%s12146 + $0x94] sm:$0xf]
    %v12185 = vld [vmem:[%s12146 + $0x98] sm:$0xf]
    %v12186 = vld [vmem:[%s12146 + $0x9c] sm:$0xf]
    %v12187 = vld [vmem:[%s12146 + $0xa0] sm:$0xf]
    %v12188 = vld [vmem:[%s12146 + $0xa4] sm:$0xf]
    %v12189 = vld [vmem:[%s12146 + $0xa8] sm:$0xf]
    %v12190 = vld [vmem:[%s12146 + $0xac] sm:$0xf]
    %v12191 = vld [vmem:[%s12146 + $0xb0] sm:$0xf]
    %v12192 = vld [vmem:[%s12146 + $0xb4] sm:$0xf]
    %v12193 = vld [vmem:[%s12146 + $0xb8] sm:$0xf]
    %v12194 = vld [vmem:[%s12146 + $0xbc] sm:$0xf]
    %v12195 = vld [vmem:[%s12146 + $0xc0] sm:$0xf]
    %v12196 = vld [vmem:[%s12146 + $0xc4] sm:$0xf]
    %v12197 = vld [vmem:[%s12146 + $0xc8] sm:$0xf]
    %v12198 = vld [vmem:[%s12146 + $0xcc] sm:$0xf]
    %v12199 = vld [vmem:[%s12146 + $0xd0] sm:$0xf]
    %v12200 = vld [vmem:[%s12146 + $0xd4] sm:$0xf]
    %v12201 = vld [vmem:[%s12146 + $0xd8] sm:$0xf]
    %v12202 = vld [vmem:[%s12146 + $0xdc] sm:$0xf]
    %v12203 = vld [vmem:[%s12146 + $0xe0] sm:$0xf]
    %v12204 = vld [vmem:[%s12146 + $0xe4] sm:$0xf]
    %v12205 = vld [vmem:[%s12146 + $0xe8] sm:$0xf]
    %v12206 = vld [vmem:[%s12146 + $0xec] sm:$0xf]
    %v12207 = vld [vmem:[%s12146 + $0xf0] sm:$0xf]
    %v12208 = vld [vmem:[%s12146 + $0xf4] sm:$0xf]
    %v12209 = vld [vmem:[%s12146 + $0xf8] sm:$0xf]
    %v12210 = vld [vmem:[%s12146 + $0xfc] sm:$0xf]
    %v12211 = vld [vmem:[%s12146 + $0x100] sm:$0xf]
    %v12212 = vld [vmem:[%s12146 + $0x104] sm:$0xf]
    %v12213 = vld [vmem:[%s12146 + $0x108] sm:$0xf]
    %v12214 = vld [vmem:[%s12146 + $0x10c] sm:$0xf]
    %v12215 = vld [vmem:[%s12146 + $0x110] sm:$0xf]
    %v12216 = vld [vmem:[%s12146 + $0x114] sm:$0xf]
    %v12217 = vld [vmem:[%s12146 + $0x118] sm:$0xf]
    %v12218 = vld [vmem:[%s12146 + $0x11c] sm:$0xf]
    %v12219 = vld [vmem:[%s12146 + $0x120] sm:$0xf]
    %v12220 = vld [vmem:[%s12146 + $0x124] sm:$0xf]
    %v12221 = vld [vmem:[%s12146 + $0x128] sm:$0xf]
    %v12222 = vld [vmem:[%s12146 + $0x12c] sm:$0xf]
    %v12223 = vld [vmem:[%s12146 + $0x130] sm:$0xf]
    %v12224 = vld [vmem:[%s12146 + $0x134] sm:$0xf]
    %v12225 = vld [vmem:[%s12146 + $0x138] sm:$0xf]
    %v12226 = vld [vmem:[%s12146 + $0x13c] sm:$0xf]
    %v12227 = vld [vmem:[%s12146 + $0x140] sm:$0xf]
    %v12228 = vld [vmem:[%s12146 + $0x144] sm:$0xf]
    %v12229 = vld [vmem:[%s12146 + $0x148] sm:$0xf]
    %v12230 = vld [vmem:[%s12146 + $0x14c] sm:$0xf]
    %v12231 = vld [vmem:[%s12146 + $0x150] sm:$0xf]
    %v12232 = vld [vmem:[%s12146 + $0x154] sm:$0xf]
    %v12233 = vld [vmem:[%s12146 + $0x158] sm:$0xf]
    %v12234 = vld [vmem:[%s12146 + $0x15c] sm:$0xf]
    %v12235 = vld [vmem:[%s12146 + $0x160] sm:$0xf]
    %v12236 = vld [vmem:[%s12146 + $0x164] sm:$0xf]
    %v12237 = vld [vmem:[%s12146 + $0x168] sm:$0xf]
    %v12238 = vld [vmem:[%s12146 + $0x16c] sm:$0xf]
    %v12239 = vld [vmem:[%s12146 + $0x170] sm:$0xf]
    %v12240 = vld [vmem:[%s12146 + $0x174] sm:$0xf]
    %v12241 = vld [vmem:[%s12146 + $0x178] sm:$0xf]
    %v12242 = vld [vmem:[%s12146 + $0x17c] sm:$0xf]
    %v12243 = vld [vmem:[%s12146 + $0x180] sm:$0xf]
    %v12244 = vld [vmem:[%s12146 + $0x184] sm:$0xf]
    %v12245 = vld [vmem:[%s12146 + $0x188] sm:$0xf]
    %v12246 = vld [vmem:[%s12146 + $0x18c] sm:$0xf]
    %v12247 = vld [vmem:[%s12146 + $0x190] sm:$0xf]
    %v12248 = vld [vmem:[%s12146 + $0x194] sm:$0xf]
    %v12249 = vld [vmem:[%s12146 + $0x198] sm:$0xf]
    %v12250 = vld [vmem:[%s12146 + $0x19c] sm:$0xf]
    %v12251 = vld [vmem:[%s12146 + $0x1a0] sm:$0xf]
    %v12252 = vld [vmem:[%s12146 + $0x1a4] sm:$0xf]
    %v12253 = vld [vmem:[%s12146 + $0x1a8] sm:$0xf]
    %v12254 = vld [vmem:[%s12146 + $0x1ac] sm:$0xf]
    %v12255 = vld [vmem:[%s12146 + $0x1b0] sm:$0xf]
    %v12256 = vld [vmem:[%s12146 + $0x1b4] sm:$0xf]
    %v12257 = vld [vmem:[%s12146 + $0x1b8] sm:$0xf]
    %v12258 = vld [vmem:[%s12146 + $0x1bc] sm:$0xf]
    %v12259 = vld [vmem:[%s12146 + $0x1c0] sm:$0xf]
    %v12260 = vld [vmem:[%s12146 + $0x1c4] sm:$0xf]
    %v12261 = vld [vmem:[%s12146 + $0x1c8] sm:$0xf]
    %v12262 = vld [vmem:[%s12146 + $0x1cc] sm:$0xf]
    %v12263 = vld [vmem:[%s12146 + $0x1d0] sm:$0xf]
    %v12264 = vld [vmem:[%s12146 + $0x1d4] sm:$0xf]
    %v12265 = vld [vmem:[%s12146 + $0x1d8] sm:$0xf]
    %v12266 = vld [vmem:[%s12146 + $0x1dc] sm:$0xf]
    %v12267 = vld [vmem:[%s12146 + $0x1e0] sm:$0xf]
    %v12268 = vld [vmem:[%s12146 + $0x1e4] sm:$0xf]
    %v12269 = vld [vmem:[%s12146 + $0x1e8] sm:$0xf]
    %v12270 = vld [vmem:[%s12146 + $0x1ec] sm:$0xf]
    %v12271 = vld [vmem:[%s12146 + $0x1f0] sm:$0xf]
    %v12272 = vld [vmem:[%s12146 + $0x1f4] sm:$0xf]
    %v12273 = vld [vmem:[%s12146 + $0x1f8] sm:$0xf]
    %v12274 = vld [vmem:[%s12146 + $0x1fc] sm:$0xf]
    %v12275 = vld [vmem:[%s12146 + $0x200] sm:$0xf]
    %v12276 = vld [vmem:[%s12146 + $0x204] sm:$0xf]
    %v12277 = vld [vmem:[%s12146 + $0x208] sm:$0xf]
    %v12278 = vld [vmem:[%s12146 + $0x20c] sm:$0xf]
    %v12279 = vld [vmem:[%s12146 + $0x210] sm:$0xf]
    %v12280 = vld [vmem:[%s12146 + $0x214] sm:$0xf]
    %v12281 = vld [vmem:[%s12146 + $0x218] sm:$0xf]
    %v12282 = vld [vmem:[%s12146 + $0x21c] sm:$0xf]
    %v12283 = vld [vmem:[%s12146 + $0x220] sm:$0xf]
    %v12284 = vld [vmem:[%s12146 + $0x224] sm:$0xf]
    %v12285 = vld [vmem:[%s12146 + $0x228] sm:$0xf]
    %v12286 = vld [vmem:[%s12146 + $0x22c] sm:$0xf]
    %v12287 = vld [vmem:[%s12146 + $0x230] sm:$0xf]
    %v12288 = vld [vmem:[%s12146 + $0x234] sm:$0xf]
    %v12289 = vld [vmem:[%s12146 + $0x238] sm:$0xf]
    %v12290 = vld [vmem:[%s12146 + $0x23c] sm:$0xf]
    %v12291 = vld [vmem:[%s12146 + $0x240] sm:$0xf]
    %v12292 = vld [vmem:[%s12146 + $0x244] sm:$0xf]
    %v12293 = vld [vmem:[%s12146 + $0x248] sm:$0xf]
    %v12294 = vld [vmem:[%s12146 + $0x24c] sm:$0xf]
    %v12295 = vld [vmem:[%s12146 + $0x250] sm:$0xf]
    %v12296 = vld [vmem:[%s12146 + $0x254] sm:$0xf]
    %v12297 = vld [vmem:[%s12146 + $0x258] sm:$0xf]
    %v12298 = vld [vmem:[%s12146 + $0x25c] sm:$0xf]
    %v12299 = vld [vmem:[%s12146 + $0x260] sm:$0xf]
    %v12300 = vld [vmem:[%s12146 + $0x264] sm:$0xf]
    %v12301 = vld [vmem:[%s12146 + $0x268] sm:$0xf]
    %v12302 = vld [vmem:[%s12146 + $0x26c] sm:$0xf]
    %v12303 = vld [vmem:[%s12146 + $0x270] sm:$0xf]
    %v12304 = vld [vmem:[%s12146 + $0x274] sm:$0xf]
    %v12305 = vld [vmem:[%s12146 + $0x278] sm:$0xf]
    %v12306 = vld [vmem:[%s12146 + $0x27c] sm:$0xf]
    %v12307 = vld [vmem:[%s12146 + $0x280] sm:$0xf]
    %v12308 = vld [vmem:[%s12146 + $0x284] sm:$0xf]
    %v12309 = vld [vmem:[%s12146 + $0x288] sm:$0xf]
    %v12310 = vld [vmem:[%s12146 + $0x28c] sm:$0xf]
    %v12311 = vld [vmem:[%s12146 + $0x290] sm:$0xf]
    %v12312 = vld [vmem:[%s12146 + $0x294] sm:$0xf]
    %v12313 = vld [vmem:[%s12146 + $0x298] sm:$0xf]
    %v12314 = vld [vmem:[%s12146 + $0x29c] sm:$0xf]
    %v12315 = vld [vmem:[%s12146 + $0x2a0] sm:$0xf]
    %v12316 = vld [vmem:[%s12146 + $0x2a4] sm:$0xf]
    %v12317 = vld [vmem:[%s12146 + $0x2a8] sm:$0xf]
    %v12318 = vld [vmem:[%s12146 + $0x2ac] sm:$0xf]
    %v12319 = vld [vmem:[%s12146 + $0x2b0] sm:$0xf]
    %v12320 = vld [vmem:[%s12146 + $0x2b4] sm:$0xf]
    %v12321 = vld [vmem:[%s12146 + $0x2b8] sm:$0xf]
    %v12322 = vld [vmem:[%s12146 + $0x2bc] sm:$0xf]
    %v12323 = vld [vmem:[%s12146 + $0x2c0] sm:$0xf]
    %v12324 = vld [vmem:[%s12146 + $0x2c4] sm:$0xf]
    %v12325 = vld [vmem:[%s12146 + $0x2c8] sm:$0xf]
    %v12326 = vld [vmem:[%s12146 + $0x2cc] sm:$0xf]
    %v12327 = vld [vmem:[%s12146 + $0x2d0] sm:$0xf]
    %v12328 = vld [vmem:[%s12146 + $0x2d4] sm:$0xf]
    %v12329 = vld [vmem:[%s12146 + $0x2d8] sm:$0xf]
    %v12330 = vld [vmem:[%s12146 + $0x2dc] sm:$0xf]
    %v12331 = vld [vmem:[%s12146 + $0x2e0] sm:$0xf]
    %v12332 = vld [vmem:[%s12146 + $0x2e4] sm:$0xf]
    %v12333 = vld [vmem:[%s12146 + $0x2e8] sm:$0xf]
    %v12334 = vld [vmem:[%s12146 + $0x2ec] sm:$0xf]
    %v12335 = vld [vmem:[%s12146 + $0x2f0] sm:$0xf]
    %v12336 = vld [vmem:[%s12146 + $0x2f4] sm:$0xf]
    %v12337 = vld [vmem:[%s12146 + $0x2f8] sm:$0xf]
    %v12338 = vld [vmem:[%s12146 + $0x2fc] sm:$0xf]
    %v12339 = vld [vmem:[%s12146 + $0x300] sm:$0xf]
    %v12340 = vld [vmem:[%s12146 + $0x304] sm:$0xf]
    %v12341 = vld [vmem:[%s12146 + $0x308] sm:$0xf]
    %v12342 = vld [vmem:[%s12146 + $0x30c] sm:$0xf]
    %v12343 = vld [vmem:[%s12146 + $0x310] sm:$0xf]
    %v12344 = vld [vmem:[%s12146 + $0x314] sm:$0xf]
    %v12345 = vld [vmem:[%s12146 + $0x318] sm:$0xf]
    %v12346 = vld [vmem:[%s12146 + $0x31c] sm:$0xf]
    %v12347 = vld [vmem:[%s12146 + $0x320] sm:$0xf]
    %v12348 = vld [vmem:[%s12146 + $0x324] sm:$0xf]
    %v12349 = vld [vmem:[%s12146 + $0x328] sm:$0xf]
    %v12350 = vld [vmem:[%s12146 + $0x32c] sm:$0xf]
    %v12351 = vld [vmem:[%s12146 + $0x330] sm:$0xf]
    %v12352 = vld [vmem:[%s12146 + $0x334] sm:$0xf]
    %v12353 = vld [vmem:[%s12146 + $0x338] sm:$0xf]
    %v12354 = vld [vmem:[%s12146 + $0x33c] sm:$0xf]
    %v12355 = vld [vmem:[%s12146 + $0x340] sm:$0xf]
    %v12356 = vld [vmem:[%s12146 + $0x344] sm:$0xf]
    %v12357 = vld [vmem:[%s12146 + $0x348] sm:$0xf]
    %v12358 = vld [vmem:[%s12146 + $0x34c] sm:$0xf]
    %v12359 = vld [vmem:[%s12146 + $0x350] sm:$0xf]
    %v12360 = vld [vmem:[%s12146 + $0x354] sm:$0xf]
    %v12361 = vld [vmem:[%s12146 + $0x358] sm:$0xf]
    %v12362 = vld [vmem:[%s12146 + $0x35c] sm:$0xf]
    %v12363 = vld [vmem:[%s12146 + $0x360] sm:$0xf]
    %v12364 = vld [vmem:[%s12146 + $0x364] sm:$0xf]
    %v12365 = vld [vmem:[%s12146 + $0x368] sm:$0xf]
    %v12366 = vld [vmem:[%s12146 + $0x36c] sm:$0xf]
    %v12367 = vld [vmem:[%s12146 + $0x370] sm:$0xf]
    %v12368 = vld [vmem:[%s12146 + $0x374] sm:$0xf]
    %v12369 = vld [vmem:[%s12146 + $0x378] sm:$0xf]
    %v12370 = vld [vmem:[%s12146 + $0x37c] sm:$0xf]
    %v12595 = vunpack.c.l.b16 %v12147
    %v12596 = vunpack.c.l.b16 %v12148
    %v12597 = vunpack.c.l.b16 %v12149
    %v12598 = vunpack.c.l.b16 %v12150
    %v12599 = vunpack.c.l.b16 %v12151
    %v12600 = vunpack.c.l.b16 %v12152
    %v12601 = vunpack.c.l.b16 %v12153
    %v12602 = vunpack.c.l.b16 %v12154
    %v12603 = vunpack.c.l.b16 %v12155
    %v12604 = vunpack.c.l.b16 %v12156
    %v12605 = vunpack.c.l.b16 %v12157
    %v12606 = vunpack.c.l.b16 %v12158
    %v12607 = vunpack.c.l.b16 %v12159
    %v12608 = vunpack.c.l.b16 %v12160
    %v12609 = vunpack.c.l.b16 %v12161
    %v12610 = vunpack.c.l.b16 %v12162
    %v12611 = vunpack.c.l.b16 %v12163
    %v12612 = vunpack.c.l.b16 %v12164
    %v12613 = vunpack.c.l.b16 %v12165
    %v12614 = vunpack.c.l.b16 %v12166
    %v12615 = vunpack.c.l.b16 %v12167
    %v12616 = vunpack.c.l.b16 %v12168
    %v12617 = vunpack.c.l.b16 %v12169
    %v12618 = vunpack.c.l.b16 %v12170
    %v12619 = vunpack.c.l.b16 %v12171
    %v12620 = vunpack.c.l.b16 %v12172
    %v12621 = vunpack.c.l.b16 %v12173
    %v12622 = vunpack.c.l.b16 %v12174
    %v12623 = vunpack.c.l.b16 %v12175
    %v12624 = vunpack.c.l.b16 %v12176
    %v12625 = vunpack.c.l.b16 %v12177
    %v12626 = vunpack.c.l.b16 %v12178
    %v12627 = vunpack.c.l.b16 %v12179
    %v12628 = vunpack.c.l.b16 %v12180
    %v12629 = vunpack.c.l.b16 %v12181
    %v12630 = vunpack.c.l.b16 %v12182
    %v12631 = vunpack.c.l.b16 %v12183
    %v12632 = vunpack.c.l.b16 %v12184
    %v12633 = vunpack.c.l.b16 %v12185
    %v12634 = vunpack.c.l.b16 %v12186
    %v12635 = vunpack.c.l.b16 %v12187
    %v12636 = vunpack.c.l.b16 %v12188
    %v12637 = vunpack.c.l.b16 %v12189
    %v12638 = vunpack.c.l.b16 %v12190
    %v12639 = vunpack.c.l.b16 %v12191
    %v12640 = vunpack.c.l.b16 %v12192
    %v12641 = vunpack.c.l.b16 %v12193
    %v12642 = vunpack.c.l.b16 %v12194
    %v12643 = vunpack.c.l.b16 %v12195
    %v12644 = vunpack.c.l.b16 %v12196
    %v12645 = vunpack.c.l.b16 %v12197
    %v12646 = vunpack.c.l.b16 %v12198
    %v12647 = vunpack.c.l.b16 %v12199
    %v12648 = vunpack.c.l.b16 %v12200
    %v12649 = vunpack.c.l.b16 %v12201
    %v12650 = vunpack.c.l.b16 %v12202
    %v12651 = vunpack.c.l.b16 %v12203
    %v12652 = vunpack.c.l.b16 %v12204
    %v12653 = vunpack.c.l.b16 %v12205
    %v12654 = vunpack.c.l.b16 %v12206
    %v12655 = vunpack.c.l.b16 %v12207
    %v12656 = vunpack.c.l.b16 %v12208
    %v12657 = vunpack.c.l.b16 %v12209
    %v12658 = vunpack.c.l.b16 %v12210
    %v12659 = vunpack.c.l.b16 %v12211
    %v12660 = vunpack.c.l.b16 %v12212
    %v12661 = vunpack.c.l.b16 %v12213
    %v12662 = vunpack.c.l.b16 %v12214
    %v12663 = vunpack.c.l.b16 %v12215
    %v12664 = vunpack.c.l.b16 %v12216
    %v12665 = vunpack.c.l.b16 %v12217
    %v12666 = vunpack.c.l.b16 %v12218
    %v12667 = vunpack.c.l.b16 %v12219
    %v12668 = vunpack.c.l.b16 %v12220
    %v12669 = vunpack.c.l.b16 %v12221
    %v12670 = vunpack.c.l.b16 %v12222
    %v12671 = vunpack.c.l.b16 %v12223
    %v12672 = vunpack.c.l.b16 %v12224
    %v12673 = vunpack.c.l.b16 %v12225
    %v12674 = vunpack.c.l.b16 %v12226
    %v12675 = vunpack.c.l.b16 %v12227
    %v12676 = vunpack.c.l.b16 %v12228
    %v12677 = vunpack.c.l.b16 %v12229
    %v12678 = vunpack.c.l.b16 %v12230
    %v12679 = vunpack.c.l.b16 %v12231
    %v12680 = vunpack.c.l.b16 %v12232
    %v12681 = vunpack.c.l.b16 %v12233
    %v12682 = vunpack.c.l.b16 %v12234
    %v12683 = vunpack.c.l.b16 %v12235
    %v12684 = vunpack.c.l.b16 %v12236
    %v12685 = vunpack.c.l.b16 %v12237
    %v12686 = vunpack.c.l.b16 %v12238
    %v12687 = vunpack.c.l.b16 %v12239
    %v12688 = vunpack.c.l.b16 %v12240
    %v12689 = vunpack.c.l.b16 %v12241
    %v12690 = vunpack.c.l.b16 %v12242
    %v12691 = vunpack.c.l.b16 %v12243
    %v12692 = vunpack.c.l.b16 %v12244
    %v12693 = vunpack.c.l.b16 %v12245
    %v12694 = vunpack.c.l.b16 %v12246
    %v12695 = vunpack.c.l.b16 %v12247
    %v12696 = vunpack.c.l.b16 %v12248
    %v12697 = vunpack.c.l.b16 %v12249
    %v12698 = vunpack.c.l.b16 %v12250
    %v12699 = vunpack.c.l.b16 %v12251
    %v12700 = vunpack.c.l.b16 %v12252
    %v12701 = vunpack.c.l.b16 %v12253
    %v12702 = vunpack.c.l.b16 %v12254
    %v12703 = vunpack.c.l.b16 %v12255
    %v12704 = vunpack.c.l.b16 %v12256
    %v12705 = vunpack.c.l.b16 %v12257
    %v12706 = vunpack.c.l.b16 %v12258
    %v12707 = vunpack.c.l.b16 %v12259
    %v12708 = vunpack.c.l.b16 %v12260
    %v12709 = vunpack.c.l.b16 %v12261
    %v12710 = vunpack.c.l.b16 %v12262
    %v12711 = vunpack.c.l.b16 %v12263
    %v12712 = vunpack.c.l.b16 %v12264
    %v12713 = vunpack.c.l.b16 %v12265
    %v12714 = vunpack.c.l.b16 %v12266
    %v12715 = vunpack.c.l.b16 %v12267
    %v12716 = vunpack.c.l.b16 %v12268
    %v12717 = vunpack.c.l.b16 %v12269
    %v12718 = vunpack.c.l.b16 %v12270
    %v12719 = vunpack.c.l.b16 %v12271
    %v12720 = vunpack.c.l.b16 %v12272
    %v12721 = vunpack.c.l.b16 %v12273
    %v12722 = vunpack.c.l.b16 %v12274
    %v12723 = vunpack.c.l.b16 %v12275
    %v12724 = vunpack.c.l.b16 %v12276
    %v12725 = vunpack.c.l.b16 %v12277
    %v12726 = vunpack.c.l.b16 %v12278
    %v12727 = vunpack.c.l.b16 %v12279
    %v12728 = vunpack.c.l.b16 %v12280
    %v12729 = vunpack.c.l.b16 %v12281
    %v12730 = vunpack.c.l.b16 %v12282
    %v12731 = vunpack.c.l.b16 %v12283
    %v12732 = vunpack.c.l.b16 %v12284
    %v12733 = vunpack.c.l.b16 %v12285
    %v12734 = vunpack.c.l.b16 %v12286
    %v12735 = vunpack.c.l.b16 %v12287
    %v12736 = vunpack.c.l.b16 %v12288
    %v12737 = vunpack.c.l.b16 %v12289
    %v12738 = vunpack.c.l.b16 %v12290
    %v12739 = vunpack.c.l.b16 %v12291
    %v12740 = vunpack.c.l.b16 %v12292
    %v12741 = vunpack.c.l.b16 %v12293
    %v12742 = vunpack.c.l.b16 %v12294
    %v12743 = vunpack.c.l.b16 %v12295
    %v12744 = vunpack.c.l.b16 %v12296
    %v12745 = vunpack.c.l.b16 %v12297
    %v12746 = vunpack.c.l.b16 %v12298
    %v12747 = vunpack.c.l.b16 %v12299
    %v12748 = vunpack.c.l.b16 %v12300
    %v12749 = vunpack.c.l.b16 %v12301
    %v12750 = vunpack.c.l.b16 %v12302
    %v12751 = vunpack.c.l.b16 %v12303
    %v12752 = vunpack.c.l.b16 %v12304
    %v12753 = vunpack.c.l.b16 %v12305
    %v12754 = vunpack.c.l.b16 %v12306
    %v12755 = vunpack.c.l.b16 %v12307
    %v12756 = vunpack.c.l.b16 %v12308
    %v12757 = vunpack.c.l.b16 %v12309
    %v12758 = vunpack.c.l.b16 %v12310
    %v12759 = vunpack.c.l.b16 %v12311
    %v12760 = vunpack.c.l.b16 %v12312
    %v12761 = vunpack.c.l.b16 %v12313
    %v12762 = vunpack.c.l.b16 %v12314
    %v12763 = vunpack.c.l.b16 %v12315
    %v12764 = vunpack.c.l.b16 %v12316
    %v12765 = vunpack.c.l.b16 %v12317
    %v12766 = vunpack.c.l.b16 %v12318
    %v12767 = vunpack.c.l.b16 %v12319
    %v12768 = vunpack.c.l.b16 %v12320
    %v12769 = vunpack.c.l.b16 %v12321
    %v12770 = vunpack.c.l.b16 %v12322
    %v12771 = vunpack.c.l.b16 %v12323
    %v12772 = vunpack.c.l.b16 %v12324
    %v12773 = vunpack.c.l.b16 %v12325
    %v12774 = vunpack.c.l.b16 %v12326
    %v12775 = vunpack.c.l.b16 %v12327
    %v12776 = vunpack.c.l.b16 %v12328
    %v12777 = vunpack.c.l.b16 %v12329
    %v12778 = vunpack.c.l.b16 %v12330
    %v12779 = vunpack.c.l.b16 %v12331
    %v12780 = vunpack.c.l.b16 %v12332
    %v12781 = vunpack.c.l.b16 %v12333
    %v12782 = vunpack.c.l.b16 %v12334
    %v12783 = vunpack.c.l.b16 %v12335
    %v12784 = vunpack.c.l.b16 %v12336
    %v12785 = vunpack.c.l.b16 %v12337
    %v12786 = vunpack.c.l.b16 %v12338
    %v12787 = vunpack.c.l.b16 %v12339
    %v12788 = vunpack.c.l.b16 %v12340
    %v12789 = vunpack.c.l.b16 %v12341
    %v12790 = vunpack.c.l.b16 %v12342
    %v12791 = vunpack.c.l.b16 %v12343
    %v12792 = vunpack.c.l.b16 %v12344
    %v12793 = vunpack.c.l.b16 %v12345
    %v12794 = vunpack.c.l.b16 %v12346
    %v12795 = vunpack.c.l.b16 %v12347
    %v12796 = vunpack.c.l.b16 %v12348
    %v12797 = vunpack.c.l.b16 %v12349
    %v12798 = vunpack.c.l.b16 %v12350
    %v12799 = vunpack.c.l.b16 %v12351
    %v12800 = vunpack.c.l.b16 %v12352
    %v12801 = vunpack.c.l.b16 %v12353
    %v12802 = vunpack.c.l.b16 %v12354
    %v12803 = vunpack.c.l.b16 %v12355
    %v12804 = vunpack.c.l.b16 %v12356
    %v12805 = vunpack.c.l.b16 %v12357
    %v12806 = vunpack.c.l.b16 %v12358
    %v12807 = vunpack.c.l.b16 %v12359
    %v12808 = vunpack.c.l.b16 %v12360
    %v12809 = vunpack.c.l.b16 %v12361
    %v12810 = vunpack.c.l.b16 %v12362
    %v12811 = vunpack.c.l.b16 %v12363
    %v12812 = vunpack.c.l.b16 %v12364
    %v12813 = vunpack.c.l.b16 %v12365
    %v12814 = vunpack.c.l.b16 %v12366
    %v12815 = vunpack.c.l.b16 %v12367
    %v12816 = vunpack.c.l.b16 %v12368
    %v12817 = vunpack.c.l.b16 %v12369
    %v12818 = vunpack.c.l.b16 %v12370
    %v12819 = vpack.c.b16 %v12596, %v12595
    %v12820 = vpack.c.b16 %v12598, %v12597
    %v12821 = vpack.c.b16 %v12600, %v12599
    %v12822 = vpack.c.b16 %v12602, %v12601
    %v12823 = vpack.c.b16 %v12604, %v12603
    %v12824 = vpack.c.b16 %v12606, %v12605
    %v12825 = vpack.c.b16 %v12608, %v12607
    %v12826 = vpack.c.b16 %v12610, %v12609
    %v12827 = vpack.c.b16 %v12612, %v12611
    %v12828 = vpack.c.b16 %v12614, %v12613
    %v12829 = vpack.c.b16 %v12616, %v12615
    %v12830 = vpack.c.b16 %v12618, %v12617
    %v12831 = vpack.c.b16 %v12620, %v12619
    %v12832 = vpack.c.b16 %v12622, %v12621
    %v12833 = vpack.c.b16 %v12624, %v12623
    %v12834 = vpack.c.b16 %v12626, %v12625
    %v12835 = vpack.c.b16 %v12628, %v12627
    %v12836 = vpack.c.b16 %v12630, %v12629
    %v12837 = vpack.c.b16 %v12632, %v12631
    %v12838 = vpack.c.b16 %v12634, %v12633
    %v12839 = vpack.c.b16 %v12636, %v12635
    %v12840 = vpack.c.b16 %v12638, %v12637
    %v12841 = vpack.c.b16 %v12640, %v12639
    %v12842 = vpack.c.b16 %v12642, %v12641
    %v12843 = vpack.c.b16 %v12644, %v12643
    %v12844 = vpack.c.b16 %v12646, %v12645
    %v12845 = vpack.c.b16 %v12648, %v12647
    %v12846 = vpack.c.b16 %v12650, %v12649
    %v12847 = vpack.c.b16 %v12652, %v12651
    %v12848 = vpack.c.b16 %v12654, %v12653
    %v12849 = vpack.c.b16 %v12656, %v12655
    %v12850 = vpack.c.b16 %v12658, %v12657
    %v12851 = vpack.c.b16 %v12660, %v12659
    %v12852 = vpack.c.b16 %v12662, %v12661
    %v12853 = vpack.c.b16 %v12664, %v12663
    %v12854 = vpack.c.b16 %v12666, %v12665
    %v12855 = vpack.c.b16 %v12668, %v12667
    %v12856 = vpack.c.b16 %v12670, %v12669
    %v12857 = vpack.c.b16 %v12672, %v12671
    %v12858 = vpack.c.b16 %v12674, %v12673
    %v12859 = vpack.c.b16 %v12676, %v12675
    %v12860 = vpack.c.b16 %v12678, %v12677
    %v12861 = vpack.c.b16 %v12680, %v12679
    %v12862 = vpack.c.b16 %v12682, %v12681
    %v12863 = vpack.c.b16 %v12684, %v12683
    %v12864 = vpack.c.b16 %v12686, %v12685
    %v12865 = vpack.c.b16 %v12688, %v12687
    %v12866 = vpack.c.b16 %v12690, %v12689
    %v12867 = vpack.c.b16 %v12692, %v12691
    %v12868 = vpack.c.b16 %v12694, %v12693
    %v12869 = vpack.c.b16 %v12696, %v12695
    %v12870 = vpack.c.b16 %v12698, %v12697
    %v12871 = vpack.c.b16 %v12700, %v12699
    %v12872 = vpack.c.b16 %v12702, %v12701
    %v12873 = vpack.c.b16 %v12704, %v12703
    %v12874 = vpack.c.b16 %v12706, %v12705
    %v12875 = vpack.c.b16 %v12708, %v12707
    %v12876 = vpack.c.b16 %v12710, %v12709
    %v12877 = vpack.c.b16 %v12712, %v12711
    %v12878 = vpack.c.b16 %v12714, %v12713
    %v12879 = vpack.c.b16 %v12716, %v12715
    %v12880 = vpack.c.b16 %v12718, %v12717
    %v12881 = vpack.c.b16 %v12720, %v12719
    %v12882 = vpack.c.b16 %v12722, %v12721
    %v12883 = vpack.c.b16 %v12724, %v12723
    %v12884 = vpack.c.b16 %v12726, %v12725
    %v12885 = vpack.c.b16 %v12728, %v12727
    %v12886 = vpack.c.b16 %v12730, %v12729
    %v12887 = vpack.c.b16 %v12732, %v12731
    %v12888 = vpack.c.b16 %v12734, %v12733
    %v12889 = vpack.c.b16 %v12736, %v12735
    %v12890 = vpack.c.b16 %v12738, %v12737
    %v12891 = vpack.c.b16 %v12740, %v12739
    %v12892 = vpack.c.b16 %v12742, %v12741
    %v12893 = vpack.c.b16 %v12744, %v12743
    %v12894 = vpack.c.b16 %v12746, %v12745
    %v12895 = vpack.c.b16 %v12748, %v12747
    %v12896 = vpack.c.b16 %v12750, %v12749
    %v12897 = vpack.c.b16 %v12752, %v12751
    %v12898 = vpack.c.b16 %v12754, %v12753
    %v12899 = vpack.c.b16 %v12756, %v12755
    %v12900 = vpack.c.b16 %v12758, %v12757
    %v12901 = vpack.c.b16 %v12760, %v12759
    %v12902 = vpack.c.b16 %v12762, %v12761
    %v12903 = vpack.c.b16 %v12764, %v12763
    %v12904 = vpack.c.b16 %v12766, %v12765
    %v12905 = vpack.c.b16 %v12768, %v12767
    %v12906 = vpack.c.b16 %v12770, %v12769
    %v12907 = vpack.c.b16 %v12772, %v12771
    %v12908 = vpack.c.b16 %v12774, %v12773
    %v12909 = vpack.c.b16 %v12776, %v12775
    %v12910 = vpack.c.b16 %v12778, %v12777
    %v12911 = vpack.c.b16 %v12780, %v12779
    %v12912 = vpack.c.b16 %v12782, %v12781
    %v12913 = vpack.c.b16 %v12784, %v12783
    %v12914 = vpack.c.b16 %v12786, %v12785
    %v12915 = vpack.c.b16 %v12788, %v12787
    %v12916 = vpack.c.b16 %v12790, %v12789
    %v12917 = vpack.c.b16 %v12792, %v12791
    %v12918 = vpack.c.b16 %v12794, %v12793
    %v12919 = vpack.c.b16 %v12796, %v12795
    %v12920 = vpack.c.b16 %v12798, %v12797
    %v12921 = vpack.c.b16 %v12800, %v12799
    %v12922 = vpack.c.b16 %v12802, %v12801
    %v12923 = vpack.c.b16 %v12804, %v12803
    %v12924 = vpack.c.b16 %v12806, %v12805
    %v12925 = vpack.c.b16 %v12808, %v12807
    %v12926 = vpack.c.b16 %v12810, %v12809
    %v12927 = vpack.c.b16 %v12812, %v12811
    %v12928 = vpack.c.b16 %v12814, %v12813
    %v12929 = vpack.c.b16 %v12816, %v12815
    %v12930 = vpack.c.b16 %v12818, %v12817
    %13043 = vmatpush.bf16.msra.mxu0 %v12826
    %13044 = vmatpush.bf16.msra.mxu0 %v12825
    %13045 = vmatpush.bf16.msra.mxu0 %v12824
    %13046 = vmatpush.bf16.msra.mxu0 %v12823
    %13047 = vmatpush.bf16.msra.mxu0 %v12822
    %13048 = vmatpush.bf16.msra.mxu0 %v12821
    %13049 = vmatpush.bf16.msra.mxu0 %v12820
    %13050 = vmatpush.bf16.msra.mxu0 %v12819
    %13051 = vmatmul.bf16.gmra.mxu0 %v12132
    %v13052 = vpop.f32.mrf.mxu0
    %v13053 = vadd.f32 0.0, %v13052
    %v13054 = vpop.f32.mrf.mxu0
    %13055 = vdwg.mxu0
    %13056 = vmatpush.bf16.msra.mxu0 %v12834
    %13057 = vmatpush.bf16.msra.mxu0 %v12833
    %13058 = vmatpush.bf16.msra.mxu0 %v12832
    %13059 = vmatpush.bf16.msra.mxu0 %v12831
    %13060 = vmatpush.bf16.msra.mxu0 %v12830
    %13061 = vmatpush.bf16.msra.mxu0 %v12829
    %13062 = vmatpush.bf16.msra.mxu0 %v12828
    %13063 = vmatpush.bf16.msra.mxu0 %v12827
    %13064 = vmatmul.bf16.gmra.mxu0 %v12133
    %v13065 = vpop.f32.mrf.mxu0
    %v13066 = vadd.f32 %v13053, %v13065
    %v13067 = vpop.f32.mrf.mxu0
    %13068 = vdwg.mxu0
    %13069 = vmatpush.bf16.msra.mxu0 %v12842
    %13070 = vmatpush.bf16.msra.mxu0 %v12841
    %13071 = vmatpush.bf16.msra.mxu0 %v12840
    %13072 = vmatpush.bf16.msra.mxu0 %v12839
    %13073 = vmatpush.bf16.msra.mxu0 %v12838
    %13074 = vmatpush.bf16.msra.mxu0 %v12837
    %13075 = vmatpush.bf16.msra.mxu0 %v12836
    %13076 = vmatpush.bf16.msra.mxu0 %v12835
    %13077 = vmatmul.bf16.gmra.mxu0 %v12134
    %v13078 = vpop.f32.mrf.mxu0
    %v13079 = vadd.f32 %v13066, %v13078
    %v13080 = vpop.f32.mrf.mxu0
    %13081 = vdwg.mxu0
    %13082 = vmatpush.bf16.msra.mxu0 %v12850
    %13083 = vmatpush.bf16.msra.mxu0 %v12849
    %13084 = vmatpush.bf16.msra.mxu0 %v12848
    %13085 = vmatpush.bf16.msra.mxu0 %v12847
    %13086 = vmatpush.bf16.msra.mxu0 %v12846
    %13087 = vmatpush.bf16.msra.mxu0 %v12845
    %13088 = vmatpush.bf16.msra.mxu0 %v12844
    %13089 = vmatpush.bf16.msra.mxu0 %v12843
    %13090 = vmatmul.bf16.gmra.mxu0 %v12135
    %v13091 = vpop.f32.mrf.mxu0
    %v13092 = vadd.f32 %v13079, %v13091
    %v13093 = vpop.f32.mrf.mxu0
    %13094 = vdwg.mxu0
    %13095 = vmatpush.bf16.msra.mxu0 %v12858
    %13096 = vmatpush.bf16.msra.mxu0 %v12857
    %13097 = vmatpush.bf16.msra.mxu0 %v12856
    %13098 = vmatpush.bf16.msra.mxu0 %v12855
    %13099 = vmatpush.bf16.msra.mxu0 %v12854
    %13100 = vmatpush.bf16.msra.mxu0 %v12853
    %13101 = vmatpush.bf16.msra.mxu0 %v12852
    %13102 = vmatpush.bf16.msra.mxu0 %v12851
    %13103 = vmatmul.bf16.gmra.mxu0 %v12136
    %v13104 = vpop.f32.mrf.mxu0
    %v13105 = vadd.f32 %v13092, %v13104
    %v13106 = vpop.f32.mrf.mxu0
    %13107 = vdwg.mxu0
    %13108 = vmatpush.bf16.msra.mxu0 %v12866
    %13109 = vmatpush.bf16.msra.mxu0 %v12865
    %13110 = vmatpush.bf16.msra.mxu0 %v12864
    %13111 = vmatpush.bf16.msra.mxu0 %v12863
    %13112 = vmatpush.bf16.msra.mxu0 %v12862
    %13113 = vmatpush.bf16.msra.mxu0 %v12861
    %13114 = vmatpush.bf16.msra.mxu0 %v12860
    %13115 = vmatpush.bf16.msra.mxu0 %v12859
    %13116 = vmatmul.bf16.gmra.mxu0 %v12137
    %v13117 = vpop.f32.mrf.mxu0
    %v13118 = vadd.f32 %v13105, %v13117
    %v13119 = vpop.f32.mrf.mxu0
    %13120 = vdwg.mxu0
    %13121 = vmatpush.bf16.msra.mxu0 %v12874
    %13122 = vmatpush.bf16.msra.mxu0 %v12873
    %13123 = vmatpush.bf16.msra.mxu0 %v12872
    %13124 = vmatpush.bf16.msra.mxu0 %v12871
    %13125 = vmatpush.bf16.msra.mxu0 %v12870
    %13126 = vmatpush.bf16.msra.mxu0 %v12869
    %13127 = vmatpush.bf16.msra.mxu0 %v12868
    %13128 = vmatpush.bf16.msra.mxu0 %v12867
    %13129 = vmatmul.bf16.gmra.mxu0 %v12138
    %v13130 = vpop.f32.mrf.mxu0
    %v13131 = vadd.f32 %v13118, %v13130
    %v13132 = vpop.f32.mrf.mxu0
    %13133 = vdwg.mxu0
    %13134 = vmatpush.bf16.msra.mxu0 %v12882
    %13135 = vmatpush.bf16.msra.mxu0 %v12881
    %13136 = vmatpush.bf16.msra.mxu0 %v12880
    %13137 = vmatpush.bf16.msra.mxu0 %v12879
    %13138 = vmatpush.bf16.msra.mxu0 %v12878
    %13139 = vmatpush.bf16.msra.mxu0 %v12877
    %13140 = vmatpush.bf16.msra.mxu0 %v12876
    %13141 = vmatpush.bf16.msra.mxu0 %v12875
    %13142 = vmatmul.bf16.gmra.mxu0 %v12139
    %v13143 = vpop.f32.mrf.mxu0
    %v13144 = vadd.f32 %v13131, %v13143
    %v13145 = vpop.f32.mrf.mxu0
    %13146 = vdwg.mxu0
    %13147 = vmatpush.bf16.msra.mxu0 %v12890
    %13148 = vmatpush.bf16.msra.mxu0 %v12889
    %13149 = vmatpush.bf16.msra.mxu0 %v12888
    %13150 = vmatpush.bf16.msra.mxu0 %v12887
    %13151 = vmatpush.bf16.msra.mxu0 %v12886
    %13152 = vmatpush.bf16.msra.mxu0 %v12885
    %13153 = vmatpush.bf16.msra.mxu0 %v12884
    %13154 = vmatpush.bf16.msra.mxu0 %v12883
    %13155 = vmatmul.bf16.gmra.mxu0 %v12140
    %v13156 = vpop.f32.mrf.mxu0
    %v13157 = vadd.f32 %v13144, %v13156
    %v13158 = vpop.f32.mrf.mxu0
    %13159 = vdwg.mxu0
    %13160 = vmatpush.bf16.msra.mxu0 %v12898
    %13161 = vmatpush.bf16.msra.mxu0 %v12897
    %13162 = vmatpush.bf16.msra.mxu0 %v12896
    %13163 = vmatpush.bf16.msra.mxu0 %v12895
    %13164 = vmatpush.bf16.msra.mxu0 %v12894
    %13165 = vmatpush.bf16.msra.mxu0 %v12893
    %13166 = vmatpush.bf16.msra.mxu0 %v12892
    %13167 = vmatpush.bf16.msra.mxu0 %v12891
    %13168 = vmatmul.bf16.gmra.mxu0 %v12141
    %v13169 = vpop.f32.mrf.mxu0
    %v13170 = vadd.f32 %v13157, %v13169
    %v13171 = vpop.f32.mrf.mxu0
    %13172 = vdwg.mxu0
    %13173 = vmatpush.bf16.msra.mxu0 %v12906
    %13174 = vmatpush.bf16.msra.mxu0 %v12905
    %13175 = vmatpush.bf16.msra.mxu0 %v12904
    %13176 = vmatpush.bf16.msra.mxu0 %v12903
    %13177 = vmatpush.bf16.msra.mxu0 %v12902
    %13178 = vmatpush.bf16.msra.mxu0 %v12901
    %13179 = vmatpush.bf16.msra.mxu0 %v12900
    %13180 = vmatpush.bf16.msra.mxu0 %v12899
    %13181 = vmatmul.bf16.gmra.mxu0 %v12142
    %v13182 = vpop.f32.mrf.mxu0
    %v13183 = vadd.f32 %v13170, %v13182
    %v13184 = vpop.f32.mrf.mxu0
    %13185 = vdwg.mxu0
    %13186 = vmatpush.bf16.msra.mxu0 %v12914
    %13187 = vmatpush.bf16.msra.mxu0 %v12913
    %13188 = vmatpush.bf16.msra.mxu0 %v12912
    %13189 = vmatpush.bf16.msra.mxu0 %v12911
    %13190 = vmatpush.bf16.msra.mxu0 %v12910
    %13191 = vmatpush.bf16.msra.mxu0 %v12909
    %13192 = vmatpush.bf16.msra.mxu0 %v12908
    %13193 = vmatpush.bf16.msra.mxu0 %v12907
    %13194 = vmatmul.bf16.gmra.mxu0 %v12143
    %v13195 = vpop.f32.mrf.mxu0
    %v13196 = vadd.f32 %v13183, %v13195
    %v13197 = vpop.f32.mrf.mxu0
    %13198 = vdwg.mxu0
    %13199 = vmatpush.bf16.msra.mxu0 %v12922
    %13200 = vmatpush.bf16.msra.mxu0 %v12921
    %13201 = vmatpush.bf16.msra.mxu0 %v12920
    %13202 = vmatpush.bf16.msra.mxu0 %v12919
    %13203 = vmatpush.bf16.msra.mxu0 %v12918
    %13204 = vmatpush.bf16.msra.mxu0 %v12917
    %13205 = vmatpush.bf16.msra.mxu0 %v12916
    %13206 = vmatpush.bf16.msra.mxu0 %v12915
    %13207 = vmatmul.bf16.gmra.mxu0 %v12144
    %v13208 = vpop.f32.mrf.mxu0
    %v13209 = vadd.f32 %v13196, %v13208
    %v13210 = vpop.f32.mrf.mxu0
    %13211 = vdwg.mxu0
    %13212 = vmatpush.bf16.msra.mxu0 %v12930
    %13213 = vmatpush.bf16.msra.mxu0 %v12929
    %13214 = vmatpush.bf16.msra.mxu0 %v12928
    %13215 = vmatpush.bf16.msra.mxu0 %v12927
    %13216 = vmatpush.bf16.msra.mxu0 %v12926
    %13217 = vmatpush.bf16.msra.mxu0 %v12925
    %13218 = vmatpush.bf16.msra.mxu0 %v12924
    %13219 = vmatpush.bf16.msra.mxu0 %v12923
    %13220 = vmatmul.bf16.gmra.mxu0 %v12145
    %v13221 = vpop.f32.mrf.mxu0
    %v13222 = vadd.f32 %v13209, %v13221
    %v13223 = vpop.f32.mrf.mxu0
    %13224 = vdwg.mxu0
    %v13225 = vadd.f32 %v12059, %v13222
    %v13226 = vsel %vm1818, %v13225, 0.0
    %v13227 = vrot.slane %v13226, 4
    %v13228 = vadd.f32 %v13226, %v13227
    %v13229 = vrot.slane %v13228, 2
    %v13230 = vadd.f32 %v13228, %v13229
    %v13231 = vrot.slane %v13230, 1
    %v13232 = vadd.f32 %v13230, %v13231
    %v13233 = vrcp.pop 2.0
    %v13234 = vmul.f32 2.0, %v13233
    %v13235 = vsub.f32 1.0, %v13234
    %v13236 = vmul.f32 %v13233, %v13235
    %v13237 = vadd.f32 %v13233, %v13236
    %vm13238 = vweird.f32 %v13233
    %v13239 = vsel %vm13238, %v13233, %v13237
    %v13240 = vmul.f32 %v13232, %v13239
    %v13241 = vmul.f32 %v13225, %v13225
    %v13242 = vsel %vm1818, %v13241, 0.0
    %v13243 = vrot.slane %v13242, 4
    %v13244 = vadd.f32 %v13242, %v13243
    %v13245 = vrot.slane %v13244, 2
    %v13246 = vadd.f32 %v13244, %v13245
    %v13247 = vrot.slane %v13246, 1
    %v13248 = vadd.f32 %v13246, %v13247
    %v13249 = vmul.f32 %v13248, %v13239
    %v13250 = vmul.f32 %v13240, %v13240
    %v13251 = vsub.f32 %v13249, %v13250
    %v13252 = vmax.f32 %v13251, 0.0
    %v13253 = vsub.f32 %v13225, %v13240
    %v13254 = vadd.f32 %v13252, 1e-05
    %v13255 = vrsqrt.pop %v13254
    %v13256 = vmul.f32 %v13255, %v13254
    %v13257 = vmul.f32 %v13256, %v13255
    %v13258 = vmul.f32 0.5, %v13257
    %v13259 = vsub.f32 1.5, %v13258
    %v13260 = vmul.f32 %v13255, %v13259
    %vm13261 = vweird.f32 %v13254
    %vm13262 = vweird.f32 %v13255
    %vm13263 = vmor %vm13261, %vm13262
    %v13264 = vsel %vm13263, %v13255, %v13260
    %v13265 = vld [vmem:[#allocation12 + $0x6] ss:$0 sm:$0xff]
    %v13266 = vmul.f32 %v13264, %v13265
    %v13267 = vmul.f32 %v13253, %v13266
    %v13268 = vld [vmem:[#allocation12 + $0x7] ss:$0 sm:$0xff]
    %v13269 = vadd.f32 %v13267, %v13268
    %v13270 = vmax.f32 %v13269, 0.0
    %v13271 = vpack.c.bf16 %v13270, %v13270
    %v13272 = vld [vmem:[#allocation14] sm:$0xf]
    %v13273 = vld [vmem:[#allocation14 + $0x4] sm:$0xf]
    %v13274 = vld [vmem:[#allocation14 + $0x8] sm:$0xf]
    %v13275 = vld [vmem:[#allocation14 + $0xc] sm:$0xf]
    %v13276 = vld [vmem:[#allocation14 + $0x10] sm:$0xf]
    %v13277 = vld [vmem:[#allocation14 + $0x14] sm:$0xf]
    %v13278 = vld [vmem:[#allocation14 + $0x18] sm:$0xf]
    %v13279 = vld [vmem:[#allocation14 + $0x1c] sm:$0xf]
    %v13280 = vld [vmem:[#allocation14 + $0x20] sm:$0xf]
    %v13281 = vld [vmem:[#allocation14 + $0x24] sm:$0xf]
    %v13282 = vld [vmem:[#allocation14 + $0x28] sm:$0xf]
    %v13283 = vld [vmem:[#allocation14 + $0x2c] sm:$0xf]
    %v13284 = vld [vmem:[#allocation14 + $0x30] sm:$0xf]
    %v13285 = vld [vmem:[#allocation14 + $0x34] sm:$0xf]
    %v13286 = vld [vmem:[#allocation14 + $0x38] sm:$0xf]
    %v13287 = vld [vmem:[#allocation14 + $0x3c] sm:$0xf]
    %v13288 = vld [vmem:[#allocation12 + $0x10] ss:$0 sm:$0xff]
    %v13305 = vunpack.c.l.b16 %v13272
    %v13306 = vunpack.c.l.b16 %v13273
    %v13307 = vunpack.c.l.b16 %v13274
    %v13308 = vunpack.c.l.b16 %v13275
    %v13309 = vunpack.c.l.b16 %v13276
    %v13310 = vunpack.c.l.b16 %v13277
    %v13311 = vunpack.c.l.b16 %v13278
    %v13312 = vunpack.c.l.b16 %v13279
    %v13313 = vunpack.c.l.b16 %v13280
    %v13314 = vunpack.c.l.b16 %v13281
    %v13315 = vunpack.c.l.b16 %v13282
    %v13316 = vunpack.c.l.b16 %v13283
    %v13317 = vunpack.c.l.b16 %v13284
    %v13318 = vunpack.c.l.b16 %v13285
    %v13319 = vunpack.c.l.b16 %v13286
    %v13320 = vunpack.c.l.b16 %v13287
    %v13321 = vpack.c.b16 %v13306, %v13305
    %v13322 = vpack.c.b16 %v13308, %v13307
    %v13323 = vpack.c.b16 %v13310, %v13309
    %v13324 = vpack.c.b16 %v13312, %v13311
    %v13325 = vpack.c.b16 %v13314, %v13313
    %v13326 = vpack.c.b16 %v13316, %v13315
    %v13327 = vpack.c.b16 %v13318, %v13317
    %v13328 = vpack.c.b16 %v13320, %v13319
    %13337 = vmatpush.bf16.msra.mxu0 %v13328
    %13338 = vmatpush.bf16.msra.mxu0 %v13327
    %13339 = vmatpush.bf16.msra.mxu0 %v13326
    %13340 = vmatpush.bf16.msra.mxu0 %v13325
    %13341 = vmatpush.bf16.msra.mxu0 %v13324
    %13342 = vmatpush.bf16.msra.mxu0 %v13323
    %13343 = vmatpush.bf16.msra.mxu0 %v13322
    %13344 = vmatpush.bf16.msra.mxu0 %v13321
    %13345 = vmatmul.bf16.gmra.mxu0 %v13271
    %v13346 = vpop.f32.mrf.mxu0
    %v13347 = vadd.f32 %v13288, %v13346
    %v13348 = vpop.f32.mrf.mxu0
    %13349 = vdwg.mxu0
    %13350 = vst [vmem:[#allocation15] sm:$0x3] %v13347
    // Predicated region
    $region50: #{cap_recover_forward.1} parent=1 // pred_check
      _
    $region51: #{cap_recover_forward.1} parent=1 // pred_check_branch
      %13352 = sbr.rel (0) target = $region53
    $region52: #{cap_recover_forward.1} parent=1 // pred_region
      %13354 = vsyncadd [#allocation8], 0
      %s13356 = sshll.u32 [#allocation15], 4
      %s13357 = int_to_ptr.vmem [resolvable:$true] %s13356
      %s13358 = sshll.u32 %s7, 4
      %s13359 = int_to_ptr.hbm [resolvable:$true] %s13358
      %13361 = dma.vmem_to_hbm [thread:$0]  %s13357, 32, %s13359, [#allocation8]
    $region53: #{cap_recover_forward.1} parent=1 // pred_fallthru
      _
    // Predicated region
    $region54: #{cap_recover_forward.1} parent=1 // pred_check
      _
    $region55: #{cap_recover_forward.1} parent=1 // pred_check_branch
      %13363 = sbr.rel (0) target = $region57
    $region56: #{cap_recover_forward.1} parent=1 // pred_region
      %13365 = dma.done [#allocation8], 32
    $region57: #{cap_recover_forward.1} parent=1 // pred_fallthru
      _
    %13366 = vsyncpa [#allocation7], 1
    %13367 = vsyncpa [#allocation10], 1
    %13368 = vsyncpa [#allocation13], 1
    %13369 = vsyncpa [#allocation8], 1
  %13370 = vsyncmov [#allocation5]
  %s13371 = vpop.sfrf %13370
  %p13372 = scmp.eq.s32.totalorder %s13371, 0
  %p13373 = pneg %p13372
  %13375 = shalt.err (%p13373)

</llo_original>
